<compile_context>
chip_gen: v7x
topology: tpu7x:2x2x1
jax: 0.10.0
libtpu: 0.0.40
codegen_flags: <defaults>
</compile_context>

<pallas_src>
import functools

import jax
import jax.numpy as jnp
from jax.experimental import pallas as pl
from jax.experimental.pallas import tpu as pltpu

PAD = 128  # lane padding for feature / hidden / gate / output widths


def _sigmoid_eup(x):
    # sigmoid(x) == 0.5 * tanh(0.5 * x) + 0.5  -> single EUP tanh, no VPU divide.
    return 0.5 * jnp.tanh(0.5 * x) + 0.5


def _gru_stack_kernel(x_ref, wih_ref, whh_ref, bias_ref, bhn_ref,
                      wlin_ref, blin_ref, out_ref):
    """Whole 4-layer GRU stack + linear head in one grid-less kernel call."""
    S, P = x_ref.shape
    L = wih_ref.shape[0]
    GP = wih_ref.shape[2] // 3            # per-gate lane width (== P == 128)

    # Layer 0 input projection: x is known for every timestep up front, so it is
    # one batched MXU matmul, entirely off the recurrence critical path.
    gi0 = jnp.dot(x_ref[...].astype(jnp.bfloat16), wih_ref[0],
                  preferred_element_type=jnp.float32) + bias_ref[pl.ds(0, 1), :]

    prev_rows = None                      # bf16 rows h_t^{l-1}, one per timestep
    for l in range(L):                    # static unroll over layers
        whh = whh_ref[l]                  # (P, 3*GP) bf16, VMEM resident
        bhn = bhn_ref[pl.ds(l, 1), :]     # (1, GP)  f32 recurrent n-gate bias
        if l > 0:
            wih = wih_ref[l]              # (P, 3*GP) bf16
            bias = bias_ref[pl.ds(l, 1), :]   # b_ih+b_hh for r/z, b_in for n

        h = jnp.zeros((1, P), jnp.float32)
        h_bf = jnp.zeros((1, P), jnp.bfloat16)
        rows_bf = []
        for t in range(S):                # static unroll of the recurrence (S=8)
            if l == 0:
                gi = gi0[t:t + 1, :]      # precomputed, bias already added
            else:
                # per-step input projection: node (l,t) depends only on (l-1,t)
                gi = jnp.dot(prev_rows[t], wih,
                             preferred_element_type=jnp.float32) + bias
            gh = jnp.dot(h_bf, whh, preferred_element_type=jnp.float32)
            # r and z occupy adjacent 128-lane blocks: one fused add + sigmoid
            # over (1, 256), sliced afterwards (tile-aligned slices).
            rz = _sigmoid_eup(gi[:, 0:2 * GP] + gh[:, 0:2 * GP])
            r = rz[:, 0:GP]
            z = rz[:, GP:2 * GP]
            n = jnp.tanh(gi[:, 2 * GP:3 * GP] +
                         r * (gh[:, 2 * GP:3 * GP] + bhn))
            h = n + z * (h - n)           # == (1-z)*n + z*h ; pad lanes stay 0
            h_bf = h.astype(jnp.bfloat16)  # single pack, reused by gh & next gi
            rows_bf.append(h_bf)
        prev_rows = rows_bf

    # Linear head (identity matrix when the module has no Linear layer).  Single
    # lane-dense (S, 128) store; real columns are sliced off outside the kernel.
    seq = jnp.concatenate(prev_rows, axis=0)            # (S, P) bf16
    out_ref[...] = (jnp.dot(seq, wlin_ref[...],
                            preferred_element_type=jnp.float32) + blin_ref[...])


def _run_gru_pallas(x_pad, wih, whh, bias, bhn, wlin, blin):
    S, P = x_pad.shape
    L = wih.shape[0]
    args = (x_pad, wih, whh, bias, bhn, wlin, blin)
    vmem = lambda: pl.BlockSpec(memory_space=pltpu.MemorySpace.VMEM)
    cost = pl.CostEstimate(
        flops=int(2 * S * P * (3 * P) * (2 * L) + 2 * S * P * P),
        transcendentals=int(L * S * 3 * P),
        bytes_accessed=int(sum(a.size * a.dtype.itemsize for a in args)
                           + S * P * 4),
    )
    return pl.pallas_call(
        _gru_stack_kernel,
        out_shape=jax.ShapeDtypeStruct((S, P), jnp.float32),
        in_specs=[vmem() for _ in range(len(args))],
        out_specs=vmem(),
        cost_estimate=cost,
    )(*args)


def _gru_forward(input_seq, wih, whh, bias, bhn, wlin, blin, *,
                 input_size, output_size):
    """Pad -> pallas kernel -> slice, all inside one jit (no stray tiny XLA ops)."""
    S = input_seq.shape[0]
    x_pad = jnp.zeros((S, PAD), jnp.float32).at[:, :input_size].set(
        input_seq.astype(jnp.float32))
    out_pad = _run_gru_pallas(x_pad, wih, whh, bias, bhn, wlin, blin)
    return out_pad[:, :output_size]       # drop lane padding


class GRU:
    """JAX/Pallas port of models/RNNmodel.py::GRU (forward pass only)."""

    NUM_LAYERS = 4

    def __init__(self, input_size=1, hidden_layer_size=None, output_size=4,
                 bidirectional=False, *, key):
        if bidirectional:
            # TODO(synk): bidirectional=True path (reverse-direction GRU + concat)
            # is not implemented in the Pallas kernel.
            raise NotImplementedError("bidirectional GRU not implemented")
        self.input_size = input_size
        self.hidden = output_size if hidden_layer_size is None else hidden_layer_size
        self.has_linear = hidden_layer_size is not None
        self.output_size = output_size
        H = self.hidden
        assert input_size <= PAD and H <= PAD and output_size <= PAD, \
            "kernel packs features/hidden/output into a single 128-lane block"

        keys = jax.random.split(key, 4 * self.NUM_LAYERS + 2)
        k = 1.0 / jnp.sqrt(jnp.float32(H))

        # PyTorch-layout parameters (gate order r, z, n), f32 master copies.
        self.layers = []
        for layer in range(self.NUM_LAYERS):
            in_dim = input_size if layer == 0 else H
            kw = keys[4 * layer:4 * layer + 4]
            w_ih = jax.random.uniform(kw[0], (3 * H, in_dim), jnp.float32, -k, k)
            w_hh = jax.random.uniform(kw[1], (3 * H, H), jnp.float32, -k, k)
            b_ih = jax.random.uniform(kw[2], (3 * H,), jnp.float32, -k, k)
            b_hh = jax.random.uniform(kw[3], (3 * H,), jnp.float32, -k, k)
            self.layers.append((w_ih, w_hh, b_ih, b_hh))

        if self.has_linear:
            kl = 1.0 / jnp.sqrt(jnp.float32(H))
            self.w_lin = jax.random.uniform(keys[-2], (output_size, H),
                                            jnp.float32, -kl, kl)
            self.b_lin = jax.random.uniform(keys[-1], (output_size,),
                                            jnp.float32, -kl, kl)
        else:
            self.w_lin = None
            self.b_lin = None

        self._packed = self._pack_params()
        self._fwd = jax.jit(functools.partial(
            _gru_forward, input_size=self.input_size,
            output_size=self.output_size))

    def _pack_params(self):
        """Pack weights gate-aligned to 128 lanes; bf16 copies feed the MXU."""
        H, L, P = self.hidden, self.NUM_LAYERS, PAD
        wih = jnp.zeros((L, P, 3 * P), jnp.float32)
        whh = jnp.zeros((L, P, 3 * P), jnp.float32)
        bias = jnp.zeros((L, 3 * P), jnp.float32)   # b_ih+b_hh (r,z), b_in (n)
        bhn = jnp.zeros((L, P), jnp.float32)        # b_hn (stays inside r* term)
        for l, (w_ih, w_hh, b_ih, b_hh) in enumerate(self.layers):
            in_dim = w_ih.shape[1]
            for g in range(3):                      # gates at lane offsets 0/128/256
                wih = wih.at[l, :in_dim, g * P:g * P + H].set(
                    w_ih[g * H:(g + 1) * H, :].T)
                whh = whh.at[l, :H, g * P:g * P + H].set(
                    w_hh[g * H:(g + 1) * H, :].T)
                bg = b_ih[g * H:(g + 1) * H]
                if g < 2:                           # hoist recurrent r/z biases
                    bg = bg + b_hh[g * H:(g + 1) * H]
                bias = bias.at[l, g * P:g * P + H].set(bg)
            bhn = bhn.at[l, :H].set(b_hh[2 * H:3 * H])
        if self.has_linear:
            wlin = jnp.zeros((P, P), jnp.float32).at[:H, :self.output_size].set(
                self.w_lin.T)
            blin = jnp.zeros((1, P), jnp.float32).at[0, :self.output_size].set(
                self.b_lin)
        else:
            wlin = jnp.zeros((P, P), jnp.float32).at[:H, :H].set(
                jnp.eye(H, dtype=jnp.float32))      # identity head == no Linear
            blin = jnp.zeros((1, P), jnp.float32)
        # Zero-padded lanes/rows keep the "padding stays exactly 0" invariant.
        return (wih.astype(jnp.bfloat16), whh.astype(jnp.bfloat16),
                bias, bhn, wlin.astype(jnp.bfloat16), blin)

    def forward(self, input_seq):
        """input_seq: (S, input_size) float32 -> (S, output_size) float32."""
        S = input_seq.shape[0]
        # TODO(synk): for S beyond ~32 switch the in-kernel time unroll to a
        # bounded-unroll lax.fori_loop (register pressure / compile-time guard).
        assert S <= 32, "kernel fully unrolls the time recurrence; keep S small"
        return self._fwd(input_seq, *self._packed)

    __call__ = forward

    # Pure-JAX f32 reference (mirrors torch.nn.GRU math) for validation.
    def reference(self, input_seq):
        H = self.hidden
        h_in = input_seq.astype(jnp.float32)
        for (w_ih, w_hh, b_ih, b_hh) in self.layers:
            S = h_in.shape[0]
            h = jnp.zeros((H,), jnp.float32)
            outs = []
            for t in range(S):
                gi = w_ih @ h_in[t] + b_ih
                gh = w_hh @ h + b_hh
                r = jax.nn.sigmoid(gi[:H] + gh[:H])
                z = jax.nn.sigmoid(gi[H:2 * H] + gh[H:2 * H])
                n = jnp.tanh(gi[2 * H:] + r * gh[2 * H:])
                h = (1.0 - z) * n + z * h
                outs.append(h)
            h_in = jnp.stack(outs)
        if self.has_linear:
            return h_in @ self.w_lin.T + self.b_lin
        return h_in


if __name__ == "__main__":
    root = jax.random.PRNGKey(0)
    pkey, pkey2, xkey = jax.random.split(root, 3)

    x = jax.random.normal(xkey, (8, 1), jnp.float32)   # (seq=8, input_size=1)

    # Case 1: hidden_layer_size=32 -> Linear(32, 4) head present.
    model = GRU(input_size=1, hidden_layer_size=32, output_size=4,
                bidirectional=False, key=pkey)
    out = model(x)
    jax.block_until_ready(out)
    assert out.shape == (8, 4), out.shape
    ref = model.reference(x)
    # bf16 MXU operands (f32 accumulation / f32 gate math) -> relaxed tolerance.
    assert jnp.allclose(out, ref, atol=2e-2, rtol=2e-2), (
        float(jnp.max(jnp.abs(out - ref))))

    # Case 2: hidden_layer_size=None -> no Linear; hidden == output_size.
    model2 = GRU(input_size=1, hidden_layer_size=None, output_size=4,
                 bidirectional=False, key=pkey2)
    out2 = model2(x)
    jax.block_until_ready(out2)
    assert out2.shape == (8, 4), out2.shape
    ref2 = model2.reference(x)
    assert jnp.allclose(out2, ref2, atol=2e-2, rtol=2e-2), (
        float(jnp.max(jnp.abs(out2 - ref2))))

    print("KERNEL_OK")
</pallas_src>

<mosaic_0001>
module attributes {stable_mosaic.version = 11 : i64} {
  func.func @_gru_stack_kernel(%arg0: memref<8x128xf32, #tpu.memory_space<vmem>>, %arg1: memref<4x128x384xbf16, #tpu.memory_space<vmem>>, %arg2: memref<4x128x384xbf16, #tpu.memory_space<vmem>>, %arg3: memref<4x384xf32, #tpu.memory_space<vmem>>, %arg4: memref<4x128xf32, #tpu.memory_space<vmem>>, %arg5: memref<128x128xbf16, #tpu.memory_space<vmem>>, %arg6: memref<1x128xf32, #tpu.memory_space<vmem>>, %arg7: memref<8x128xf32, #tpu.memory_space<vmem>>) attributes {dimension_semantics = [], scalar_prefetch = 0 : i64, scratch_operands = 0 : i64, tpu.core_type = #tpu.core_type<tc>} {
    %c0 = arith.constant 0 : index
    %c0_0 = arith.constant 0 : index
    %0 = vector.load %arg0[%c0, %c0_0] : memref<8x128xf32, #tpu.memory_space<vmem>>, vector<8x128xf32>
    %1 = arith.truncf %0 : vector<8x128xf32> to vector<8x128xbf16>
    %c0_1 = arith.constant 0 : index
    %c0_2 = arith.constant 0 : index
    %c0_3 = arith.constant 0 : index
    %2 = vector.load %arg1[%c0_1, %c0_2, %c0_3] : memref<4x128x384xbf16, #tpu.memory_space<vmem>>, vector<1x128x384xbf16>
    %3 = vector.shape_cast %2 : vector<1x128x384xbf16> to vector<128x384xbf16>
    %cst = arith.constant dense<0.000000e+00> : vector<8x384xf32>
    %4 = tpu.matmul %1, %3, %cst {dimension_numbers = #tpu.dot_dimension_numbers<[1], [0], [0], [1], [0, 0, 1, 1], [], []>} : vector<8x128xbf16>, vector<128x384xbf16>, vector<8x384xf32> -> vector<8x384xf32>
    %c0_4 = arith.constant 0 : index
    %c0_5 = arith.constant 0 : index
    %5 = vector.load %arg3[%c0_4, %c0_5] : memref<4x384xf32, #tpu.memory_space<vmem>>, vector<1x384xf32>
    %6 = vector.broadcast %5 : vector<1x384xf32> to vector<8x384xf32>
    %7 = arith.addf %4, %6 : vector<8x384xf32>
    %c0_6 = arith.constant 0 : index
    %c0_7 = arith.constant 0 : index
    %c0_8 = arith.constant 0 : index
    %8 = vector.load %arg2[%c0_6, %c0_7, %c0_8] : memref<4x128x384xbf16, #tpu.memory_space<vmem>>, vector<1x128x384xbf16>
    %9 = vector.shape_cast %8 : vector<1x128x384xbf16> to vector<128x384xbf16>
    %c0_9 = arith.constant 0 : index
    %c0_10 = arith.constant 0 : index
    %10 = vector.load %arg4[%c0_9, %c0_10] : memref<4x128xf32, #tpu.memory_space<vmem>>, vector<1x128xf32>
    %cst_11 = arith.constant 0.000000e+00 : f32
    %11 = vector.broadcast %cst_11 : f32 to vector<1x128xf32>
    %cst_12 = arith.constant 0.000000e+00 : bf16
    %12 = vector.broadcast %cst_12 : bf16 to vector<1x128xbf16>
    %13 = vector.extract_strided_slice %7 {offsets = [0, 0], sizes = [1, 384], strides = [1, 1]} : vector<8x384xf32> to vector<1x384xf32>
    %cst_13 = arith.constant dense<0.000000e+00> : vector<1x384xf32>
    %14 = tpu.matmul %12, %9, %cst_13 {dimension_numbers = #tpu.dot_dimension_numbers<[1], [0], [0], [1], [0, 0, 1, 1], [], []>} : vector<1x128xbf16>, vector<128x384xbf16>, vector<1x384xf32> -> vector<1x384xf32>
    %15 = vector.extract_strided_slice %13 {offsets = [0, 0], sizes = [1, 256], strides = [1, 1]} : vector<1x384xf32> to vector<1x256xf32>
    %16 = vector.extract_strided_slice %14 {offsets = [0, 0], sizes = [1, 256], strides = [1, 1]} : vector<1x384xf32> to vector<1x256xf32>
    %17 = arith.addf %15, %16 : vector<1x256xf32>
    %cst_14 = arith.constant 5.000000e-01 : f32
    %18 = vector.broadcast %cst_14 : f32 to vector<1x256xf32>
    %19 = arith.mulf %18, %17 : vector<1x256xf32>
    %20 = math.tanh %19 : vector<1x256xf32>
    %cst_15 = arith.constant 5.000000e-01 : f32
    %21 = vector.broadcast %cst_15 : f32 to vector<1x256xf32>
    %22 = arith.mulf %21, %20 : vector<1x256xf32>
    %cst_16 = arith.constant 5.000000e-01 : f32
    %23 = vector.broadcast %cst_16 : f32 to vector<1x256xf32>
    %24 = arith.addf %22, %23 : vector<1x256xf32>
    %25 = vector.extract_strided_slice %24 {offsets = [0, 0], sizes = [1, 128], strides = [1, 1]} : vector<1x256xf32> to vector<1x128xf32>
    %26 = vector.extract_strided_slice %24 {offsets = [0, 128], sizes = [1, 128], strides = [1, 1]} : vector<1x256xf32> to vector<1x128xf32>
    %27 = vector.extract_strided_slice %13 {offsets = [0, 256], sizes = [1, 128], strides = [1, 1]} : vector<1x384xf32> to vector<1x128xf32>
    %28 = vector.extract_strided_slice %14 {offsets = [0, 256], sizes = [1, 128], strides = [1, 1]} : vector<1x384xf32> to vector<1x128xf32>
    %29 = arith.addf %28, %10 : vector<1x128xf32>
    %30 = arith.mulf %25, %29 : vector<1x128xf32>
    %31 = arith.addf %27, %30 : vector<1x128xf32>
    %32 = math.tanh %31 : vector<1x128xf32>
    %33 = arith.subf %11, %32 : vector<1x128xf32>
    %34 = arith.mulf %26, %33 : vector<1x128xf32>
    %35 = arith.addf %32, %34 : vector<1x128xf32>
    %36 = arith.truncf %35 : vector<1x128xf32> to vector<1x128xbf16>
    %37 = vector.extract_strided_slice %7 {offsets = [1, 0], sizes = [1, 384], strides = [1, 1]} : vector<8x384xf32> to vector<1x384xf32>
    %cst_17 = arith.constant dense<0.000000e+00> : vector<1x384xf32>
    %38 = tpu.matmul %36, %9, %cst_17 {dimension_numbers = #tpu.dot_dimension_numbers<[1], [0], [0], [1], [0, 0, 1, 1], [], []>} : vector<1x128xbf16>, vector<128x384xbf16>, vector<1x384xf32> -> vector<1x384xf32>
    %39 = vector.extract_strided_slice %37 {offsets = [0, 0], sizes = [1, 256], strides = [1, 1]} : vector<1x384xf32> to vector<1x256xf32>
    %40 = vector.extract_strided_slice %38 {offsets = [0, 0], sizes = [1, 256], strides = [1, 1]} : vector<1x384xf32> to vector<1x256xf32>
    %41 = arith.addf %39, %40 : vector<1x256xf32>
    %cst_18 = arith.constant 5.000000e-01 : f32
    %42 = vector.broadcast %cst_18 : f32 to vector<1x256xf32>
    %43 = arith.mulf %42, %41 : vector<1x256xf32>
    %44 = math.tanh %43 : vector<1x256xf32>
    %cst_19 = arith.constant 5.000000e-01 : f32
    %45 = vector.broadcast %cst_19 : f32 to vector<1x256xf32>
    %46 = arith.mulf %45, %44 : vector<1x256xf32>
    %cst_20 = arith.constant 5.000000e-01 : f32
    %47 = vector.broadcast %cst_20 : f32 to vector<1x256xf32>
    %48 = arith.addf %46, %47 : vector<1x256xf32>
    %49 = vector.extract_strided_slice %48 {offsets = [0, 0], sizes = [1, 128], strides = [1, 1]} : vector<1x256xf32> to vector<1x128xf32>
    %50 = vector.extract_strided_slice %48 {offsets = [0, 128], sizes = [1, 128], strides = [1, 1]} : vector<1x256xf32> to vector<1x128xf32>
    %51 = vector.extract_strided_slice %37 {offsets = [0, 256], sizes = [1, 128], strides = [1, 1]} : vector<1x384xf32> to vector<1x128xf32>
    %52 = vector.extract_strided_slice %38 {offsets = [0, 256], sizes = [1, 128], strides = [1, 1]} : vector<1x384xf32> to vector<1x128xf32>
    %53 = arith.addf %52, %10 : vector<1x128xf32>
    %54 = arith.mulf %49, %53 : vector<1x128xf32>
    %55 = arith.addf %51, %54 : vector<1x128xf32>
    %56 = math.tanh %55 : vector<1x128xf32>
    %57 = arith.subf %35, %56 : vector<1x128xf32>
    %58 = arith.mulf %50, %57 : vector<1x128xf32>
    %59 = arith.addf %56, %58 : vector<1x128xf32>
    %60 = arith.truncf %59 : vector<1x128xf32> to vector<1x128xbf16>
    %61 = vector.extract_strided_slice %7 {offsets = [2, 0], sizes = [1, 384], strides = [1, 1]} : vector<8x384xf32> to vector<1x384xf32>
    %cst_21 = arith.constant dense<0.000000e+00> : vector<1x384xf32>
    %62 = tpu.matmul %60, %9, %cst_21 {dimension_numbers = #tpu.dot_dimension_numbers<[1], [0], [0], [1], [0, 0, 1, 1], [], []>} : vector<1x128xbf16>, vector<128x384xbf16>, vector<1x384xf32> -> vector<1x384xf32>
    %63 = vector.extract_strided_slice %61 {offsets = [0, 0], sizes = [1, 256], strides = [1, 1]} : vector<1x384xf32> to vector<1x256xf32>
    %64 = vector.extract_strided_slice %62 {offsets = [0, 0], sizes = [1, 256], strides = [1, 1]} : vector<1x384xf32> to vector<1x256xf32>
    %65 = arith.addf %63, %64 : vector<1x256xf32>
    %cst_22 = arith.constant 5.000000e-01 : f32
    %66 = vector.broadcast %cst_22 : f32 to vector<1x256xf32>
    %67 = arith.mulf %66, %65 : vector<1x256xf32>
    %68 = math.tanh %67 : vector<1x256xf32>
    %cst_23 = arith.constant 5.000000e-01 : f32
    %69 = vector.broadcast %cst_23 : f32 to vector<1x256xf32>
    %70 = arith.mulf %69, %68 : vector<1x256xf32>
    %cst_24 = arith.constant 5.000000e-01 : f32
    %71 = vector.broadcast %cst_24 : f32 to vector<1x256xf32>
    %72 = arith.addf %70, %71 : vector<1x256xf32>
    %73 = vector.extract_strided_slice %72 {offsets = [0, 0], sizes = [1, 128], strides = [1, 1]} : vector<1x256xf32> to vector<1x128xf32>
    %74 = vector.extract_strided_slice %72 {offsets = [0, 128], sizes = [1, 128], strides = [1, 1]} : vector<1x256xf32> to vector<1x128xf32>
    %75 = vector.extract_strided_slice %61 {offsets = [0, 256], sizes = [1, 128], strides = [1, 1]} : vector<1x384xf32> to vector<1x128xf32>
    %76 = vector.extract_strided_slice %62 {offsets = [0, 256], sizes = [1, 128], strides = [1, 1]} : vector<1x384xf32> to vector<1x128xf32>
    %77 = arith.addf %76, %10 : vector<1x128xf32>
    %78 = arith.mulf %73, %77 : vector<1x128xf32>
    %79 = arith.addf %75, %78 : vector<1x128xf32>
    %80 = math.tanh %79 : vector<1x128xf32>
    %81 = arith.subf %59, %80 : vector<1x128xf32>
    %82 = arith.mulf %74, %81 : vector<1x128xf32>
    %83 = arith.addf %80, %82 : vector<1x128xf32>
    %84 = arith.truncf %83 : vector<1x128xf32> to vector<1x128xbf16>
    %85 = vector.extract_strided_slice %7 {offsets = [3, 0], sizes = [1, 384], strides = [1, 1]} : vector<8x384xf32> to vector<1x384xf32>
    %cst_25 = arith.constant dense<0.000000e+00> : vector<1x384xf32>
    %86 = tpu.matmul %84, %9, %cst_25 {dimension_numbers = #tpu.dot_dimension_numbers<[1], [0], [0], [1], [0, 0, 1, 1], [], []>} : vector<1x128xbf16>, vector<128x384xbf16>, vector<1x384xf32> -> vector<1x384xf32>
    %87 = vector.extract_strided_slice %85 {offsets = [0, 0], sizes = [1, 256], strides = [1, 1]} : vector<1x384xf32> to vector<1x256xf32>
    %88 = vector.extract_strided_slice %86 {offsets = [0, 0], sizes = [1, 256], strides = [1, 1]} : vector<1x384xf32> to vector<1x256xf32>
    %89 = arith.addf %87, %88 : vector<1x256xf32>
    %cst_26 = arith.constant 5.000000e-01 : f32
    %90 = vector.broadcast %cst_26 : f32 to vector<1x256xf32>
    %91 = arith.mulf %90, %89 : vector<1x256xf32>
    %92 = math.tanh %91 : vector<1x256xf32>
    %cst_27 = arith.constant 5.000000e-01 : f32
    %93 = vector.broadcast %cst_27 : f32 to vector<1x256xf32>
    %94 = arith.mulf %93, %92 : vector<1x256xf32>
    %cst_28 = arith.constant 5.000000e-01 : f32
    %95 = vector.broadcast %cst_28 : f32 to vector<1x256xf32>
    %96 = arith.addf %94, %95 : vector<1x256xf32>
    %97 = vector.extract_strided_slice %96 {offsets = [0, 0], sizes = [1, 128], strides = [1, 1]} : vector<1x256xf32> to vector<1x128xf32>
    %98 = vector.extract_strided_slice %96 {offsets = [0, 128], sizes = [1, 128], strides = [1, 1]} : vector<1x256xf32> to vector<1x128xf32>
    %99 = vector.extract_strided_slice %85 {offsets = [0, 256], sizes = [1, 128], strides = [1, 1]} : vector<1x384xf32> to vector<1x128xf32>
    %100 = vector.extract_strided_slice %86 {offsets = [0, 256], sizes = [1, 128], strides = [1, 1]} : vector<1x384xf32> to vector<1x128xf32>
    %101 = arith.addf %100, %10 : vector<1x128xf32>
    %102 = arith.mulf %97, %101 : vector<1x128xf32>
    %103 = arith.addf %99, %102 : vector<1x128xf32>
    %104 = math.tanh %103 : vector<1x128xf32>
    %105 = arith.subf %83, %104 : vector<1x128xf32>
    %106 = arith.mulf %98, %105 : vector<1x128xf32>
    %107 = arith.addf %104, %106 : vector<1x128xf32>
    %108 = arith.truncf %107 : vector<1x128xf32> to vector<1x128xbf16>
    %109 = vector.extract_strided_slice %7 {offsets = [4, 0], sizes = [1, 384], strides = [1, 1]} : vector<8x384xf32> to vector<1x384xf32>
    %cst_29 = arith.constant dense<0.000000e+00> : vector<1x384xf32>
    %110 = tpu.matmul %108, %9, %cst_29 {dimension_numbers = #tpu.dot_dimension_numbers<[1], [0], [0], [1], [0, 0, 1, 1], [], []>} : vector<1x128xbf16>, vector<128x384xbf16>, vector<1x384xf32> -> vector<1x384xf32>
    %111 = vector.extract_strided_slice %109 {offsets = [0, 0], sizes = [1, 256], strides = [1, 1]} : vector<1x384xf32> to vector<1x256xf32>
    %112 = vector.extract_strided_slice %110 {offsets = [0, 0], sizes = [1, 256], strides = [1, 1]} : vector<1x384xf32> to vector<1x256xf32>
    %113 = arith.addf %111, %112 : vector<1x256xf32>
    %cst_30 = arith.constant 5.000000e-01 : f32
    %114 = vector.broadcast %cst_30 : f32 to vector<1x256xf32>
    %115 = arith.mulf %114, %113 : vector<1x256xf32>
    %116 = math.tanh %115 : vector<1x256xf32>
    %cst_31 = arith.constant 5.000000e-01 : f32
    %117 = vector.broadcast %cst_31 : f32 to vector<1x256xf32>
    %118 = arith.mulf %117, %116 : vector<1x256xf32>
    %cst_32 = arith.constant 5.000000e-01 : f32
    %119 = vector.broadcast %cst_32 : f32 to vector<1x256xf32>
    %120 = arith.addf %118, %119 : vector<1x256xf32>
    %121 = vector.extract_strided_slice %120 {offsets = [0, 0], sizes = [1, 128], strides = [1, 1]} : vector<1x256xf32> to vector<1x128xf32>
    %122 = vector.extract_strided_slice %120 {offsets = [0, 128], sizes = [1, 128], strides = [1, 1]} : vector<1x256xf32> to vector<1x128xf32>
    %123 = vector.extract_strided_slice %109 {offsets = [0, 256], sizes = [1, 128], strides = [1, 1]} : vector<1x384xf32> to vector<1x128xf32>
    %124 = vector.extract_strided_slice %110 {offsets = [0, 256], sizes = [1, 128], strides = [1, 1]} : vector<1x384xf32> to vector<1x128xf32>
    %125 = arith.addf %124, %10 : vector<1x128xf32>
    %126 = arith.mulf %121, %125 : vector<1x128xf32>
    %127 = arith.addf %123, %126 : vector<1x128xf32>
    %128 = math.tanh %127 : vector<1x128xf32>
    %129 = arith.subf %107, %128 : vector<1x128xf32>
    %130 = arith.mulf %122, %129 : vector<1x128xf32>
    %131 = arith.addf %128, %130 : vector<1x128xf32>
    %132 = arith.truncf %131 : vector<1x128xf32> to vector<1x128xbf16>
    %133 = vector.extract_strided_slice %7 {offsets = [5, 0], sizes = [1, 384], strides = [1, 1]} : vector<8x384xf32> to vector<1x384xf32>
    %cst_33 = arith.constant dense<0.000000e+00> : vector<1x384xf32>
    %134 = tpu.matmul %132, %9, %cst_33 {dimension_numbers = #tpu.dot_dimension_numbers<[1], [0], [0], [1], [0, 0, 1, 1], [], []>} : vector<1x128xbf16>, vector<128x384xbf16>, vector<1x384xf32> -> vector<1x384xf32>
    %135 = vector.extract_strided_slice %133 {offsets = [0, 0], sizes = [1, 256], strides = [1, 1]} : vector<1x384xf32> to vector<1x256xf32>
    %136 = vector.extract_strided_slice %134 {offsets = [0, 0], sizes = [1, 256], strides = [1, 1]} : vector<1x384xf32> to vector<1x256xf32>
    %137 = arith.addf %135, %136 : vector<1x256xf32>
    %cst_34 = arith.constant 5.000000e-01 : f32
    %138 = vector.broadcast %cst_34 : f32 to vector<1x256xf32>
    %139 = arith.mulf %138, %137 : vector<1x256xf32>
    %140 = math.tanh %139 : vector<1x256xf32>
    %cst_35 = arith.constant 5.000000e-01 : f32
    %141 = vector.broadcast %cst_35 : f32 to vector<1x256xf32>
    %142 = arith.mulf %141, %140 : vector<1x256xf32>
    %cst_36 = arith.constant 5.000000e-01 : f32
    %143 = vector.broadcast %cst_36 : f32 to vector<1x256xf32>
    %144 = arith.addf %142, %143 : vector<1x256xf32>
    %145 = vector.extract_strided_slice %144 {offsets = [0, 0], sizes = [1, 128], strides = [1, 1]} : vector<1x256xf32> to vector<1x128xf32>
    %146 = vector.extract_strided_slice %144 {offsets = [0, 128], sizes = [1, 128], strides = [1, 1]} : vector<1x256xf32> to vector<1x128xf32>
    %147 = vector.extract_strided_slice %133 {offsets = [0, 256], sizes = [1, 128], strides = [1, 1]} : vector<1x384xf32> to vector<1x128xf32>
    %148 = vector.extract_strided_slice %134 {offsets = [0, 256], sizes = [1, 128], strides = [1, 1]} : vector<1x384xf32> to vector<1x128xf32>
    %149 = arith.addf %148, %10 : vector<1x128xf32>
    %150 = arith.mulf %145, %149 : vector<1x128xf32>
    %151 = arith.addf %147, %150 : vector<1x128xf32>
    %152 = math.tanh %151 : vector<1x128xf32>
    %153 = arith.subf %131, %152 : vector<1x128xf32>
    %154 = arith.mulf %146, %153 : vector<1x128xf32>
    %155 = arith.addf %152, %154 : vector<1x128xf32>
    %156 = arith.truncf %155 : vector<1x128xf32> to vector<1x128xbf16>
    %157 = vector.extract_strided_slice %7 {offsets = [6, 0], sizes = [1, 384], strides = [1, 1]} : vector<8x384xf32> to vector<1x384xf32>
    %cst_37 = arith.constant dense<0.000000e+00> : vector<1x384xf32>
    %158 = tpu.matmul %156, %9, %cst_37 {dimension_numbers = #tpu.dot_dimension_numbers<[1], [0], [0], [1], [0, 0, 1, 1], [], []>} : vector<1x128xbf16>, vector<128x384xbf16>, vector<1x384xf32> -> vector<1x384xf32>
    %159 = vector.extract_strided_slice %157 {offsets = [0, 0], sizes = [1, 256], strides = [1, 1]} : vector<1x384xf32> to vector<1x256xf32>
    %160 = vector.extract_strided_slice %158 {offsets = [0, 0], sizes = [1, 256], strides = [1, 1]} : vector<1x384xf32> to vector<1x256xf32>
    %161 = arith.addf %159, %160 : vector<1x256xf32>
    %cst_38 = arith.constant 5.000000e-01 : f32
    %162 = vector.broadcast %cst_38 : f32 to vector<1x256xf32>
    %163 = arith.mulf %162, %161 : vector<1x256xf32>
    %164 = math.tanh %163 : vector<1x256xf32>
    %cst_39 = arith.constant 5.000000e-01 : f32
    %165 = vector.broadcast %cst_39 : f32 to vector<1x256xf32>
    %166 = arith.mulf %165, %164 : vector<1x256xf32>
    %cst_40 = arith.constant 5.000000e-01 : f32
    %167 = vector.broadcast %cst_40 : f32 to vector<1x256xf32>
    %168 = arith.addf %166, %167 : vector<1x256xf32>
    %169 = vector.extract_strided_slice %168 {offsets = [0, 0], sizes = [1, 128], strides = [1, 1]} : vector<1x256xf32> to vector<1x128xf32>
    %170 = vector.extract_strided_slice %168 {offsets = [0, 128], sizes = [1, 128], strides = [1, 1]} : vector<1x256xf32> to vector<1x128xf32>
    %171 = vector.extract_strided_slice %157 {offsets = [0, 256], sizes = [1, 128], strides = [1, 1]} : vector<1x384xf32> to vector<1x128xf32>
    %172 = vector.extract_strided_slice %158 {offsets = [0, 256], sizes = [1, 128], strides = [1, 1]} : vector<1x384xf32> to vector<1x128xf32>
    %173 = arith.addf %172, %10 : vector<1x128xf32>
    %174 = arith.mulf %169, %173 : vector<1x128xf32>
    %175 = arith.addf %171, %174 : vector<1x128xf32>
    %176 = math.tanh %175 : vector<1x128xf32>
    %177 = arith.subf %155, %176 : vector<1x128xf32>
    %178 = arith.mulf %170, %177 : vector<1x128xf32>
    %179 = arith.addf %176, %178 : vector<1x128xf32>
    %180 = arith.truncf %179 : vector<1x128xf32> to vector<1x128xbf16>
    %181 = vector.extract_strided_slice %7 {offsets = [7, 0], sizes = [1, 384], strides = [1, 1]} : vector<8x384xf32> to vector<1x384xf32>
    %cst_41 = arith.constant dense<0.000000e+00> : vector<1x384xf32>
    %182 = tpu.matmul %180, %9, %cst_41 {dimension_numbers = #tpu.dot_dimension_numbers<[1], [0], [0], [1], [0, 0, 1, 1], [], []>} : vector<1x128xbf16>, vector<128x384xbf16>, vector<1x384xf32> -> vector<1x384xf32>
    %183 = vector.extract_strided_slice %181 {offsets = [0, 0], sizes = [1, 256], strides = [1, 1]} : vector<1x384xf32> to vector<1x256xf32>
    %184 = vector.extract_strided_slice %182 {offsets = [0, 0], sizes = [1, 256], strides = [1, 1]} : vector<1x384xf32> to vector<1x256xf32>
    %185 = arith.addf %183, %184 : vector<1x256xf32>
    %cst_42 = arith.constant 5.000000e-01 : f32
    %186 = vector.broadcast %cst_42 : f32 to vector<1x256xf32>
    %187 = arith.mulf %186, %185 : vector<1x256xf32>
    %188 = math.tanh %187 : vector<1x256xf32>
    %cst_43 = arith.constant 5.000000e-01 : f32
    %189 = vector.broadcast %cst_43 : f32 to vector<1x256xf32>
    %190 = arith.mulf %189, %188 : vector<1x256xf32>
    %cst_44 = arith.constant 5.000000e-01 : f32
    %191 = vector.broadcast %cst_44 : f32 to vector<1x256xf32>
    %192 = arith.addf %190, %191 : vector<1x256xf32>
    %193 = vector.extract_strided_slice %192 {offsets = [0, 0], sizes = [1, 128], strides = [1, 1]} : vector<1x256xf32> to vector<1x128xf32>
    %194 = vector.extract_strided_slice %192 {offsets = [0, 128], sizes = [1, 128], strides = [1, 1]} : vector<1x256xf32> to vector<1x128xf32>
    %195 = vector.extract_strided_slice %181 {offsets = [0, 256], sizes = [1, 128], strides = [1, 1]} : vector<1x384xf32> to vector<1x128xf32>
    %196 = vector.extract_strided_slice %182 {offsets = [0, 256], sizes = [1, 128], strides = [1, 1]} : vector<1x384xf32> to vector<1x128xf32>
    %197 = arith.addf %196, %10 : vector<1x128xf32>
    %198 = arith.mulf %193, %197 : vector<1x128xf32>
    %199 = arith.addf %195, %198 : vector<1x128xf32>
    %200 = math.tanh %199 : vector<1x128xf32>
    %201 = arith.subf %179, %200 : vector<1x128xf32>
    %202 = arith.mulf %194, %201 : vector<1x128xf32>
    %203 = arith.addf %200, %202 : vector<1x128xf32>
    %204 = arith.truncf %203 : vector<1x128xf32> to vector<1x128xbf16>
    %c1 = arith.constant 1 : index
    %c0_45 = arith.constant 0 : index
    %c0_46 = arith.constant 0 : index
    %205 = vector.load %arg2[%c1, %c0_45, %c0_46] : memref<4x128x384xbf16, #tpu.memory_space<vmem>>, vector<1x128x384xbf16>
    %206 = vector.shape_cast %205 : vector<1x128x384xbf16> to vector<128x384xbf16>
    %c1_47 = arith.constant 1 : index
    %c0_48 = arith.constant 0 : index
    %207 = vector.load %arg4[%c1_47, %c0_48] : memref<4x128xf32, #tpu.memory_space<vmem>>, vector<1x128xf32>
    %c1_49 = arith.constant 1 : index
    %c0_50 = arith.constant 0 : index
    %c0_51 = arith.constant 0 : index
    %208 = vector.load %arg1[%c1_49, %c0_50, %c0_51] : memref<4x128x384xbf16, #tpu.memory_space<vmem>>, vector<1x128x384xbf16>
    %209 = vector.shape_cast %208 : vector<1x128x384xbf16> to vector<128x384xbf16>
    %c1_52 = arith.constant 1 : index
    %c0_53 = arith.constant 0 : index
    %210 = vector.load %arg3[%c1_52, %c0_53] : memref<4x384xf32, #tpu.memory_space<vmem>>, vector<1x384xf32>
    %cst_54 = arith.constant 0.000000e+00 : f32
    %211 = vector.broadcast %cst_54 : f32 to vector<1x128xf32>
    %cst_55 = arith.constant 0.000000e+00 : bf16
    %212 = vector.broadcast %cst_55 : bf16 to vector<1x128xbf16>
    %cst_56 = arith.constant dense<0.000000e+00> : vector<1x384xf32>
    %213 = tpu.matmul %36, %209, %cst_56 {dimension_numbers = #tpu.dot_dimension_numbers<[1], [0], [0], [1], [0, 0, 1, 1], [], []>} : vector<1x128xbf16>, vector<128x384xbf16>, vector<1x384xf32> -> vector<1x384xf32>
    %214 = arith.addf %213, %210 : vector<1x384xf32>
    %cst_57 = arith.constant dense<0.000000e+00> : vector<1x384xf32>
    %215 = tpu.matmul %212, %206, %cst_57 {dimension_numbers = #tpu.dot_dimension_numbers<[1], [0], [0], [1], [0, 0, 1, 1], [], []>} : vector<1x128xbf16>, vector<128x384xbf16>, vector<1x384xf32> -> vector<1x384xf32>
    %216 = vector.extract_strided_slice %214 {offsets = [0, 0], sizes = [1, 256], strides = [1, 1]} : vector<1x384xf32> to vector<1x256xf32>
    %217 = vector.extract_strided_slice %215 {offsets = [0, 0], sizes = [1, 256], strides = [1, 1]} : vector<1x384xf32> to vector<1x256xf32>
    %218 = arith.addf %216, %217 : vector<1x256xf32>
    %cst_58 = arith.constant 5.000000e-01 : f32
    %219 = vector.broadcast %cst_58 : f32 to vector<1x256xf32>
    %220 = arith.mulf %219, %218 : vector<1x256xf32>
    %221 = math.tanh %220 : vector<1x256xf32>
    %cst_59 = arith.constant 5.000000e-01 : f32
    %222 = vector.broadcast %cst_59 : f32 to vector<1x256xf32>
    %223 = arith.mulf %222, %221 : vector<1x256xf32>
    %cst_60 = arith.constant 5.000000e-01 : f32
    %224 = vector.broadcast %cst_60 : f32 to vector<1x256xf32>
    %225 = arith.addf %223, %224 : vector<1x256xf32>
    %226 = vector.extract_strided_slice %225 {offsets = [0, 0], sizes = [1, 128], strides = [1, 1]} : vector<1x256xf32> to vector<1x128xf32>
    %227 = vector.extract_strided_slice %225 {offsets = [0, 128], sizes = [1, 128], strides = [1, 1]} : vector<1x256xf32> to vector<1x128xf32>
    %228 = vector.extract_strided_slice %214 {offsets = [0, 256], sizes = [1, 128], strides = [1, 1]} : vector<1x384xf32> to vector<1x128xf32>
    %229 = vector.extract_strided_slice %215 {offsets = [0, 256], sizes = [1, 128], strides = [1, 1]} : vector<1x384xf32> to vector<1x128xf32>
    %230 = arith.addf %229, %207 : vector<1x128xf32>
    %231 = arith.mulf %226, %230 : vector<1x128xf32>
    %232 = arith.addf %228, %231 : vector<1x128xf32>
    %233 = math.tanh %232 : vector<1x128xf32>
    %234 = arith.subf %211, %233 : vector<1x128xf32>
    %235 = arith.mulf %227, %234 : vector<1x128xf32>
    %236 = arith.addf %233, %235 : vector<1x128xf32>
    %237 = arith.truncf %236 : vector<1x128xf32> to vector<1x128xbf16>
    %cst_61 = arith.constant dense<0.000000e+00> : vector<1x384xf32>
    %238 = tpu.matmul %60, %209, %cst_61 {dimension_numbers = #tpu.dot_dimension_numbers<[1], [0], [0], [1], [0, 0, 1, 1], [], []>} : vector<1x128xbf16>, vector<128x384xbf16>, vector<1x384xf32> -> vector<1x384xf32>
    %239 = arith.addf %238, %210 : vector<1x384xf32>
    %cst_62 = arith.constant dense<0.000000e+00> : vector<1x384xf32>
    %240 = tpu.matmul %237, %206, %cst_62 {dimension_numbers = #tpu.dot_dimension_numbers<[1], [0], [0], [1], [0, 0, 1, 1], [], []>} : vector<1x128xbf16>, vector<128x384xbf16>, vector<1x384xf32> -> vector<1x384xf32>
    %241 = vector.extract_strided_slice %239 {offsets = [0, 0], sizes = [1, 256], strides = [1, 1]} : vector<1x384xf32> to vector<1x256xf32>
    %242 = vector.extract_strided_slice %240 {offsets = [0, 0], sizes = [1, 256], strides = [1, 1]} : vector<1x384xf32> to vector<1x256xf32>
    %243 = arith.addf %241, %242 : vector<1x256xf32>
    %cst_63 = arith.constant 5.000000e-01 : f32
    %244 = vector.broadcast %cst_63 : f32 to vector<1x256xf32>
    %245 = arith.mulf %244, %243 : vector<1x256xf32>
    %246 = math.tanh %245 : vector<1x256xf32>
    %cst_64 = arith.constant 5.000000e-01 : f32
    %247 = vector.broadcast %cst_64 : f32 to vector<1x256xf32>
    %248 = arith.mulf %247, %246 : vector<1x256xf32>
    %cst_65 = arith.constant 5.000000e-01 : f32
    %249 = vector.broadcast %cst_65 : f32 to vector<1x256xf32>
    %250 = arith.addf %248, %249 : vector<1x256xf32>
    %251 = vector.extract_strided_slice %250 {offsets = [0, 0], sizes = [1, 128], strides = [1, 1]} : vector<1x256xf32> to vector<1x128xf32>
    %252 = vector.extract_strided_slice %250 {offsets = [0, 128], sizes = [1, 128], strides = [1, 1]} : vector<1x256xf32> to vector<1x128xf32>
    %253 = vector.extract_strided_slice %239 {offsets = [0, 256], sizes = [1, 128], strides = [1, 1]} : vector<1x384xf32> to vector<1x128xf32>
    %254 = vector.extract_strided_slice %240 {offsets = [0, 256], sizes = [1, 128], strides = [1, 1]} : vector<1x384xf32> to vector<1x128xf32>
    %255 = arith.addf %254, %207 : vector<1x128xf32>
    %256 = arith.mulf %251, %255 : vector<1x128xf32>
    %257 = arith.addf %253, %256 : vector<1x128xf32>
    %258 = math.tanh %257 : vector<1x128xf32>
    %259 = arith.subf %236, %258 : vector<1x128xf32>
    %260 = arith.mulf %252, %259 : vector<1x128xf32>
    %261 = arith.addf %258, %260 : vector<1x128xf32>
    %262 = arith.truncf %261 : vector<1x128xf32> to vector<1x128xbf16>
    %cst_66 = arith.constant dense<0.000000e+00> : vector<1x384xf32>
    %263 = tpu.matmul %84, %209, %cst_66 {dimension_numbers = #tpu.dot_dimension_numbers<[1], [0], [0], [1], [0, 0, 1, 1], [], []>} : vector<1x128xbf16>, vector<128x384xbf16>, vector<1x384xf32> -> vector<1x384xf32>
    %264 = arith.addf %263, %210 : vector<1x384xf32>
    %cst_67 = arith.constant dense<0.000000e+00> : vector<1x384xf32>
    %265 = tpu.matmul %262, %206, %cst_67 {dimension_numbers = #tpu.dot_dimension_numbers<[1], [0], [0], [1], [0, 0, 1, 1], [], []>} : vector<1x128xbf16>, vector<128x384xbf16>, vector<1x384xf32> -> vector<1x384xf32>
    %266 = vector.extract_strided_slice %264 {offsets = [0, 0], sizes = [1, 256], strides = [1, 1]} : vector<1x384xf32> to vector<1x256xf32>
    %267 = vector.extract_strided_slice %265 {offsets = [0, 0], sizes = [1, 256], strides = [1, 1]} : vector<1x384xf32> to vector<1x256xf32>
    %268 = arith.addf %266, %267 : vector<1x256xf32>
    %cst_68 = arith.constant 5.000000e-01 : f32
    %269 = vector.broadcast %cst_68 : f32 to vector<1x256xf32>
    %270 = arith.mulf %269, %268 : vector<1x256xf32>
    %271 = math.tanh %270 : vector<1x256xf32>
    %cst_69 = arith.constant 5.000000e-01 : f32
    %272 = vector.broadcast %cst_69 : f32 to vector<1x256xf32>
    %273 = arith.mulf %272, %271 : vector<1x256xf32>
    %cst_70 = arith.constant 5.000000e-01 : f32
    %274 = vector.broadcast %cst_70 : f32 to vector<1x256xf32>
    %275 = arith.addf %273, %274 : vector<1x256xf32>
    %276 = vector.extract_strided_slice %275 {offsets = [0, 0], sizes = [1, 128], strides = [1, 1]} : vector<1x256xf32> to vector<1x128xf32>
    %277 = vector.extract_strided_slice %275 {offsets = [0, 128], sizes = [1, 128], strides = [1, 1]} : vector<1x256xf32> to vector<1x128xf32>
    %278 = vector.extract_strided_slice %264 {offsets = [0, 256], sizes = [1, 128], strides = [1, 1]} : vector<1x384xf32> to vector<1x128xf32>
    %279 = vector.extract_strided_slice %265 {offsets = [0, 256], sizes = [1, 128], strides = [1, 1]} : vector<1x384xf32> to vector<1x128xf32>
    %280 = arith.addf %279, %207 : vector<1x128xf32>
    %281 = arith.mulf %276, %280 : vector<1x128xf32>
    %282 = arith.addf %278, %281 : vector<1x128xf32>
    %283 = math.tanh %282 : vector<1x128xf32>
    %284 = arith.subf %261, %283 : vector<1x128xf32>
    %285 = arith.mulf %277, %284 : vector<1x128xf32>
    %286 = arith.addf %283, %285 : vector<1x128xf32>
    %287 = arith.truncf %286 : vector<1x128xf32> to vector<1x128xbf16>
    %cst_71 = arith.constant dense<0.000000e+00> : vector<1x384xf32>
    %288 = tpu.matmul %108, %209, %cst_71 {dimension_numbers = #tpu.dot_dimension_numbers<[1], [0], [0], [1], [0, 0, 1, 1], [], []>} : vector<1x128xbf16>, vector<128x384xbf16>, vector<1x384xf32> -> vector<1x384xf32>
    %289 = arith.addf %288, %210 : vector<1x384xf32>
    %cst_72 = arith.constant dense<0.000000e+00> : vector<1x384xf32>
    %290 = tpu.matmul %287, %206, %cst_72 {dimension_numbers = #tpu.dot_dimension_numbers<[1], [0], [0], [1], [0, 0, 1, 1], [], []>} : vector<1x128xbf16>, vector<128x384xbf16>, vector<1x384xf32> -> vector<1x384xf32>
    %291 = vector.extract_strided_slice %289 {offsets = [0, 0], sizes = [1, 256], strides = [1, 1]} : vector<1x384xf32> to vector<1x256xf32>
    %292 = vector.extract_strided_slice %290 {offsets = [0, 0], sizes = [1, 256], strides = [1, 1]} : vector<1x384xf32> to vector<1x256xf32>
    %293 = arith.addf %291, %292 : vector<1x256xf32>
    %cst_73 = arith.constant 5.000000e-01 : f32
    %294 = vector.broadcast %cst_73 : f32 to vector<1x256xf32>
    %295 = arith.mulf %294, %293 : vector<1x256xf32>
    %296 = math.tanh %295 : vector<1x256xf32>
    %cst_74 = arith.constant 5.000000e-01 : f32
    %297 = vector.broadcast %cst_74 : f32 to vector<1x256xf32>
    %298 = arith.mulf %297, %296 : vector<1x256xf32>
    %cst_75 = arith.constant 5.000000e-01 : f32
    %299 = vector.broadcast %cst_75 : f32 to vector<1x256xf32>
    %300 = arith.addf %298, %299 : vector<1x256xf32>
    %301 = vector.extract_strided_slice %300 {offsets = [0, 0], sizes = [1, 128], strides = [1, 1]} : vector<1x256xf32> to vector<1x128xf32>
    %302 = vector.extract_strided_slice %300 {offsets = [0, 128], sizes = [1, 128], strides = [1, 1]} : vector<1x256xf32> to vector<1x128xf32>
    %303 = vector.extract_strided_slice %289 {offsets = [0, 256], sizes = [1, 128], strides = [1, 1]} : vector<1x384xf32> to vector<1x128xf32>
    %304 = vector.extract_strided_slice %290 {offsets = [0, 256], sizes = [1, 128], strides = [1, 1]} : vector<1x384xf32> to vector<1x128xf32>
    %305 = arith.addf %304, %207 : vector<1x128xf32>
    %306 = arith.mulf %301, %305 : vector<1x128xf32>
    %307 = arith.addf %303, %306 : vector<1x128xf32>
    %308 = math.tanh %307 : vector<1x128xf32>
    %309 = arith.subf %286, %308 : vector<1x128xf32>
    %310 = arith.mulf %302, %309 : vector<1x128xf32>
    %311 = arith.addf %308, %310 : vector<1x128xf32>
    %312 = arith.truncf %311 : vector<1x128xf32> to vector<1x128xbf16>
    %cst_76 = arith.constant dense<0.000000e+00> : vector<1x384xf32>
    %313 = tpu.matmul %132, %209, %cst_76 {dimension_numbers = #tpu.dot_dimension_numbers<[1], [0], [0], [1], [0, 0, 1, 1], [], []>} : vector<1x128xbf16>, vector<128x384xbf16>, vector<1x384xf32> -> vector<1x384xf32>
    %314 = arith.addf %313, %210 : vector<1x384xf32>
    %cst_77 = arith.constant dense<0.000000e+00> : vector<1x384xf32>
    %315 = tpu.matmul %312, %206, %cst_77 {dimension_numbers = #tpu.dot_dimension_numbers<[1], [0], [0], [1], [0, 0, 1, 1], [], []>} : vector<1x128xbf16>, vector<128x384xbf16>, vector<1x384xf32> -> vector<1x384xf32>
    %316 = vector.extract_strided_slice %314 {offsets = [0, 0], sizes = [1, 256], strides = [1, 1]} : vector<1x384xf32> to vector<1x256xf32>
    %317 = vector.extract_strided_slice %315 {offsets = [0, 0], sizes = [1, 256], strides = [1, 1]} : vector<1x384xf32> to vector<1x256xf32>
    %318 = arith.addf %316, %317 : vector<1x256xf32>
    %cst_78 = arith.constant 5.000000e-01 : f32
    %319 = vector.broadcast %cst_78 : f32 to vector<1x256xf32>
    %320 = arith.mulf %319, %318 : vector<1x256xf32>
    %321 = math.tanh %320 : vector<1x256xf32>
    %cst_79 = arith.constant 5.000000e-01 : f32
    %322 = vector.broadcast %cst_79 : f32 to vector<1x256xf32>
    %323 = arith.mulf %322, %321 : vector<1x256xf32>
    %cst_80 = arith.constant 5.000000e-01 : f32
    %324 = vector.broadcast %cst_80 : f32 to vector<1x256xf32>
    %325 = arith.addf %323, %324 : vector<1x256xf32>
    %326 = vector.extract_strided_slice %325 {offsets = [0, 0], sizes = [1, 128], strides = [1, 1]} : vector<1x256xf32> to vector<1x128xf32>
    %327 = vector.extract_strided_slice %325 {offsets = [0, 128], sizes = [1, 128], strides = [1, 1]} : vector<1x256xf32> to vector<1x128xf32>
    %328 = vector.extract_strided_slice %314 {offsets = [0, 256], sizes = [1, 128], strides = [1, 1]} : vector<1x384xf32> to vector<1x128xf32>
    %329 = vector.extract_strided_slice %315 {offsets = [0, 256], sizes = [1, 128], strides = [1, 1]} : vector<1x384xf32> to vector<1x128xf32>
    %330 = arith.addf %329, %207 : vector<1x128xf32>
    %331 = arith.mulf %326, %330 : vector<1x128xf32>
    %332 = arith.addf %328, %331 : vector<1x128xf32>
    %333 = math.tanh %332 : vector<1x128xf32>
    %334 = arith.subf %311, %333 : vector<1x128xf32>
    %335 = arith.mulf %327, %334 : vector<1x128xf32>
    %336 = arith.addf %333, %335 : vector<1x128xf32>
    %337 = arith.truncf %336 : vector<1x128xf32> to vector<1x128xbf16>
    %cst_81 = arith.constant dense<0.000000e+00> : vector<1x384xf32>
    %338 = tpu.matmul %156, %209, %cst_81 {dimension_numbers = #tpu.dot_dimension_numbers<[1], [0], [0], [1], [0, 0, 1, 1], [], []>} : vector<1x128xbf16>, vector<128x384xbf16>, vector<1x384xf32> -> vector<1x384xf32>
    %339 = arith.addf %338, %210 : vector<1x384xf32>
    %cst_82 = arith.constant dense<0.000000e+00> : vector<1x384xf32>
    %340 = tpu.matmul %337, %206, %cst_82 {dimension_numbers = #tpu.dot_dimension_numbers<[1], [0], [0], [1], [0, 0, 1, 1], [], []>} : vector<1x128xbf16>, vector<128x384xbf16>, vector<1x384xf32> -> vector<1x384xf32>
    %341 = vector.extract_strided_slice %339 {offsets = [0, 0], sizes = [1, 256], strides = [1, 1]} : vector<1x384xf32> to vector<1x256xf32>
    %342 = vector.extract_strided_slice %340 {offsets = [0, 0], sizes = [1, 256], strides = [1, 1]} : vector<1x384xf32> to vector<1x256xf32>
    %343 = arith.addf %341, %342 : vector<1x256xf32>
    %cst_83 = arith.constant 5.000000e-01 : f32
    %344 = vector.broadcast %cst_83 : f32 to vector<1x256xf32>
    %345 = arith.mulf %344, %343 : vector<1x256xf32>
    %346 = math.tanh %345 : vector<1x256xf32>
    %cst_84 = arith.constant 5.000000e-01 : f32
    %347 = vector.broadcast %cst_84 : f32 to vector<1x256xf32>
    %348 = arith.mulf %347, %346 : vector<1x256xf32>
    %cst_85 = arith.constant 5.000000e-01 : f32
    %349 = vector.broadcast %cst_85 : f32 to vector<1x256xf32>
    %350 = arith.addf %348, %349 : vector<1x256xf32>
    %351 = vector.extract_strided_slice %350 {offsets = [0, 0], sizes = [1, 128], strides = [1, 1]} : vector<1x256xf32> to vector<1x128xf32>
    %352 = vector.extract_strided_slice %350 {offsets = [0, 128], sizes = [1, 128], strides = [1, 1]} : vector<1x256xf32> to vector<1x128xf32>
    %353 = vector.extract_strided_slice %339 {offsets = [0, 256], sizes = [1, 128], strides = [1, 1]} : vector<1x384xf32> to vector<1x128xf32>
    %354 = vector.extract_strided_slice %340 {offsets = [0, 256], sizes = [1, 128], strides = [1, 1]} : vector<1x384xf32> to vector<1x128xf32>
    %355 = arith.addf %354, %207 : vector<1x128xf32>
    %356 = arith.mulf %351, %355 : vector<1x128xf32>
    %357 = arith.addf %353, %356 : vector<1x128xf32>
    %358 = math.tanh %357 : vector<1x128xf32>
    %359 = arith.subf %336, %358 : vector<1x128xf32>
    %360 = arith.mulf %352, %359 : vector<1x128xf32>
    %361 = arith.addf %358, %360 : vector<1x128xf32>
    %362 = arith.truncf %361 : vector<1x128xf32> to vector<1x128xbf16>
    %cst_86 = arith.constant dense<0.000000e+00> : vector<1x384xf32>
    %363 = tpu.matmul %180, %209, %cst_86 {dimension_numbers = #tpu.dot_dimension_numbers<[1], [0], [0], [1], [0, 0, 1, 1], [], []>} : vector<1x128xbf16>, vector<128x384xbf16>, vector<1x384xf32> -> vector<1x384xf32>
    %364 = arith.addf %363, %210 : vector<1x384xf32>
    %cst_87 = arith.constant dense<0.000000e+00> : vector<1x384xf32>
    %365 = tpu.matmul %362, %206, %cst_87 {dimension_numbers = #tpu.dot_dimension_numbers<[1], [0], [0], [1], [0, 0, 1, 1], [], []>} : vector<1x128xbf16>, vector<128x384xbf16>, vector<1x384xf32> -> vector<1x384xf32>
    %366 = vector.extract_strided_slice %364 {offsets = [0, 0], sizes = [1, 256], strides = [1, 1]} : vector<1x384xf32> to vector<1x256xf32>
    %367 = vector.extract_strided_slice %365 {offsets = [0, 0], sizes = [1, 256], strides = [1, 1]} : vector<1x384xf32> to vector<1x256xf32>
    %368 = arith.addf %366, %367 : vector<1x256xf32>
    %cst_88 = arith.constant 5.000000e-01 : f32
    %369 = vector.broadcast %cst_88 : f32 to vector<1x256xf32>
    %370 = arith.mulf %369, %368 : vector<1x256xf32>
    %371 = math.tanh %370 : vector<1x256xf32>
    %cst_89 = arith.constant 5.000000e-01 : f32
    %372 = vector.broadcast %cst_89 : f32 to vector<1x256xf32>
    %373 = arith.mulf %372, %371 : vector<1x256xf32>
    %cst_90 = arith.constant 5.000000e-01 : f32
    %374 = vector.broadcast %cst_90 : f32 to vector<1x256xf32>
    %375 = arith.addf %373, %374 : vector<1x256xf32>
    %376 = vector.extract_strided_slice %375 {offsets = [0, 0], sizes = [1, 128], strides = [1, 1]} : vector<1x256xf32> to vector<1x128xf32>
    %377 = vector.extract_strided_slice %375 {offsets = [0, 128], sizes = [1, 128], strides = [1, 1]} : vector<1x256xf32> to vector<1x128xf32>
    %378 = vector.extract_strided_slice %364 {offsets = [0, 256], sizes = [1, 128], strides = [1, 1]} : vector<1x384xf32> to vector<1x128xf32>
    %379 = vector.extract_strided_slice %365 {offsets = [0, 256], sizes = [1, 128], strides = [1, 1]} : vector<1x384xf32> to vector<1x128xf32>
    %380 = arith.addf %379, %207 : vector<1x128xf32>
    %381 = arith.mulf %376, %380 : vector<1x128xf32>
    %382 = arith.addf %378, %381 : vector<1x128xf32>
    %383 = math.tanh %382 : vector<1x128xf32>
    %384 = arith.subf %361, %383 : vector<1x128xf32>
    %385 = arith.mulf %377, %384 : vector<1x128xf32>
    %386 = arith.addf %383, %385 : vector<1x128xf32>
    %387 = arith.truncf %386 : vector<1x128xf32> to vector<1x128xbf16>
    %cst_91 = arith.constant dense<0.000000e+00> : vector<1x384xf32>
    %388 = tpu.matmul %204, %209, %cst_91 {dimension_numbers = #tpu.dot_dimension_numbers<[1], [0], [0], [1], [0, 0, 1, 1], [], []>} : vector<1x128xbf16>, vector<128x384xbf16>, vector<1x384xf32> -> vector<1x384xf32>
    %389 = arith.addf %388, %210 : vector<1x384xf32>
    %cst_92 = arith.constant dense<0.000000e+00> : vector<1x384xf32>
    %390 = tpu.matmul %387, %206, %cst_92 {dimension_numbers = #tpu.dot_dimension_numbers<[1], [0], [0], [1], [0, 0, 1, 1], [], []>} : vector<1x128xbf16>, vector<128x384xbf16>, vector<1x384xf32> -> vector<1x384xf32>
    %391 = vector.extract_strided_slice %389 {offsets = [0, 0], sizes = [1, 256], strides = [1, 1]} : vector<1x384xf32> to vector<1x256xf32>
    %392 = vector.extract_strided_slice %390 {offsets = [0, 0], sizes = [1, 256], strides = [1, 1]} : vector<1x384xf32> to vector<1x256xf32>
    %393 = arith.addf %391, %392 : vector<1x256xf32>
    %cst_93 = arith.constant 5.000000e-01 : f32
    %394 = vector.broadcast %cst_93 : f32 to vector<1x256xf32>
    %395 = arith.mulf %394, %393 : vector<1x256xf32>
    %396 = math.tanh %395 : vector<1x256xf32>
    %cst_94 = arith.constant 5.000000e-01 : f32
    %397 = vector.broadcast %cst_94 : f32 to vector<1x256xf32>
    %398 = arith.mulf %397, %396 : vector<1x256xf32>
    %cst_95 = arith.constant 5.000000e-01 : f32
    %399 = vector.broadcast %cst_95 : f32 to vector<1x256xf32>
    %400 = arith.addf %398, %399 : vector<1x256xf32>
    %401 = vector.extract_strided_slice %400 {offsets = [0, 0], sizes = [1, 128], strides = [1, 1]} : vector<1x256xf32> to vector<1x128xf32>
    %402 = vector.extract_strided_slice %400 {offsets = [0, 128], sizes = [1, 128], strides = [1, 1]} : vector<1x256xf32> to vector<1x128xf32>
    %403 = vector.extract_strided_slice %389 {offsets = [0, 256], sizes = [1, 128], strides = [1, 1]} : vector<1x384xf32> to vector<1x128xf32>
    %404 = vector.extract_strided_slice %390 {offsets = [0, 256], sizes = [1, 128], strides = [1, 1]} : vector<1x384xf32> to vector<1x128xf32>
    %405 = arith.addf %404, %207 : vector<1x128xf32>
    %406 = arith.mulf %401, %405 : vector<1x128xf32>
    %407 = arith.addf %403, %406 : vector<1x128xf32>
    %408 = math.tanh %407 : vector<1x128xf32>
    %409 = arith.subf %386, %408 : vector<1x128xf32>
    %410 = arith.mulf %402, %409 : vector<1x128xf32>
    %411 = arith.addf %408, %410 : vector<1x128xf32>
    %412 = arith.truncf %411 : vector<1x128xf32> to vector<1x128xbf16>
    %c2 = arith.constant 2 : index
    %c0_96 = arith.constant 0 : index
    %c0_97 = arith.constant 0 : index
    %413 = vector.load %arg2[%c2, %c0_96, %c0_97] : memref<4x128x384xbf16, #tpu.memory_space<vmem>>, vector<1x128x384xbf16>
    %414 = vector.shape_cast %413 : vector<1x128x384xbf16> to vector<128x384xbf16>
    %c2_98 = arith.constant 2 : index
    %c0_99 = arith.constant 0 : index
    %415 = vector.load %arg4[%c2_98, %c0_99] : memref<4x128xf32, #tpu.memory_space<vmem>>, vector<1x128xf32>
    %c2_100 = arith.constant 2 : index
    %c0_101 = arith.constant 0 : index
    %c0_102 = arith.constant 0 : index
    %416 = vector.load %arg1[%c2_100, %c0_101, %c0_102] : memref<4x128x384xbf16, #tpu.memory_space<vmem>>, vector<1x128x384xbf16>
    %417 = vector.shape_cast %416 : vector<1x128x384xbf16> to vector<128x384xbf16>
    %c2_103 = arith.constant 2 : index
    %c0_104 = arith.constant 0 : index
    %418 = vector.load %arg3[%c2_103, %c0_104] : memref<4x384xf32, #tpu.memory_space<vmem>>, vector<1x384xf32>
    %cst_105 = arith.constant 0.000000e+00 : f32
    %419 = vector.broadcast %cst_105 : f32 to vector<1x128xf32>
    %cst_106 = arith.constant 0.000000e+00 : bf16
    %420 = vector.broadcast %cst_106 : bf16 to vector<1x128xbf16>
    %cst_107 = arith.constant dense<0.000000e+00> : vector<1x384xf32>
    %421 = tpu.matmul %237, %417, %cst_107 {dimension_numbers = #tpu.dot_dimension_numbers<[1], [0], [0], [1], [0, 0, 1, 1], [], []>} : vector<1x128xbf16>, vector<128x384xbf16>, vector<1x384xf32> -> vector<1x384xf32>
    %422 = arith.addf %421, %418 : vector<1x384xf32>
    %cst_108 = arith.constant dense<0.000000e+00> : vector<1x384xf32>
    %423 = tpu.matmul %420, %414, %cst_108 {dimension_numbers = #tpu.dot_dimension_numbers<[1], [0], [0], [1], [0, 0, 1, 1], [], []>} : vector<1x128xbf16>, vector<128x384xbf16>, vector<1x384xf32> -> vector<1x384xf32>
    %424 = vector.extract_strided_slice %422 {offsets = [0, 0], sizes = [1, 256], strides = [1, 1]} : vector<1x384xf32> to vector<1x256xf32>
    %425 = vector.extract_strided_slice %423 {offsets = [0, 0], sizes = [1, 256], strides = [1, 1]} : vector<1x384xf32> to vector<1x256xf32>
    %426 = arith.addf %424, %425 : vector<1x256xf32>
    %cst_109 = arith.constant 5.000000e-01 : f32
    %427 = vector.broadcast %cst_109 : f32 to vector<1x256xf32>
    %428 = arith.mulf %427, %426 : vector<1x256xf32>
    %429 = math.tanh %428 : vector<1x256xf32>
    %cst_110 = arith.constant 5.000000e-01 : f32
    %430 = vector.broadcast %cst_110 : f32 to vector<1x256xf32>
    %431 = arith.mulf %430, %429 : vector<1x256xf32>
    %cst_111 = arith.constant 5.000000e-01 : f32
    %432 = vector.broadcast %cst_111 : f32 to vector<1x256xf32>
    %433 = arith.addf %431, %432 : vector<1x256xf32>
    %434 = vector.extract_strided_slice %433 {offsets = [0, 0], sizes = [1, 128], strides = [1, 1]} : vector<1x256xf32> to vector<1x128xf32>
    %435 = vector.extract_strided_slice %433 {offsets = [0, 128], sizes = [1, 128], strides = [1, 1]} : vector<1x256xf32> to vector<1x128xf32>
    %436 = vector.extract_strided_slice %422 {offsets = [0, 256], sizes = [1, 128], strides = [1, 1]} : vector<1x384xf32> to vector<1x128xf32>
    %437 = vector.extract_strided_slice %423 {offsets = [0, 256], sizes = [1, 128], strides = [1, 1]} : vector<1x384xf32> to vector<1x128xf32>
    %438 = arith.addf %437, %415 : vector<1x128xf32>
    %439 = arith.mulf %434, %438 : vector<1x128xf32>
    %440 = arith.addf %436, %439 : vector<1x128xf32>
    %441 = math.tanh %440 : vector<1x128xf32>
    %442 = arith.subf %419, %441 : vector<1x128xf32>
    %443 = arith.mulf %435, %442 : vector<1x128xf32>
    %444 = arith.addf %441, %443 : vector<1x128xf32>
    %445 = arith.truncf %444 : vector<1x128xf32> to vector<1x128xbf16>
    %cst_112 = arith.constant dense<0.000000e+00> : vector<1x384xf32>
    %446 = tpu.matmul %262, %417, %cst_112 {dimension_numbers = #tpu.dot_dimension_numbers<[1], [0], [0], [1], [0, 0, 1, 1], [], []>} : vector<1x128xbf16>, vector<128x384xbf16>, vector<1x384xf32> -> vector<1x384xf32>
    %447 = arith.addf %446, %418 : vector<1x384xf32>
    %cst_113 = arith.constant dense<0.000000e+00> : vector<1x384xf32>
    %448 = tpu.matmul %445, %414, %cst_113 {dimension_numbers = #tpu.dot_dimension_numbers<[1], [0], [0], [1], [0, 0, 1, 1], [], []>} : vector<1x128xbf16>, vector<128x384xbf16>, vector<1x384xf32> -> vector<1x384xf32>
    %449 = vector.extract_strided_slice %447 {offsets = [0, 0], sizes = [1, 256], strides = [1, 1]} : vector<1x384xf32> to vector<1x256xf32>
    %450 = vector.extract_strided_slice %448 {offsets = [0, 0], sizes = [1, 256], strides = [1, 1]} : vector<1x384xf32> to vector<1x256xf32>
    %451 = arith.addf %449, %450 : vector<1x256xf32>
    %cst_114 = arith.constant 5.000000e-01 : f32
    %452 = vector.broadcast %cst_114 : f32 to vector<1x256xf32>
    %453 = arith.mulf %452, %451 : vector<1x256xf32>
    %454 = math.tanh %453 : vector<1x256xf32>
    %cst_115 = arith.constant 5.000000e-01 : f32
    %455 = vector.broadcast %cst_115 : f32 to vector<1x256xf32>
    %456 = arith.mulf %455, %454 : vector<1x256xf32>
    %cst_116 = arith.constant 5.000000e-01 : f32
    %457 = vector.broadcast %cst_116 : f32 to vector<1x256xf32>
    %458 = arith.addf %456, %457 : vector<1x256xf32>
    %459 = vector.extract_strided_slice %458 {offsets = [0, 0], sizes = [1, 128], strides = [1, 1]} : vector<1x256xf32> to vector<1x128xf32>
    %460 = vector.extract_strided_slice %458 {offsets = [0, 128], sizes = [1, 128], strides = [1, 1]} : vector<1x256xf32> to vector<1x128xf32>
    %461 = vector.extract_strided_slice %447 {offsets = [0, 256], sizes = [1, 128], strides = [1, 1]} : vector<1x384xf32> to vector<1x128xf32>
    %462 = vector.extract_strided_slice %448 {offsets = [0, 256], sizes = [1, 128], strides = [1, 1]} : vector<1x384xf32> to vector<1x128xf32>
    %463 = arith.addf %462, %415 : vector<1x128xf32>
    %464 = arith.mulf %459, %463 : vector<1x128xf32>
    %465 = arith.addf %461, %464 : vector<1x128xf32>
    %466 = math.tanh %465 : vector<1x128xf32>
    %467 = arith.subf %444, %466 : vector<1x128xf32>
    %468 = arith.mulf %460, %467 : vector<1x128xf32>
    %469 = arith.addf %466, %468 : vector<1x128xf32>
    %470 = arith.truncf %469 : vector<1x128xf32> to vector<1x128xbf16>
    %cst_117 = arith.constant dense<0.000000e+00> : vector<1x384xf32>
    %471 = tpu.matmul %287, %417, %cst_117 {dimension_numbers = #tpu.dot_dimension_numbers<[1], [0], [0], [1], [0, 0, 1, 1], [], []>} : vector<1x128xbf16>, vector<128x384xbf16>, vector<1x384xf32> -> vector<1x384xf32>
    %472 = arith.addf %471, %418 : vector<1x384xf32>
    %cst_118 = arith.constant dense<0.000000e+00> : vector<1x384xf32>
    %473 = tpu.matmul %470, %414, %cst_118 {dimension_numbers = #tpu.dot_dimension_numbers<[1], [0], [0], [1], [0, 0, 1, 1], [], []>} : vector<1x128xbf16>, vector<128x384xbf16>, vector<1x384xf32> -> vector<1x384xf32>
    %474 = vector.extract_strided_slice %472 {offsets = [0, 0], sizes = [1, 256], strides = [1, 1]} : vector<1x384xf32> to vector<1x256xf32>
    %475 = vector.extract_strided_slice %473 {offsets = [0, 0], sizes = [1, 256], strides = [1, 1]} : vector<1x384xf32> to vector<1x256xf32>
    %476 = arith.addf %474, %475 : vector<1x256xf32>
    %cst_119 = arith.constant 5.000000e-01 : f32
    %477 = vector.broadcast %cst_119 : f32 to vector<1x256xf32>
    %478 = arith.mulf %477, %476 : vector<1x256xf32>
    %479 = math.tanh %478 : vector<1x256xf32>
    %cst_120 = arith.constant 5.000000e-01 : f32
    %480 = vector.broadcast %cst_120 : f32 to vector<1x256xf32>
    %481 = arith.mulf %480, %479 : vector<1x256xf32>
    %cst_121 = arith.constant 5.000000e-01 : f32
    %482 = vector.broadcast %cst_121 : f32 to vector<1x256xf32>
    %483 = arith.addf %481, %482 : vector<1x256xf32>
    %484 = vector.extract_strided_slice %483 {offsets = [0, 0], sizes = [1, 128], strides = [1, 1]} : vector<1x256xf32> to vector<1x128xf32>
    %485 = vector.extract_strided_slice %483 {offsets = [0, 128], sizes = [1, 128], strides = [1, 1]} : vector<1x256xf32> to vector<1x128xf32>
    %486 = vector.extract_strided_slice %472 {offsets = [0, 256], sizes = [1, 128], strides = [1, 1]} : vector<1x384xf32> to vector<1x128xf32>
    %487 = vector.extract_strided_slice %473 {offsets = [0, 256], sizes = [1, 128], strides = [1, 1]} : vector<1x384xf32> to vector<1x128xf32>
    %488 = arith.addf %487, %415 : vector<1x128xf32>
    %489 = arith.mulf %484, %488 : vector<1x128xf32>
    %490 = arith.addf %486, %489 : vector<1x128xf32>
    %491 = math.tanh %490 : vector<1x128xf32>
    %492 = arith.subf %469, %491 : vector<1x128xf32>
    %493 = arith.mulf %485, %492 : vector<1x128xf32>
    %494 = arith.addf %491, %493 : vector<1x128xf32>
    %495 = arith.truncf %494 : vector<1x128xf32> to vector<1x128xbf16>
    %cst_122 = arith.constant dense<0.000000e+00> : vector<1x384xf32>
    %496 = tpu.matmul %312, %417, %cst_122 {dimension_numbers = #tpu.dot_dimension_numbers<[1], [0], [0], [1], [0, 0, 1, 1], [], []>} : vector<1x128xbf16>, vector<128x384xbf16>, vector<1x384xf32> -> vector<1x384xf32>
    %497 = arith.addf %496, %418 : vector<1x384xf32>
    %cst_123 = arith.constant dense<0.000000e+00> : vector<1x384xf32>
    %498 = tpu.matmul %495, %414, %cst_123 {dimension_numbers = #tpu.dot_dimension_numbers<[1], [0], [0], [1], [0, 0, 1, 1], [], []>} : vector<1x128xbf16>, vector<128x384xbf16>, vector<1x384xf32> -> vector<1x384xf32>
    %499 = vector.extract_strided_slice %497 {offsets = [0, 0], sizes = [1, 256], strides = [1, 1]} : vector<1x384xf32> to vector<1x256xf32>
    %500 = vector.extract_strided_slice %498 {offsets = [0, 0], sizes = [1, 256], strides = [1, 1]} : vector<1x384xf32> to vector<1x256xf32>
    %501 = arith.addf %499, %500 : vector<1x256xf32>
    %cst_124 = arith.constant 5.000000e-01 : f32
    %502 = vector.broadcast %cst_124 : f32 to vector<1x256xf32>
    %503 = arith.mulf %502, %501 : vector<1x256xf32>
    %504 = math.tanh %503 : vector<1x256xf32>
    %cst_125 = arith.constant 5.000000e-01 : f32
    %505 = vector.broadcast %cst_125 : f32 to vector<1x256xf32>
    %506 = arith.mulf %505, %504 : vector<1x256xf32>
    %cst_126 = arith.constant 5.000000e-01 : f32
    %507 = vector.broadcast %cst_126 : f32 to vector<1x256xf32>
    %508 = arith.addf %506, %507 : vector<1x256xf32>
    %509 = vector.extract_strided_slice %508 {offsets = [0, 0], sizes = [1, 128], strides = [1, 1]} : vector<1x256xf32> to vector<1x128xf32>
    %510 = vector.extract_strided_slice %508 {offsets = [0, 128], sizes = [1, 128], strides = [1, 1]} : vector<1x256xf32> to vector<1x128xf32>
    %511 = vector.extract_strided_slice %497 {offsets = [0, 256], sizes = [1, 128], strides = [1, 1]} : vector<1x384xf32> to vector<1x128xf32>
    %512 = vector.extract_strided_slice %498 {offsets = [0, 256], sizes = [1, 128], strides = [1, 1]} : vector<1x384xf32> to vector<1x128xf32>
    %513 = arith.addf %512, %415 : vector<1x128xf32>
    %514 = arith.mulf %509, %513 : vector<1x128xf32>
    %515 = arith.addf %511, %514 : vector<1x128xf32>
    %516 = math.tanh %515 : vector<1x128xf32>
    %517 = arith.subf %494, %516 : vector<1x128xf32>
    %518 = arith.mulf %510, %517 : vector<1x128xf32>
    %519 = arith.addf %516, %518 : vector<1x128xf32>
    %520 = arith.truncf %519 : vector<1x128xf32> to vector<1x128xbf16>
    %cst_127 = arith.constant dense<0.000000e+00> : vector<1x384xf32>
    %521 = tpu.matmul %337, %417, %cst_127 {dimension_numbers = #tpu.dot_dimension_numbers<[1], [0], [0], [1], [0, 0, 1, 1], [], []>} : vector<1x128xbf16>, vector<128x384xbf16>, vector<1x384xf32> -> vector<1x384xf32>
    %522 = arith.addf %521, %418 : vector<1x384xf32>
    %cst_128 = arith.constant dense<0.000000e+00> : vector<1x384xf32>
    %523 = tpu.matmul %520, %414, %cst_128 {dimension_numbers = #tpu.dot_dimension_numbers<[1], [0], [0], [1], [0, 0, 1, 1], [], []>} : vector<1x128xbf16>, vector<128x384xbf16>, vector<1x384xf32> -> vector<1x384xf32>
    %524 = vector.extract_strided_slice %522 {offsets = [0, 0], sizes = [1, 256], strides = [1, 1]} : vector<1x384xf32> to vector<1x256xf32>
    %525 = vector.extract_strided_slice %523 {offsets = [0, 0], sizes = [1, 256], strides = [1, 1]} : vector<1x384xf32> to vector<1x256xf32>
    %526 = arith.addf %524, %525 : vector<1x256xf32>
    %cst_129 = arith.constant 5.000000e-01 : f32
    %527 = vector.broadcast %cst_129 : f32 to vector<1x256xf32>
    %528 = arith.mulf %527, %526 : vector<1x256xf32>
    %529 = math.tanh %528 : vector<1x256xf32>
    %cst_130 = arith.constant 5.000000e-01 : f32
    %530 = vector.broadcast %cst_130 : f32 to vector<1x256xf32>
    %531 = arith.mulf %530, %529 : vector<1x256xf32>
    %cst_131 = arith.constant 5.000000e-01 : f32
    %532 = vector.broadcast %cst_131 : f32 to vector<1x256xf32>
    %533 = arith.addf %531, %532 : vector<1x256xf32>
    %534 = vector.extract_strided_slice %533 {offsets = [0, 0], sizes = [1, 128], strides = [1, 1]} : vector<1x256xf32> to vector<1x128xf32>
    %535 = vector.extract_strided_slice %533 {offsets = [0, 128], sizes = [1, 128], strides = [1, 1]} : vector<1x256xf32> to vector<1x128xf32>
    %536 = vector.extract_strided_slice %522 {offsets = [0, 256], sizes = [1, 128], strides = [1, 1]} : vector<1x384xf32> to vector<1x128xf32>
    %537 = vector.extract_strided_slice %523 {offsets = [0, 256], sizes = [1, 128], strides = [1, 1]} : vector<1x384xf32> to vector<1x128xf32>
    %538 = arith.addf %537, %415 : vector<1x128xf32>
    %539 = arith.mulf %534, %538 : vector<1x128xf32>
    %540 = arith.addf %536, %539 : vector<1x128xf32>
    %541 = math.tanh %540 : vector<1x128xf32>
    %542 = arith.subf %519, %541 : vector<1x128xf32>
    %543 = arith.mulf %535, %542 : vector<1x128xf32>
    %544 = arith.addf %541, %543 : vector<1x128xf32>
    %545 = arith.truncf %544 : vector<1x128xf32> to vector<1x128xbf16>
    %cst_132 = arith.constant dense<0.000000e+00> : vector<1x384xf32>
    %546 = tpu.matmul %362, %417, %cst_132 {dimension_numbers = #tpu.dot_dimension_numbers<[1], [0], [0], [1], [0, 0, 1, 1], [], []>} : vector<1x128xbf16>, vector<128x384xbf16>, vector<1x384xf32> -> vector<1x384xf32>
    %547 = arith.addf %546, %418 : vector<1x384xf32>
    %cst_133 = arith.constant dense<0.000000e+00> : vector<1x384xf32>
    %548 = tpu.matmul %545, %414, %cst_133 {dimension_numbers = #tpu.dot_dimension_numbers<[1], [0], [0], [1], [0, 0, 1, 1], [], []>} : vector<1x128xbf16>, vector<128x384xbf16>, vector<1x384xf32> -> vector<1x384xf32>
    %549 = vector.extract_strided_slice %547 {offsets = [0, 0], sizes = [1, 256], strides = [1, 1]} : vector<1x384xf32> to vector<1x256xf32>
    %550 = vector.extract_strided_slice %548 {offsets = [0, 0], sizes = [1, 256], strides = [1, 1]} : vector<1x384xf32> to vector<1x256xf32>
    %551 = arith.addf %549, %550 : vector<1x256xf32>
    %cst_134 = arith.constant 5.000000e-01 : f32
    %552 = vector.broadcast %cst_134 : f32 to vector<1x256xf32>
    %553 = arith.mulf %552, %551 : vector<1x256xf32>
    %554 = math.tanh %553 : vector<1x256xf32>
    %cst_135 = arith.constant 5.000000e-01 : f32
    %555 = vector.broadcast %cst_135 : f32 to vector<1x256xf32>
    %556 = arith.mulf %555, %554 : vector<1x256xf32>
    %cst_136 = arith.constant 5.000000e-01 : f32
    %557 = vector.broadcast %cst_136 : f32 to vector<1x256xf32>
    %558 = arith.addf %556, %557 : vector<1x256xf32>
    %559 = vector.extract_strided_slice %558 {offsets = [0, 0], sizes = [1, 128], strides = [1, 1]} : vector<1x256xf32> to vector<1x128xf32>
    %560 = vector.extract_strided_slice %558 {offsets = [0, 128], sizes = [1, 128], strides = [1, 1]} : vector<1x256xf32> to vector<1x128xf32>
    %561 = vector.extract_strided_slice %547 {offsets = [0, 256], sizes = [1, 128], strides = [1, 1]} : vector<1x384xf32> to vector<1x128xf32>
    %562 = vector.extract_strided_slice %548 {offsets = [0, 256], sizes = [1, 128], strides = [1, 1]} : vector<1x384xf32> to vector<1x128xf32>
    %563 = arith.addf %562, %415 : vector<1x128xf32>
    %564 = arith.mulf %559, %563 : vector<1x128xf32>
    %565 = arith.addf %561, %564 : vector<1x128xf32>
    %566 = math.tanh %565 : vector<1x128xf32>
    %567 = arith.subf %544, %566 : vector<1x128xf32>
    %568 = arith.mulf %560, %567 : vector<1x128xf32>
    %569 = arith.addf %566, %568 : vector<1x128xf32>
    %570 = arith.truncf %569 : vector<1x128xf32> to vector<1x128xbf16>
    %cst_137 = arith.constant dense<0.000000e+00> : vector<1x384xf32>
    %571 = tpu.matmul %387, %417, %cst_137 {dimension_numbers = #tpu.dot_dimension_numbers<[1], [0], [0], [1], [0, 0, 1, 1], [], []>} : vector<1x128xbf16>, vector<128x384xbf16>, vector<1x384xf32> -> vector<1x384xf32>
    %572 = arith.addf %571, %418 : vector<1x384xf32>
    %cst_138 = arith.constant dense<0.000000e+00> : vector<1x384xf32>
    %573 = tpu.matmul %570, %414, %cst_138 {dimension_numbers = #tpu.dot_dimension_numbers<[1], [0], [0], [1], [0, 0, 1, 1], [], []>} : vector<1x128xbf16>, vector<128x384xbf16>, vector<1x384xf32> -> vector<1x384xf32>
    %574 = vector.extract_strided_slice %572 {offsets = [0, 0], sizes = [1, 256], strides = [1, 1]} : vector<1x384xf32> to vector<1x256xf32>
    %575 = vector.extract_strided_slice %573 {offsets = [0, 0], sizes = [1, 256], strides = [1, 1]} : vector<1x384xf32> to vector<1x256xf32>
    %576 = arith.addf %574, %575 : vector<1x256xf32>
    %cst_139 = arith.constant 5.000000e-01 : f32
    %577 = vector.broadcast %cst_139 : f32 to vector<1x256xf32>
    %578 = arith.mulf %577, %576 : vector<1x256xf32>
    %579 = math.tanh %578 : vector<1x256xf32>
    %cst_140 = arith.constant 5.000000e-01 : f32
    %580 = vector.broadcast %cst_140 : f32 to vector<1x256xf32>
    %581 = arith.mulf %580, %579 : vector<1x256xf32>
    %cst_141 = arith.constant 5.000000e-01 : f32
    %582 = vector.broadcast %cst_141 : f32 to vector<1x256xf32>
    %583 = arith.addf %581, %582 : vector<1x256xf32>
    %584 = vector.extract_strided_slice %583 {offsets = [0, 0], sizes = [1, 128], strides = [1, 1]} : vector<1x256xf32> to vector<1x128xf32>
    %585 = vector.extract_strided_slice %583 {offsets = [0, 128], sizes = [1, 128], strides = [1, 1]} : vector<1x256xf32> to vector<1x128xf32>
    %586 = vector.extract_strided_slice %572 {offsets = [0, 256], sizes = [1, 128], strides = [1, 1]} : vector<1x384xf32> to vector<1x128xf32>
    %587 = vector.extract_strided_slice %573 {offsets = [0, 256], sizes = [1, 128], strides = [1, 1]} : vector<1x384xf32> to vector<1x128xf32>
    %588 = arith.addf %587, %415 : vector<1x128xf32>
    %589 = arith.mulf %584, %588 : vector<1x128xf32>
    %590 = arith.addf %586, %589 : vector<1x128xf32>
    %591 = math.tanh %590 : vector<1x128xf32>
    %592 = arith.subf %569, %591 : vector<1x128xf32>
    %593 = arith.mulf %585, %592 : vector<1x128xf32>
    %594 = arith.addf %591, %593 : vector<1x128xf32>
    %595 = arith.truncf %594 : vector<1x128xf32> to vector<1x128xbf16>
    %cst_142 = arith.constant dense<0.000000e+00> : vector<1x384xf32>
    %596 = tpu.matmul %412, %417, %cst_142 {dimension_numbers = #tpu.dot_dimension_numbers<[1], [0], [0], [1], [0, 0, 1, 1], [], []>} : vector<1x128xbf16>, vector<128x384xbf16>, vector<1x384xf32> -> vector<1x384xf32>
    %597 = arith.addf %596, %418 : vector<1x384xf32>
    %cst_143 = arith.constant dense<0.000000e+00> : vector<1x384xf32>
    %598 = tpu.matmul %595, %414, %cst_143 {dimension_numbers = #tpu.dot_dimension_numbers<[1], [0], [0], [1], [0, 0, 1, 1], [], []>} : vector<1x128xbf16>, vector<128x384xbf16>, vector<1x384xf32> -> vector<1x384xf32>
    %599 = vector.extract_strided_slice %597 {offsets = [0, 0], sizes = [1, 256], strides = [1, 1]} : vector<1x384xf32> to vector<1x256xf32>
    %600 = vector.extract_strided_slice %598 {offsets = [0, 0], sizes = [1, 256], strides = [1, 1]} : vector<1x384xf32> to vector<1x256xf32>
    %601 = arith.addf %599, %600 : vector<1x256xf32>
    %cst_144 = arith.constant 5.000000e-01 : f32
    %602 = vector.broadcast %cst_144 : f32 to vector<1x256xf32>
    %603 = arith.mulf %602, %601 : vector<1x256xf32>
    %604 = math.tanh %603 : vector<1x256xf32>
    %cst_145 = arith.constant 5.000000e-01 : f32
    %605 = vector.broadcast %cst_145 : f32 to vector<1x256xf32>
    %606 = arith.mulf %605, %604 : vector<1x256xf32>
    %cst_146 = arith.constant 5.000000e-01 : f32
    %607 = vector.broadcast %cst_146 : f32 to vector<1x256xf32>
    %608 = arith.addf %606, %607 : vector<1x256xf32>
    %609 = vector.extract_strided_slice %608 {offsets = [0, 0], sizes = [1, 128], strides = [1, 1]} : vector<1x256xf32> to vector<1x128xf32>
    %610 = vector.extract_strided_slice %608 {offsets = [0, 128], sizes = [1, 128], strides = [1, 1]} : vector<1x256xf32> to vector<1x128xf32>
    %611 = vector.extract_strided_slice %597 {offsets = [0, 256], sizes = [1, 128], strides = [1, 1]} : vector<1x384xf32> to vector<1x128xf32>
    %612 = vector.extract_strided_slice %598 {offsets = [0, 256], sizes = [1, 128], strides = [1, 1]} : vector<1x384xf32> to vector<1x128xf32>
    %613 = arith.addf %612, %415 : vector<1x128xf32>
    %614 = arith.mulf %609, %613 : vector<1x128xf32>
    %615 = arith.addf %611, %614 : vector<1x128xf32>
    %616 = math.tanh %615 : vector<1x128xf32>
    %617 = arith.subf %594, %616 : vector<1x128xf32>
    %618 = arith.mulf %610, %617 : vector<1x128xf32>
    %619 = arith.addf %616, %618 : vector<1x128xf32>
    %620 = arith.truncf %619 : vector<1x128xf32> to vector<1x128xbf16>
    %c3 = arith.constant 3 : index
    %c0_147 = arith.constant 0 : index
    %c0_148 = arith.constant 0 : index
    %621 = vector.load %arg2[%c3, %c0_147, %c0_148] : memref<4x128x384xbf16, #tpu.memory_space<vmem>>, vector<1x128x384xbf16>
    %622 = vector.shape_cast %621 : vector<1x128x384xbf16> to vector<128x384xbf16>
    %c3_149 = arith.constant 3 : index
    %c0_150 = arith.constant 0 : index
    %623 = vector.load %arg4[%c3_149, %c0_150] : memref<4x128xf32, #tpu.memory_space<vmem>>, vector<1x128xf32>
    %c3_151 = arith.constant 3 : index
    %c0_152 = arith.constant 0 : index
    %c0_153 = arith.constant 0 : index
    %624 = vector.load %arg1[%c3_151, %c0_152, %c0_153] : memref<4x128x384xbf16, #tpu.memory_space<vmem>>, vector<1x128x384xbf16>
    %625 = vector.shape_cast %624 : vector<1x128x384xbf16> to vector<128x384xbf16>
    %c3_154 = arith.constant 3 : index
    %c0_155 = arith.constant 0 : index
    %626 = vector.load %arg3[%c3_154, %c0_155] : memref<4x384xf32, #tpu.memory_space<vmem>>, vector<1x384xf32>
    %cst_156 = arith.constant 0.000000e+00 : f32
    %627 = vector.broadcast %cst_156 : f32 to vector<1x128xf32>
    %cst_157 = arith.constant 0.000000e+00 : bf16
    %628 = vector.broadcast %cst_157 : bf16 to vector<1x128xbf16>
    %cst_158 = arith.constant dense<0.000000e+00> : vector<1x384xf32>
    %629 = tpu.matmul %445, %625, %cst_158 {dimension_numbers = #tpu.dot_dimension_numbers<[1], [0], [0], [1], [0, 0, 1, 1], [], []>} : vector<1x128xbf16>, vector<128x384xbf16>, vector<1x384xf32> -> vector<1x384xf32>
    %630 = arith.addf %629, %626 : vector<1x384xf32>
    %cst_159 = arith.constant dense<0.000000e+00> : vector<1x384xf32>
    %631 = tpu.matmul %628, %622, %cst_159 {dimension_numbers = #tpu.dot_dimension_numbers<[1], [0], [0], [1], [0, 0, 1, 1], [], []>} : vector<1x128xbf16>, vector<128x384xbf16>, vector<1x384xf32> -> vector<1x384xf32>
    %632 = vector.extract_strided_slice %630 {offsets = [0, 0], sizes = [1, 256], strides = [1, 1]} : vector<1x384xf32> to vector<1x256xf32>
    %633 = vector.extract_strided_slice %631 {offsets = [0, 0], sizes = [1, 256], strides = [1, 1]} : vector<1x384xf32> to vector<1x256xf32>
    %634 = arith.addf %632, %633 : vector<1x256xf32>
    %cst_160 = arith.constant 5.000000e-01 : f32
    %635 = vector.broadcast %cst_160 : f32 to vector<1x256xf32>
    %636 = arith.mulf %635, %634 : vector<1x256xf32>
    %637 = math.tanh %636 : vector<1x256xf32>
    %cst_161 = arith.constant 5.000000e-01 : f32
    %638 = vector.broadcast %cst_161 : f32 to vector<1x256xf32>
    %639 = arith.mulf %638, %637 : vector<1x256xf32>
    %cst_162 = arith.constant 5.000000e-01 : f32
    %640 = vector.broadcast %cst_162 : f32 to vector<1x256xf32>
    %641 = arith.addf %639, %640 : vector<1x256xf32>
    %642 = vector.extract_strided_slice %641 {offsets = [0, 0], sizes = [1, 128], strides = [1, 1]} : vector<1x256xf32> to vector<1x128xf32>
    %643 = vector.extract_strided_slice %641 {offsets = [0, 128], sizes = [1, 128], strides = [1, 1]} : vector<1x256xf32> to vector<1x128xf32>
    %644 = vector.extract_strided_slice %630 {offsets = [0, 256], sizes = [1, 128], strides = [1, 1]} : vector<1x384xf32> to vector<1x128xf32>
    %645 = vector.extract_strided_slice %631 {offsets = [0, 256], sizes = [1, 128], strides = [1, 1]} : vector<1x384xf32> to vector<1x128xf32>
    %646 = arith.addf %645, %623 : vector<1x128xf32>
    %647 = arith.mulf %642, %646 : vector<1x128xf32>
    %648 = arith.addf %644, %647 : vector<1x128xf32>
    %649 = math.tanh %648 : vector<1x128xf32>
    %650 = arith.subf %627, %649 : vector<1x128xf32>
    %651 = arith.mulf %643, %650 : vector<1x128xf32>
    %652 = arith.addf %649, %651 : vector<1x128xf32>
    %653 = arith.truncf %652 : vector<1x128xf32> to vector<1x128xbf16>
    %cst_163 = arith.constant dense<0.000000e+00> : vector<1x384xf32>
    %654 = tpu.matmul %470, %625, %cst_163 {dimension_numbers = #tpu.dot_dimension_numbers<[1], [0], [0], [1], [0, 0, 1, 1], [], []>} : vector<1x128xbf16>, vector<128x384xbf16>, vector<1x384xf32> -> vector<1x384xf32>
    %655 = arith.addf %654, %626 : vector<1x384xf32>
    %cst_164 = arith.constant dense<0.000000e+00> : vector<1x384xf32>
    %656 = tpu.matmul %653, %622, %cst_164 {dimension_numbers = #tpu.dot_dimension_numbers<[1], [0], [0], [1], [0, 0, 1, 1], [], []>} : vector<1x128xbf16>, vector<128x384xbf16>, vector<1x384xf32> -> vector<1x384xf32>
    %657 = vector.extract_strided_slice %655 {offsets = [0, 0], sizes = [1, 256], strides = [1, 1]} : vector<1x384xf32> to vector<1x256xf32>
    %658 = vector.extract_strided_slice %656 {offsets = [0, 0], sizes = [1, 256], strides = [1, 1]} : vector<1x384xf32> to vector<1x256xf32>
    %659 = arith.addf %657, %658 : vector<1x256xf32>
    %cst_165 = arith.constant 5.000000e-01 : f32
    %660 = vector.broadcast %cst_165 : f32 to vector<1x256xf32>
    %661 = arith.mulf %660, %659 : vector<1x256xf32>
    %662 = math.tanh %661 : vector<1x256xf32>
    %cst_166 = arith.constant 5.000000e-01 : f32
    %663 = vector.broadcast %cst_166 : f32 to vector<1x256xf32>
    %664 = arith.mulf %663, %662 : vector<1x256xf32>
    %cst_167 = arith.constant 5.000000e-01 : f32
    %665 = vector.broadcast %cst_167 : f32 to vector<1x256xf32>
    %666 = arith.addf %664, %665 : vector<1x256xf32>
    %667 = vector.extract_strided_slice %666 {offsets = [0, 0], sizes = [1, 128], strides = [1, 1]} : vector<1x256xf32> to vector<1x128xf32>
    %668 = vector.extract_strided_slice %666 {offsets = [0, 128], sizes = [1, 128], strides = [1, 1]} : vector<1x256xf32> to vector<1x128xf32>
    %669 = vector.extract_strided_slice %655 {offsets = [0, 256], sizes = [1, 128], strides = [1, 1]} : vector<1x384xf32> to vector<1x128xf32>
    %670 = vector.extract_strided_slice %656 {offsets = [0, 256], sizes = [1, 128], strides = [1, 1]} : vector<1x384xf32> to vector<1x128xf32>
    %671 = arith.addf %670, %623 : vector<1x128xf32>
    %672 = arith.mulf %667, %671 : vector<1x128xf32>
    %673 = arith.addf %669, %672 : vector<1x128xf32>
    %674 = math.tanh %673 : vector<1x128xf32>
    %675 = arith.subf %652, %674 : vector<1x128xf32>
    %676 = arith.mulf %668, %675 : vector<1x128xf32>
    %677 = arith.addf %674, %676 : vector<1x128xf32>
    %678 = arith.truncf %677 : vector<1x128xf32> to vector<1x128xbf16>
    %cst_168 = arith.constant dense<0.000000e+00> : vector<1x384xf32>
    %679 = tpu.matmul %495, %625, %cst_168 {dimension_numbers = #tpu.dot_dimension_numbers<[1], [0], [0], [1], [0, 0, 1, 1], [], []>} : vector<1x128xbf16>, vector<128x384xbf16>, vector<1x384xf32> -> vector<1x384xf32>
    %680 = arith.addf %679, %626 : vector<1x384xf32>
    %cst_169 = arith.constant dense<0.000000e+00> : vector<1x384xf32>
    %681 = tpu.matmul %678, %622, %cst_169 {dimension_numbers = #tpu.dot_dimension_numbers<[1], [0], [0], [1], [0, 0, 1, 1], [], []>} : vector<1x128xbf16>, vector<128x384xbf16>, vector<1x384xf32> -> vector<1x384xf32>
    %682 = vector.extract_strided_slice %680 {offsets = [0, 0], sizes = [1, 256], strides = [1, 1]} : vector<1x384xf32> to vector<1x256xf32>
    %683 = vector.extract_strided_slice %681 {offsets = [0, 0], sizes = [1, 256], strides = [1, 1]} : vector<1x384xf32> to vector<1x256xf32>
    %684 = arith.addf %682, %683 : vector<1x256xf32>
    %cst_170 = arith.constant 5.000000e-01 : f32
    %685 = vector.broadcast %cst_170 : f32 to vector<1x256xf32>
    %686 = arith.mulf %685, %684 : vector<1x256xf32>
    %687 = math.tanh %686 : vector<1x256xf32>
    %cst_171 = arith.constant 5.000000e-01 : f32
    %688 = vector.broadcast %cst_171 : f32 to vector<1x256xf32>
    %689 = arith.mulf %688, %687 : vector<1x256xf32>
    %cst_172 = arith.constant 5.000000e-01 : f32
    %690 = vector.broadcast %cst_172 : f32 to vector<1x256xf32>
    %691 = arith.addf %689, %690 : vector<1x256xf32>
    %692 = vector.extract_strided_slice %691 {offsets = [0, 0], sizes = [1, 128], strides = [1, 1]} : vector<1x256xf32> to vector<1x128xf32>
    %693 = vector.extract_strided_slice %691 {offsets = [0, 128], sizes = [1, 128], strides = [1, 1]} : vector<1x256xf32> to vector<1x128xf32>
    %694 = vector.extract_strided_slice %680 {offsets = [0, 256], sizes = [1, 128], strides = [1, 1]} : vector<1x384xf32> to vector<1x128xf32>
    %695 = vector.extract_strided_slice %681 {offsets = [0, 256], sizes = [1, 128], strides = [1, 1]} : vector<1x384xf32> to vector<1x128xf32>
    %696 = arith.addf %695, %623 : vector<1x128xf32>
    %697 = arith.mulf %692, %696 : vector<1x128xf32>
    %698 = arith.addf %694, %697 : vector<1x128xf32>
    %699 = math.tanh %698 : vector<1x128xf32>
    %700 = arith.subf %677, %699 : vector<1x128xf32>
    %701 = arith.mulf %693, %700 : vector<1x128xf32>
    %702 = arith.addf %699, %701 : vector<1x128xf32>
    %703 = arith.truncf %702 : vector<1x128xf32> to vector<1x128xbf16>
    %cst_173 = arith.constant dense<0.000000e+00> : vector<1x384xf32>
    %704 = tpu.matmul %520, %625, %cst_173 {dimension_numbers = #tpu.dot_dimension_numbers<[1], [0], [0], [1], [0, 0, 1, 1], [], []>} : vector<1x128xbf16>, vector<128x384xbf16>, vector<1x384xf32> -> vector<1x384xf32>
    %705 = arith.addf %704, %626 : vector<1x384xf32>
    %cst_174 = arith.constant dense<0.000000e+00> : vector<1x384xf32>
    %706 = tpu.matmul %703, %622, %cst_174 {dimension_numbers = #tpu.dot_dimension_numbers<[1], [0], [0], [1], [0, 0, 1, 1], [], []>} : vector<1x128xbf16>, vector<128x384xbf16>, vector<1x384xf32> -> vector<1x384xf32>
    %707 = vector.extract_strided_slice %705 {offsets = [0, 0], sizes = [1, 256], strides = [1, 1]} : vector<1x384xf32> to vector<1x256xf32>
    %708 = vector.extract_strided_slice %706 {offsets = [0, 0], sizes = [1, 256], strides = [1, 1]} : vector<1x384xf32> to vector<1x256xf32>
    %709 = arith.addf %707, %708 : vector<1x256xf32>
    %cst_175 = arith.constant 5.000000e-01 : f32
    %710 = vector.broadcast %cst_175 : f32 to vector<1x256xf32>
    %711 = arith.mulf %710, %709 : vector<1x256xf32>
    %712 = math.tanh %711 : vector<1x256xf32>
    %cst_176 = arith.constant 5.000000e-01 : f32
    %713 = vector.broadcast %cst_176 : f32 to vector<1x256xf32>
    %714 = arith.mulf %713, %712 : vector<1x256xf32>
    %cst_177 = arith.constant 5.000000e-01 : f32
    %715 = vector.broadcast %cst_177 : f32 to vector<1x256xf32>
    %716 = arith.addf %714, %715 : vector<1x256xf32>
    %717 = vector.extract_strided_slice %716 {offsets = [0, 0], sizes = [1, 128], strides = [1, 1]} : vector<1x256xf32> to vector<1x128xf32>
    %718 = vector.extract_strided_slice %716 {offsets = [0, 128], sizes = [1, 128], strides = [1, 1]} : vector<1x256xf32> to vector<1x128xf32>
    %719 = vector.extract_strided_slice %705 {offsets = [0, 256], sizes = [1, 128], strides = [1, 1]} : vector<1x384xf32> to vector<1x128xf32>
    %720 = vector.extract_strided_slice %706 {offsets = [0, 256], sizes = [1, 128], strides = [1, 1]} : vector<1x384xf32> to vector<1x128xf32>
    %721 = arith.addf %720, %623 : vector<1x128xf32>
    %722 = arith.mulf %717, %721 : vector<1x128xf32>
    %723 = arith.addf %719, %722 : vector<1x128xf32>
    %724 = math.tanh %723 : vector<1x128xf32>
    %725 = arith.subf %702, %724 : vector<1x128xf32>
    %726 = arith.mulf %718, %725 : vector<1x128xf32>
    %727 = arith.addf %724, %726 : vector<1x128xf32>
    %728 = arith.truncf %727 : vector<1x128xf32> to vector<1x128xbf16>
    %cst_178 = arith.constant dense<0.000000e+00> : vector<1x384xf32>
    %729 = tpu.matmul %545, %625, %cst_178 {dimension_numbers = #tpu.dot_dimension_numbers<[1], [0], [0], [1], [0, 0, 1, 1], [], []>} : vector<1x128xbf16>, vector<128x384xbf16>, vector<1x384xf32> -> vector<1x384xf32>
    %730 = arith.addf %729, %626 : vector<1x384xf32>
    %cst_179 = arith.constant dense<0.000000e+00> : vector<1x384xf32>
    %731 = tpu.matmul %728, %622, %cst_179 {dimension_numbers = #tpu.dot_dimension_numbers<[1], [0], [0], [1], [0, 0, 1, 1], [], []>} : vector<1x128xbf16>, vector<128x384xbf16>, vector<1x384xf32> -> vector<1x384xf32>
    %732 = vector.extract_strided_slice %730 {offsets = [0, 0], sizes = [1, 256], strides = [1, 1]} : vector<1x384xf32> to vector<1x256xf32>
    %733 = vector.extract_strided_slice %731 {offsets = [0, 0], sizes = [1, 256], strides = [1, 1]} : vector<1x384xf32> to vector<1x256xf32>
    %734 = arith.addf %732, %733 : vector<1x256xf32>
    %cst_180 = arith.constant 5.000000e-01 : f32
    %735 = vector.broadcast %cst_180 : f32 to vector<1x256xf32>
    %736 = arith.mulf %735, %734 : vector<1x256xf32>
    %737 = math.tanh %736 : vector<1x256xf32>
    %cst_181 = arith.constant 5.000000e-01 : f32
    %738 = vector.broadcast %cst_181 : f32 to vector<1x256xf32>
    %739 = arith.mulf %738, %737 : vector<1x256xf32>
    %cst_182 = arith.constant 5.000000e-01 : f32
    %740 = vector.broadcast %cst_182 : f32 to vector<1x256xf32>
    %741 = arith.addf %739, %740 : vector<1x256xf32>
    %742 = vector.extract_strided_slice %741 {offsets = [0, 0], sizes = [1, 128], strides = [1, 1]} : vector<1x256xf32> to vector<1x128xf32>
    %743 = vector.extract_strided_slice %741 {offsets = [0, 128], sizes = [1, 128], strides = [1, 1]} : vector<1x256xf32> to vector<1x128xf32>
    %744 = vector.extract_strided_slice %730 {offsets = [0, 256], sizes = [1, 128], strides = [1, 1]} : vector<1x384xf32> to vector<1x128xf32>
    %745 = vector.extract_strided_slice %731 {offsets = [0, 256], sizes = [1, 128], strides = [1, 1]} : vector<1x384xf32> to vector<1x128xf32>
    %746 = arith.addf %745, %623 : vector<1x128xf32>
    %747 = arith.mulf %742, %746 : vector<1x128xf32>
    %748 = arith.addf %744, %747 : vector<1x128xf32>
    %749 = math.tanh %748 : vector<1x128xf32>
    %750 = arith.subf %727, %749 : vector<1x128xf32>
    %751 = arith.mulf %743, %750 : vector<1x128xf32>
    %752 = arith.addf %749, %751 : vector<1x128xf32>
    %753 = arith.truncf %752 : vector<1x128xf32> to vector<1x128xbf16>
    %cst_183 = arith.constant dense<0.000000e+00> : vector<1x384xf32>
    %754 = tpu.matmul %570, %625, %cst_183 {dimension_numbers = #tpu.dot_dimension_numbers<[1], [0], [0], [1], [0, 0, 1, 1], [], []>} : vector<1x128xbf16>, vector<128x384xbf16>, vector<1x384xf32> -> vector<1x384xf32>
    %755 = arith.addf %754, %626 : vector<1x384xf32>
    %cst_184 = arith.constant dense<0.000000e+00> : vector<1x384xf32>
    %756 = tpu.matmul %753, %622, %cst_184 {dimension_numbers = #tpu.dot_dimension_numbers<[1], [0], [0], [1], [0, 0, 1, 1], [], []>} : vector<1x128xbf16>, vector<128x384xbf16>, vector<1x384xf32> -> vector<1x384xf32>
    %757 = vector.extract_strided_slice %755 {offsets = [0, 0], sizes = [1, 256], strides = [1, 1]} : vector<1x384xf32> to vector<1x256xf32>
    %758 = vector.extract_strided_slice %756 {offsets = [0, 0], sizes = [1, 256], strides = [1, 1]} : vector<1x384xf32> to vector<1x256xf32>
    %759 = arith.addf %757, %758 : vector<1x256xf32>
    %cst_185 = arith.constant 5.000000e-01 : f32
    %760 = vector.broadcast %cst_185 : f32 to vector<1x256xf32>
    %761 = arith.mulf %760, %759 : vector<1x256xf32>
    %762 = math.tanh %761 : vector<1x256xf32>
    %cst_186 = arith.constant 5.000000e-01 : f32
    %763 = vector.broadcast %cst_186 : f32 to vector<1x256xf32>
    %764 = arith.mulf %763, %762 : vector<1x256xf32>
    %cst_187 = arith.constant 5.000000e-01 : f32
    %765 = vector.broadcast %cst_187 : f32 to vector<1x256xf32>
    %766 = arith.addf %764, %765 : vector<1x256xf32>
    %767 = vector.extract_strided_slice %766 {offsets = [0, 0], sizes = [1, 128], strides = [1, 1]} : vector<1x256xf32> to vector<1x128xf32>
    %768 = vector.extract_strided_slice %766 {offsets = [0, 128], sizes = [1, 128], strides = [1, 1]} : vector<1x256xf32> to vector<1x128xf32>
    %769 = vector.extract_strided_slice %755 {offsets = [0, 256], sizes = [1, 128], strides = [1, 1]} : vector<1x384xf32> to vector<1x128xf32>
    %770 = vector.extract_strided_slice %756 {offsets = [0, 256], sizes = [1, 128], strides = [1, 1]} : vector<1x384xf32> to vector<1x128xf32>
    %771 = arith.addf %770, %623 : vector<1x128xf32>
    %772 = arith.mulf %767, %771 : vector<1x128xf32>
    %773 = arith.addf %769, %772 : vector<1x128xf32>
    %774 = math.tanh %773 : vector<1x128xf32>
    %775 = arith.subf %752, %774 : vector<1x128xf32>
    %776 = arith.mulf %768, %775 : vector<1x128xf32>
    %777 = arith.addf %774, %776 : vector<1x128xf32>
    %778 = arith.truncf %777 : vector<1x128xf32> to vector<1x128xbf16>
    %cst_188 = arith.constant dense<0.000000e+00> : vector<1x384xf32>
    %779 = tpu.matmul %595, %625, %cst_188 {dimension_numbers = #tpu.dot_dimension_numbers<[1], [0], [0], [1], [0, 0, 1, 1], [], []>} : vector<1x128xbf16>, vector<128x384xbf16>, vector<1x384xf32> -> vector<1x384xf32>
    %780 = arith.addf %779, %626 : vector<1x384xf32>
    %cst_189 = arith.constant dense<0.000000e+00> : vector<1x384xf32>
    %781 = tpu.matmul %778, %622, %cst_189 {dimension_numbers = #tpu.dot_dimension_numbers<[1], [0], [0], [1], [0, 0, 1, 1], [], []>} : vector<1x128xbf16>, vector<128x384xbf16>, vector<1x384xf32> -> vector<1x384xf32>
    %782 = vector.extract_strided_slice %780 {offsets = [0, 0], sizes = [1, 256], strides = [1, 1]} : vector<1x384xf32> to vector<1x256xf32>
    %783 = vector.extract_strided_slice %781 {offsets = [0, 0], sizes = [1, 256], strides = [1, 1]} : vector<1x384xf32> to vector<1x256xf32>
    %784 = arith.addf %782, %783 : vector<1x256xf32>
    %cst_190 = arith.constant 5.000000e-01 : f32
    %785 = vector.broadcast %cst_190 : f32 to vector<1x256xf32>
    %786 = arith.mulf %785, %784 : vector<1x256xf32>
    %787 = math.tanh %786 : vector<1x256xf32>
    %cst_191 = arith.constant 5.000000e-01 : f32
    %788 = vector.broadcast %cst_191 : f32 to vector<1x256xf32>
    %789 = arith.mulf %788, %787 : vector<1x256xf32>
    %cst_192 = arith.constant 5.000000e-01 : f32
    %790 = vector.broadcast %cst_192 : f32 to vector<1x256xf32>
    %791 = arith.addf %789, %790 : vector<1x256xf32>
    %792 = vector.extract_strided_slice %791 {offsets = [0, 0], sizes = [1, 128], strides = [1, 1]} : vector<1x256xf32> to vector<1x128xf32>
    %793 = vector.extract_strided_slice %791 {offsets = [0, 128], sizes = [1, 128], strides = [1, 1]} : vector<1x256xf32> to vector<1x128xf32>
    %794 = vector.extract_strided_slice %780 {offsets = [0, 256], sizes = [1, 128], strides = [1, 1]} : vector<1x384xf32> to vector<1x128xf32>
    %795 = vector.extract_strided_slice %781 {offsets = [0, 256], sizes = [1, 128], strides = [1, 1]} : vector<1x384xf32> to vector<1x128xf32>
    %796 = arith.addf %795, %623 : vector<1x128xf32>
    %797 = arith.mulf %792, %796 : vector<1x128xf32>
    %798 = arith.addf %794, %797 : vector<1x128xf32>
    %799 = math.tanh %798 : vector<1x128xf32>
    %800 = arith.subf %777, %799 : vector<1x128xf32>
    %801 = arith.mulf %793, %800 : vector<1x128xf32>
    %802 = arith.addf %799, %801 : vector<1x128xf32>
    %803 = arith.truncf %802 : vector<1x128xf32> to vector<1x128xbf16>
    %cst_193 = arith.constant dense<0.000000e+00> : vector<1x384xf32>
    %804 = tpu.matmul %620, %625, %cst_193 {dimension_numbers = #tpu.dot_dimension_numbers<[1], [0], [0], [1], [0, 0, 1, 1], [], []>} : vector<1x128xbf16>, vector<128x384xbf16>, vector<1x384xf32> -> vector<1x384xf32>
    %805 = arith.addf %804, %626 : vector<1x384xf32>
    %cst_194 = arith.constant dense<0.000000e+00> : vector<1x384xf32>
    %806 = tpu.matmul %803, %622, %cst_194 {dimension_numbers = #tpu.dot_dimension_numbers<[1], [0], [0], [1], [0, 0, 1, 1], [], []>} : vector<1x128xbf16>, vector<128x384xbf16>, vector<1x384xf32> -> vector<1x384xf32>
    %807 = vector.extract_strided_slice %805 {offsets = [0, 0], sizes = [1, 256], strides = [1, 1]} : vector<1x384xf32> to vector<1x256xf32>
    %808 = vector.extract_strided_slice %806 {offsets = [0, 0], sizes = [1, 256], strides = [1, 1]} : vector<1x384xf32> to vector<1x256xf32>
    %809 = arith.addf %807, %808 : vector<1x256xf32>
    %cst_195 = arith.constant 5.000000e-01 : f32
    %810 = vector.broadcast %cst_195 : f32 to vector<1x256xf32>
    %811 = arith.mulf %810, %809 : vector<1x256xf32>
    %812 = math.tanh %811 : vector<1x256xf32>
    %cst_196 = arith.constant 5.000000e-01 : f32
    %813 = vector.broadcast %cst_196 : f32 to vector<1x256xf32>
    %814 = arith.mulf %813, %812 : vector<1x256xf32>
    %cst_197 = arith.constant 5.000000e-01 : f32
    %815 = vector.broadcast %cst_197 : f32 to vector<1x256xf32>
    %816 = arith.addf %814, %815 : vector<1x256xf32>
    %817 = vector.extract_strided_slice %816 {offsets = [0, 0], sizes = [1, 128], strides = [1, 1]} : vector<1x256xf32> to vector<1x128xf32>
    %818 = vector.extract_strided_slice %816 {offsets = [0, 128], sizes = [1, 128], strides = [1, 1]} : vector<1x256xf32> to vector<1x128xf32>
    %819 = vector.extract_strided_slice %805 {offsets = [0, 256], sizes = [1, 128], strides = [1, 1]} : vector<1x384xf32> to vector<1x128xf32>
    %820 = vector.extract_strided_slice %806 {offsets = [0, 256], sizes = [1, 128], strides = [1, 1]} : vector<1x384xf32> to vector<1x128xf32>
    %821 = arith.addf %820, %623 : vector<1x128xf32>
    %822 = arith.mulf %817, %821 : vector<1x128xf32>
    %823 = arith.addf %819, %822 : vector<1x128xf32>
    %824 = math.tanh %823 : vector<1x128xf32>
    %825 = arith.subf %802, %824 : vector<1x128xf32>
    %826 = arith.mulf %818, %825 : vector<1x128xf32>
    %827 = arith.addf %824, %826 : vector<1x128xf32>
    %828 = arith.truncf %827 : vector<1x128xf32> to vector<1x128xbf16>
    %829 = tpu.concatenate %653, %678, %703, %728, %753, %778, %803, %828 in 0 : vector<1x128xbf16>, vector<1x128xbf16>, vector<1x128xbf16>, vector<1x128xbf16>, vector<1x128xbf16>, vector<1x128xbf16>, vector<1x128xbf16>, vector<1x128xbf16> -> vector<8x128xbf16>
    %c0_198 = arith.constant 0 : index
    %c0_199 = arith.constant 0 : index
    %830 = vector.load %arg5[%c0_198, %c0_199] : memref<128x128xbf16, #tpu.memory_space<vmem>>, vector<128x128xbf16>
    %cst_200 = arith.constant dense<0.000000e+00> : vector<8x128xf32>
    %831 = tpu.matmul %829, %830, %cst_200 {dimension_numbers = #tpu.dot_dimension_numbers<[1], [0], [0], [1], [0, 0, 1, 1], [], []>} : vector<8x128xbf16>, vector<128x128xbf16>, vector<8x128xf32> -> vector<8x128xf32>
    %c0_201 = arith.constant 0 : index
    %c0_202 = arith.constant 0 : index
    %832 = vector.load %arg6[%c0_201, %c0_202] : memref<1x128xf32, #tpu.memory_space<vmem>>, vector<1x128xf32>
    %833 = vector.broadcast %832 : vector<1x128xf32> to vector<8x128xf32>
    %834 = arith.addf %831, %833 : vector<8x128xf32>
    %c0_203 = arith.constant 0 : index
    %c0_204 = arith.constant 0 : index
    %835 = vector.load %arg7[%c0_203, %c0_204] : memref<8x128xf32, #tpu.memory_space<vmem>>, vector<8x128xf32>
    tpu.vector_store %arg7[%c0_203, %c0_204], %834 {strides = array<i32>} : memref<8x128xf32, #tpu.memory_space<vmem>>, vector<8x128xf32>,
    return
  }
}

</mosaic_0001>

<llo_original>
// kernel: _gru_forward.1
$region0: #{_gru_forward.1}
  #allocation0 [shape = 'u32[]', space=smem, size = 0x4, offset = 0x4, fixed_abs, tag = 'smem constant byte address 0x4 - core index']
  #allocation1 [shape = 'u32[144,128]{1,0:T(1,128)}', space=vmem, size = 0x12000, scoped, tag = 'internal scratch']
  %s0 = inlined_call_operand.vmem [shape: f32[8,128], index: 0, kind: input, shape index: {}]
  %s1 = inlined_call_operand.hbm [shape: bf16[4,128,384], index: 1, kind: input, shape index: {}]
  %s2 = inlined_call_operand.hbm [shape: bf16[4,128,384], index: 2, kind: input, shape index: {}]
  %s3 = inlined_call_operand.hbm [shape: f32[4,384], index: 3, kind: input, shape index: {}]
  %s4 = inlined_call_operand.hbm [shape: f32[4,128], index: 4, kind: input, shape index: {}]
  %s5 = inlined_call_operand.vmem [shape: bf16[128,128], index: 5, kind: input, shape index: {}]
  %s6 = inlined_call_operand.vmem [shape: f32[1,128], index: 6, kind: input, shape index: {}]
  %s7 = inlined_call_operand.vmem [shape: f32[8,128], index: 7, kind: output, shape index: {}]
  %s8 = sld [smem:[#allocation0]]
  $region54: #{_gru_forward.1} parent=0
    _
  %s10 = ssub.s32 1, %s8
  %s11 = scalar_select 0, %s10, %s8
  $region1: #{_gru_forward.1} parent=0
    #allocation2 [shape = 'u8[393216]{0}', space=vmem, size = 0x60000, scoped, tag = 'input window, operand 1, single buffered']
    #allocation3 [shape = 's32[1]{0}', space=sflag, size = 0x4, scoped, tag = 'scoped memory for _gru_forward.1']
    #allocation4 [shape = 'u8[393216]{0}', space=vmem, size = 0x60000, scoped, tag = 'input window, operand 2, single buffered']
    #allocation5 [shape = 's32[1]{0}', space=sflag, size = 0x4, scoped, tag = 'scoped memory for _gru_forward.1']
    #allocation6 [shape = 'u8[6144]{0}', space=vmem, size = 0x1800, scoped, tag = 'input window, operand 3, single buffered']
    #allocation7 [shape = 'u8[2048]{0}', space=vmem, size = 0x800, scoped, tag = 'input window, operand 4, single buffered']
    #allocation8 [shape = 's32[1]{0}', space=sflag, size = 0x4, scoped, tag = 'scoped memory for _gru_forward.1']
    %12 = vsyncpa [#allocation3], 0
    %13 = vsyncpa [#allocation5], 0
    %14 = vsyncpa [#allocation8], 0
    // Predicated region
    $region2: #{_gru_forward.1} parent=1 // pred_check
      _
    $region3: #{_gru_forward.1} parent=1 // pred_check_branch
      %16 = sbr.rel (0) target = $region5
    $region4: #{_gru_forward.1} parent=1 // pred_region
      _
    $region5: #{_gru_forward.1} parent=1 // pred_fallthru
      _
    // Predicated region
    $region6: #{_gru_forward.1} parent=1 // pred_check
      _
    $region7: #{_gru_forward.1} parent=1 // pred_check_branch
      %18 = sbr.rel (0) target = $region9
    $region8: #{_gru_forward.1} parent=1 // pred_region
      %s20 = ssub.s32 12288, 12288
      %21 = vsyncadd [#allocation3], %s20
      %s22 = sshll.u32 [#allocation2], 4
      %s23 = int_to_ptr.vmem [resolvable:$true] %s22
      %28 = dma.hbm_to_vmem [thread:$0]  %s1, 12288, %s23, [#allocation3], 192, 192, 12
    $region9: #{_gru_forward.1} parent=1 // pred_fallthru
      _
    // Predicated region
    $region10: #{_gru_forward.1} parent=1 // pred_check
      _
    $region11: #{_gru_forward.1} parent=1 // pred_check_branch
      %30 = sbr.rel (0) target = $region13
    $region12: #{_gru_forward.1} parent=1 // pred_region
      %s32 = ssub.s32 12288, 12288
      %33 = vsyncadd [#allocation5], %s32
      %s34 = sshll.u32 [#allocation4], 4
      %s35 = int_to_ptr.vmem [resolvable:$true] %s34
      %40 = dma.hbm_to_vmem [thread:$0]  %s2, 12288, %s35, [#allocation5], 192, 192, 12
    $region13: #{_gru_forward.1} parent=1 // pred_fallthru
      _
    // Predicated region
    $region14: #{_gru_forward.1} parent=1 // pred_check
      _
    $region15: #{_gru_forward.1} parent=1 // pred_check_branch
      %42 = sbr.rel (0) target = $region17
    $region16: #{_gru_forward.1} parent=1 // pred_region
      %s44 = ssub.s32 192, 192
      %45 = vsyncadd [#allocation5], %s44
      %s47 = sshll.u32 [#allocation6], 4
      %s48 = int_to_ptr.vmem [resolvable:$true] %s47
      %50 = dma.hbm_to_vmem [thread:$0]  %s3, 192, %s48, [#allocation5]
    $region17: #{_gru_forward.1} parent=1 // pred_fallthru
      _
    // Predicated region
    $region18: #{_gru_forward.1} parent=1 // pred_check
      _
    $region19: #{_gru_forward.1} parent=1 // pred_check_branch
      %52 = sbr.rel (0) target = $region21
    $region20: #{_gru_forward.1} parent=1 // pred_region
      %s54 = ssub.s32 64, 64
      %55 = vsyncadd [#allocation8], %s54
      %s57 = sshll.u32 [#allocation7], 4
      %s58 = int_to_ptr.vmem [resolvable:$true] %s57
      %60 = dma.hbm_to_vmem [thread:$0]  %s4, 64, %s58, [#allocation8]
    $region21: #{_gru_forward.1} parent=1 // pred_fallthru
      _
    // Predicated region
    $region22: #{_gru_forward.1} parent=1 // pred_check
      _
    $region23: #{_gru_forward.1} parent=1 // pred_check_branch
      %62 = sbr.rel (0) target = $region25
    $region24: #{_gru_forward.1} parent=1 // pred_region
      _
    $region25: #{_gru_forward.1} parent=1 // pred_fallthru
      _
    // Predicated region
    $region26: #{_gru_forward.1} parent=1 // pred_check
      _
    $region27: #{_gru_forward.1} parent=1 // pred_check_branch
      %64 = sbr.rel (0) target = $region29
    $region28: #{_gru_forward.1} parent=1 // pred_region
      _
    $region29: #{_gru_forward.1} parent=1 // pred_fallthru
      _
    // Predicated region
    $region30: #{_gru_forward.1} parent=1 // pred_check
      _
    $region31: #{_gru_forward.1} parent=1 // pred_check_branch
      %66 = sbr.rel (0) target = $region33
    $region32: #{_gru_forward.1} parent=1 // pred_region
      %67 = dma.done [#allocation3], 12288
    $region33: #{_gru_forward.1} parent=1 // pred_fallthru
      _
    // Predicated region
    $region34: #{_gru_forward.1} parent=1 // pred_check
      _
    $region35: #{_gru_forward.1} parent=1 // pred_check_branch
      %69 = sbr.rel (0) target = $region37
    $region36: #{_gru_forward.1} parent=1 // pred_region
      %70 = dma.done [#allocation5], 12288
    $region37: #{_gru_forward.1} parent=1 // pred_fallthru
      _
    // Predicated region
    $region38: #{_gru_forward.1} parent=1 // pred_check
      _
    $region39: #{_gru_forward.1} parent=1 // pred_check_branch
      %72 = sbr.rel (0) target = $region41
    $region40: #{_gru_forward.1} parent=1 // pred_region
      %73 = dma.done [#allocation5], 192
    $region41: #{_gru_forward.1} parent=1 // pred_fallthru
      _
    // Predicated region
    $region42: #{_gru_forward.1} parent=1 // pred_check
      _
    $region43: #{_gru_forward.1} parent=1 // pred_check_branch
      %75 = sbr.rel (0) target = $region45
    $region44: #{_gru_forward.1} parent=1 // pred_region
      %76 = dma.done [#allocation8], 64
    $region45: #{_gru_forward.1} parent=1 // pred_fallthru
      _
    %v78 = vld [vmem:[%s0] sm:$0xff]
    %v79 = vpack.c.bf16 %v78, %v78
    %v80 = vld [vmem:[#allocation2] sm:$0xff]
    %v81 = vld [vmem:[#allocation2 + $0x8] sm:$0xf]
    %v82 = vld [vmem:[#allocation2 + $0xc] sm:$0xff]
    %v83 = vld [vmem:[#allocation2 + $0x14] sm:$0xf]
    %v84 = vld [vmem:[#allocation2 + $0x18] sm:$0xff]
    %v85 = vld [vmem:[#allocation2 + $0x20] sm:$0xf]
    %v86 = vld [vmem:[#allocation2 + $0x24] sm:$0xff]
    %v87 = vld [vmem:[#allocation2 + $0x2c] sm:$0xf]
    %v88 = vld [vmem:[#allocation2 + $0x30] sm:$0xff]
    %v89 = vld [vmem:[#allocation2 + $0x38] sm:$0xf]
    %v90 = vld [vmem:[#allocation2 + $0x3c] sm:$0xff]
    %v91 = vld [vmem:[#allocation2 + $0x44] sm:$0xf]
    %v92 = vld [vmem:[#allocation2 + $0x48] sm:$0xff]
    %v93 = vld [vmem:[#allocation2 + $0x50] sm:$0xf]
    %v94 = vld [vmem:[#allocation2 + $0x54] sm:$0xff]
    %v95 = vld [vmem:[#allocation2 + $0x5c] sm:$0xf]
    %v96 = vld [vmem:[#allocation2 + $0x60] sm:$0xff]
    %v97 = vld [vmem:[#allocation2 + $0x68] sm:$0xf]
    %v98 = vld [vmem:[#allocation2 + $0x6c] sm:$0xff]
    %v99 = vld [vmem:[#allocation2 + $0x74] sm:$0xf]
    %v100 = vld [vmem:[#allocation2 + $0x78] sm:$0xff]
    %v101 = vld [vmem:[#allocation2 + $0x80] sm:$0xf]
    %v102 = vld [vmem:[#allocation2 + $0x84] sm:$0xff]
    %v103 = vld [vmem:[#allocation2 + $0x8c] sm:$0xf]
    %v104 = vld [vmem:[#allocation2 + $0x90] sm:$0xff]
    %v105 = vld [vmem:[#allocation2 + $0x98] sm:$0xf]
    %v106 = vld [vmem:[#allocation2 + $0x9c] sm:$0xff]
    %v107 = vld [vmem:[#allocation2 + $0xa4] sm:$0xf]
    %v108 = vld [vmem:[#allocation2 + $0xa8] sm:$0xff]
    %v109 = vld [vmem:[#allocation2 + $0xb0] sm:$0xf]
    %v110 = vld [vmem:[#allocation2 + $0xb4] sm:$0xff]
    %v111 = vld [vmem:[#allocation2 + $0xbc] sm:$0xf]
    %v112 = vld [vmem:[#allocation6] ss:$4 sm:$0x7]
    %v114 = vlaneseq
    %v115 = vshrl.u32 %v114, 7
    %v116 = vsub.s32 0, %v115
    %v117 = vrot.slane %v112, %v116
    %v118 = vlaneseq
    %v119 = vshrl.u32 %v118, 7
    %v120 = vsub.s32 1, %v119
    %v121 = vrot.slane %v112, %v120
    %v122 = vlaneseq
    %v123 = vshrl.u32 %v122, 7
    %v124 = vsub.s32 2, %v123
    %v125 = vrot.slane %v112, %v124
    %v161 = vunpack.c.l.b16 %v80
    %v162 = vunpack.c.h.b16 %v80
    %v163 = vunpack.c.l.b16 %v81
    %v164 = vunpack.c.l.b16 %v82
    %v165 = vunpack.c.h.b16 %v82
    %v166 = vunpack.c.l.b16 %v83
    %v167 = vunpack.c.l.b16 %v84
    %v168 = vunpack.c.h.b16 %v84
    %v169 = vunpack.c.l.b16 %v85
    %v170 = vunpack.c.l.b16 %v86
    %v171 = vunpack.c.h.b16 %v86
    %v172 = vunpack.c.l.b16 %v87
    %v173 = vunpack.c.l.b16 %v88
    %v174 = vunpack.c.h.b16 %v88
    %v175 = vunpack.c.l.b16 %v89
    %v176 = vunpack.c.l.b16 %v90
    %v177 = vunpack.c.h.b16 %v90
    %v178 = vunpack.c.l.b16 %v91
    %v179 = vunpack.c.l.b16 %v92
    %v180 = vunpack.c.h.b16 %v92
    %v181 = vunpack.c.l.b16 %v93
    %v182 = vunpack.c.l.b16 %v94
    %v183 = vunpack.c.h.b16 %v94
    %v184 = vunpack.c.l.b16 %v95
    %v185 = vunpack.c.l.b16 %v96
    %v186 = vunpack.c.h.b16 %v96
    %v187 = vunpack.c.l.b16 %v97
    %v188 = vunpack.c.l.b16 %v98
    %v189 = vunpack.c.h.b16 %v98
    %v190 = vunpack.c.l.b16 %v99
    %v191 = vunpack.c.l.b16 %v100
    %v192 = vunpack.c.h.b16 %v100
    %v193 = vunpack.c.l.b16 %v101
    %v194 = vunpack.c.l.b16 %v102
    %v195 = vunpack.c.h.b16 %v102
    %v196 = vunpack.c.l.b16 %v103
    %v197 = vunpack.c.l.b16 %v104
    %v198 = vunpack.c.h.b16 %v104
    %v199 = vunpack.c.l.b16 %v105
    %v200 = vunpack.c.l.b16 %v106
    %v201 = vunpack.c.h.b16 %v106
    %v202 = vunpack.c.l.b16 %v107
    %v203 = vunpack.c.l.b16 %v108
    %v204 = vunpack.c.h.b16 %v108
    %v205 = vunpack.c.l.b16 %v109
    %v206 = vunpack.c.l.b16 %v110
    %v207 = vunpack.c.h.b16 %v110
    %v208 = vunpack.c.l.b16 %v111
    %v209 = vpack.c.b16 %v164, %v161
    %v210 = vpack.c.b16 %v165, %v162
    %v211 = vpack.c.b16 %v166, %v163
    %v212 = vpack.c.b16 %v170, %v167
    %v213 = vpack.c.b16 %v171, %v168
    %v214 = vpack.c.b16 %v172, %v169
    %v215 = vpack.c.b16 %v176, %v173
    %v216 = vpack.c.b16 %v177, %v174
    %v217 = vpack.c.b16 %v178, %v175
    %v218 = vpack.c.b16 %v182, %v179
    %v219 = vpack.c.b16 %v183, %v180
    %v220 = vpack.c.b16 %v184, %v181
    %v221 = vpack.c.b16 %v188, %v185
    %v222 = vpack.c.b16 %v189, %v186
    %v223 = vpack.c.b16 %v190, %v187
    %v224 = vpack.c.b16 %v194, %v191
    %v225 = vpack.c.b16 %v195, %v192
    %v226 = vpack.c.b16 %v196, %v193
    %v227 = vpack.c.b16 %v200, %v197
    %v228 = vpack.c.b16 %v201, %v198
    %v229 = vpack.c.b16 %v202, %v199
    %v230 = vpack.c.b16 %v206, %v203
    %v231 = vpack.c.b16 %v207, %v204
    %v232 = vpack.c.b16 %v208, %v205
    %257 = vmatprep.subr.bf16.mxu0 %v210
    %258 = vmatpush1.bf16.msra.mxu0 %v209
    %259 = vmatprep.subr.bf16.mxu0 %v213
    %260 = vmatpush1.bf16.msra.mxu0 %v212
    %261 = vmatprep.subr.bf16.mxu0 %v216
    %262 = vmatpush1.bf16.msra.mxu0 %v215
    %263 = vmatprep.subr.bf16.mxu0 %v219
    %264 = vmatpush1.bf16.msra.mxu0 %v218
    %265 = vmatprep.subr.bf16.mxu0 %v222
    %266 = vmatpush1.bf16.msra.mxu0 %v221
    %267 = vmatprep.subr.bf16.mxu0 %v225
    %268 = vmatpush1.bf16.msra.mxu0 %v224
    %269 = vmatprep.subr.bf16.mxu0 %v228
    %270 = vmatpush1.bf16.msra.mxu0 %v227
    %271 = vmatprep.subr.bf16.mxu0 %v231
    %272 = vmatpush1.bf16.msra.mxu0 %v230
    %273 = vmatprep.subr.bf16.mxu0 0
    %274 = vmatpush1.bf16.msra.mxu0 0
    %275 = vmatprep.subr.bf16.mxu0 0
    %276 = vmatpush1.bf16.msra.mxu0 0
    %277 = vmatprep.subr.bf16.mxu0 0
    %278 = vmatpush1.bf16.msra.mxu0 0
    %279 = vmatprep.subr.bf16.mxu0 0
    %280 = vmatpush1.bf16.msra.mxu0 0
    %281 = vmatprep.subr.bf16.mxu0 0
    %282 = vmatpush1.bf16.msra.mxu0 0
    %283 = vmatprep.subr.bf16.mxu0 0
    %284 = vmatpush1.bf16.msra.mxu0 0
    %285 = vmatprep.subr.bf16.mxu0 0
    %286 = vmatpush1.bf16.msra.mxu0 0
    %287 = vmatprep.subr.bf16.mxu0 0
    %288 = vmatpush1.bf16.msra.mxu0 0
    %289 = vmatprep.mubr.bf16.mxu0 0
    %290 = vmatmul.mubr.bf16.gmra.mrb[0].mxu0 %v79
    %v291 = vpop.f32.mrb[0].mxu0
    %v292 = vadd.f32 %v117, %v291
    %v293 = vpop.f32.mrb[0].mxu0
    %v294 = vadd.f32 %v121, %v293
    %v295 = vpop.f32.mrb[0].mxu0
    %v296 = vpop.f32.mrb[0].mxu0
    %297 = vdwg.mxu0
    %298 = vmatprep.subr.bf16.mxu0 0
    %299 = vmatpush1.bf16.msra.mxu0 %v211
    %300 = vmatprep.subr.bf16.mxu0 0
    %301 = vmatpush1.bf16.msra.mxu0 %v214
    %302 = vmatprep.subr.bf16.mxu0 0
    %303 = vmatpush1.bf16.msra.mxu0 %v217
    %304 = vmatprep.subr.bf16.mxu0 0
    %305 = vmatpush1.bf16.msra.mxu0 %v220
    %306 = vmatprep.subr.bf16.mxu0 0
    %307 = vmatpush1.bf16.msra.mxu0 %v223
    %308 = vmatprep.subr.bf16.mxu0 0
    %309 = vmatpush1.bf16.msra.mxu0 %v226
    %310 = vmatprep.subr.bf16.mxu0 0
    %311 = vmatpush1.bf16.msra.mxu0 %v229
    %312 = vmatprep.subr.bf16.mxu0 0
    %313 = vmatpush1.bf16.msra.mxu0 %v232
    %314 = vmatprep.subr.bf16.mxu0 0
    %315 = vmatpush1.bf16.msra.mxu0 0
    %316 = vmatprep.subr.bf16.mxu0 0
    %317 = vmatpush1.bf16.msra.mxu0 0
    %318 = vmatprep.subr.bf16.mxu0 0
    %319 = vmatpush1.bf16.msra.mxu0 0
    %320 = vmatprep.subr.bf16.mxu0 0
    %321 = vmatpush1.bf16.msra.mxu0 0
    %322 = vmatprep.subr.bf16.mxu0 0
    %323 = vmatpush1.bf16.msra.mxu0 0
    %324 = vmatprep.subr.bf16.mxu0 0
    %325 = vmatpush1.bf16.msra.mxu0 0
    %326 = vmatprep.subr.bf16.mxu0 0
    %327 = vmatpush1.bf16.msra.mxu0 0
    %328 = vmatprep.subr.bf16.mxu0 0
    %329 = vmatpush1.bf16.msra.mxu0 0
    %330 = vmatprep.mubr.bf16.mxu0 0
    %331 = vmatmul.mubr.bf16.gmra.mrb[0].mxu0 %v79
    %v332 = vpop.f32.mrb[0].mxu0
    %v333 = vadd.f32 %v125, %v332
    %v334 = vpop.f32.mrb[0].mxu0
    %v335 = vpop.f32.mrb[0].mxu0
    %v336 = vpop.f32.mrb[0].mxu0
    %337 = vdwg.mxu0
    %v338 = vld [vmem:[#allocation4] sm:$0xff]
    %v339 = vld [vmem:[#allocation4 + $0x8] sm:$0xf]
    %v340 = vld [vmem:[#allocation4 + $0xc] sm:$0xff]
    %v341 = vld [vmem:[#allocation4 + $0x14] sm:$0xf]
    %v342 = vld [vmem:[#allocation4 + $0x18] sm:$0xff]
    %v343 = vld [vmem:[#allocation4 + $0x20] sm:$0xf]
    %v344 = vld [vmem:[#allocation4 + $0x24] sm:$0xff]
    %v345 = vld [vmem:[#allocation4 + $0x2c] sm:$0xf]
    %v346 = vld [vmem:[#allocation4 + $0x30] sm:$0xff]
    %v347 = vld [vmem:[#allocation4 + $0x38] sm:$0xf]
    %v348 = vld [vmem:[#allocation4 + $0x3c] sm:$0xff]
    %v349 = vld [vmem:[#allocation4 + $0x44] sm:$0xf]
    %v350 = vld [vmem:[#allocation4 + $0x48] sm:$0xff]
    %v351 = vld [vmem:[#allocation4 + $0x50] sm:$0xf]
    %v352 = vld [vmem:[#allocation4 + $0x54] sm:$0xff]
    %v353 = vld [vmem:[#allocation4 + $0x5c] sm:$0xf]
    %v354 = vld [vmem:[#allocation4 + $0x60] sm:$0xff]
    %v355 = vld [vmem:[#allocation4 + $0x68] sm:$0xf]
    %v356 = vld [vmem:[#allocation4 + $0x6c] sm:$0xff]
    %v357 = vld [vmem:[#allocation4 + $0x74] sm:$0xf]
    %v358 = vld [vmem:[#allocation4 + $0x78] sm:$0xff]
    %v359 = vld [vmem:[#allocation4 + $0x80] sm:$0xf]
    %v360 = vld [vmem:[#allocation4 + $0x84] sm:$0xff]
    %v361 = vld [vmem:[#allocation4 + $0x8c] sm:$0xf]
    %v362 = vld [vmem:[#allocation4 + $0x90] sm:$0xff]
    %v363 = vld [vmem:[#allocation4 + $0x98] sm:$0xf]
    %v364 = vld [vmem:[#allocation4 + $0x9c] sm:$0xff]
    %v365 = vld [vmem:[#allocation4 + $0xa4] sm:$0xf]
    %v366 = vld [vmem:[#allocation4 + $0xa8] sm:$0xff]
    %v367 = vld [vmem:[#allocation4 + $0xb0] sm:$0xf]
    %v368 = vld [vmem:[#allocation4 + $0xb4] sm:$0xff]
    %v369 = vld [vmem:[#allocation4 + $0xbc] sm:$0xf]
    %v370 = vld [vmem:[#allocation7] sm:$0x1]
    %v403 = vunpack.c.l.b16 %v338
    %v404 = vunpack.c.h.b16 %v338
    %v405 = vunpack.c.l.b16 %v339
    %v406 = vunpack.c.l.b16 %v340
    %v407 = vunpack.c.h.b16 %v340
    %v408 = vunpack.c.l.b16 %v341
    %v409 = vunpack.c.l.b16 %v342
    %v410 = vunpack.c.h.b16 %v342
    %v411 = vunpack.c.l.b16 %v343
    %v412 = vunpack.c.l.b16 %v344
    %v413 = vunpack.c.h.b16 %v344
    %v414 = vunpack.c.l.b16 %v345
    %v415 = vunpack.c.l.b16 %v346
    %v416 = vunpack.c.h.b16 %v346
    %v417 = vunpack.c.l.b16 %v347
    %v418 = vunpack.c.l.b16 %v348
    %v419 = vunpack.c.h.b16 %v348
    %v420 = vunpack.c.l.b16 %v349
    %v421 = vunpack.c.l.b16 %v350
    %v422 = vunpack.c.h.b16 %v350
    %v423 = vunpack.c.l.b16 %v351
    %v424 = vunpack.c.l.b16 %v352
    %v425 = vunpack.c.h.b16 %v352
    %v426 = vunpack.c.l.b16 %v353
    %v427 = vunpack.c.l.b16 %v354
    %v428 = vunpack.c.h.b16 %v354
    %v429 = vunpack.c.l.b16 %v355
    %v430 = vunpack.c.l.b16 %v356
    %v431 = vunpack.c.h.b16 %v356
    %v432 = vunpack.c.l.b16 %v357
    %v433 = vunpack.c.l.b16 %v358
    %v434 = vunpack.c.h.b16 %v358
    %v435 = vunpack.c.l.b16 %v359
    %v436 = vunpack.c.l.b16 %v360
    %v437 = vunpack.c.h.b16 %v360
    %v438 = vunpack.c.l.b16 %v361
    %v439 = vunpack.c.l.b16 %v362
    %v440 = vunpack.c.h.b16 %v362
    %v441 = vunpack.c.l.b16 %v363
    %v442 = vunpack.c.l.b16 %v364
    %v443 = vunpack.c.h.b16 %v364
    %v444 = vunpack.c.l.b16 %v365
    %v445 = vunpack.c.l.b16 %v366
    %v446 = vunpack.c.h.b16 %v366
    %v447 = vunpack.c.l.b16 %v367
    %v448 = vunpack.c.l.b16 %v368
    %v449 = vunpack.c.h.b16 %v368
    %v450 = vunpack.c.l.b16 %v369
    %v451 = vpack.c.b16 %v406, %v403
    %v452 = vpack.c.b16 %v407, %v404
    %v453 = vpack.c.b16 %v408, %v405
    %v454 = vpack.c.b16 %v412, %v409
    %v455 = vpack.c.b16 %v413, %v410
    %v456 = vpack.c.b16 %v414, %v411
    %v457 = vpack.c.b16 %v418, %v415
    %v458 = vpack.c.b16 %v419, %v416
    %v459 = vpack.c.b16 %v420, %v417
    %v460 = vpack.c.b16 %v424, %v421
    %v461 = vpack.c.b16 %v425, %v422
    %v462 = vpack.c.b16 %v426, %v423
    %v463 = vpack.c.b16 %v430, %v427
    %v464 = vpack.c.b16 %v431, %v428
    %v465 = vpack.c.b16 %v432, %v429
    %v466 = vpack.c.b16 %v436, %v433
    %v467 = vpack.c.b16 %v437, %v434
    %v468 = vpack.c.b16 %v438, %v435
    %v469 = vpack.c.b16 %v442, %v439
    %v470 = vpack.c.b16 %v443, %v440
    %v471 = vpack.c.b16 %v444, %v441
    %v472 = vpack.c.b16 %v448, %v445
    %v473 = vpack.c.b16 %v449, %v446
    %v474 = vpack.c.b16 %v450, %v447
    %499 = vmatprep.subr.bf16.mxu0 %v452
    %500 = vmatpush1.bf16.msra.mxu0 %v451
    %501 = vmatprep.subr.bf16.mxu0 %v455
    %502 = vmatpush1.bf16.msra.mxu0 %v454
    %503 = vmatprep.subr.bf16.mxu0 %v458
    %504 = vmatpush1.bf16.msra.mxu0 %v457
    %505 = vmatprep.subr.bf16.mxu0 %v461
    %506 = vmatpush1.bf16.msra.mxu0 %v460
    %507 = vmatprep.subr.bf16.mxu0 %v464
    %508 = vmatpush1.bf16.msra.mxu0 %v463
    %509 = vmatprep.subr.bf16.mxu0 %v467
    %510 = vmatpush1.bf16.msra.mxu0 %v466
    %511 = vmatprep.subr.bf16.mxu0 %v470
    %512 = vmatpush1.bf16.msra.mxu0 %v469
    %513 = vmatprep.subr.bf16.mxu0 %v473
    %514 = vmatpush1.bf16.msra.mxu0 %v472
    %515 = vmatprep.subr.bf16.mxu0 0
    %516 = vmatpush1.bf16.msra.mxu0 0
    %517 = vmatprep.subr.bf16.mxu0 0
    %518 = vmatpush1.bf16.msra.mxu0 0
    %519 = vmatprep.subr.bf16.mxu0 0
    %520 = vmatpush1.bf16.msra.mxu0 0
    %521 = vmatprep.subr.bf16.mxu0 0
    %522 = vmatpush1.bf16.msra.mxu0 0
    %523 = vmatprep.subr.bf16.mxu0 0
    %524 = vmatpush1.bf16.msra.mxu0 0
    %525 = vmatprep.subr.bf16.mxu0 0
    %526 = vmatpush1.bf16.msra.mxu0 0
    %527 = vmatprep.subr.bf16.mxu0 0
    %528 = vmatpush1.bf16.msra.mxu0 0
    %529 = vmatprep.subr.bf16.mxu0 0
    %530 = vmatpush1.bf16.msra.mxu0 0
    %531 = vmatprep.mubr.bf16.mxu0 0
    %532 = vmatmul.mubr.bf16.gmra.mrb[0].mxu0 0
    %v533 = vpop.f32.mrb[0].mxu0
    %v534 = vadd.f32 0.0, %v533
    %v535 = vpop.f32.mrb[0].mxu0
    %v536 = vadd.f32 0.0, %v535
    %v537 = vpop.f32.mrb[0].mxu0
    %v538 = vpop.f32.mrb[0].mxu0
    %539 = vdwg.mxu0
    %540 = vmatprep.subr.bf16.mxu0 0
    %541 = vmatpush1.bf16.msra.mxu0 %v453
    %542 = vmatprep.subr.bf16.mxu0 0
    %543 = vmatpush1.bf16.msra.mxu0 %v456
    %544 = vmatprep.subr.bf16.mxu0 0
    %545 = vmatpush1.bf16.msra.mxu0 %v459
    %546 = vmatprep.subr.bf16.mxu0 0
    %547 = vmatpush1.bf16.msra.mxu0 %v462
    %548 = vmatprep.subr.bf16.mxu0 0
    %549 = vmatpush1.bf16.msra.mxu0 %v465
    %550 = vmatprep.subr.bf16.mxu0 0
    %551 = vmatpush1.bf16.msra.mxu0 %v468
    %552 = vmatprep.subr.bf16.mxu0 0
    %553 = vmatpush1.bf16.msra.mxu0 %v471
    %554 = vmatprep.subr.bf16.mxu0 0
    %555 = vmatpush1.bf16.msra.mxu0 %v474
    %556 = vmatprep.subr.bf16.mxu0 0
    %557 = vmatpush1.bf16.msra.mxu0 0
    %558 = vmatprep.subr.bf16.mxu0 0
    %559 = vmatpush1.bf16.msra.mxu0 0
    %560 = vmatprep.subr.bf16.mxu0 0
    %561 = vmatpush1.bf16.msra.mxu0 0
    %562 = vmatprep.subr.bf16.mxu0 0
    %563 = vmatpush1.bf16.msra.mxu0 0
    %564 = vmatprep.subr.bf16.mxu0 0
    %565 = vmatpush1.bf16.msra.mxu0 0
    %566 = vmatprep.subr.bf16.mxu0 0
    %567 = vmatpush1.bf16.msra.mxu0 0
    %568 = vmatprep.subr.bf16.mxu0 0
    %569 = vmatpush1.bf16.msra.mxu0 0
    %570 = vmatprep.subr.bf16.mxu0 0
    %571 = vmatpush1.bf16.msra.mxu0 0
    %572 = vmatprep.mubr.bf16.mxu0 0
    %573 = vmatmul.mubr.bf16.gmra.mrb[0].mxu0 0
    %v574 = vpop.f32.mrb[0].mxu0
    %v575 = vadd.f32 0.0, %v574
    %v576 = vpop.f32.mrb[0].mxu0
    %v577 = vpop.f32.mrb[0].mxu0
    %v578 = vpop.f32.mrb[0].mxu0
    %579 = vdwg.mxu0
    %v580 = vadd.f32 %v292, %v534
    %v581 = vadd.f32 %v294, %v536
    %v582 = vmul.f32 %v580, 0.5
    %v583 = vmul.f32 %v581, 0.5
    %v584 = vtanh.pop %v582
    %v585 = vtanh.pop %v583
    %v586 = vmul.f32 %v584, 0.5
    %v587 = vmul.f32 %v585, 0.5
    %v588 = vadd.f32 %v586, 0.5
    %v589 = vadd.f32 %v587, 0.5
    %v590 = vadd.f32 %v575, %v370
    %v591 = vmul.f32 %v588, %v590
    %v592 = vadd.f32 %v333, %v591
    %v593 = vtanh.pop %v592
    %v594 = vsub.f32 0.0, %v593
    %v595 = vmul.f32 %v589, %v594
    %v596 = vadd.f32 %v593, %v595
    %v597 = vpack.c.bf16 %v596, %v596
    %598 = vmatprep.subr.bf16.mxu0 %v452
    %599 = vmatpush1.bf16.msra.mxu0 %v451
    %600 = vmatprep.subr.bf16.mxu0 %v455
    %601 = vmatpush1.bf16.msra.mxu0 %v454
    %602 = vmatprep.subr.bf16.mxu0 %v458
    %603 = vmatpush1.bf16.msra.mxu0 %v457
    %604 = vmatprep.subr.bf16.mxu0 %v461
    %605 = vmatpush1.bf16.msra.mxu0 %v460
    %606 = vmatprep.subr.bf16.mxu0 %v464
    %607 = vmatpush1.bf16.msra.mxu0 %v463
    %608 = vmatprep.subr.bf16.mxu0 %v467
    %609 = vmatpush1.bf16.msra.mxu0 %v466
    %610 = vmatprep.subr.bf16.mxu0 %v470
    %611 = vmatpush1.bf16.msra.mxu0 %v469
    %612 = vmatprep.subr.bf16.mxu0 %v473
    %613 = vmatpush1.bf16.msra.mxu0 %v472
    %614 = vmatprep.subr.bf16.mxu0 0
    %615 = vmatpush1.bf16.msra.mxu0 0
    %616 = vmatprep.subr.bf16.mxu0 0
    %617 = vmatpush1.bf16.msra.mxu0 0
    %618 = vmatprep.subr.bf16.mxu0 0
    %619 = vmatpush1.bf16.msra.mxu0 0
    %620 = vmatprep.subr.bf16.mxu0 0
    %621 = vmatpush1.bf16.msra.mxu0 0
    %622 = vmatprep.subr.bf16.mxu0 0
    %623 = vmatpush1.bf16.msra.mxu0 0
    %624 = vmatprep.subr.bf16.mxu0 0
    %625 = vmatpush1.bf16.msra.mxu0 0
    %626 = vmatprep.subr.bf16.mxu0 0
    %627 = vmatpush1.bf16.msra.mxu0 0
    %628 = vmatprep.subr.bf16.mxu0 0
    %629 = vmatpush1.bf16.msra.mxu0 0
    %630 = vmatprep.mubr.bf16.mxu0 0
    %631 = vmatmul.mubr.bf16.gmra.mrb[0].mxu0 %v597
    %v632 = vpop.f32.mrb[0].mxu0
    %v633 = vadd.f32 0.0, %v632
    %v634 = vpop.f32.mrb[0].mxu0
    %v635 = vadd.f32 0.0, %v634
    %v636 = vpop.f32.mrb[0].mxu0
    %v637 = vpop.f32.mrb[0].mxu0
    %638 = vdwg.mxu0
    %639 = vmatprep.subr.bf16.mxu0 0
    %640 = vmatpush1.bf16.msra.mxu0 %v453
    %641 = vmatprep.subr.bf16.mxu0 0
    %642 = vmatpush1.bf16.msra.mxu0 %v456
    %643 = vmatprep.subr.bf16.mxu0 0
    %644 = vmatpush1.bf16.msra.mxu0 %v459
    %645 = vmatprep.subr.bf16.mxu0 0
    %646 = vmatpush1.bf16.msra.mxu0 %v462
    %647 = vmatprep.subr.bf16.mxu0 0
    %648 = vmatpush1.bf16.msra.mxu0 %v465
    %649 = vmatprep.subr.bf16.mxu0 0
    %650 = vmatpush1.bf16.msra.mxu0 %v468
    %651 = vmatprep.subr.bf16.mxu0 0
    %652 = vmatpush1.bf16.msra.mxu0 %v471
    %653 = vmatprep.subr.bf16.mxu0 0
    %654 = vmatpush1.bf16.msra.mxu0 %v474
    %655 = vmatprep.subr.bf16.mxu0 0
    %656 = vmatpush1.bf16.msra.mxu0 0
    %657 = vmatprep.subr.bf16.mxu0 0
    %658 = vmatpush1.bf16.msra.mxu0 0
    %659 = vmatprep.subr.bf16.mxu0 0
    %660 = vmatpush1.bf16.msra.mxu0 0
    %661 = vmatprep.subr.bf16.mxu0 0
    %662 = vmatpush1.bf16.msra.mxu0 0
    %663 = vmatprep.subr.bf16.mxu0 0
    %664 = vmatpush1.bf16.msra.mxu0 0
    %665 = vmatprep.subr.bf16.mxu0 0
    %666 = vmatpush1.bf16.msra.mxu0 0
    %667 = vmatprep.subr.bf16.mxu0 0
    %668 = vmatpush1.bf16.msra.mxu0 0
    %669 = vmatprep.subr.bf16.mxu0 0
    %670 = vmatpush1.bf16.msra.mxu0 0
    %671 = vmatprep.mubr.bf16.mxu0 0
    %672 = vmatmul.mubr.bf16.gmra.mrb[0].mxu0 %v597
    %v673 = vpop.f32.mrb[0].mxu0
    %v674 = vadd.f32 0.0, %v673
    %v675 = vpop.f32.mrb[0].mxu0
    %v676 = vpop.f32.mrb[0].mxu0
    %v677 = vpop.f32.mrb[0].mxu0
    %678 = vdwg.mxu0
    %v681 = vrot.slane %v633, 7
    %v682 = vrot.slane %v635, 7
    %v685 = vadd.f32 %v292, %v681
    %v686 = vadd.f32 %v294, %v682
    %v687 = vmul.f32 %v685, 0.5
    %v688 = vmul.f32 %v686, 0.5
    %v689 = vtanh.pop %v687
    %v690 = vtanh.pop %v688
    %v691 = vmul.f32 %v689, 0.5
    %v692 = vmul.f32 %v690, 0.5
    %v693 = vadd.f32 %v691, 0.5
    %v694 = vadd.f32 %v692, 0.5
    %v695 = vadd.f32 %v674, %v370
    %v697 = vrot.slane %v695, 7
    %v699 = vmul.f32 %v693, %v697
    %v700 = vadd.f32 %v333, %v699
    %v701 = vtanh.pop %v700
    %v703 = vrot.slane %v701, 1
    %v705 = vsub.f32 %v596, %v703
    %v707 = vrot.slane %v705, 7
    %v709 = vmul.f32 %v694, %v707
    %v710 = vadd.f32 %v701, %v709
    %v711 = vpack.c.bf16 %v710, %v710
    %v713 = vshrl.u32 %v711, 16
    %716 = vmatprep.subr.bf16.mxu0 %v452
    %717 = vmatpush1.bf16.msra.mxu0 %v451
    %718 = vmatprep.subr.bf16.mxu0 %v455
    %719 = vmatpush1.bf16.msra.mxu0 %v454
    %720 = vmatprep.subr.bf16.mxu0 %v458
    %721 = vmatpush1.bf16.msra.mxu0 %v457
    %722 = vmatprep.subr.bf16.mxu0 %v461
    %723 = vmatpush1.bf16.msra.mxu0 %v460
    %724 = vmatprep.subr.bf16.mxu0 %v464
    %725 = vmatpush1.bf16.msra.mxu0 %v463
    %726 = vmatprep.subr.bf16.mxu0 %v467
    %727 = vmatpush1.bf16.msra.mxu0 %v466
    %728 = vmatprep.subr.bf16.mxu0 %v470
    %729 = vmatpush1.bf16.msra.mxu0 %v469
    %730 = vmatprep.subr.bf16.mxu0 %v473
    %731 = vmatpush1.bf16.msra.mxu0 %v472
    %732 = vmatprep.subr.bf16.mxu0 0
    %733 = vmatpush1.bf16.msra.mxu0 0
    %734 = vmatprep.subr.bf16.mxu0 0
    %735 = vmatpush1.bf16.msra.mxu0 0
    %736 = vmatprep.subr.bf16.mxu0 0
    %737 = vmatpush1.bf16.msra.mxu0 0
    %738 = vmatprep.subr.bf16.mxu0 0
    %739 = vmatpush1.bf16.msra.mxu0 0
    %740 = vmatprep.subr.bf16.mxu0 0
    %741 = vmatpush1.bf16.msra.mxu0 0
    %742 = vmatprep.subr.bf16.mxu0 0
    %743 = vmatpush1.bf16.msra.mxu0 0
    %744 = vmatprep.subr.bf16.mxu0 0
    %745 = vmatpush1.bf16.msra.mxu0 0
    %746 = vmatprep.subr.bf16.mxu0 0
    %747 = vmatpush1.bf16.msra.mxu0 0
    %748 = vmatprep.mubr.bf16.mxu0 0
    %749 = vmatmul.mubr.bf16.gmra.mrb[0].mxu0 %v713
    %v750 = vpop.f32.mrb[0].mxu0
    %v751 = vadd.f32 0.0, %v750
    %v752 = vpop.f32.mrb[0].mxu0
    %v753 = vadd.f32 0.0, %v752
    %v754 = vpop.f32.mrb[0].mxu0
    %v755 = vpop.f32.mrb[0].mxu0
    %756 = vdwg.mxu0
    %757 = vmatprep.subr.bf16.mxu0 0
    %758 = vmatpush1.bf16.msra.mxu0 %v453
    %759 = vmatprep.subr.bf16.mxu0 0
    %760 = vmatpush1.bf16.msra.mxu0 %v456
    %761 = vmatprep.subr.bf16.mxu0 0
    %762 = vmatpush1.bf16.msra.mxu0 %v459
    %763 = vmatprep.subr.bf16.mxu0 0
    %764 = vmatpush1.bf16.msra.mxu0 %v462
    %765 = vmatprep.subr.bf16.mxu0 0
    %766 = vmatpush1.bf16.msra.mxu0 %v465
    %767 = vmatprep.subr.bf16.mxu0 0
    %768 = vmatpush1.bf16.msra.mxu0 %v468
    %769 = vmatprep.subr.bf16.mxu0 0
    %770 = vmatpush1.bf16.msra.mxu0 %v471
    %771 = vmatprep.subr.bf16.mxu0 0
    %772 = vmatpush1.bf16.msra.mxu0 %v474
    %773 = vmatprep.subr.bf16.mxu0 0
    %774 = vmatpush1.bf16.msra.mxu0 0
    %775 = vmatprep.subr.bf16.mxu0 0
    %776 = vmatpush1.bf16.msra.mxu0 0
    %777 = vmatprep.subr.bf16.mxu0 0
    %778 = vmatpush1.bf16.msra.mxu0 0
    %779 = vmatprep.subr.bf16.mxu0 0
    %780 = vmatpush1.bf16.msra.mxu0 0
    %781 = vmatprep.subr.bf16.mxu0 0
    %782 = vmatpush1.bf16.msra.mxu0 0
    %783 = vmatprep.subr.bf16.mxu0 0
    %784 = vmatpush1.bf16.msra.mxu0 0
    %785 = vmatprep.subr.bf16.mxu0 0
    %786 = vmatpush1.bf16.msra.mxu0 0
    %787 = vmatprep.subr.bf16.mxu0 0
    %788 = vmatpush1.bf16.msra.mxu0 0
    %789 = vmatprep.mubr.bf16.mxu0 0
    %790 = vmatmul.mubr.bf16.gmra.mrb[0].mxu0 %v713
    %v791 = vpop.f32.mrb[0].mxu0
    %v792 = vadd.f32 0.0, %v791
    %v793 = vpop.f32.mrb[0].mxu0
    %v794 = vpop.f32.mrb[0].mxu0
    %v795 = vpop.f32.mrb[0].mxu0
    %796 = vdwg.mxu0
    %v799 = vrot.slane %v751, 6
    %v800 = vrot.slane %v753, 6
    %v803 = vadd.f32 %v292, %v799
    %v804 = vadd.f32 %v294, %v800
    %v805 = vmul.f32 %v803, 0.5
    %v806 = vmul.f32 %v804, 0.5
    %v807 = vtanh.pop %v805
    %v808 = vtanh.pop %v806
    %v809 = vmul.f32 %v807, 0.5
    %v810 = vmul.f32 %v808, 0.5
    %v811 = vadd.f32 %v809, 0.5
    %v812 = vadd.f32 %v810, 0.5
    %v813 = vadd.f32 %v792, %v370
    %v815 = vrot.slane %v813, 6
    %v817 = vmul.f32 %v811, %v815
    %v818 = vadd.f32 %v333, %v817
    %v819 = vtanh.pop %v818
    %v821 = vrot.slane %v819, 1
    %v823 = vsub.f32 %v710, %v821
    %v825 = vrot.slane %v823, 7
    %v827 = vmul.f32 %v812, %v825
    %v828 = vadd.f32 %v819, %v827
    %v829 = vpack.c.bf16 %v828, %v828
    %v831 = vrot.slane %v829, 1
    %833 = vmatprep.subr.bf16.mxu0 %v452
    %834 = vmatpush1.bf16.msra.mxu0 %v451
    %835 = vmatprep.subr.bf16.mxu0 %v455
    %836 = vmatpush1.bf16.msra.mxu0 %v454
    %837 = vmatprep.subr.bf16.mxu0 %v458
    %838 = vmatpush1.bf16.msra.mxu0 %v457
    %839 = vmatprep.subr.bf16.mxu0 %v461
    %840 = vmatpush1.bf16.msra.mxu0 %v460
    %841 = vmatprep.subr.bf16.mxu0 %v464
    %842 = vmatpush1.bf16.msra.mxu0 %v463
    %843 = vmatprep.subr.bf16.mxu0 %v467
    %844 = vmatpush1.bf16.msra.mxu0 %v466
    %845 = vmatprep.subr.bf16.mxu0 %v470
    %846 = vmatpush1.bf16.msra.mxu0 %v469
    %847 = vmatprep.subr.bf16.mxu0 %v473
    %848 = vmatpush1.bf16.msra.mxu0 %v472
    %849 = vmatprep.subr.bf16.mxu0 0
    %850 = vmatpush1.bf16.msra.mxu0 0
    %851 = vmatprep.subr.bf16.mxu0 0
    %852 = vmatpush1.bf16.msra.mxu0 0
    %853 = vmatprep.subr.bf16.mxu0 0
    %854 = vmatpush1.bf16.msra.mxu0 0
    %855 = vmatprep.subr.bf16.mxu0 0
    %856 = vmatpush1.bf16.msra.mxu0 0
    %857 = vmatprep.subr.bf16.mxu0 0
    %858 = vmatpush1.bf16.msra.mxu0 0
    %859 = vmatprep.subr.bf16.mxu0 0
    %860 = vmatpush1.bf16.msra.mxu0 0
    %861 = vmatprep.subr.bf16.mxu0 0
    %862 = vmatpush1.bf16.msra.mxu0 0
    %863 = vmatprep.subr.bf16.mxu0 0
    %864 = vmatpush1.bf16.msra.mxu0 0
    %865 = vmatprep.mubr.bf16.mxu0 0
    %866 = vmatmul.mubr.bf16.gmra.mrb[0].mxu0 %v831
    %v867 = vpop.f32.mrb[0].mxu0
    %v868 = vadd.f32 0.0, %v867
    %v869 = vpop.f32.mrb[0].mxu0
    %v870 = vadd.f32 0.0, %v869
    %v871 = vpop.f32.mrb[0].mxu0
    %v872 = vpop.f32.mrb[0].mxu0
    %873 = vdwg.mxu0
    %874 = vmatprep.subr.bf16.mxu0 0
    %875 = vmatpush1.bf16.msra.mxu0 %v453
    %876 = vmatprep.subr.bf16.mxu0 0
    %877 = vmatpush1.bf16.msra.mxu0 %v456
    %878 = vmatprep.subr.bf16.mxu0 0
    %879 = vmatpush1.bf16.msra.mxu0 %v459
    %880 = vmatprep.subr.bf16.mxu0 0
    %881 = vmatpush1.bf16.msra.mxu0 %v462
    %882 = vmatprep.subr.bf16.mxu0 0
    %883 = vmatpush1.bf16.msra.mxu0 %v465
    %884 = vmatprep.subr.bf16.mxu0 0
    %885 = vmatpush1.bf16.msra.mxu0 %v468
    %886 = vmatprep.subr.bf16.mxu0 0
    %887 = vmatpush1.bf16.msra.mxu0 %v471
    %888 = vmatprep.subr.bf16.mxu0 0
    %889 = vmatpush1.bf16.msra.mxu0 %v474
    %890 = vmatprep.subr.bf16.mxu0 0
    %891 = vmatpush1.bf16.msra.mxu0 0
    %892 = vmatprep.subr.bf16.mxu0 0
    %893 = vmatpush1.bf16.msra.mxu0 0
    %894 = vmatprep.subr.bf16.mxu0 0
    %895 = vmatpush1.bf16.msra.mxu0 0
    %896 = vmatprep.subr.bf16.mxu0 0
    %897 = vmatpush1.bf16.msra.mxu0 0
    %898 = vmatprep.subr.bf16.mxu0 0
    %899 = vmatpush1.bf16.msra.mxu0 0
    %900 = vmatprep.subr.bf16.mxu0 0
    %901 = vmatpush1.bf16.msra.mxu0 0
    %902 = vmatprep.subr.bf16.mxu0 0
    %903 = vmatpush1.bf16.msra.mxu0 0
    %904 = vmatprep.subr.bf16.mxu0 0
    %905 = vmatpush1.bf16.msra.mxu0 0
    %906 = vmatprep.mubr.bf16.mxu0 0
    %907 = vmatmul.mubr.bf16.gmra.mrb[0].mxu0 %v831
    %v908 = vpop.f32.mrb[0].mxu0
    %v909 = vadd.f32 0.0, %v908
    %v910 = vpop.f32.mrb[0].mxu0
    %v911 = vpop.f32.mrb[0].mxu0
    %v912 = vpop.f32.mrb[0].mxu0
    %913 = vdwg.mxu0
    %v916 = vrot.slane %v868, 5
    %v917 = vrot.slane %v870, 5
    %v920 = vadd.f32 %v292, %v916
    %v921 = vadd.f32 %v294, %v917
    %v922 = vmul.f32 %v920, 0.5
    %v923 = vmul.f32 %v921, 0.5
    %v924 = vtanh.pop %v922
    %v925 = vtanh.pop %v923
    %v926 = vmul.f32 %v924, 0.5
    %v927 = vmul.f32 %v925, 0.5
    %v928 = vadd.f32 %v926, 0.5
    %v929 = vadd.f32 %v927, 0.5
    %v930 = vadd.f32 %v909, %v370
    %v932 = vrot.slane %v930, 5
    %v934 = vmul.f32 %v928, %v932
    %v935 = vadd.f32 %v333, %v934
    %v936 = vtanh.pop %v935
    %v938 = vrot.slane %v936, 1
    %v940 = vsub.f32 %v828, %v938
    %v942 = vrot.slane %v940, 7
    %v944 = vmul.f32 %v929, %v942
    %v945 = vadd.f32 %v936, %v944
    %v946 = vpack.c.bf16 %v945, %v945
    %v948 = vshrl.u32 %v946, 16
    %v950 = vrot.slane %v948, 1
    %952 = vmatprep.subr.bf16.mxu0 %v452
    %953 = vmatpush1.bf16.msra.mxu0 %v451
    %954 = vmatprep.subr.bf16.mxu0 %v455
    %955 = vmatpush1.bf16.msra.mxu0 %v454
    %956 = vmatprep.subr.bf16.mxu0 %v458
    %957 = vmatpush1.bf16.msra.mxu0 %v457
    %958 = vmatprep.subr.bf16.mxu0 %v461
    %959 = vmatpush1.bf16.msra.mxu0 %v460
    %960 = vmatprep.subr.bf16.mxu0 %v464
    %961 = vmatpush1.bf16.msra.mxu0 %v463
    %962 = vmatprep.subr.bf16.mxu0 %v467
    %963 = vmatpush1.bf16.msra.mxu0 %v466
    %964 = vmatprep.subr.bf16.mxu0 %v470
    %965 = vmatpush1.bf16.msra.mxu0 %v469
    %966 = vmatprep.subr.bf16.mxu0 %v473
    %967 = vmatpush1.bf16.msra.mxu0 %v472
    %968 = vmatprep.subr.bf16.mxu0 0
    %969 = vmatpush1.bf16.msra.mxu0 0
    %970 = vmatprep.subr.bf16.mxu0 0
    %971 = vmatpush1.bf16.msra.mxu0 0
    %972 = vmatprep.subr.bf16.mxu0 0
    %973 = vmatpush1.bf16.msra.mxu0 0
    %974 = vmatprep.subr.bf16.mxu0 0
    %975 = vmatpush1.bf16.msra.mxu0 0
    %976 = vmatprep.subr.bf16.mxu0 0
    %977 = vmatpush1.bf16.msra.mxu0 0
    %978 = vmatprep.subr.bf16.mxu0 0
    %979 = vmatpush1.bf16.msra.mxu0 0
    %980 = vmatprep.subr.bf16.mxu0 0
    %981 = vmatpush1.bf16.msra.mxu0 0
    %982 = vmatprep.subr.bf16.mxu0 0
    %983 = vmatpush1.bf16.msra.mxu0 0
    %984 = vmatprep.mubr.bf16.mxu0 0
    %985 = vmatmul.mubr.bf16.gmra.mrb[0].mxu0 %v950
    %v986 = vpop.f32.mrb[0].mxu0
    %v987 = vadd.f32 0.0, %v986
    %v988 = vpop.f32.mrb[0].mxu0
    %v989 = vadd.f32 0.0, %v988
    %v990 = vpop.f32.mrb[0].mxu0
    %v991 = vpop.f32.mrb[0].mxu0
    %992 = vdwg.mxu0
    %993 = vmatprep.subr.bf16.mxu0 0
    %994 = vmatpush1.bf16.msra.mxu0 %v453
    %995 = vmatprep.subr.bf16.mxu0 0
    %996 = vmatpush1.bf16.msra.mxu0 %v456
    %997 = vmatprep.subr.bf16.mxu0 0
    %998 = vmatpush1.bf16.msra.mxu0 %v459
    %999 = vmatprep.subr.bf16.mxu0 0
    %1000 = vmatpush1.bf16.msra.mxu0 %v462
    %1001 = vmatprep.subr.bf16.mxu0 0
    %1002 = vmatpush1.bf16.msra.mxu0 %v465
    %1003 = vmatprep.subr.bf16.mxu0 0
    %1004 = vmatpush1.bf16.msra.mxu0 %v468
    %1005 = vmatprep.subr.bf16.mxu0 0
    %1006 = vmatpush1.bf16.msra.mxu0 %v471
    %1007 = vmatprep.subr.bf16.mxu0 0
    %1008 = vmatpush1.bf16.msra.mxu0 %v474
    %1009 = vmatprep.subr.bf16.mxu0 0
    %1010 = vmatpush1.bf16.msra.mxu0 0
    %1011 = vmatprep.subr.bf16.mxu0 0
    %1012 = vmatpush1.bf16.msra.mxu0 0
    %1013 = vmatprep.subr.bf16.mxu0 0
    %1014 = vmatpush1.bf16.msra.mxu0 0
    %1015 = vmatprep.subr.bf16.mxu0 0
    %1016 = vmatpush1.bf16.msra.mxu0 0
    %1017 = vmatprep.subr.bf16.mxu0 0
    %1018 = vmatpush1.bf16.msra.mxu0 0
    %1019 = vmatprep.subr.bf16.mxu0 0
    %1020 = vmatpush1.bf16.msra.mxu0 0
    %1021 = vmatprep.subr.bf16.mxu0 0
    %1022 = vmatpush1.bf16.msra.mxu0 0
    %1023 = vmatprep.subr.bf16.mxu0 0
    %1024 = vmatpush1.bf16.msra.mxu0 0
    %1025 = vmatprep.mubr.bf16.mxu0 0
    %1026 = vmatmul.mubr.bf16.gmra.mrb[0].mxu0 %v950
    %v1027 = vpop.f32.mrb[0].mxu0
    %v1028 = vadd.f32 0.0, %v1027
    %v1029 = vpop.f32.mrb[0].mxu0
    %v1030 = vpop.f32.mrb[0].mxu0
    %v1031 = vpop.f32.mrb[0].mxu0
    %1032 = vdwg.mxu0
    %v1035 = vrot.slane %v987, 4
    %v1036 = vrot.slane %v989, 4
    %v1039 = vadd.f32 %v292, %v1035
    %v1040 = vadd.f32 %v294, %v1036
    %v1041 = vmul.f32 %v1039, 0.5
    %v1042 = vmul.f32 %v1040, 0.5
    %v1043 = vtanh.pop %v1041
    %v1044 = vtanh.pop %v1042
    %v1045 = vmul.f32 %v1043, 0.5
    %v1046 = vmul.f32 %v1044, 0.5
    %v1047 = vadd.f32 %v1045, 0.5
    %v1048 = vadd.f32 %v1046, 0.5
    %v1049 = vadd.f32 %v1028, %v370
    %v1051 = vrot.slane %v1049, 4
    %v1053 = vmul.f32 %v1047, %v1051
    %v1054 = vadd.f32 %v333, %v1053
    %v1055 = vtanh.pop %v1054
    %v1057 = vrot.slane %v1055, 1
    %v1059 = vsub.f32 %v945, %v1057
    %v1061 = vrot.slane %v1059, 7
    %v1063 = vmul.f32 %v1048, %v1061
    %v1064 = vadd.f32 %v1055, %v1063
    %v1065 = vpack.c.bf16 %v1064, %v1064
    %v1067 = vrot.slane %v1065, 2
    %1069 = vmatprep.subr.bf16.mxu0 %v452
    %1070 = vmatpush1.bf16.msra.mxu0 %v451
    %1071 = vmatprep.subr.bf16.mxu0 %v455
    %1072 = vmatpush1.bf16.msra.mxu0 %v454
    %1073 = vmatprep.subr.bf16.mxu0 %v458
    %1074 = vmatpush1.bf16.msra.mxu0 %v457
    %1075 = vmatprep.subr.bf16.mxu0 %v461
    %1076 = vmatpush1.bf16.msra.mxu0 %v460
    %1077 = vmatprep.subr.bf16.mxu0 %v464
    %1078 = vmatpush1.bf16.msra.mxu0 %v463
    %1079 = vmatprep.subr.bf16.mxu0 %v467
    %1080 = vmatpush1.bf16.msra.mxu0 %v466
    %1081 = vmatprep.subr.bf16.mxu0 %v470
    %1082 = vmatpush1.bf16.msra.mxu0 %v469
    %1083 = vmatprep.subr.bf16.mxu0 %v473
    %1084 = vmatpush1.bf16.msra.mxu0 %v472
    %1085 = vmatprep.subr.bf16.mxu0 0
    %1086 = vmatpush1.bf16.msra.mxu0 0
    %1087 = vmatprep.subr.bf16.mxu0 0
    %1088 = vmatpush1.bf16.msra.mxu0 0
    %1089 = vmatprep.subr.bf16.mxu0 0
    %1090 = vmatpush1.bf16.msra.mxu0 0
    %1091 = vmatprep.subr.bf16.mxu0 0
    %1092 = vmatpush1.bf16.msra.mxu0 0
    %1093 = vmatprep.subr.bf16.mxu0 0
    %1094 = vmatpush1.bf16.msra.mxu0 0
    %1095 = vmatprep.subr.bf16.mxu0 0
    %1096 = vmatpush1.bf16.msra.mxu0 0
    %1097 = vmatprep.subr.bf16.mxu0 0
    %1098 = vmatpush1.bf16.msra.mxu0 0
    %1099 = vmatprep.subr.bf16.mxu0 0
    %1100 = vmatpush1.bf16.msra.mxu0 0
    %1101 = vmatprep.mubr.bf16.mxu0 0
    %1102 = vmatmul.mubr.bf16.gmra.mrb[0].mxu0 %v1067
    %v1103 = vpop.f32.mrb[0].mxu0
    %v1104 = vadd.f32 0.0, %v1103
    %v1105 = vpop.f32.mrb[0].mxu0
    %v1106 = vadd.f32 0.0, %v1105
    %v1107 = vpop.f32.mrb[0].mxu0
    %v1108 = vpop.f32.mrb[0].mxu0
    %1109 = vdwg.mxu0
    %1110 = vmatprep.subr.bf16.mxu0 0
    %1111 = vmatpush1.bf16.msra.mxu0 %v453
    %1112 = vmatprep.subr.bf16.mxu0 0
    %1113 = vmatpush1.bf16.msra.mxu0 %v456
    %1114 = vmatprep.subr.bf16.mxu0 0
    %1115 = vmatpush1.bf16.msra.mxu0 %v459
    %1116 = vmatprep.subr.bf16.mxu0 0
    %1117 = vmatpush1.bf16.msra.mxu0 %v462
    %1118 = vmatprep.subr.bf16.mxu0 0
    %1119 = vmatpush1.bf16.msra.mxu0 %v465
    %1120 = vmatprep.subr.bf16.mxu0 0
    %1121 = vmatpush1.bf16.msra.mxu0 %v468
    %1122 = vmatprep.subr.bf16.mxu0 0
    %1123 = vmatpush1.bf16.msra.mxu0 %v471
    %1124 = vmatprep.subr.bf16.mxu0 0
    %1125 = vmatpush1.bf16.msra.mxu0 %v474
    %1126 = vmatprep.subr.bf16.mxu0 0
    %1127 = vmatpush1.bf16.msra.mxu0 0
    %1128 = vmatprep.subr.bf16.mxu0 0
    %1129 = vmatpush1.bf16.msra.mxu0 0
    %1130 = vmatprep.subr.bf16.mxu0 0
    %1131 = vmatpush1.bf16.msra.mxu0 0
    %1132 = vmatprep.subr.bf16.mxu0 0
    %1133 = vmatpush1.bf16.msra.mxu0 0
    %1134 = vmatprep.subr.bf16.mxu0 0
    %1135 = vmatpush1.bf16.msra.mxu0 0
    %1136 = vmatprep.subr.bf16.mxu0 0
    %1137 = vmatpush1.bf16.msra.mxu0 0
    %1138 = vmatprep.subr.bf16.mxu0 0
    %1139 = vmatpush1.bf16.msra.mxu0 0
    %1140 = vmatprep.subr.bf16.mxu0 0
    %1141 = vmatpush1.bf16.msra.mxu0 0
    %1142 = vmatprep.mubr.bf16.mxu0 0
    %1143 = vmatmul.mubr.bf16.gmra.mrb[0].mxu0 %v1067
    %v1144 = vpop.f32.mrb[0].mxu0
    %v1145 = vadd.f32 0.0, %v1144
    %v1146 = vpop.f32.mrb[0].mxu0
    %v1147 = vpop.f32.mrb[0].mxu0
    %v1148 = vpop.f32.mrb[0].mxu0
    %1149 = vdwg.mxu0
    %v1152 = vrot.slane %v1104, 3
    %v1153 = vrot.slane %v1106, 3
    %v1156 = vadd.f32 %v292, %v1152
    %v1157 = vadd.f32 %v294, %v1153
    %v1158 = vmul.f32 %v1156, 0.5
    %v1159 = vmul.f32 %v1157, 0.5
    %v1160 = vtanh.pop %v1158
    %v1161 = vtanh.pop %v1159
    %v1162 = vmul.f32 %v1160, 0.5
    %v1163 = vmul.f32 %v1161, 0.5
    %v1164 = vadd.f32 %v1162, 0.5
    %v1165 = vadd.f32 %v1163, 0.5
    %v1166 = vadd.f32 %v1145, %v370
    %v1168 = vrot.slane %v1166, 3
    %v1170 = vmul.f32 %v1164, %v1168
    %v1171 = vadd.f32 %v333, %v1170
    %v1172 = vtanh.pop %v1171
    %v1174 = vrot.slane %v1172, 1
    %v1176 = vsub.f32 %v1064, %v1174
    %v1178 = vrot.slane %v1176, 7
    %v1180 = vmul.f32 %v1165, %v1178
    %v1181 = vadd.f32 %v1172, %v1180
    %v1182 = vpack.c.bf16 %v1181, %v1181
    %v1184 = vshrl.u32 %v1182, 16
    %v1186 = vrot.slane %v1184, 2
    %1188 = vmatprep.subr.bf16.mxu0 %v452
    %1189 = vmatpush1.bf16.msra.mxu0 %v451
    %1190 = vmatprep.subr.bf16.mxu0 %v455
    %1191 = vmatpush1.bf16.msra.mxu0 %v454
    %1192 = vmatprep.subr.bf16.mxu0 %v458
    %1193 = vmatpush1.bf16.msra.mxu0 %v457
    %1194 = vmatprep.subr.bf16.mxu0 %v461
    %1195 = vmatpush1.bf16.msra.mxu0 %v460
    %1196 = vmatprep.subr.bf16.mxu0 %v464
    %1197 = vmatpush1.bf16.msra.mxu0 %v463
    %1198 = vmatprep.subr.bf16.mxu0 %v467
    %1199 = vmatpush1.bf16.msra.mxu0 %v466
    %1200 = vmatprep.subr.bf16.mxu0 %v470
    %1201 = vmatpush1.bf16.msra.mxu0 %v469
    %1202 = vmatprep.subr.bf16.mxu0 %v473
    %1203 = vmatpush1.bf16.msra.mxu0 %v472
    %1204 = vmatprep.subr.bf16.mxu0 0
    %1205 = vmatpush1.bf16.msra.mxu0 0
    %1206 = vmatprep.subr.bf16.mxu0 0
    %1207 = vmatpush1.bf16.msra.mxu0 0
    %1208 = vmatprep.subr.bf16.mxu0 0
    %1209 = vmatpush1.bf16.msra.mxu0 0
    %1210 = vmatprep.subr.bf16.mxu0 0
    %1211 = vmatpush1.bf16.msra.mxu0 0
    %1212 = vmatprep.subr.bf16.mxu0 0
    %1213 = vmatpush1.bf16.msra.mxu0 0
    %1214 = vmatprep.subr.bf16.mxu0 0
    %1215 = vmatpush1.bf16.msra.mxu0 0
    %1216 = vmatprep.subr.bf16.mxu0 0
    %1217 = vmatpush1.bf16.msra.mxu0 0
    %1218 = vmatprep.subr.bf16.mxu0 0
    %1219 = vmatpush1.bf16.msra.mxu0 0
    %1220 = vmatprep.mubr.bf16.mxu0 0
    %1221 = vmatmul.mubr.bf16.gmra.mrb[0].mxu0 %v1186
    %v1222 = vpop.f32.mrb[0].mxu0
    %v1223 = vadd.f32 0.0, %v1222
    %v1224 = vpop.f32.mrb[0].mxu0
    %v1225 = vadd.f32 0.0, %v1224
    %v1226 = vpop.f32.mrb[0].mxu0
    %v1227 = vpop.f32.mrb[0].mxu0
    %1228 = vdwg.mxu0
    %1229 = vmatprep.subr.bf16.mxu0 0
    %1230 = vmatpush1.bf16.msra.mxu0 %v453
    %1231 = vmatprep.subr.bf16.mxu0 0
    %1232 = vmatpush1.bf16.msra.mxu0 %v456
    %1233 = vmatprep.subr.bf16.mxu0 0
    %1234 = vmatpush1.bf16.msra.mxu0 %v459
    %1235 = vmatprep.subr.bf16.mxu0 0
    %1236 = vmatpush1.bf16.msra.mxu0 %v462
    %1237 = vmatprep.subr.bf16.mxu0 0
    %1238 = vmatpush1.bf16.msra.mxu0 %v465
    %1239 = vmatprep.subr.bf16.mxu0 0
    %1240 = vmatpush1.bf16.msra.mxu0 %v468
    %1241 = vmatprep.subr.bf16.mxu0 0
    %1242 = vmatpush1.bf16.msra.mxu0 %v471
    %1243 = vmatprep.subr.bf16.mxu0 0
    %1244 = vmatpush1.bf16.msra.mxu0 %v474
    %1245 = vmatprep.subr.bf16.mxu0 0
    %1246 = vmatpush1.bf16.msra.mxu0 0
    %1247 = vmatprep.subr.bf16.mxu0 0
    %1248 = vmatpush1.bf16.msra.mxu0 0
    %1249 = vmatprep.subr.bf16.mxu0 0
    %1250 = vmatpush1.bf16.msra.mxu0 0
    %1251 = vmatprep.subr.bf16.mxu0 0
    %1252 = vmatpush1.bf16.msra.mxu0 0
    %1253 = vmatprep.subr.bf16.mxu0 0
    %1254 = vmatpush1.bf16.msra.mxu0 0
    %1255 = vmatprep.subr.bf16.mxu0 0
    %1256 = vmatpush1.bf16.msra.mxu0 0
    %1257 = vmatprep.subr.bf16.mxu0 0
    %1258 = vmatpush1.bf16.msra.mxu0 0
    %1259 = vmatprep.subr.bf16.mxu0 0
    %1260 = vmatpush1.bf16.msra.mxu0 0
    %1261 = vmatprep.mubr.bf16.mxu0 0
    %1262 = vmatmul.mubr.bf16.gmra.mrb[0].mxu0 %v1186
    %v1263 = vpop.f32.mrb[0].mxu0
    %v1264 = vadd.f32 0.0, %v1263
    %v1265 = vpop.f32.mrb[0].mxu0
    %v1266 = vpop.f32.mrb[0].mxu0
    %v1267 = vpop.f32.mrb[0].mxu0
    %1268 = vdwg.mxu0
    %v1271 = vrot.slane %v1223, 2
    %v1272 = vrot.slane %v1225, 2
    %v1275 = vadd.f32 %v292, %v1271
    %v1276 = vadd.f32 %v294, %v1272
    %v1277 = vmul.f32 %v1275, 0.5
    %v1278 = vmul.f32 %v1276, 0.5
    %v1279 = vtanh.pop %v1277
    %v1280 = vtanh.pop %v1278
    %v1281 = vmul.f32 %v1279, 0.5
    %v1282 = vmul.f32 %v1280, 0.5
    %v1283 = vadd.f32 %v1281, 0.5
    %v1284 = vadd.f32 %v1282, 0.5
    %v1285 = vadd.f32 %v1264, %v370
    %v1287 = vrot.slane %v1285, 2
    %v1289 = vmul.f32 %v1283, %v1287
    %v1290 = vadd.f32 %v333, %v1289
    %v1291 = vtanh.pop %v1290
    %v1293 = vrot.slane %v1291, 1
    %v1295 = vsub.f32 %v1181, %v1293
    %v1297 = vrot.slane %v1295, 7
    %v1299 = vmul.f32 %v1284, %v1297
    %v1300 = vadd.f32 %v1291, %v1299
    %v1301 = vpack.c.bf16 %v1300, %v1300
    %v1303 = vrot.slane %v1301, 3
    %1305 = vmatprep.subr.bf16.mxu0 %v452
    %1306 = vmatpush1.bf16.msra.mxu0 %v451
    %1307 = vmatprep.subr.bf16.mxu0 %v455
    %1308 = vmatpush1.bf16.msra.mxu0 %v454
    %1309 = vmatprep.subr.bf16.mxu0 %v458
    %1310 = vmatpush1.bf16.msra.mxu0 %v457
    %1311 = vmatprep.subr.bf16.mxu0 %v461
    %1312 = vmatpush1.bf16.msra.mxu0 %v460
    %1313 = vmatprep.subr.bf16.mxu0 %v464
    %1314 = vmatpush1.bf16.msra.mxu0 %v463
    %1315 = vmatprep.subr.bf16.mxu0 %v467
    %1316 = vmatpush1.bf16.msra.mxu0 %v466
    %1317 = vmatprep.subr.bf16.mxu0 %v470
    %1318 = vmatpush1.bf16.msra.mxu0 %v469
    %1319 = vmatprep.subr.bf16.mxu0 %v473
    %1320 = vmatpush1.bf16.msra.mxu0 %v472
    %1321 = vmatprep.subr.bf16.mxu0 0
    %1322 = vmatpush1.bf16.msra.mxu0 0
    %1323 = vmatprep.subr.bf16.mxu0 0
    %1324 = vmatpush1.bf16.msra.mxu0 0
    %1325 = vmatprep.subr.bf16.mxu0 0
    %1326 = vmatpush1.bf16.msra.mxu0 0
    %1327 = vmatprep.subr.bf16.mxu0 0
    %1328 = vmatpush1.bf16.msra.mxu0 0
    %1329 = vmatprep.subr.bf16.mxu0 0
    %1330 = vmatpush1.bf16.msra.mxu0 0
    %1331 = vmatprep.subr.bf16.mxu0 0
    %1332 = vmatpush1.bf16.msra.mxu0 0
    %1333 = vmatprep.subr.bf16.mxu0 0
    %1334 = vmatpush1.bf16.msra.mxu0 0
    %1335 = vmatprep.subr.bf16.mxu0 0
    %1336 = vmatpush1.bf16.msra.mxu0 0
    %1337 = vmatprep.mubr.bf16.mxu0 0
    %1338 = vmatmul.mubr.bf16.gmra.mrb[0].mxu0 %v1303
    %v1339 = vpop.f32.mrb[0].mxu0
    %v1340 = vadd.f32 0.0, %v1339
    %v1341 = vpop.f32.mrb[0].mxu0
    %v1342 = vadd.f32 0.0, %v1341
    %v1343 = vpop.f32.mrb[0].mxu0
    %v1344 = vpop.f32.mrb[0].mxu0
    %1345 = vdwg.mxu0
    %1346 = vmatprep.subr.bf16.mxu0 0
    %1347 = vmatpush1.bf16.msra.mxu0 %v453
    %1348 = vmatprep.subr.bf16.mxu0 0
    %1349 = vmatpush1.bf16.msra.mxu0 %v456
    %1350 = vmatprep.subr.bf16.mxu0 0
    %1351 = vmatpush1.bf16.msra.mxu0 %v459
    %1352 = vmatprep.subr.bf16.mxu0 0
    %1353 = vmatpush1.bf16.msra.mxu0 %v462
    %1354 = vmatprep.subr.bf16.mxu0 0
    %1355 = vmatpush1.bf16.msra.mxu0 %v465
    %1356 = vmatprep.subr.bf16.mxu0 0
    %1357 = vmatpush1.bf16.msra.mxu0 %v468
    %1358 = vmatprep.subr.bf16.mxu0 0
    %1359 = vmatpush1.bf16.msra.mxu0 %v471
    %1360 = vmatprep.subr.bf16.mxu0 0
    %1361 = vmatpush1.bf16.msra.mxu0 %v474
    %1362 = vmatprep.subr.bf16.mxu0 0
    %1363 = vmatpush1.bf16.msra.mxu0 0
    %1364 = vmatprep.subr.bf16.mxu0 0
    %1365 = vmatpush1.bf16.msra.mxu0 0
    %1366 = vmatprep.subr.bf16.mxu0 0
    %1367 = vmatpush1.bf16.msra.mxu0 0
    %1368 = vmatprep.subr.bf16.mxu0 0
    %1369 = vmatpush1.bf16.msra.mxu0 0
    %1370 = vmatprep.subr.bf16.mxu0 0
    %1371 = vmatpush1.bf16.msra.mxu0 0
    %1372 = vmatprep.subr.bf16.mxu0 0
    %1373 = vmatpush1.bf16.msra.mxu0 0
    %1374 = vmatprep.subr.bf16.mxu0 0
    %1375 = vmatpush1.bf16.msra.mxu0 0
    %1376 = vmatprep.subr.bf16.mxu0 0
    %1377 = vmatpush1.bf16.msra.mxu0 0
    %1378 = vmatprep.mubr.bf16.mxu0 0
    %1379 = vmatmul.mubr.bf16.gmra.mrb[0].mxu0 %v1303
    %v1380 = vpop.f32.mrb[0].mxu0
    %v1381 = vadd.f32 0.0, %v1380
    %v1382 = vpop.f32.mrb[0].mxu0
    %v1383 = vpop.f32.mrb[0].mxu0
    %v1384 = vpop.f32.mrb[0].mxu0
    %1385 = vdwg.mxu0
    %v1388 = vrot.slane %v1340, 1
    %v1389 = vrot.slane %v1342, 1
    %v1392 = vadd.f32 %v292, %v1388
    %v1393 = vadd.f32 %v294, %v1389
    %v1394 = vmul.f32 %v1392, 0.5
    %v1395 = vmul.f32 %v1393, 0.5
    %v1396 = vtanh.pop %v1394
    %v1397 = vtanh.pop %v1395
    %v1398 = vmul.f32 %v1396, 0.5
    %v1399 = vmul.f32 %v1397, 0.5
    %v1400 = vadd.f32 %v1398, 0.5
    %v1401 = vadd.f32 %v1399, 0.5
    %v1402 = vadd.f32 %v1381, %v370
    %v1404 = vrot.slane %v1402, 1
    %v1406 = vmul.f32 %v1400, %v1404
    %v1407 = vadd.f32 %v333, %v1406
    %v1408 = vtanh.pop %v1407
    %v1410 = vrot.slane %v1408, 1
    %v1412 = vsub.f32 %v1300, %v1410
    %v1414 = vrot.slane %v1412, 7
    %v1416 = vmul.f32 %v1401, %v1414
    %v1417 = vadd.f32 %v1408, %v1416
    %v1418 = vpack.c.bf16 %v1417, %v1417
    %s1419 = scalar_lea.vmem [#allocation4], 192
    %v1420 = vld [vmem:[%s1419] sm:$0xff]
    %v1421 = vld [vmem:[%s1419 + $0x8] sm:$0xf]
    %v1422 = vld [vmem:[%s1419 + $0xc] sm:$0xff]
    %v1423 = vld [vmem:[%s1419 + $0x14] sm:$0xf]
    %v1424 = vld [vmem:[%s1419 + $0x18] sm:$0xff]
    %v1425 = vld [vmem:[%s1419 + $0x20] sm:$0xf]
    %v1426 = vld [vmem:[%s1419 + $0x24] sm:$0xff]
    %v1427 = vld [vmem:[%s1419 + $0x2c] sm:$0xf]
    %v1428 = vld [vmem:[%s1419 + $0x30] sm:$0xff]
    %v1429 = vld [vmem:[%s1419 + $0x38] sm:$0xf]
    %v1430 = vld [vmem:[%s1419 + $0x3c] sm:$0xff]
    %v1431 = vld [vmem:[%s1419 + $0x44] sm:$0xf]
    %v1432 = vld [vmem:[%s1419 + $0x48] sm:$0xff]
    %v1433 = vld [vmem:[%s1419 + $0x50] sm:$0xf]
    %v1434 = vld [vmem:[%s1419 + $0x54] sm:$0xff]
    %v1435 = vld [vmem:[%s1419 + $0x5c] sm:$0xf]
    %v1436 = vld [vmem:[%s1419 + $0x60] sm:$0xff]
    %v1437 = vld [vmem:[%s1419 + $0x68] sm:$0xf]
    %v1438 = vld [vmem:[%s1419 + $0x6c] sm:$0xff]
    %v1439 = vld [vmem:[%s1419 + $0x74] sm:$0xf]
    %v1440 = vld [vmem:[%s1419 + $0x78] sm:$0xff]
    %v1441 = vld [vmem:[%s1419 + $0x80] sm:$0xf]
    %v1442 = vld [vmem:[%s1419 + $0x84] sm:$0xff]
    %v1443 = vld [vmem:[%s1419 + $0x8c] sm:$0xf]
    %v1444 = vld [vmem:[%s1419 + $0x90] sm:$0xff]
    %v1445 = vld [vmem:[%s1419 + $0x98] sm:$0xf]
    %v1446 = vld [vmem:[%s1419 + $0x9c] sm:$0xff]
    %v1447 = vld [vmem:[%s1419 + $0xa4] sm:$0xf]
    %v1448 = vld [vmem:[%s1419 + $0xa8] sm:$0xff]
    %v1449 = vld [vmem:[%s1419 + $0xb0] sm:$0xf]
    %v1450 = vld [vmem:[%s1419 + $0xb4] sm:$0xff]
    %v1451 = vld [vmem:[%s1419 + $0xbc] sm:$0xf]
    %v1452 = vld [vmem:[#allocation7 + $0x1] sm:$0x1]
    %s1453 = scalar_lea.vmem [#allocation2], 192
    %v1454 = vld [vmem:[%s1453] sm:$0xff]
    %v1455 = vld [vmem:[%s1453 + $0x8] sm:$0xf]
    %v1456 = vld [vmem:[%s1453 + $0xc] sm:$0xff]
    %v1457 = vld [vmem:[%s1453 + $0x14] sm:$0xf]
    %v1458 = vld [vmem:[%s1453 + $0x18] sm:$0xff]
    %v1459 = vld [vmem:[%s1453 + $0x20] sm:$0xf]
    %v1460 = vld [vmem:[%s1453 + $0x24] sm:$0xff]
    %v1461 = vld [vmem:[%s1453 + $0x2c] sm:$0xf]
    %v1462 = vld [vmem:[%s1453 + $0x30] sm:$0xff]
    %v1463 = vld [vmem:[%s1453 + $0x38] sm:$0xf]
    %v1464 = vld [vmem:[%s1453 + $0x3c] sm:$0xff]
    %v1465 = vld [vmem:[%s1453 + $0x44] sm:$0xf]
    %v1466 = vld [vmem:[%s1453 + $0x48] sm:$0xff]
    %v1467 = vld [vmem:[%s1453 + $0x50] sm:$0xf]
    %v1468 = vld [vmem:[%s1453 + $0x54] sm:$0xff]
    %v1469 = vld [vmem:[%s1453 + $0x5c] sm:$0xf]
    %v1470 = vld [vmem:[%s1453 + $0x60] sm:$0xff]
    %v1471 = vld [vmem:[%s1453 + $0x68] sm:$0xf]
    %v1472 = vld [vmem:[%s1453 + $0x6c] sm:$0xff]
    %v1473 = vld [vmem:[%s1453 + $0x74] sm:$0xf]
    %v1474 = vld [vmem:[%s1453 + $0x78] sm:$0xff]
    %v1475 = vld [vmem:[%s1453 + $0x80] sm:$0xf]
    %v1476 = vld [vmem:[%s1453 + $0x84] sm:$0xff]
    %v1477 = vld [vmem:[%s1453 + $0x8c] sm:$0xf]
    %v1478 = vld [vmem:[%s1453 + $0x90] sm:$0xff]
    %v1479 = vld [vmem:[%s1453 + $0x98] sm:$0xf]
    %v1480 = vld [vmem:[%s1453 + $0x9c] sm:$0xff]
    %v1481 = vld [vmem:[%s1453 + $0xa4] sm:$0xf]
    %v1482 = vld [vmem:[%s1453 + $0xa8] sm:$0xff]
    %v1483 = vld [vmem:[%s1453 + $0xb0] sm:$0xf]
    %v1484 = vld [vmem:[%s1453 + $0xb4] sm:$0xff]
    %v1485 = vld [vmem:[%s1453 + $0xbc] sm:$0xf]
    %s1486 = scalar_lea.vmem [#allocation6], 1
    %v1487 = vld [vmem:[%s1486] ss:$4 sm:$0x7]
    %v1520 = vunpack.c.l.b16 %v1454
    %v1521 = vunpack.c.h.b16 %v1454
    %v1522 = vunpack.c.l.b16 %v1455
    %v1523 = vunpack.c.l.b16 %v1456
    %v1524 = vunpack.c.h.b16 %v1456
    %v1525 = vunpack.c.l.b16 %v1457
    %v1526 = vunpack.c.l.b16 %v1458
    %v1527 = vunpack.c.h.b16 %v1458
    %v1528 = vunpack.c.l.b16 %v1459
    %v1529 = vunpack.c.l.b16 %v1460
    %v1530 = vunpack.c.h.b16 %v1460
    %v1531 = vunpack.c.l.b16 %v1461
    %v1532 = vunpack.c.l.b16 %v1462
    %v1533 = vunpack.c.h.b16 %v1462
    %v1534 = vunpack.c.l.b16 %v1463
    %v1535 = vunpack.c.l.b16 %v1464
    %v1536 = vunpack.c.h.b16 %v1464
    %v1537 = vunpack.c.l.b16 %v1465
    %v1538 = vunpack.c.l.b16 %v1466
    %v1539 = vunpack.c.h.b16 %v1466
    %v1540 = vunpack.c.l.b16 %v1467
    %v1541 = vunpack.c.l.b16 %v1468
    %v1542 = vunpack.c.h.b16 %v1468
    %v1543 = vunpack.c.l.b16 %v1469
    %v1544 = vunpack.c.l.b16 %v1470
    %v1545 = vunpack.c.h.b16 %v1470
    %v1546 = vunpack.c.l.b16 %v1471
    %v1547 = vunpack.c.l.b16 %v1472
    %v1548 = vunpack.c.h.b16 %v1472
    %v1549 = vunpack.c.l.b16 %v1473
    %v1550 = vunpack.c.l.b16 %v1474
    %v1551 = vunpack.c.h.b16 %v1474
    %v1552 = vunpack.c.l.b16 %v1475
    %v1553 = vunpack.c.l.b16 %v1476
    %v1554 = vunpack.c.h.b16 %v1476
    %v1555 = vunpack.c.l.b16 %v1477
    %v1556 = vunpack.c.l.b16 %v1478
    %v1557 = vunpack.c.h.b16 %v1478
    %v1558 = vunpack.c.l.b16 %v1479
    %v1559 = vunpack.c.l.b16 %v1480
    %v1560 = vunpack.c.h.b16 %v1480
    %v1561 = vunpack.c.l.b16 %v1481
    %v1562 = vunpack.c.l.b16 %v1482
    %v1563 = vunpack.c.h.b16 %v1482
    %v1564 = vunpack.c.l.b16 %v1483
    %v1565 = vunpack.c.l.b16 %v1484
    %v1566 = vunpack.c.h.b16 %v1484
    %v1567 = vunpack.c.l.b16 %v1485
    %v1568 = vpack.c.b16 %v1523, %v1520
    %v1569 = vpack.c.b16 %v1524, %v1521
    %v1570 = vpack.c.b16 %v1525, %v1522
    %v1571 = vpack.c.b16 %v1529, %v1526
    %v1572 = vpack.c.b16 %v1530, %v1527
    %v1573 = vpack.c.b16 %v1531, %v1528
    %v1574 = vpack.c.b16 %v1535, %v1532
    %v1575 = vpack.c.b16 %v1536, %v1533
    %v1576 = vpack.c.b16 %v1537, %v1534
    %v1577 = vpack.c.b16 %v1541, %v1538
    %v1578 = vpack.c.b16 %v1542, %v1539
    %v1579 = vpack.c.b16 %v1543, %v1540
    %v1580 = vpack.c.b16 %v1547, %v1544
    %v1581 = vpack.c.b16 %v1548, %v1545
    %v1582 = vpack.c.b16 %v1549, %v1546
    %v1583 = vpack.c.b16 %v1553, %v1550
    %v1584 = vpack.c.b16 %v1554, %v1551
    %v1585 = vpack.c.b16 %v1555, %v1552
    %v1586 = vpack.c.b16 %v1559, %v1556
    %v1587 = vpack.c.b16 %v1560, %v1557
    %v1588 = vpack.c.b16 %v1561, %v1558
    %v1589 = vpack.c.b16 %v1565, %v1562
    %v1590 = vpack.c.b16 %v1566, %v1563
    %v1591 = vpack.c.b16 %v1567, %v1564
    %v1617 = vlaneseq
    %v1618 = vshrl.u32 %v1617, 7
    %v1619 = vsub.s32 0, %v1618
    %v1620 = vrot.slane %v1487, %v1619
    %v1621 = vlaneseq
    %v1622 = vshrl.u32 %v1621, 7
    %v1623 = vsub.s32 1, %v1622
    %v1624 = vrot.slane %v1487, %v1623
    %v1625 = vlaneseq
    %v1626 = vshrl.u32 %v1625, 7
    %v1627 = vsub.s32 2, %v1626
    %v1628 = vrot.slane %v1487, %v1627
    %1632 = vmatprep.subr.bf16.mxu0 %v1569
    %1633 = vmatpush1.bf16.msra.mxu0 %v1568
    %1634 = vmatprep.subr.bf16.mxu0 %v1572
    %1635 = vmatpush1.bf16.msra.mxu0 %v1571
    %1636 = vmatprep.subr.bf16.mxu0 %v1575
    %1637 = vmatpush1.bf16.msra.mxu0 %v1574
    %1638 = vmatprep.subr.bf16.mxu0 %v1578
    %1639 = vmatpush1.bf16.msra.mxu0 %v1577
    %1640 = vmatprep.subr.bf16.mxu0 %v1581
    %1641 = vmatpush1.bf16.msra.mxu0 %v1580
    %1642 = vmatprep.subr.bf16.mxu0 %v1584
    %1643 = vmatpush1.bf16.msra.mxu0 %v1583
    %1644 = vmatprep.subr.bf16.mxu0 %v1587
    %1645 = vmatpush1.bf16.msra.mxu0 %v1586
    %1646 = vmatprep.subr.bf16.mxu0 %v1590
    %1647 = vmatpush1.bf16.msra.mxu0 %v1589
    %1648 = vmatprep.subr.bf16.mxu0 0
    %1649 = vmatpush1.bf16.msra.mxu0 0
    %1650 = vmatprep.subr.bf16.mxu0 0
    %1651 = vmatpush1.bf16.msra.mxu0 0
    %1652 = vmatprep.subr.bf16.mxu0 0
    %1653 = vmatpush1.bf16.msra.mxu0 0
    %1654 = vmatprep.subr.bf16.mxu0 0
    %1655 = vmatpush1.bf16.msra.mxu0 0
    %1656 = vmatprep.subr.bf16.mxu0 0
    %1657 = vmatpush1.bf16.msra.mxu0 0
    %1658 = vmatprep.subr.bf16.mxu0 0
    %1659 = vmatpush1.bf16.msra.mxu0 0
    %1660 = vmatprep.subr.bf16.mxu0 0
    %1661 = vmatpush1.bf16.msra.mxu0 0
    %1662 = vmatprep.subr.bf16.mxu0 0
    %1663 = vmatpush1.bf16.msra.mxu0 0
    %1664 = vmatprep.mubr.bf16.mxu0 0
    %1665 = vmatmul.mubr.bf16.gmra.mrb[0].mxu0 %v597
    %v1666 = vpop.f32.mrb[0].mxu0
    %v1667 = vadd.f32 %v1620, %v1666
    %v1668 = vpop.f32.mrb[0].mxu0
    %v1669 = vadd.f32 %v1624, %v1668
    %v1670 = vpop.f32.mrb[0].mxu0
    %v1671 = vpop.f32.mrb[0].mxu0
    %1672 = vdwg.mxu0
    %1673 = vmatprep.subr.bf16.mxu0 0
    %1674 = vmatpush1.bf16.msra.mxu0 %v1570
    %1675 = vmatprep.subr.bf16.mxu0 0
    %1676 = vmatpush1.bf16.msra.mxu0 %v1573
    %1677 = vmatprep.subr.bf16.mxu0 0
    %1678 = vmatpush1.bf16.msra.mxu0 %v1576
    %1679 = vmatprep.subr.bf16.mxu0 0
    %1680 = vmatpush1.bf16.msra.mxu0 %v1579
    %1681 = vmatprep.subr.bf16.mxu0 0
    %1682 = vmatpush1.bf16.msra.mxu0 %v1582
    %1683 = vmatprep.subr.bf16.mxu0 0
    %1684 = vmatpush1.bf16.msra.mxu0 %v1585
    %1685 = vmatprep.subr.bf16.mxu0 0
    %1686 = vmatpush1.bf16.msra.mxu0 %v1588
    %1687 = vmatprep.subr.bf16.mxu0 0
    %1688 = vmatpush1.bf16.msra.mxu0 %v1591
    %1689 = vmatprep.subr.bf16.mxu0 0
    %1690 = vmatpush1.bf16.msra.mxu0 0
    %1691 = vmatprep.subr.bf16.mxu0 0
    %1692 = vmatpush1.bf16.msra.mxu0 0
    %1693 = vmatprep.subr.bf16.mxu0 0
    %1694 = vmatpush1.bf16.msra.mxu0 0
    %1695 = vmatprep.subr.bf16.mxu0 0
    %1696 = vmatpush1.bf16.msra.mxu0 0
    %1697 = vmatprep.subr.bf16.mxu0 0
    %1698 = vmatpush1.bf16.msra.mxu0 0
    %1699 = vmatprep.subr.bf16.mxu0 0
    %1700 = vmatpush1.bf16.msra.mxu0 0
    %1701 = vmatprep.subr.bf16.mxu0 0
    %1702 = vmatpush1.bf16.msra.mxu0 0
    %1703 = vmatprep.subr.bf16.mxu0 0
    %1704 = vmatpush1.bf16.msra.mxu0 0
    %1705 = vmatprep.mubr.bf16.mxu0 0
    %1706 = vmatmul.mubr.bf16.gmra.mrb[0].mxu0 %v597
    %v1707 = vpop.f32.mrb[0].mxu0
    %v1708 = vadd.f32 %v1628, %v1707
    %v1709 = vpop.f32.mrb[0].mxu0
    %v1710 = vpop.f32.mrb[0].mxu0
    %v1711 = vpop.f32.mrb[0].mxu0
    %1712 = vdwg.mxu0
    %v1745 = vunpack.c.l.b16 %v1420
    %v1746 = vunpack.c.h.b16 %v1420
    %v1747 = vunpack.c.l.b16 %v1421
    %v1748 = vunpack.c.l.b16 %v1422
    %v1749 = vunpack.c.h.b16 %v1422
    %v1750 = vunpack.c.l.b16 %v1423
    %v1751 = vunpack.c.l.b16 %v1424
    %v1752 = vunpack.c.h.b16 %v1424
    %v1753 = vunpack.c.l.b16 %v1425
    %v1754 = vunpack.c.l.b16 %v1426
    %v1755 = vunpack.c.h.b16 %v1426
    %v1756 = vunpack.c.l.b16 %v1427
    %v1757 = vunpack.c.l.b16 %v1428
    %v1758 = vunpack.c.h.b16 %v1428
    %v1759 = vunpack.c.l.b16 %v1429
    %v1760 = vunpack.c.l.b16 %v1430
    %v1761 = vunpack.c.h.b16 %v1430
    %v1762 = vunpack.c.l.b16 %v1431
    %v1763 = vunpack.c.l.b16 %v1432
    %v1764 = vunpack.c.h.b16 %v1432
    %v1765 = vunpack.c.l.b16 %v1433
    %v1766 = vunpack.c.l.b16 %v1434
    %v1767 = vunpack.c.h.b16 %v1434
    %v1768 = vunpack.c.l.b16 %v1435
    %v1769 = vunpack.c.l.b16 %v1436
    %v1770 = vunpack.c.h.b16 %v1436
    %v1771 = vunpack.c.l.b16 %v1437
    %v1772 = vunpack.c.l.b16 %v1438
    %v1773 = vunpack.c.h.b16 %v1438
    %v1774 = vunpack.c.l.b16 %v1439
    %v1775 = vunpack.c.l.b16 %v1440
    %v1776 = vunpack.c.h.b16 %v1440
    %v1777 = vunpack.c.l.b16 %v1441
    %v1778 = vunpack.c.l.b16 %v1442
    %v1779 = vunpack.c.h.b16 %v1442
    %v1780 = vunpack.c.l.b16 %v1443
    %v1781 = vunpack.c.l.b16 %v1444
    %v1782 = vunpack.c.h.b16 %v1444
    %v1783 = vunpack.c.l.b16 %v1445
    %v1784 = vunpack.c.l.b16 %v1446
    %v1785 = vunpack.c.h.b16 %v1446
    %v1786 = vunpack.c.l.b16 %v1447
    %v1787 = vunpack.c.l.b16 %v1448
    %v1788 = vunpack.c.h.b16 %v1448
    %v1789 = vunpack.c.l.b16 %v1449
    %v1790 = vunpack.c.l.b16 %v1450
    %v1791 = vunpack.c.h.b16 %v1450
    %v1792 = vunpack.c.l.b16 %v1451
    %v1793 = vpack.c.b16 %v1748, %v1745
    %v1794 = vpack.c.b16 %v1749, %v1746
    %v1795 = vpack.c.b16 %v1750, %v1747
    %v1796 = vpack.c.b16 %v1754, %v1751
    %v1797 = vpack.c.b16 %v1755, %v1752
    %v1798 = vpack.c.b16 %v1756, %v1753
    %v1799 = vpack.c.b16 %v1760, %v1757
    %v1800 = vpack.c.b16 %v1761, %v1758
    %v1801 = vpack.c.b16 %v1762, %v1759
    %v1802 = vpack.c.b16 %v1766, %v1763
    %v1803 = vpack.c.b16 %v1767, %v1764
    %v1804 = vpack.c.b16 %v1768, %v1765
    %v1805 = vpack.c.b16 %v1772, %v1769
    %v1806 = vpack.c.b16 %v1773, %v1770
    %v1807 = vpack.c.b16 %v1774, %v1771
    %v1808 = vpack.c.b16 %v1778, %v1775
    %v1809 = vpack.c.b16 %v1779, %v1776
    %v1810 = vpack.c.b16 %v1780, %v1777
    %v1811 = vpack.c.b16 %v1784, %v1781
    %v1812 = vpack.c.b16 %v1785, %v1782
    %v1813 = vpack.c.b16 %v1786, %v1783
    %v1814 = vpack.c.b16 %v1790, %v1787
    %v1815 = vpack.c.b16 %v1791, %v1788
    %v1816 = vpack.c.b16 %v1792, %v1789
    %1841 = vmatprep.subr.bf16.mxu0 %v1794
    %1842 = vmatpush1.bf16.msra.mxu0 %v1793
    %1843 = vmatprep.subr.bf16.mxu0 %v1797
    %1844 = vmatpush1.bf16.msra.mxu0 %v1796
    %1845 = vmatprep.subr.bf16.mxu0 %v1800
    %1846 = vmatpush1.bf16.msra.mxu0 %v1799
    %1847 = vmatprep.subr.bf16.mxu0 %v1803
    %1848 = vmatpush1.bf16.msra.mxu0 %v1802
    %1849 = vmatprep.subr.bf16.mxu0 %v1806
    %1850 = vmatpush1.bf16.msra.mxu0 %v1805
    %1851 = vmatprep.subr.bf16.mxu0 %v1809
    %1852 = vmatpush1.bf16.msra.mxu0 %v1808
    %1853 = vmatprep.subr.bf16.mxu0 %v1812
    %1854 = vmatpush1.bf16.msra.mxu0 %v1811
    %1855 = vmatprep.subr.bf16.mxu0 %v1815
    %1856 = vmatpush1.bf16.msra.mxu0 %v1814
    %1857 = vmatprep.subr.bf16.mxu0 0
    %1858 = vmatpush1.bf16.msra.mxu0 0
    %1859 = vmatprep.subr.bf16.mxu0 0
    %1860 = vmatpush1.bf16.msra.mxu0 0
    %1861 = vmatprep.subr.bf16.mxu0 0
    %1862 = vmatpush1.bf16.msra.mxu0 0
    %1863 = vmatprep.subr.bf16.mxu0 0
    %1864 = vmatpush1.bf16.msra.mxu0 0
    %1865 = vmatprep.subr.bf16.mxu0 0
    %1866 = vmatpush1.bf16.msra.mxu0 0
    %1867 = vmatprep.subr.bf16.mxu0 0
    %1868 = vmatpush1.bf16.msra.mxu0 0
    %1869 = vmatprep.subr.bf16.mxu0 0
    %1870 = vmatpush1.bf16.msra.mxu0 0
    %1871 = vmatprep.subr.bf16.mxu0 0
    %1872 = vmatpush1.bf16.msra.mxu0 0
    %1873 = vmatprep.mubr.bf16.mxu0 0
    %1874 = vmatmul.mubr.bf16.gmra.mrb[0].mxu0 0
    %v1875 = vpop.f32.mrb[0].mxu0
    %v1876 = vadd.f32 0.0, %v1875
    %v1877 = vpop.f32.mrb[0].mxu0
    %v1878 = vadd.f32 0.0, %v1877
    %v1879 = vpop.f32.mrb[0].mxu0
    %v1880 = vpop.f32.mrb[0].mxu0
    %1881 = vdwg.mxu0
    %1882 = vmatprep.subr.bf16.mxu0 0
    %1883 = vmatpush1.bf16.msra.mxu0 %v1795
    %1884 = vmatprep.subr.bf16.mxu0 0
    %1885 = vmatpush1.bf16.msra.mxu0 %v1798
    %1886 = vmatprep.subr.bf16.mxu0 0
    %1887 = vmatpush1.bf16.msra.mxu0 %v1801
    %1888 = vmatprep.subr.bf16.mxu0 0
    %1889 = vmatpush1.bf16.msra.mxu0 %v1804
    %1890 = vmatprep.subr.bf16.mxu0 0
    %1891 = vmatpush1.bf16.msra.mxu0 %v1807
    %1892 = vmatprep.subr.bf16.mxu0 0
    %1893 = vmatpush1.bf16.msra.mxu0 %v1810
    %1894 = vmatprep.subr.bf16.mxu0 0
    %1895 = vmatpush1.bf16.msra.mxu0 %v1813
    %1896 = vmatprep.subr.bf16.mxu0 0
    %1897 = vmatpush1.bf16.msra.mxu0 %v1816
    %1898 = vmatprep.subr.bf16.mxu0 0
    %1899 = vmatpush1.bf16.msra.mxu0 0
    %1900 = vmatprep.subr.bf16.mxu0 0
    %1901 = vmatpush1.bf16.msra.mxu0 0
    %1902 = vmatprep.subr.bf16.mxu0 0
    %1903 = vmatpush1.bf16.msra.mxu0 0
    %1904 = vmatprep.subr.bf16.mxu0 0
    %1905 = vmatpush1.bf16.msra.mxu0 0
    %1906 = vmatprep.subr.bf16.mxu0 0
    %1907 = vmatpush1.bf16.msra.mxu0 0
    %1908 = vmatprep.subr.bf16.mxu0 0
    %1909 = vmatpush1.bf16.msra.mxu0 0
    %1910 = vmatprep.subr.bf16.mxu0 0
    %1911 = vmatpush1.bf16.msra.mxu0 0
    %1912 = vmatprep.subr.bf16.mxu0 0
    %1913 = vmatpush1.bf16.msra.mxu0 0
    %1914 = vmatprep.mubr.bf16.mxu0 0
    %1915 = vmatmul.mubr.bf16.gmra.mrb[0].mxu0 0
    %v1916 = vpop.f32.mrb[0].mxu0
    %v1917 = vadd.f32 0.0, %v1916
    %v1918 = vpop.f32.mrb[0].mxu0
    %v1919 = vpop.f32.mrb[0].mxu0
    %v1920 = vpop.f32.mrb[0].mxu0
    %1921 = vdwg.mxu0
    %v1922 = vadd.f32 %v1667, %v1876
    %v1923 = vadd.f32 %v1669, %v1878
    %v1924 = vmul.f32 %v1922, 0.5
    %v1925 = vmul.f32 %v1923, 0.5
    %v1926 = vtanh.pop %v1924
    %v1927 = vtanh.pop %v1925
    %v1928 = vmul.f32 %v1926, 0.5
    %v1929 = vmul.f32 %v1927, 0.5
    %v1930 = vadd.f32 %v1928, 0.5
    %v1931 = vadd.f32 %v1929, 0.5
    %v1932 = vadd.f32 %v1917, %v1452
    %v1933 = vmul.f32 %v1930, %v1932
    %v1934 = vadd.f32 %v1708, %v1933
    %v1935 = vtanh.pop %v1934
    %v1936 = vsub.f32 0.0, %v1935
    %v1937 = vmul.f32 %v1931, %v1936
    %v1938 = vadd.f32 %v1935, %v1937
    %v1939 = vpack.c.bf16 %v1938, %v1938
    %1940 = vmatprep.subr.bf16.mxu0 %v1569
    %1941 = vmatpush1.bf16.msra.mxu0 %v1568
    %1942 = vmatprep.subr.bf16.mxu0 %v1572
    %1943 = vmatpush1.bf16.msra.mxu0 %v1571
    %1944 = vmatprep.subr.bf16.mxu0 %v1575
    %1945 = vmatpush1.bf16.msra.mxu0 %v1574
    %1946 = vmatprep.subr.bf16.mxu0 %v1578
    %1947 = vmatpush1.bf16.msra.mxu0 %v1577
    %1948 = vmatprep.subr.bf16.mxu0 %v1581
    %1949 = vmatpush1.bf16.msra.mxu0 %v1580
    %1950 = vmatprep.subr.bf16.mxu0 %v1584
    %1951 = vmatpush1.bf16.msra.mxu0 %v1583
    %1952 = vmatprep.subr.bf16.mxu0 %v1587
    %1953 = vmatpush1.bf16.msra.mxu0 %v1586
    %1954 = vmatprep.subr.bf16.mxu0 %v1590
    %1955 = vmatpush1.bf16.msra.mxu0 %v1589
    %1956 = vmatprep.subr.bf16.mxu0 0
    %1957 = vmatpush1.bf16.msra.mxu0 0
    %1958 = vmatprep.subr.bf16.mxu0 0
    %1959 = vmatpush1.bf16.msra.mxu0 0
    %1960 = vmatprep.subr.bf16.mxu0 0
    %1961 = vmatpush1.bf16.msra.mxu0 0
    %1962 = vmatprep.subr.bf16.mxu0 0
    %1963 = vmatpush1.bf16.msra.mxu0 0
    %1964 = vmatprep.subr.bf16.mxu0 0
    %1965 = vmatpush1.bf16.msra.mxu0 0
    %1966 = vmatprep.subr.bf16.mxu0 0
    %1967 = vmatpush1.bf16.msra.mxu0 0
    %1968 = vmatprep.subr.bf16.mxu0 0
    %1969 = vmatpush1.bf16.msra.mxu0 0
    %1970 = vmatprep.subr.bf16.mxu0 0
    %1971 = vmatpush1.bf16.msra.mxu0 0
    %1972 = vmatprep.mubr.bf16.mxu0 0
    %1973 = vmatmul.mubr.bf16.gmra.mrb[0].mxu0 %v713
    %v1974 = vpop.f32.mrb[0].mxu0
    %v1975 = vadd.f32 %v1620, %v1974
    %v1976 = vpop.f32.mrb[0].mxu0
    %v1977 = vadd.f32 %v1624, %v1976
    %v1978 = vpop.f32.mrb[0].mxu0
    %v1979 = vpop.f32.mrb[0].mxu0
    %1980 = vdwg.mxu0
    %1981 = vmatprep.subr.bf16.mxu0 0
    %1982 = vmatpush1.bf16.msra.mxu0 %v1570
    %1983 = vmatprep.subr.bf16.mxu0 0
    %1984 = vmatpush1.bf16.msra.mxu0 %v1573
    %1985 = vmatprep.subr.bf16.mxu0 0
    %1986 = vmatpush1.bf16.msra.mxu0 %v1576
    %1987 = vmatprep.subr.bf16.mxu0 0
    %1988 = vmatpush1.bf16.msra.mxu0 %v1579
    %1989 = vmatprep.subr.bf16.mxu0 0
    %1990 = vmatpush1.bf16.msra.mxu0 %v1582
    %1991 = vmatprep.subr.bf16.mxu0 0
    %1992 = vmatpush1.bf16.msra.mxu0 %v1585
    %1993 = vmatprep.subr.bf16.mxu0 0
    %1994 = vmatpush1.bf16.msra.mxu0 %v1588
    %1995 = vmatprep.subr.bf16.mxu0 0
    %1996 = vmatpush1.bf16.msra.mxu0 %v1591
    %1997 = vmatprep.subr.bf16.mxu0 0
    %1998 = vmatpush1.bf16.msra.mxu0 0
    %1999 = vmatprep.subr.bf16.mxu0 0
    %2000 = vmatpush1.bf16.msra.mxu0 0
    %2001 = vmatprep.subr.bf16.mxu0 0
    %2002 = vmatpush1.bf16.msra.mxu0 0
    %2003 = vmatprep.subr.bf16.mxu0 0
    %2004 = vmatpush1.bf16.msra.mxu0 0
    %2005 = vmatprep.subr.bf16.mxu0 0
    %2006 = vmatpush1.bf16.msra.mxu0 0
    %2007 = vmatprep.subr.bf16.mxu0 0
    %2008 = vmatpush1.bf16.msra.mxu0 0
    %2009 = vmatprep.subr.bf16.mxu0 0
    %2010 = vmatpush1.bf16.msra.mxu0 0
    %2011 = vmatprep.subr.bf16.mxu0 0
    %2012 = vmatpush1.bf16.msra.mxu0 0
    %2013 = vmatprep.mubr.bf16.mxu0 0
    %2014 = vmatmul.mubr.bf16.gmra.mrb[0].mxu0 %v713
    %v2015 = vpop.f32.mrb[0].mxu0
    %v2016 = vadd.f32 %v1628, %v2015
    %v2017 = vpop.f32.mrb[0].mxu0
    %v2018 = vpop.f32.mrb[0].mxu0
    %v2019 = vpop.f32.mrb[0].mxu0
    %2020 = vdwg.mxu0
    %2021 = vmatprep.subr.bf16.mxu0 %v1794
    %2022 = vmatpush1.bf16.msra.mxu0 %v1793
    %2023 = vmatprep.subr.bf16.mxu0 %v1797
    %2024 = vmatpush1.bf16.msra.mxu0 %v1796
    %2025 = vmatprep.subr.bf16.mxu0 %v1800
    %2026 = vmatpush1.bf16.msra.mxu0 %v1799
    %2027 = vmatprep.subr.bf16.mxu0 %v1803
    %2028 = vmatpush1.bf16.msra.mxu0 %v1802
    %2029 = vmatprep.subr.bf16.mxu0 %v1806
    %2030 = vmatpush1.bf16.msra.mxu0 %v1805
    %2031 = vmatprep.subr.bf16.mxu0 %v1809
    %2032 = vmatpush1.bf16.msra.mxu0 %v1808
    %2033 = vmatprep.subr.bf16.mxu0 %v1812
    %2034 = vmatpush1.bf16.msra.mxu0 %v1811
    %2035 = vmatprep.subr.bf16.mxu0 %v1815
    %2036 = vmatpush1.bf16.msra.mxu0 %v1814
    %2037 = vmatprep.subr.bf16.mxu0 0
    %2038 = vmatpush1.bf16.msra.mxu0 0
    %2039 = vmatprep.subr.bf16.mxu0 0
    %2040 = vmatpush1.bf16.msra.mxu0 0
    %2041 = vmatprep.subr.bf16.mxu0 0
    %2042 = vmatpush1.bf16.msra.mxu0 0
    %2043 = vmatprep.subr.bf16.mxu0 0
    %2044 = vmatpush1.bf16.msra.mxu0 0
    %2045 = vmatprep.subr.bf16.mxu0 0
    %2046 = vmatpush1.bf16.msra.mxu0 0
    %2047 = vmatprep.subr.bf16.mxu0 0
    %2048 = vmatpush1.bf16.msra.mxu0 0
    %2049 = vmatprep.subr.bf16.mxu0 0
    %2050 = vmatpush1.bf16.msra.mxu0 0
    %2051 = vmatprep.subr.bf16.mxu0 0
    %2052 = vmatpush1.bf16.msra.mxu0 0
    %2053 = vmatprep.mubr.bf16.mxu0 0
    %2054 = vmatmul.mubr.bf16.gmra.mrb[0].mxu0 %v1939
    %v2055 = vpop.f32.mrb[0].mxu0
    %v2056 = vadd.f32 0.0, %v2055
    %v2057 = vpop.f32.mrb[0].mxu0
    %v2058 = vadd.f32 0.0, %v2057
    %v2059 = vpop.f32.mrb[0].mxu0
    %v2060 = vpop.f32.mrb[0].mxu0
    %2061 = vdwg.mxu0
    %2062 = vmatprep.subr.bf16.mxu0 0
    %2063 = vmatpush1.bf16.msra.mxu0 %v1795
    %2064 = vmatprep.subr.bf16.mxu0 0
    %2065 = vmatpush1.bf16.msra.mxu0 %v1798
    %2066 = vmatprep.subr.bf16.mxu0 0
    %2067 = vmatpush1.bf16.msra.mxu0 %v1801
    %2068 = vmatprep.subr.bf16.mxu0 0
    %2069 = vmatpush1.bf16.msra.mxu0 %v1804
    %2070 = vmatprep.subr.bf16.mxu0 0
    %2071 = vmatpush1.bf16.msra.mxu0 %v1807
    %2072 = vmatprep.subr.bf16.mxu0 0
    %2073 = vmatpush1.bf16.msra.mxu0 %v1810
    %2074 = vmatprep.subr.bf16.mxu0 0
    %2075 = vmatpush1.bf16.msra.mxu0 %v1813
    %2076 = vmatprep.subr.bf16.mxu0 0
    %2077 = vmatpush1.bf16.msra.mxu0 %v1816
    %2078 = vmatprep.subr.bf16.mxu0 0
    %2079 = vmatpush1.bf16.msra.mxu0 0
    %2080 = vmatprep.subr.bf16.mxu0 0
    %2081 = vmatpush1.bf16.msra.mxu0 0
    %2082 = vmatprep.subr.bf16.mxu0 0
    %2083 = vmatpush1.bf16.msra.mxu0 0
    %2084 = vmatprep.subr.bf16.mxu0 0
    %2085 = vmatpush1.bf16.msra.mxu0 0
    %2086 = vmatprep.subr.bf16.mxu0 0
    %2087 = vmatpush1.bf16.msra.mxu0 0
    %2088 = vmatprep.subr.bf16.mxu0 0
    %2089 = vmatpush1.bf16.msra.mxu0 0
    %2090 = vmatprep.subr.bf16.mxu0 0
    %2091 = vmatpush1.bf16.msra.mxu0 0
    %2092 = vmatprep.subr.bf16.mxu0 0
    %2093 = vmatpush1.bf16.msra.mxu0 0
    %2094 = vmatprep.mubr.bf16.mxu0 0
    %2095 = vmatmul.mubr.bf16.gmra.mrb[0].mxu0 %v1939
    %v2096 = vpop.f32.mrb[0].mxu0
    %v2097 = vadd.f32 0.0, %v2096
    %v2098 = vpop.f32.mrb[0].mxu0
    %v2099 = vpop.f32.mrb[0].mxu0
    %v2100 = vpop.f32.mrb[0].mxu0
    %2101 = vdwg.mxu0
    %v2102 = vadd.f32 %v1975, %v2056
    %v2103 = vadd.f32 %v1977, %v2058
    %v2104 = vmul.f32 %v2102, 0.5
    %v2105 = vmul.f32 %v2103, 0.5
    %v2106 = vtanh.pop %v2104
    %v2107 = vtanh.pop %v2105
    %v2108 = vmul.f32 %v2106, 0.5
    %v2109 = vmul.f32 %v2107, 0.5
    %v2110 = vadd.f32 %v2108, 0.5
    %v2111 = vadd.f32 %v2109, 0.5
    %v2112 = vadd.f32 %v2097, %v1452
    %v2113 = vmul.f32 %v2110, %v2112
    %v2114 = vadd.f32 %v2016, %v2113
    %v2115 = vtanh.pop %v2114
    %v2116 = vsub.f32 %v1938, %v2115
    %v2117 = vmul.f32 %v2111, %v2116
    %v2118 = vadd.f32 %v2115, %v2117
    %v2119 = vpack.c.bf16 %v2118, %v2118
    %2120 = vmatprep.subr.bf16.mxu0 %v1569
    %2121 = vmatpush1.bf16.msra.mxu0 %v1568
    %2122 = vmatprep.subr.bf16.mxu0 %v1572
    %2123 = vmatpush1.bf16.msra.mxu0 %v1571
    %2124 = vmatprep.subr.bf16.mxu0 %v1575
    %2125 = vmatpush1.bf16.msra.mxu0 %v1574
    %2126 = vmatprep.subr.bf16.mxu0 %v1578
    %2127 = vmatpush1.bf16.msra.mxu0 %v1577
    %2128 = vmatprep.subr.bf16.mxu0 %v1581
    %2129 = vmatpush1.bf16.msra.mxu0 %v1580
    %2130 = vmatprep.subr.bf16.mxu0 %v1584
    %2131 = vmatpush1.bf16.msra.mxu0 %v1583
    %2132 = vmatprep.subr.bf16.mxu0 %v1587
    %2133 = vmatpush1.bf16.msra.mxu0 %v1586
    %2134 = vmatprep.subr.bf16.mxu0 %v1590
    %2135 = vmatpush1.bf16.msra.mxu0 %v1589
    %2136 = vmatprep.subr.bf16.mxu0 0
    %2137 = vmatpush1.bf16.msra.mxu0 0
    %2138 = vmatprep.subr.bf16.mxu0 0
    %2139 = vmatpush1.bf16.msra.mxu0 0
    %2140 = vmatprep.subr.bf16.mxu0 0
    %2141 = vmatpush1.bf16.msra.mxu0 0
    %2142 = vmatprep.subr.bf16.mxu0 0
    %2143 = vmatpush1.bf16.msra.mxu0 0
    %2144 = vmatprep.subr.bf16.mxu0 0
    %2145 = vmatpush1.bf16.msra.mxu0 0
    %2146 = vmatprep.subr.bf16.mxu0 0
    %2147 = vmatpush1.bf16.msra.mxu0 0
    %2148 = vmatprep.subr.bf16.mxu0 0
    %2149 = vmatpush1.bf16.msra.mxu0 0
    %2150 = vmatprep.subr.bf16.mxu0 0
    %2151 = vmatpush1.bf16.msra.mxu0 0
    %2152 = vmatprep.mubr.bf16.mxu0 0
    %2153 = vmatmul.mubr.bf16.gmra.mrb[0].mxu0 %v831
    %v2154 = vpop.f32.mrb[0].mxu0
    %v2155 = vadd.f32 %v1620, %v2154
    %v2156 = vpop.f32.mrb[0].mxu0
    %v2157 = vadd.f32 %v1624, %v2156
    %v2158 = vpop.f32.mrb[0].mxu0
    %v2159 = vpop.f32.mrb[0].mxu0
    %2160 = vdwg.mxu0
    %2161 = vmatprep.subr.bf16.mxu0 0
    %2162 = vmatpush1.bf16.msra.mxu0 %v1570
    %2163 = vmatprep.subr.bf16.mxu0 0
    %2164 = vmatpush1.bf16.msra.mxu0 %v1573
    %2165 = vmatprep.subr.bf16.mxu0 0
    %2166 = vmatpush1.bf16.msra.mxu0 %v1576
    %2167 = vmatprep.subr.bf16.mxu0 0
    %2168 = vmatpush1.bf16.msra.mxu0 %v1579
    %2169 = vmatprep.subr.bf16.mxu0 0
    %2170 = vmatpush1.bf16.msra.mxu0 %v1582
    %2171 = vmatprep.subr.bf16.mxu0 0
    %2172 = vmatpush1.bf16.msra.mxu0 %v1585
    %2173 = vmatprep.subr.bf16.mxu0 0
    %2174 = vmatpush1.bf16.msra.mxu0 %v1588
    %2175 = vmatprep.subr.bf16.mxu0 0
    %2176 = vmatpush1.bf16.msra.mxu0 %v1591
    %2177 = vmatprep.subr.bf16.mxu0 0
    %2178 = vmatpush1.bf16.msra.mxu0 0
    %2179 = vmatprep.subr.bf16.mxu0 0
    %2180 = vmatpush1.bf16.msra.mxu0 0
    %2181 = vmatprep.subr.bf16.mxu0 0
    %2182 = vmatpush1.bf16.msra.mxu0 0
    %2183 = vmatprep.subr.bf16.mxu0 0
    %2184 = vmatpush1.bf16.msra.mxu0 0
    %2185 = vmatprep.subr.bf16.mxu0 0
    %2186 = vmatpush1.bf16.msra.mxu0 0
    %2187 = vmatprep.subr.bf16.mxu0 0
    %2188 = vmatpush1.bf16.msra.mxu0 0
    %2189 = vmatprep.subr.bf16.mxu0 0
    %2190 = vmatpush1.bf16.msra.mxu0 0
    %2191 = vmatprep.subr.bf16.mxu0 0
    %2192 = vmatpush1.bf16.msra.mxu0 0
    %2193 = vmatprep.mubr.bf16.mxu0 0
    %2194 = vmatmul.mubr.bf16.gmra.mrb[0].mxu0 %v831
    %v2195 = vpop.f32.mrb[0].mxu0
    %v2196 = vadd.f32 %v1628, %v2195
    %v2197 = vpop.f32.mrb[0].mxu0
    %v2198 = vpop.f32.mrb[0].mxu0
    %v2199 = vpop.f32.mrb[0].mxu0
    %2200 = vdwg.mxu0
    %2201 = vmatprep.subr.bf16.mxu0 %v1794
    %2202 = vmatpush1.bf16.msra.mxu0 %v1793
    %2203 = vmatprep.subr.bf16.mxu0 %v1797
    %2204 = vmatpush1.bf16.msra.mxu0 %v1796
    %2205 = vmatprep.subr.bf16.mxu0 %v1800
    %2206 = vmatpush1.bf16.msra.mxu0 %v1799
    %2207 = vmatprep.subr.bf16.mxu0 %v1803
    %2208 = vmatpush1.bf16.msra.mxu0 %v1802
    %2209 = vmatprep.subr.bf16.mxu0 %v1806
    %2210 = vmatpush1.bf16.msra.mxu0 %v1805
    %2211 = vmatprep.subr.bf16.mxu0 %v1809
    %2212 = vmatpush1.bf16.msra.mxu0 %v1808
    %2213 = vmatprep.subr.bf16.mxu0 %v1812
    %2214 = vmatpush1.bf16.msra.mxu0 %v1811
    %2215 = vmatprep.subr.bf16.mxu0 %v1815
    %2216 = vmatpush1.bf16.msra.mxu0 %v1814
    %2217 = vmatprep.subr.bf16.mxu0 0
    %2218 = vmatpush1.bf16.msra.mxu0 0
    %2219 = vmatprep.subr.bf16.mxu0 0
    %2220 = vmatpush1.bf16.msra.mxu0 0
    %2221 = vmatprep.subr.bf16.mxu0 0
    %2222 = vmatpush1.bf16.msra.mxu0 0
    %2223 = vmatprep.subr.bf16.mxu0 0
    %2224 = vmatpush1.bf16.msra.mxu0 0
    %2225 = vmatprep.subr.bf16.mxu0 0
    %2226 = vmatpush1.bf16.msra.mxu0 0
    %2227 = vmatprep.subr.bf16.mxu0 0
    %2228 = vmatpush1.bf16.msra.mxu0 0
    %2229 = vmatprep.subr.bf16.mxu0 0
    %2230 = vmatpush1.bf16.msra.mxu0 0
    %2231 = vmatprep.subr.bf16.mxu0 0
    %2232 = vmatpush1.bf16.msra.mxu0 0
    %2233 = vmatprep.mubr.bf16.mxu0 0
    %2234 = vmatmul.mubr.bf16.gmra.mrb[0].mxu0 %v2119
    %v2235 = vpop.f32.mrb[0].mxu0
    %v2236 = vadd.f32 0.0, %v2235
    %v2237 = vpop.f32.mrb[0].mxu0
    %v2238 = vadd.f32 0.0, %v2237
    %v2239 = vpop.f32.mrb[0].mxu0
    %v2240 = vpop.f32.mrb[0].mxu0
    %2241 = vdwg.mxu0
    %2242 = vmatprep.subr.bf16.mxu0 0
    %2243 = vmatpush1.bf16.msra.mxu0 %v1795
    %2244 = vmatprep.subr.bf16.mxu0 0
    %2245 = vmatpush1.bf16.msra.mxu0 %v1798
    %2246 = vmatprep.subr.bf16.mxu0 0
    %2247 = vmatpush1.bf16.msra.mxu0 %v1801
    %2248 = vmatprep.subr.bf16.mxu0 0
    %2249 = vmatpush1.bf16.msra.mxu0 %v1804
    %2250 = vmatprep.subr.bf16.mxu0 0
    %2251 = vmatpush1.bf16.msra.mxu0 %v1807
    %2252 = vmatprep.subr.bf16.mxu0 0
    %2253 = vmatpush1.bf16.msra.mxu0 %v1810
    %2254 = vmatprep.subr.bf16.mxu0 0
    %2255 = vmatpush1.bf16.msra.mxu0 %v1813
    %2256 = vmatprep.subr.bf16.mxu0 0
    %2257 = vmatpush1.bf16.msra.mxu0 %v1816
    %2258 = vmatprep.subr.bf16.mxu0 0
    %2259 = vmatpush1.bf16.msra.mxu0 0
    %2260 = vmatprep.subr.bf16.mxu0 0
    %2261 = vmatpush1.bf16.msra.mxu0 0
    %2262 = vmatprep.subr.bf16.mxu0 0
    %2263 = vmatpush1.bf16.msra.mxu0 0
    %2264 = vmatprep.subr.bf16.mxu0 0
    %2265 = vmatpush1.bf16.msra.mxu0 0
    %2266 = vmatprep.subr.bf16.mxu0 0
    %2267 = vmatpush1.bf16.msra.mxu0 0
    %2268 = vmatprep.subr.bf16.mxu0 0
    %2269 = vmatpush1.bf16.msra.mxu0 0
    %2270 = vmatprep.subr.bf16.mxu0 0
    %2271 = vmatpush1.bf16.msra.mxu0 0
    %2272 = vmatprep.subr.bf16.mxu0 0
    %2273 = vmatpush1.bf16.msra.mxu0 0
    %2274 = vmatprep.mubr.bf16.mxu0 0
    %2275 = vmatmul.mubr.bf16.gmra.mrb[0].mxu0 %v2119
    %v2276 = vpop.f32.mrb[0].mxu0
    %v2277 = vadd.f32 0.0, %v2276
    %v2278 = vpop.f32.mrb[0].mxu0
    %v2279 = vpop.f32.mrb[0].mxu0
    %v2280 = vpop.f32.mrb[0].mxu0
    %2281 = vdwg.mxu0
    %v2282 = vadd.f32 %v2155, %v2236
    %v2283 = vadd.f32 %v2157, %v2238
    %v2284 = vmul.f32 %v2282, 0.5
    %v2285 = vmul.f32 %v2283, 0.5
    %v2286 = vtanh.pop %v2284
    %v2287 = vtanh.pop %v2285
    %v2288 = vmul.f32 %v2286, 0.5
    %v2289 = vmul.f32 %v2287, 0.5
    %v2290 = vadd.f32 %v2288, 0.5
    %v2291 = vadd.f32 %v2289, 0.5
    %v2292 = vadd.f32 %v2277, %v1452
    %v2293 = vmul.f32 %v2290, %v2292
    %v2294 = vadd.f32 %v2196, %v2293
    %v2295 = vtanh.pop %v2294
    %v2296 = vsub.f32 %v2118, %v2295
    %v2297 = vmul.f32 %v2291, %v2296
    %v2298 = vadd.f32 %v2295, %v2297
    %v2299 = vpack.c.bf16 %v2298, %v2298
    %2300 = vmatprep.subr.bf16.mxu0 %v1569
    %2301 = vmatpush1.bf16.msra.mxu0 %v1568
    %2302 = vmatprep.subr.bf16.mxu0 %v1572
    %2303 = vmatpush1.bf16.msra.mxu0 %v1571
    %2304 = vmatprep.subr.bf16.mxu0 %v1575
    %2305 = vmatpush1.bf16.msra.mxu0 %v1574
    %2306 = vmatprep.subr.bf16.mxu0 %v1578
    %2307 = vmatpush1.bf16.msra.mxu0 %v1577
    %2308 = vmatprep.subr.bf16.mxu0 %v1581
    %2309 = vmatpush1.bf16.msra.mxu0 %v1580
    %2310 = vmatprep.subr.bf16.mxu0 %v1584
    %2311 = vmatpush1.bf16.msra.mxu0 %v1583
    %2312 = vmatprep.subr.bf16.mxu0 %v1587
    %2313 = vmatpush1.bf16.msra.mxu0 %v1586
    %2314 = vmatprep.subr.bf16.mxu0 %v1590
    %2315 = vmatpush1.bf16.msra.mxu0 %v1589
    %2316 = vmatprep.subr.bf16.mxu0 0
    %2317 = vmatpush1.bf16.msra.mxu0 0
    %2318 = vmatprep.subr.bf16.mxu0 0
    %2319 = vmatpush1.bf16.msra.mxu0 0
    %2320 = vmatprep.subr.bf16.mxu0 0
    %2321 = vmatpush1.bf16.msra.mxu0 0
    %2322 = vmatprep.subr.bf16.mxu0 0
    %2323 = vmatpush1.bf16.msra.mxu0 0
    %2324 = vmatprep.subr.bf16.mxu0 0
    %2325 = vmatpush1.bf16.msra.mxu0 0
    %2326 = vmatprep.subr.bf16.mxu0 0
    %2327 = vmatpush1.bf16.msra.mxu0 0
    %2328 = vmatprep.subr.bf16.mxu0 0
    %2329 = vmatpush1.bf16.msra.mxu0 0
    %2330 = vmatprep.subr.bf16.mxu0 0
    %2331 = vmatpush1.bf16.msra.mxu0 0
    %2332 = vmatprep.mubr.bf16.mxu0 0
    %2333 = vmatmul.mubr.bf16.gmra.mrb[0].mxu0 %v950
    %v2334 = vpop.f32.mrb[0].mxu0
    %v2335 = vadd.f32 %v1620, %v2334
    %v2336 = vpop.f32.mrb[0].mxu0
    %v2337 = vadd.f32 %v1624, %v2336
    %v2338 = vpop.f32.mrb[0].mxu0
    %v2339 = vpop.f32.mrb[0].mxu0
    %2340 = vdwg.mxu0
    %2341 = vmatprep.subr.bf16.mxu0 0
    %2342 = vmatpush1.bf16.msra.mxu0 %v1570
    %2343 = vmatprep.subr.bf16.mxu0 0
    %2344 = vmatpush1.bf16.msra.mxu0 %v1573
    %2345 = vmatprep.subr.bf16.mxu0 0
    %2346 = vmatpush1.bf16.msra.mxu0 %v1576
    %2347 = vmatprep.subr.bf16.mxu0 0
    %2348 = vmatpush1.bf16.msra.mxu0 %v1579
    %2349 = vmatprep.subr.bf16.mxu0 0
    %2350 = vmatpush1.bf16.msra.mxu0 %v1582
    %2351 = vmatprep.subr.bf16.mxu0 0
    %2352 = vmatpush1.bf16.msra.mxu0 %v1585
    %2353 = vmatprep.subr.bf16.mxu0 0
    %2354 = vmatpush1.bf16.msra.mxu0 %v1588
    %2355 = vmatprep.subr.bf16.mxu0 0
    %2356 = vmatpush1.bf16.msra.mxu0 %v1591
    %2357 = vmatprep.subr.bf16.mxu0 0
    %2358 = vmatpush1.bf16.msra.mxu0 0
    %2359 = vmatprep.subr.bf16.mxu0 0
    %2360 = vmatpush1.bf16.msra.mxu0 0
    %2361 = vmatprep.subr.bf16.mxu0 0
    %2362 = vmatpush1.bf16.msra.mxu0 0
    %2363 = vmatprep.subr.bf16.mxu0 0
    %2364 = vmatpush1.bf16.msra.mxu0 0
    %2365 = vmatprep.subr.bf16.mxu0 0
    %2366 = vmatpush1.bf16.msra.mxu0 0
    %2367 = vmatprep.subr.bf16.mxu0 0
    %2368 = vmatpush1.bf16.msra.mxu0 0
    %2369 = vmatprep.subr.bf16.mxu0 0
    %2370 = vmatpush1.bf16.msra.mxu0 0
    %2371 = vmatprep.subr.bf16.mxu0 0
    %2372 = vmatpush1.bf16.msra.mxu0 0
    %2373 = vmatprep.mubr.bf16.mxu0 0
    %2374 = vmatmul.mubr.bf16.gmra.mrb[0].mxu0 %v950
    %v2375 = vpop.f32.mrb[0].mxu0
    %v2376 = vadd.f32 %v1628, %v2375
    %v2377 = vpop.f32.mrb[0].mxu0
    %v2378 = vpop.f32.mrb[0].mxu0
    %v2379 = vpop.f32.mrb[0].mxu0
    %2380 = vdwg.mxu0
    %2381 = vmatprep.subr.bf16.mxu0 %v1794
    %2382 = vmatpush1.bf16.msra.mxu0 %v1793
    %2383 = vmatprep.subr.bf16.mxu0 %v1797
    %2384 = vmatpush1.bf16.msra.mxu0 %v1796
    %2385 = vmatprep.subr.bf16.mxu0 %v1800
    %2386 = vmatpush1.bf16.msra.mxu0 %v1799
    %2387 = vmatprep.subr.bf16.mxu0 %v1803
    %2388 = vmatpush1.bf16.msra.mxu0 %v1802
    %2389 = vmatprep.subr.bf16.mxu0 %v1806
    %2390 = vmatpush1.bf16.msra.mxu0 %v1805
    %2391 = vmatprep.subr.bf16.mxu0 %v1809
    %2392 = vmatpush1.bf16.msra.mxu0 %v1808
    %2393 = vmatprep.subr.bf16.mxu0 %v1812
    %2394 = vmatpush1.bf16.msra.mxu0 %v1811
    %2395 = vmatprep.subr.bf16.mxu0 %v1815
    %2396 = vmatpush1.bf16.msra.mxu0 %v1814
    %2397 = vmatprep.subr.bf16.mxu0 0
    %2398 = vmatpush1.bf16.msra.mxu0 0
    %2399 = vmatprep.subr.bf16.mxu0 0
    %2400 = vmatpush1.bf16.msra.mxu0 0
    %2401 = vmatprep.subr.bf16.mxu0 0
    %2402 = vmatpush1.bf16.msra.mxu0 0
    %2403 = vmatprep.subr.bf16.mxu0 0
    %2404 = vmatpush1.bf16.msra.mxu0 0
    %2405 = vmatprep.subr.bf16.mxu0 0
    %2406 = vmatpush1.bf16.msra.mxu0 0
    %2407 = vmatprep.subr.bf16.mxu0 0
    %2408 = vmatpush1.bf16.msra.mxu0 0
    %2409 = vmatprep.subr.bf16.mxu0 0
    %2410 = vmatpush1.bf16.msra.mxu0 0
    %2411 = vmatprep.subr.bf16.mxu0 0
    %2412 = vmatpush1.bf16.msra.mxu0 0
    %2413 = vmatprep.mubr.bf16.mxu0 0
    %2414 = vmatmul.mubr.bf16.gmra.mrb[0].mxu0 %v2299
    %v2415 = vpop.f32.mrb[0].mxu0
    %v2416 = vadd.f32 0.0, %v2415
    %v2417 = vpop.f32.mrb[0].mxu0
    %v2418 = vadd.f32 0.0, %v2417
    %v2419 = vpop.f32.mrb[0].mxu0
    %v2420 = vpop.f32.mrb[0].mxu0
    %2421 = vdwg.mxu0
    %2422 = vmatprep.subr.bf16.mxu0 0
    %2423 = vmatpush1.bf16.msra.mxu0 %v1795
    %2424 = vmatprep.subr.bf16.mxu0 0
    %2425 = vmatpush1.bf16.msra.mxu0 %v1798
    %2426 = vmatprep.subr.bf16.mxu0 0
    %2427 = vmatpush1.bf16.msra.mxu0 %v1801
    %2428 = vmatprep.subr.bf16.mxu0 0
    %2429 = vmatpush1.bf16.msra.mxu0 %v1804
    %2430 = vmatprep.subr.bf16.mxu0 0
    %2431 = vmatpush1.bf16.msra.mxu0 %v1807
    %2432 = vmatprep.subr.bf16.mxu0 0
    %2433 = vmatpush1.bf16.msra.mxu0 %v1810
    %2434 = vmatprep.subr.bf16.mxu0 0
    %2435 = vmatpush1.bf16.msra.mxu0 %v1813
    %2436 = vmatprep.subr.bf16.mxu0 0
    %2437 = vmatpush1.bf16.msra.mxu0 %v1816
    %2438 = vmatprep.subr.bf16.mxu0 0
    %2439 = vmatpush1.bf16.msra.mxu0 0
    %2440 = vmatprep.subr.bf16.mxu0 0
    %2441 = vmatpush1.bf16.msra.mxu0 0
    %2442 = vmatprep.subr.bf16.mxu0 0
    %2443 = vmatpush1.bf16.msra.mxu0 0
    %2444 = vmatprep.subr.bf16.mxu0 0
    %2445 = vmatpush1.bf16.msra.mxu0 0
    %2446 = vmatprep.subr.bf16.mxu0 0
    %2447 = vmatpush1.bf16.msra.mxu0 0
    %2448 = vmatprep.subr.bf16.mxu0 0
    %2449 = vmatpush1.bf16.msra.mxu0 0
    %2450 = vmatprep.subr.bf16.mxu0 0
    %2451 = vmatpush1.bf16.msra.mxu0 0
    %2452 = vmatprep.subr.bf16.mxu0 0
    %2453 = vmatpush1.bf16.msra.mxu0 0
    %2454 = vmatprep.mubr.bf16.mxu0 0
    %2455 = vmatmul.mubr.bf16.gmra.mrb[0].mxu0 %v2299
    %v2456 = vpop.f32.mrb[0].mxu0
    %v2457 = vadd.f32 0.0, %v2456
    %v2458 = vpop.f32.mrb[0].mxu0
    %v2459 = vpop.f32.mrb[0].mxu0
    %v2460 = vpop.f32.mrb[0].mxu0
    %2461 = vdwg.mxu0
    %v2462 = vadd.f32 %v2335, %v2416
    %v2463 = vadd.f32 %v2337, %v2418
    %v2464 = vmul.f32 %v2462, 0.5
    %v2465 = vmul.f32 %v2463, 0.5
    %v2466 = vtanh.pop %v2464
    %v2467 = vtanh.pop %v2465
    %v2468 = vmul.f32 %v2466, 0.5
    %v2469 = vmul.f32 %v2467, 0.5
    %v2470 = vadd.f32 %v2468, 0.5
    %v2471 = vadd.f32 %v2469, 0.5
    %v2472 = vadd.f32 %v2457, %v1452
    %v2473 = vmul.f32 %v2470, %v2472
    %v2474 = vadd.f32 %v2376, %v2473
    %v2475 = vtanh.pop %v2474
    %v2476 = vsub.f32 %v2298, %v2475
    %v2477 = vmul.f32 %v2471, %v2476
    %v2478 = vadd.f32 %v2475, %v2477
    %v2479 = vpack.c.bf16 %v2478, %v2478
    %2480 = vmatprep.subr.bf16.mxu0 %v1569
    %2481 = vmatpush1.bf16.msra.mxu0 %v1568
    %2482 = vmatprep.subr.bf16.mxu0 %v1572
    %2483 = vmatpush1.bf16.msra.mxu0 %v1571
    %2484 = vmatprep.subr.bf16.mxu0 %v1575
    %2485 = vmatpush1.bf16.msra.mxu0 %v1574
    %2486 = vmatprep.subr.bf16.mxu0 %v1578
    %2487 = vmatpush1.bf16.msra.mxu0 %v1577
    %2488 = vmatprep.subr.bf16.mxu0 %v1581
    %2489 = vmatpush1.bf16.msra.mxu0 %v1580
    %2490 = vmatprep.subr.bf16.mxu0 %v1584
    %2491 = vmatpush1.bf16.msra.mxu0 %v1583
    %2492 = vmatprep.subr.bf16.mxu0 %v1587
    %2493 = vmatpush1.bf16.msra.mxu0 %v1586
    %2494 = vmatprep.subr.bf16.mxu0 %v1590
    %2495 = vmatpush1.bf16.msra.mxu0 %v1589
    %2496 = vmatprep.subr.bf16.mxu0 0
    %2497 = vmatpush1.bf16.msra.mxu0 0
    %2498 = vmatprep.subr.bf16.mxu0 0
    %2499 = vmatpush1.bf16.msra.mxu0 0
    %2500 = vmatprep.subr.bf16.mxu0 0
    %2501 = vmatpush1.bf16.msra.mxu0 0
    %2502 = vmatprep.subr.bf16.mxu0 0
    %2503 = vmatpush1.bf16.msra.mxu0 0
    %2504 = vmatprep.subr.bf16.mxu0 0
    %2505 = vmatpush1.bf16.msra.mxu0 0
    %2506 = vmatprep.subr.bf16.mxu0 0
    %2507 = vmatpush1.bf16.msra.mxu0 0
    %2508 = vmatprep.subr.bf16.mxu0 0
    %2509 = vmatpush1.bf16.msra.mxu0 0
    %2510 = vmatprep.subr.bf16.mxu0 0
    %2511 = vmatpush1.bf16.msra.mxu0 0
    %2512 = vmatprep.mubr.bf16.mxu0 0
    %2513 = vmatmul.mubr.bf16.gmra.mrb[0].mxu0 %v1067
    %v2514 = vpop.f32.mrb[0].mxu0
    %v2515 = vadd.f32 %v1620, %v2514
    %v2516 = vpop.f32.mrb[0].mxu0
    %v2517 = vadd.f32 %v1624, %v2516
    %v2518 = vpop.f32.mrb[0].mxu0
    %v2519 = vpop.f32.mrb[0].mxu0
    %2520 = vdwg.mxu0
    %2521 = vmatprep.subr.bf16.mxu0 0
    %2522 = vmatpush1.bf16.msra.mxu0 %v1570
    %2523 = vmatprep.subr.bf16.mxu0 0
    %2524 = vmatpush1.bf16.msra.mxu0 %v1573
    %2525 = vmatprep.subr.bf16.mxu0 0
    %2526 = vmatpush1.bf16.msra.mxu0 %v1576
    %2527 = vmatprep.subr.bf16.mxu0 0
    %2528 = vmatpush1.bf16.msra.mxu0 %v1579
    %2529 = vmatprep.subr.bf16.mxu0 0
    %2530 = vmatpush1.bf16.msra.mxu0 %v1582
    %2531 = vmatprep.subr.bf16.mxu0 0
    %2532 = vmatpush1.bf16.msra.mxu0 %v1585
    %2533 = vmatprep.subr.bf16.mxu0 0
    %2534 = vmatpush1.bf16.msra.mxu0 %v1588
    %2535 = vmatprep.subr.bf16.mxu0 0
    %2536 = vmatpush1.bf16.msra.mxu0 %v1591
    %2537 = vmatprep.subr.bf16.mxu0 0
    %2538 = vmatpush1.bf16.msra.mxu0 0
    %2539 = vmatprep.subr.bf16.mxu0 0
    %2540 = vmatpush1.bf16.msra.mxu0 0
    %2541 = vmatprep.subr.bf16.mxu0 0
    %2542 = vmatpush1.bf16.msra.mxu0 0
    %2543 = vmatprep.subr.bf16.mxu0 0
    %2544 = vmatpush1.bf16.msra.mxu0 0
    %2545 = vmatprep.subr.bf16.mxu0 0
    %2546 = vmatpush1.bf16.msra.mxu0 0
    %2547 = vmatprep.subr.bf16.mxu0 0
    %2548 = vmatpush1.bf16.msra.mxu0 0
    %2549 = vmatprep.subr.bf16.mxu0 0
    %2550 = vmatpush1.bf16.msra.mxu0 0
    %2551 = vmatprep.subr.bf16.mxu0 0
    %2552 = vmatpush1.bf16.msra.mxu0 0
    %2553 = vmatprep.mubr.bf16.mxu0 0
    %2554 = vmatmul.mubr.bf16.gmra.mrb[0].mxu0 %v1067
    %v2555 = vpop.f32.mrb[0].mxu0
    %v2556 = vadd.f32 %v1628, %v2555
    %v2557 = vpop.f32.mrb[0].mxu0
    %v2558 = vpop.f32.mrb[0].mxu0
    %v2559 = vpop.f32.mrb[0].mxu0
    %2560 = vdwg.mxu0
    %2561 = vmatprep.subr.bf16.mxu0 %v1794
    %2562 = vmatpush1.bf16.msra.mxu0 %v1793
    %2563 = vmatprep.subr.bf16.mxu0 %v1797
    %2564 = vmatpush1.bf16.msra.mxu0 %v1796
    %2565 = vmatprep.subr.bf16.mxu0 %v1800
    %2566 = vmatpush1.bf16.msra.mxu0 %v1799
    %2567 = vmatprep.subr.bf16.mxu0 %v1803
    %2568 = vmatpush1.bf16.msra.mxu0 %v1802
    %2569 = vmatprep.subr.bf16.mxu0 %v1806
    %2570 = vmatpush1.bf16.msra.mxu0 %v1805
    %2571 = vmatprep.subr.bf16.mxu0 %v1809
    %2572 = vmatpush1.bf16.msra.mxu0 %v1808
    %2573 = vmatprep.subr.bf16.mxu0 %v1812
    %2574 = vmatpush1.bf16.msra.mxu0 %v1811
    %2575 = vmatprep.subr.bf16.mxu0 %v1815
    %2576 = vmatpush1.bf16.msra.mxu0 %v1814
    %2577 = vmatprep.subr.bf16.mxu0 0
    %2578 = vmatpush1.bf16.msra.mxu0 0
    %2579 = vmatprep.subr.bf16.mxu0 0
    %2580 = vmatpush1.bf16.msra.mxu0 0
    %2581 = vmatprep.subr.bf16.mxu0 0
    %2582 = vmatpush1.bf16.msra.mxu0 0
    %2583 = vmatprep.subr.bf16.mxu0 0
    %2584 = vmatpush1.bf16.msra.mxu0 0
    %2585 = vmatprep.subr.bf16.mxu0 0
    %2586 = vmatpush1.bf16.msra.mxu0 0
    %2587 = vmatprep.subr.bf16.mxu0 0
    %2588 = vmatpush1.bf16.msra.mxu0 0
    %2589 = vmatprep.subr.bf16.mxu0 0
    %2590 = vmatpush1.bf16.msra.mxu0 0
    %2591 = vmatprep.subr.bf16.mxu0 0
    %2592 = vmatpush1.bf16.msra.mxu0 0
    %2593 = vmatprep.mubr.bf16.mxu0 0
    %2594 = vmatmul.mubr.bf16.gmra.mrb[0].mxu0 %v2479
    %v2595 = vpop.f32.mrb[0].mxu0
    %v2596 = vadd.f32 0.0, %v2595
    %v2597 = vpop.f32.mrb[0].mxu0
    %v2598 = vadd.f32 0.0, %v2597
    %v2599 = vpop.f32.mrb[0].mxu0
    %v2600 = vpop.f32.mrb[0].mxu0
    %2601 = vdwg.mxu0
    %2602 = vmatprep.subr.bf16.mxu0 0
    %2603 = vmatpush1.bf16.msra.mxu0 %v1795
    %2604 = vmatprep.subr.bf16.mxu0 0
    %2605 = vmatpush1.bf16.msra.mxu0 %v1798
    %2606 = vmatprep.subr.bf16.mxu0 0
    %2607 = vmatpush1.bf16.msra.mxu0 %v1801
    %2608 = vmatprep.subr.bf16.mxu0 0
    %2609 = vmatpush1.bf16.msra.mxu0 %v1804
    %2610 = vmatprep.subr.bf16.mxu0 0
    %2611 = vmatpush1.bf16.msra.mxu0 %v1807
    %2612 = vmatprep.subr.bf16.mxu0 0
    %2613 = vmatpush1.bf16.msra.mxu0 %v1810
    %2614 = vmatprep.subr.bf16.mxu0 0
    %2615 = vmatpush1.bf16.msra.mxu0 %v1813
    %2616 = vmatprep.subr.bf16.mxu0 0
    %2617 = vmatpush1.bf16.msra.mxu0 %v1816
    %2618 = vmatprep.subr.bf16.mxu0 0
    %2619 = vmatpush1.bf16.msra.mxu0 0
    %2620 = vmatprep.subr.bf16.mxu0 0
    %2621 = vmatpush1.bf16.msra.mxu0 0
    %2622 = vmatprep.subr.bf16.mxu0 0
    %2623 = vmatpush1.bf16.msra.mxu0 0
    %2624 = vmatprep.subr.bf16.mxu0 0
    %2625 = vmatpush1.bf16.msra.mxu0 0
    %2626 = vmatprep.subr.bf16.mxu0 0
    %2627 = vmatpush1.bf16.msra.mxu0 0
    %2628 = vmatprep.subr.bf16.mxu0 0
    %2629 = vmatpush1.bf16.msra.mxu0 0
    %2630 = vmatprep.subr.bf16.mxu0 0
    %2631 = vmatpush1.bf16.msra.mxu0 0
    %2632 = vmatprep.subr.bf16.mxu0 0
    %2633 = vmatpush1.bf16.msra.mxu0 0
    %2634 = vmatprep.mubr.bf16.mxu0 0
    %2635 = vmatmul.mubr.bf16.gmra.mrb[0].mxu0 %v2479
    %v2636 = vpop.f32.mrb[0].mxu0
    %v2637 = vadd.f32 0.0, %v2636
    %v2638 = vpop.f32.mrb[0].mxu0
    %v2639 = vpop.f32.mrb[0].mxu0
    %v2640 = vpop.f32.mrb[0].mxu0
    %2641 = vdwg.mxu0
    %v2642 = vadd.f32 %v2515, %v2596
    %v2643 = vadd.f32 %v2517, %v2598
    %v2644 = vmul.f32 %v2642, 0.5
    %v2645 = vmul.f32 %v2643, 0.5
    %v2646 = vtanh.pop %v2644
    %v2647 = vtanh.pop %v2645
    %v2648 = vmul.f32 %v2646, 0.5
    %v2649 = vmul.f32 %v2647, 0.5
    %v2650 = vadd.f32 %v2648, 0.5
    %v2651 = vadd.f32 %v2649, 0.5
    %v2652 = vadd.f32 %v2637, %v1452
    %v2653 = vmul.f32 %v2650, %v2652
    %v2654 = vadd.f32 %v2556, %v2653
    %v2655 = vtanh.pop %v2654
    %v2656 = vsub.f32 %v2478, %v2655
    %v2657 = vmul.f32 %v2651, %v2656
    %v2658 = vadd.f32 %v2655, %v2657
    %v2659 = vpack.c.bf16 %v2658, %v2658
    %2660 = vmatprep.subr.bf16.mxu0 %v1569
    %2661 = vmatpush1.bf16.msra.mxu0 %v1568
    %2662 = vmatprep.subr.bf16.mxu0 %v1572
    %2663 = vmatpush1.bf16.msra.mxu0 %v1571
    %2664 = vmatprep.subr.bf16.mxu0 %v1575
    %2665 = vmatpush1.bf16.msra.mxu0 %v1574
    %2666 = vmatprep.subr.bf16.mxu0 %v1578
    %2667 = vmatpush1.bf16.msra.mxu0 %v1577
    %2668 = vmatprep.subr.bf16.mxu0 %v1581
    %2669 = vmatpush1.bf16.msra.mxu0 %v1580
    %2670 = vmatprep.subr.bf16.mxu0 %v1584
    %2671 = vmatpush1.bf16.msra.mxu0 %v1583
    %2672 = vmatprep.subr.bf16.mxu0 %v1587
    %2673 = vmatpush1.bf16.msra.mxu0 %v1586
    %2674 = vmatprep.subr.bf16.mxu0 %v1590
    %2675 = vmatpush1.bf16.msra.mxu0 %v1589
    %2676 = vmatprep.subr.bf16.mxu0 0
    %2677 = vmatpush1.bf16.msra.mxu0 0
    %2678 = vmatprep.subr.bf16.mxu0 0
    %2679 = vmatpush1.bf16.msra.mxu0 0
    %2680 = vmatprep.subr.bf16.mxu0 0
    %2681 = vmatpush1.bf16.msra.mxu0 0
    %2682 = vmatprep.subr.bf16.mxu0 0
    %2683 = vmatpush1.bf16.msra.mxu0 0
    %2684 = vmatprep.subr.bf16.mxu0 0
    %2685 = vmatpush1.bf16.msra.mxu0 0
    %2686 = vmatprep.subr.bf16.mxu0 0
    %2687 = vmatpush1.bf16.msra.mxu0 0
    %2688 = vmatprep.subr.bf16.mxu0 0
    %2689 = vmatpush1.bf16.msra.mxu0 0
    %2690 = vmatprep.subr.bf16.mxu0 0
    %2691 = vmatpush1.bf16.msra.mxu0 0
    %2692 = vmatprep.mubr.bf16.mxu0 0
    %2693 = vmatmul.mubr.bf16.gmra.mrb[0].mxu0 %v1186
    %v2694 = vpop.f32.mrb[0].mxu0
    %v2695 = vadd.f32 %v1620, %v2694
    %v2696 = vpop.f32.mrb[0].mxu0
    %v2697 = vadd.f32 %v1624, %v2696
    %v2698 = vpop.f32.mrb[0].mxu0
    %v2699 = vpop.f32.mrb[0].mxu0
    %2700 = vdwg.mxu0
    %2701 = vmatprep.subr.bf16.mxu0 0
    %2702 = vmatpush1.bf16.msra.mxu0 %v1570
    %2703 = vmatprep.subr.bf16.mxu0 0
    %2704 = vmatpush1.bf16.msra.mxu0 %v1573
    %2705 = vmatprep.subr.bf16.mxu0 0
    %2706 = vmatpush1.bf16.msra.mxu0 %v1576
    %2707 = vmatprep.subr.bf16.mxu0 0
    %2708 = vmatpush1.bf16.msra.mxu0 %v1579
    %2709 = vmatprep.subr.bf16.mxu0 0
    %2710 = vmatpush1.bf16.msra.mxu0 %v1582
    %2711 = vmatprep.subr.bf16.mxu0 0
    %2712 = vmatpush1.bf16.msra.mxu0 %v1585
    %2713 = vmatprep.subr.bf16.mxu0 0
    %2714 = vmatpush1.bf16.msra.mxu0 %v1588
    %2715 = vmatprep.subr.bf16.mxu0 0
    %2716 = vmatpush1.bf16.msra.mxu0 %v1591
    %2717 = vmatprep.subr.bf16.mxu0 0
    %2718 = vmatpush1.bf16.msra.mxu0 0
    %2719 = vmatprep.subr.bf16.mxu0 0
    %2720 = vmatpush1.bf16.msra.mxu0 0
    %2721 = vmatprep.subr.bf16.mxu0 0
    %2722 = vmatpush1.bf16.msra.mxu0 0
    %2723 = vmatprep.subr.bf16.mxu0 0
    %2724 = vmatpush1.bf16.msra.mxu0 0
    %2725 = vmatprep.subr.bf16.mxu0 0
    %2726 = vmatpush1.bf16.msra.mxu0 0
    %2727 = vmatprep.subr.bf16.mxu0 0
    %2728 = vmatpush1.bf16.msra.mxu0 0
    %2729 = vmatprep.subr.bf16.mxu0 0
    %2730 = vmatpush1.bf16.msra.mxu0 0
    %2731 = vmatprep.subr.bf16.mxu0 0
    %2732 = vmatpush1.bf16.msra.mxu0 0
    %2733 = vmatprep.mubr.bf16.mxu0 0
    %2734 = vmatmul.mubr.bf16.gmra.mrb[0].mxu0 %v1186
    %v2735 = vpop.f32.mrb[0].mxu0
    %v2736 = vadd.f32 %v1628, %v2735
    %v2737 = vpop.f32.mrb[0].mxu0
    %v2738 = vpop.f32.mrb[0].mxu0
    %v2739 = vpop.f32.mrb[0].mxu0
    %2740 = vdwg.mxu0
    %2741 = vmatprep.subr.bf16.mxu0 %v1794
    %2742 = vmatpush1.bf16.msra.mxu0 %v1793
    %2743 = vmatprep.subr.bf16.mxu0 %v1797
    %2744 = vmatpush1.bf16.msra.mxu0 %v1796
    %2745 = vmatprep.subr.bf16.mxu0 %v1800
    %2746 = vmatpush1.bf16.msra.mxu0 %v1799
    %2747 = vmatprep.subr.bf16.mxu0 %v1803
    %2748 = vmatpush1.bf16.msra.mxu0 %v1802
    %2749 = vmatprep.subr.bf16.mxu0 %v1806
    %2750 = vmatpush1.bf16.msra.mxu0 %v1805
    %2751 = vmatprep.subr.bf16.mxu0 %v1809
    %2752 = vmatpush1.bf16.msra.mxu0 %v1808
    %2753 = vmatprep.subr.bf16.mxu0 %v1812
    %2754 = vmatpush1.bf16.msra.mxu0 %v1811
    %2755 = vmatprep.subr.bf16.mxu0 %v1815
    %2756 = vmatpush1.bf16.msra.mxu0 %v1814
    %2757 = vmatprep.subr.bf16.mxu0 0
    %2758 = vmatpush1.bf16.msra.mxu0 0
    %2759 = vmatprep.subr.bf16.mxu0 0
    %2760 = vmatpush1.bf16.msra.mxu0 0
    %2761 = vmatprep.subr.bf16.mxu0 0
    %2762 = vmatpush1.bf16.msra.mxu0 0
    %2763 = vmatprep.subr.bf16.mxu0 0
    %2764 = vmatpush1.bf16.msra.mxu0 0
    %2765 = vmatprep.subr.bf16.mxu0 0
    %2766 = vmatpush1.bf16.msra.mxu0 0
    %2767 = vmatprep.subr.bf16.mxu0 0
    %2768 = vmatpush1.bf16.msra.mxu0 0
    %2769 = vmatprep.subr.bf16.mxu0 0
    %2770 = vmatpush1.bf16.msra.mxu0 0
    %2771 = vmatprep.subr.bf16.mxu0 0
    %2772 = vmatpush1.bf16.msra.mxu0 0
    %2773 = vmatprep.mubr.bf16.mxu0 0
    %2774 = vmatmul.mubr.bf16.gmra.mrb[0].mxu0 %v2659
    %v2775 = vpop.f32.mrb[0].mxu0
    %v2776 = vadd.f32 0.0, %v2775
    %v2777 = vpop.f32.mrb[0].mxu0
    %v2778 = vadd.f32 0.0, %v2777
    %v2779 = vpop.f32.mrb[0].mxu0
    %v2780 = vpop.f32.mrb[0].mxu0
    %2781 = vdwg.mxu0
    %2782 = vmatprep.subr.bf16.mxu0 0
    %2783 = vmatpush1.bf16.msra.mxu0 %v1795
    %2784 = vmatprep.subr.bf16.mxu0 0
    %2785 = vmatpush1.bf16.msra.mxu0 %v1798
    %2786 = vmatprep.subr.bf16.mxu0 0
    %2787 = vmatpush1.bf16.msra.mxu0 %v1801
    %2788 = vmatprep.subr.bf16.mxu0 0
    %2789 = vmatpush1.bf16.msra.mxu0 %v1804
    %2790 = vmatprep.subr.bf16.mxu0 0
    %2791 = vmatpush1.bf16.msra.mxu0 %v1807
    %2792 = vmatprep.subr.bf16.mxu0 0
    %2793 = vmatpush1.bf16.msra.mxu0 %v1810
    %2794 = vmatprep.subr.bf16.mxu0 0
    %2795 = vmatpush1.bf16.msra.mxu0 %v1813
    %2796 = vmatprep.subr.bf16.mxu0 0
    %2797 = vmatpush1.bf16.msra.mxu0 %v1816
    %2798 = vmatprep.subr.bf16.mxu0 0
    %2799 = vmatpush1.bf16.msra.mxu0 0
    %2800 = vmatprep.subr.bf16.mxu0 0
    %2801 = vmatpush1.bf16.msra.mxu0 0
    %2802 = vmatprep.subr.bf16.mxu0 0
    %2803 = vmatpush1.bf16.msra.mxu0 0
    %2804 = vmatprep.subr.bf16.mxu0 0
    %2805 = vmatpush1.bf16.msra.mxu0 0
    %2806 = vmatprep.subr.bf16.mxu0 0
    %2807 = vmatpush1.bf16.msra.mxu0 0
    %2808 = vmatprep.subr.bf16.mxu0 0
    %2809 = vmatpush1.bf16.msra.mxu0 0
    %2810 = vmatprep.subr.bf16.mxu0 0
    %2811 = vmatpush1.bf16.msra.mxu0 0
    %2812 = vmatprep.subr.bf16.mxu0 0
    %2813 = vmatpush1.bf16.msra.mxu0 0
    %2814 = vmatprep.mubr.bf16.mxu0 0
    %2815 = vmatmul.mubr.bf16.gmra.mrb[0].mxu0 %v2659
    %v2816 = vpop.f32.mrb[0].mxu0
    %v2817 = vadd.f32 0.0, %v2816
    %v2818 = vpop.f32.mrb[0].mxu0
    %v2819 = vpop.f32.mrb[0].mxu0
    %v2820 = vpop.f32.mrb[0].mxu0
    %2821 = vdwg.mxu0
    %v2822 = vadd.f32 %v2695, %v2776
    %v2823 = vadd.f32 %v2697, %v2778
    %v2824 = vmul.f32 %v2822, 0.5
    %v2825 = vmul.f32 %v2823, 0.5
    %v2826 = vtanh.pop %v2824
    %v2827 = vtanh.pop %v2825
    %v2828 = vmul.f32 %v2826, 0.5
    %v2829 = vmul.f32 %v2827, 0.5
    %v2830 = vadd.f32 %v2828, 0.5
    %v2831 = vadd.f32 %v2829, 0.5
    %v2832 = vadd.f32 %v2817, %v1452
    %v2833 = vmul.f32 %v2830, %v2832
    %v2834 = vadd.f32 %v2736, %v2833
    %v2835 = vtanh.pop %v2834
    %v2836 = vsub.f32 %v2658, %v2835
    %v2837 = vmul.f32 %v2831, %v2836
    %v2838 = vadd.f32 %v2835, %v2837
    %v2839 = vpack.c.bf16 %v2838, %v2838
    %2840 = vmatprep.subr.bf16.mxu0 %v1569
    %2841 = vmatpush1.bf16.msra.mxu0 %v1568
    %2842 = vmatprep.subr.bf16.mxu0 %v1572
    %2843 = vmatpush1.bf16.msra.mxu0 %v1571
    %2844 = vmatprep.subr.bf16.mxu0 %v1575
    %2845 = vmatpush1.bf16.msra.mxu0 %v1574
    %2846 = vmatprep.subr.bf16.mxu0 %v1578
    %2847 = vmatpush1.bf16.msra.mxu0 %v1577
    %2848 = vmatprep.subr.bf16.mxu0 %v1581
    %2849 = vmatpush1.bf16.msra.mxu0 %v1580
    %2850 = vmatprep.subr.bf16.mxu0 %v1584
    %2851 = vmatpush1.bf16.msra.mxu0 %v1583
    %2852 = vmatprep.subr.bf16.mxu0 %v1587
    %2853 = vmatpush1.bf16.msra.mxu0 %v1586
    %2854 = vmatprep.subr.bf16.mxu0 %v1590
    %2855 = vmatpush1.bf16.msra.mxu0 %v1589
    %2856 = vmatprep.subr.bf16.mxu0 0
    %2857 = vmatpush1.bf16.msra.mxu0 0
    %2858 = vmatprep.subr.bf16.mxu0 0
    %2859 = vmatpush1.bf16.msra.mxu0 0
    %2860 = vmatprep.subr.bf16.mxu0 0
    %2861 = vmatpush1.bf16.msra.mxu0 0
    %2862 = vmatprep.subr.bf16.mxu0 0
    %2863 = vmatpush1.bf16.msra.mxu0 0
    %2864 = vmatprep.subr.bf16.mxu0 0
    %2865 = vmatpush1.bf16.msra.mxu0 0
    %2866 = vmatprep.subr.bf16.mxu0 0
    %2867 = vmatpush1.bf16.msra.mxu0 0
    %2868 = vmatprep.subr.bf16.mxu0 0
    %2869 = vmatpush1.bf16.msra.mxu0 0
    %2870 = vmatprep.subr.bf16.mxu0 0
    %2871 = vmatpush1.bf16.msra.mxu0 0
    %2872 = vmatprep.mubr.bf16.mxu0 0
    %2873 = vmatmul.mubr.bf16.gmra.mrb[0].mxu0 %v1303
    %v2874 = vpop.f32.mrb[0].mxu0
    %v2875 = vadd.f32 %v1620, %v2874
    %v2876 = vpop.f32.mrb[0].mxu0
    %v2877 = vadd.f32 %v1624, %v2876
    %v2878 = vpop.f32.mrb[0].mxu0
    %v2879 = vpop.f32.mrb[0].mxu0
    %2880 = vdwg.mxu0
    %2881 = vmatprep.subr.bf16.mxu0 0
    %2882 = vmatpush1.bf16.msra.mxu0 %v1570
    %2883 = vmatprep.subr.bf16.mxu0 0
    %2884 = vmatpush1.bf16.msra.mxu0 %v1573
    %2885 = vmatprep.subr.bf16.mxu0 0
    %2886 = vmatpush1.bf16.msra.mxu0 %v1576
    %2887 = vmatprep.subr.bf16.mxu0 0
    %2888 = vmatpush1.bf16.msra.mxu0 %v1579
    %2889 = vmatprep.subr.bf16.mxu0 0
    %2890 = vmatpush1.bf16.msra.mxu0 %v1582
    %2891 = vmatprep.subr.bf16.mxu0 0
    %2892 = vmatpush1.bf16.msra.mxu0 %v1585
    %2893 = vmatprep.subr.bf16.mxu0 0
    %2894 = vmatpush1.bf16.msra.mxu0 %v1588
    %2895 = vmatprep.subr.bf16.mxu0 0
    %2896 = vmatpush1.bf16.msra.mxu0 %v1591
    %2897 = vmatprep.subr.bf16.mxu0 0
    %2898 = vmatpush1.bf16.msra.mxu0 0
    %2899 = vmatprep.subr.bf16.mxu0 0
    %2900 = vmatpush1.bf16.msra.mxu0 0
    %2901 = vmatprep.subr.bf16.mxu0 0
    %2902 = vmatpush1.bf16.msra.mxu0 0
    %2903 = vmatprep.subr.bf16.mxu0 0
    %2904 = vmatpush1.bf16.msra.mxu0 0
    %2905 = vmatprep.subr.bf16.mxu0 0
    %2906 = vmatpush1.bf16.msra.mxu0 0
    %2907 = vmatprep.subr.bf16.mxu0 0
    %2908 = vmatpush1.bf16.msra.mxu0 0
    %2909 = vmatprep.subr.bf16.mxu0 0
    %2910 = vmatpush1.bf16.msra.mxu0 0
    %2911 = vmatprep.subr.bf16.mxu0 0
    %2912 = vmatpush1.bf16.msra.mxu0 0
    %2913 = vmatprep.mubr.bf16.mxu0 0
    %2914 = vmatmul.mubr.bf16.gmra.mrb[0].mxu0 %v1303
    %v2915 = vpop.f32.mrb[0].mxu0
    %v2916 = vadd.f32 %v1628, %v2915
    %v2917 = vpop.f32.mrb[0].mxu0
    %v2918 = vpop.f32.mrb[0].mxu0
    %v2919 = vpop.f32.mrb[0].mxu0
    %2920 = vdwg.mxu0
    %2921 = vmatprep.subr.bf16.mxu0 %v1794
    %2922 = vmatpush1.bf16.msra.mxu0 %v1793
    %2923 = vmatprep.subr.bf16.mxu0 %v1797
    %2924 = vmatpush1.bf16.msra.mxu0 %v1796
    %2925 = vmatprep.subr.bf16.mxu0 %v1800
    %2926 = vmatpush1.bf16.msra.mxu0 %v1799
    %2927 = vmatprep.subr.bf16.mxu0 %v1803
    %2928 = vmatpush1.bf16.msra.mxu0 %v1802
    %2929 = vmatprep.subr.bf16.mxu0 %v1806
    %2930 = vmatpush1.bf16.msra.mxu0 %v1805
    %2931 = vmatprep.subr.bf16.mxu0 %v1809
    %2932 = vmatpush1.bf16.msra.mxu0 %v1808
    %2933 = vmatprep.subr.bf16.mxu0 %v1812
    %2934 = vmatpush1.bf16.msra.mxu0 %v1811
    %2935 = vmatprep.subr.bf16.mxu0 %v1815
    %2936 = vmatpush1.bf16.msra.mxu0 %v1814
    %2937 = vmatprep.subr.bf16.mxu0 0
    %2938 = vmatpush1.bf16.msra.mxu0 0
    %2939 = vmatprep.subr.bf16.mxu0 0
    %2940 = vmatpush1.bf16.msra.mxu0 0
    %2941 = vmatprep.subr.bf16.mxu0 0
    %2942 = vmatpush1.bf16.msra.mxu0 0
    %2943 = vmatprep.subr.bf16.mxu0 0
    %2944 = vmatpush1.bf16.msra.mxu0 0
    %2945 = vmatprep.subr.bf16.mxu0 0
    %2946 = vmatpush1.bf16.msra.mxu0 0
    %2947 = vmatprep.subr.bf16.mxu0 0
    %2948 = vmatpush1.bf16.msra.mxu0 0
    %2949 = vmatprep.subr.bf16.mxu0 0
    %2950 = vmatpush1.bf16.msra.mxu0 0
    %2951 = vmatprep.subr.bf16.mxu0 0
    %2952 = vmatpush1.bf16.msra.mxu0 0
    %2953 = vmatprep.mubr.bf16.mxu0 0
    %2954 = vmatmul.mubr.bf16.gmra.mrb[0].mxu0 %v2839
    %v2955 = vpop.f32.mrb[0].mxu0
    %v2956 = vadd.f32 0.0, %v2955
    %v2957 = vpop.f32.mrb[0].mxu0
    %v2958 = vadd.f32 0.0, %v2957
    %v2959 = vpop.f32.mrb[0].mxu0
    %v2960 = vpop.f32.mrb[0].mxu0
    %2961 = vdwg.mxu0
    %2962 = vmatprep.subr.bf16.mxu0 0
    %2963 = vmatpush1.bf16.msra.mxu0 %v1795
    %2964 = vmatprep.subr.bf16.mxu0 0
    %2965 = vmatpush1.bf16.msra.mxu0 %v1798
    %2966 = vmatprep.subr.bf16.mxu0 0
    %2967 = vmatpush1.bf16.msra.mxu0 %v1801
    %2968 = vmatprep.subr.bf16.mxu0 0
    %2969 = vmatpush1.bf16.msra.mxu0 %v1804
    %2970 = vmatprep.subr.bf16.mxu0 0
    %2971 = vmatpush1.bf16.msra.mxu0 %v1807
    %2972 = vmatprep.subr.bf16.mxu0 0
    %2973 = vmatpush1.bf16.msra.mxu0 %v1810
    %2974 = vmatprep.subr.bf16.mxu0 0
    %2975 = vmatpush1.bf16.msra.mxu0 %v1813
    %2976 = vmatprep.subr.bf16.mxu0 0
    %2977 = vmatpush1.bf16.msra.mxu0 %v1816
    %2978 = vmatprep.subr.bf16.mxu0 0
    %2979 = vmatpush1.bf16.msra.mxu0 0
    %2980 = vmatprep.subr.bf16.mxu0 0
    %2981 = vmatpush1.bf16.msra.mxu0 0
    %2982 = vmatprep.subr.bf16.mxu0 0
    %2983 = vmatpush1.bf16.msra.mxu0 0
    %2984 = vmatprep.subr.bf16.mxu0 0
    %2985 = vmatpush1.bf16.msra.mxu0 0
    %2986 = vmatprep.subr.bf16.mxu0 0
    %2987 = vmatpush1.bf16.msra.mxu0 0
    %2988 = vmatprep.subr.bf16.mxu0 0
    %2989 = vmatpush1.bf16.msra.mxu0 0
    %2990 = vmatprep.subr.bf16.mxu0 0
    %2991 = vmatpush1.bf16.msra.mxu0 0
    %2992 = vmatprep.subr.bf16.mxu0 0
    %2993 = vmatpush1.bf16.msra.mxu0 0
    %2994 = vmatprep.mubr.bf16.mxu0 0
    %2995 = vmatmul.mubr.bf16.gmra.mrb[0].mxu0 %v2839
    %v2996 = vpop.f32.mrb[0].mxu0
    %v2997 = vadd.f32 0.0, %v2996
    %v2998 = vpop.f32.mrb[0].mxu0
    %v2999 = vpop.f32.mrb[0].mxu0
    %v3000 = vpop.f32.mrb[0].mxu0
    %3001 = vdwg.mxu0
    %v3002 = vadd.f32 %v2875, %v2956
    %v3003 = vadd.f32 %v2877, %v2958
    %v3004 = vmul.f32 %v3002, 0.5
    %v3005 = vmul.f32 %v3003, 0.5
    %v3006 = vtanh.pop %v3004
    %v3007 = vtanh.pop %v3005
    %v3008 = vmul.f32 %v3006, 0.5
    %v3009 = vmul.f32 %v3007, 0.5
    %v3010 = vadd.f32 %v3008, 0.5
    %v3011 = vadd.f32 %v3009, 0.5
    %v3012 = vadd.f32 %v2997, %v1452
    %v3013 = vmul.f32 %v3010, %v3012
    %v3014 = vadd.f32 %v2916, %v3013
    %v3015 = vtanh.pop %v3014
    %v3016 = vsub.f32 %v2838, %v3015
    %v3017 = vmul.f32 %v3011, %v3016
    %v3018 = vadd.f32 %v3015, %v3017
    %v3019 = vpack.c.bf16 %v3018, %v3018
    %v3021 = vshrl.u32 %v1418, 16
    %v3023 = vrot.slane %v3021, 3
    %3025 = vmatprep.subr.bf16.mxu0 %v1569
    %3026 = vmatpush1.bf16.msra.mxu0 %v1568
    %3027 = vmatprep.subr.bf16.mxu0 %v1572
    %3028 = vmatpush1.bf16.msra.mxu0 %v1571
    %3029 = vmatprep.subr.bf16.mxu0 %v1575
    %3030 = vmatpush1.bf16.msra.mxu0 %v1574
    %3031 = vmatprep.subr.bf16.mxu0 %v1578
    %3032 = vmatpush1.bf16.msra.mxu0 %v1577
    %3033 = vmatprep.subr.bf16.mxu0 %v1581
    %3034 = vmatpush1.bf16.msra.mxu0 %v1580
    %3035 = vmatprep.subr.bf16.mxu0 %v1584
    %3036 = vmatpush1.bf16.msra.mxu0 %v1583
    %3037 = vmatprep.subr.bf16.mxu0 %v1587
    %3038 = vmatpush1.bf16.msra.mxu0 %v1586
    %3039 = vmatprep.subr.bf16.mxu0 %v1590
    %3040 = vmatpush1.bf16.msra.mxu0 %v1589
    %3041 = vmatprep.subr.bf16.mxu0 0
    %3042 = vmatpush1.bf16.msra.mxu0 0
    %3043 = vmatprep.subr.bf16.mxu0 0
    %3044 = vmatpush1.bf16.msra.mxu0 0
    %3045 = vmatprep.subr.bf16.mxu0 0
    %3046 = vmatpush1.bf16.msra.mxu0 0
    %3047 = vmatprep.subr.bf16.mxu0 0
    %3048 = vmatpush1.bf16.msra.mxu0 0
    %3049 = vmatprep.subr.bf16.mxu0 0
    %3050 = vmatpush1.bf16.msra.mxu0 0
    %3051 = vmatprep.subr.bf16.mxu0 0
    %3052 = vmatpush1.bf16.msra.mxu0 0
    %3053 = vmatprep.subr.bf16.mxu0 0
    %3054 = vmatpush1.bf16.msra.mxu0 0
    %3055 = vmatprep.subr.bf16.mxu0 0
    %3056 = vmatpush1.bf16.msra.mxu0 0
    %3057 = vmatprep.mubr.bf16.mxu0 0
    %3058 = vmatmul.mubr.bf16.gmra.mrb[0].mxu0 %v3023
    %v3059 = vpop.f32.mrb[0].mxu0
    %v3060 = vadd.f32 %v1620, %v3059
    %v3061 = vpop.f32.mrb[0].mxu0
    %v3062 = vadd.f32 %v1624, %v3061
    %v3063 = vpop.f32.mrb[0].mxu0
    %v3064 = vpop.f32.mrb[0].mxu0
    %3065 = vdwg.mxu0
    %3066 = vmatprep.subr.bf16.mxu0 0
    %3067 = vmatpush1.bf16.msra.mxu0 %v1570
    %3068 = vmatprep.subr.bf16.mxu0 0
    %3069 = vmatpush1.bf16.msra.mxu0 %v1573
    %3070 = vmatprep.subr.bf16.mxu0 0
    %3071 = vmatpush1.bf16.msra.mxu0 %v1576
    %3072 = vmatprep.subr.bf16.mxu0 0
    %3073 = vmatpush1.bf16.msra.mxu0 %v1579
    %3074 = vmatprep.subr.bf16.mxu0 0
    %3075 = vmatpush1.bf16.msra.mxu0 %v1582
    %3076 = vmatprep.subr.bf16.mxu0 0
    %3077 = vmatpush1.bf16.msra.mxu0 %v1585
    %3078 = vmatprep.subr.bf16.mxu0 0
    %3079 = vmatpush1.bf16.msra.mxu0 %v1588
    %3080 = vmatprep.subr.bf16.mxu0 0
    %3081 = vmatpush1.bf16.msra.mxu0 %v1591
    %3082 = vmatprep.subr.bf16.mxu0 0
    %3083 = vmatpush1.bf16.msra.mxu0 0
    %3084 = vmatprep.subr.bf16.mxu0 0
    %3085 = vmatpush1.bf16.msra.mxu0 0
    %3086 = vmatprep.subr.bf16.mxu0 0
    %3087 = vmatpush1.bf16.msra.mxu0 0
    %3088 = vmatprep.subr.bf16.mxu0 0
    %3089 = vmatpush1.bf16.msra.mxu0 0
    %3090 = vmatprep.subr.bf16.mxu0 0
    %3091 = vmatpush1.bf16.msra.mxu0 0
    %3092 = vmatprep.subr.bf16.mxu0 0
    %3093 = vmatpush1.bf16.msra.mxu0 0
    %3094 = vmatprep.subr.bf16.mxu0 0
    %3095 = vmatpush1.bf16.msra.mxu0 0
    %3096 = vmatprep.subr.bf16.mxu0 0
    %3097 = vmatpush1.bf16.msra.mxu0 0
    %3098 = vmatprep.mubr.bf16.mxu0 0
    %3099 = vmatmul.mubr.bf16.gmra.mrb[0].mxu0 %v3023
    %v3100 = vpop.f32.mrb[0].mxu0
    %v3101 = vadd.f32 %v1628, %v3100
    %v3102 = vpop.f32.mrb[0].mxu0
    %v3103 = vpop.f32.mrb[0].mxu0
    %v3104 = vpop.f32.mrb[0].mxu0
    %3105 = vdwg.mxu0
    %3106 = vmatprep.subr.bf16.mxu0 %v1794
    %3107 = vmatpush1.bf16.msra.mxu0 %v1793
    %3108 = vmatprep.subr.bf16.mxu0 %v1797
    %3109 = vmatpush1.bf16.msra.mxu0 %v1796
    %3110 = vmatprep.subr.bf16.mxu0 %v1800
    %3111 = vmatpush1.bf16.msra.mxu0 %v1799
    %3112 = vmatprep.subr.bf16.mxu0 %v1803
    %3113 = vmatpush1.bf16.msra.mxu0 %v1802
    %3114 = vmatprep.subr.bf16.mxu0 %v1806
    %3115 = vmatpush1.bf16.msra.mxu0 %v1805
    %3116 = vmatprep.subr.bf16.mxu0 %v1809
    %3117 = vmatpush1.bf16.msra.mxu0 %v1808
    %3118 = vmatprep.subr.bf16.mxu0 %v1812
    %3119 = vmatpush1.bf16.msra.mxu0 %v1811
    %3120 = vmatprep.subr.bf16.mxu0 %v1815
    %3121 = vmatpush1.bf16.msra.mxu0 %v1814
    %3122 = vmatprep.subr.bf16.mxu0 0
    %3123 = vmatpush1.bf16.msra.mxu0 0
    %3124 = vmatprep.subr.bf16.mxu0 0
    %3125 = vmatpush1.bf16.msra.mxu0 0
    %3126 = vmatprep.subr.bf16.mxu0 0
    %3127 = vmatpush1.bf16.msra.mxu0 0
    %3128 = vmatprep.subr.bf16.mxu0 0
    %3129 = vmatpush1.bf16.msra.mxu0 0
    %3130 = vmatprep.subr.bf16.mxu0 0
    %3131 = vmatpush1.bf16.msra.mxu0 0
    %3132 = vmatprep.subr.bf16.mxu0 0
    %3133 = vmatpush1.bf16.msra.mxu0 0
    %3134 = vmatprep.subr.bf16.mxu0 0
    %3135 = vmatpush1.bf16.msra.mxu0 0
    %3136 = vmatprep.subr.bf16.mxu0 0
    %3137 = vmatpush1.bf16.msra.mxu0 0
    %3138 = vmatprep.mubr.bf16.mxu0 0
    %3139 = vmatmul.mubr.bf16.gmra.mrb[0].mxu0 %v3019
    %v3140 = vpop.f32.mrb[0].mxu0
    %v3141 = vadd.f32 0.0, %v3140
    %v3142 = vpop.f32.mrb[0].mxu0
    %v3143 = vadd.f32 0.0, %v3142
    %v3144 = vpop.f32.mrb[0].mxu0
    %v3145 = vpop.f32.mrb[0].mxu0
    %3146 = vdwg.mxu0
    %3147 = vmatprep.subr.bf16.mxu0 0
    %3148 = vmatpush1.bf16.msra.mxu0 %v1795
    %3149 = vmatprep.subr.bf16.mxu0 0
    %3150 = vmatpush1.bf16.msra.mxu0 %v1798
    %3151 = vmatprep.subr.bf16.mxu0 0
    %3152 = vmatpush1.bf16.msra.mxu0 %v1801
    %3153 = vmatprep.subr.bf16.mxu0 0
    %3154 = vmatpush1.bf16.msra.mxu0 %v1804
    %3155 = vmatprep.subr.bf16.mxu0 0
    %3156 = vmatpush1.bf16.msra.mxu0 %v1807
    %3157 = vmatprep.subr.bf16.mxu0 0
    %3158 = vmatpush1.bf16.msra.mxu0 %v1810
    %3159 = vmatprep.subr.bf16.mxu0 0
    %3160 = vmatpush1.bf16.msra.mxu0 %v1813
    %3161 = vmatprep.subr.bf16.mxu0 0
    %3162 = vmatpush1.bf16.msra.mxu0 %v1816
    %3163 = vmatprep.subr.bf16.mxu0 0
    %3164 = vmatpush1.bf16.msra.mxu0 0
    %3165 = vmatprep.subr.bf16.mxu0 0
    %3166 = vmatpush1.bf16.msra.mxu0 0
    %3167 = vmatprep.subr.bf16.mxu0 0
    %3168 = vmatpush1.bf16.msra.mxu0 0
    %3169 = vmatprep.subr.bf16.mxu0 0
    %3170 = vmatpush1.bf16.msra.mxu0 0
    %3171 = vmatprep.subr.bf16.mxu0 0
    %3172 = vmatpush1.bf16.msra.mxu0 0
    %3173 = vmatprep.subr.bf16.mxu0 0
    %3174 = vmatpush1.bf16.msra.mxu0 0
    %3175 = vmatprep.subr.bf16.mxu0 0
    %3176 = vmatpush1.bf16.msra.mxu0 0
    %3177 = vmatprep.subr.bf16.mxu0 0
    %3178 = vmatpush1.bf16.msra.mxu0 0
    %3179 = vmatprep.mubr.bf16.mxu0 0
    %3180 = vmatmul.mubr.bf16.gmra.mrb[0].mxu0 %v3019
    %v3181 = vpop.f32.mrb[0].mxu0
    %v3182 = vadd.f32 0.0, %v3181
    %v3183 = vpop.f32.mrb[0].mxu0
    %v3184 = vpop.f32.mrb[0].mxu0
    %v3185 = vpop.f32.mrb[0].mxu0
    %3186 = vdwg.mxu0
    %v3187 = vadd.f32 %v3060, %v3141
    %v3188 = vadd.f32 %v3062, %v3143
    %v3189 = vmul.f32 %v3187, 0.5
    %v3190 = vmul.f32 %v3188, 0.5
    %v3191 = vtanh.pop %v3189
    %v3192 = vtanh.pop %v3190
    %v3193 = vmul.f32 %v3191, 0.5
    %v3194 = vmul.f32 %v3192, 0.5
    %v3195 = vadd.f32 %v3193, 0.5
    %v3196 = vadd.f32 %v3194, 0.5
    %v3197 = vadd.f32 %v3182, %v1452
    %v3198 = vmul.f32 %v3195, %v3197
    %v3199 = vadd.f32 %v3101, %v3198
    %v3200 = vtanh.pop %v3199
    %v3201 = vsub.f32 %v3018, %v3200
    %v3202 = vmul.f32 %v3196, %v3201
    %v3203 = vadd.f32 %v3200, %v3202
    %v3204 = vpack.c.bf16 %v3203, %v3203
    %s3205 = scalar_lea.vmem [#allocation4], 384
    %v3206 = vld [vmem:[%s3205] sm:$0xff]
    %v3207 = vld [vmem:[%s3205 + $0x8] sm:$0xf]
    %v3208 = vld [vmem:[%s3205 + $0xc] sm:$0xff]
    %v3209 = vld [vmem:[%s3205 + $0x14] sm:$0xf]
    %v3210 = vld [vmem:[%s3205 + $0x18] sm:$0xff]
    %v3211 = vld [vmem:[%s3205 + $0x20] sm:$0xf]
    %v3212 = vld [vmem:[%s3205 + $0x24] sm:$0xff]
    %v3213 = vld [vmem:[%s3205 + $0x2c] sm:$0xf]
    %v3214 = vld [vmem:[%s3205 + $0x30] sm:$0xff]
    %v3215 = vld [vmem:[%s3205 + $0x38] sm:$0xf]
    %v3216 = vld [vmem:[%s3205 + $0x3c] sm:$0xff]
    %v3217 = vld [vmem:[%s3205 + $0x44] sm:$0xf]
    %v3218 = vld [vmem:[%s3205 + $0x48] sm:$0xff]
    %v3219 = vld [vmem:[%s3205 + $0x50] sm:$0xf]
    %v3220 = vld [vmem:[%s3205 + $0x54] sm:$0xff]
    %v3221 = vld [vmem:[%s3205 + $0x5c] sm:$0xf]
    %v3222 = vld [vmem:[%s3205 + $0x60] sm:$0xff]
    %v3223 = vld [vmem:[%s3205 + $0x68] sm:$0xf]
    %v3224 = vld [vmem:[%s3205 + $0x6c] sm:$0xff]
    %v3225 = vld [vmem:[%s3205 + $0x74] sm:$0xf]
    %v3226 = vld [vmem:[%s3205 + $0x78] sm:$0xff]
    %v3227 = vld [vmem:[%s3205 + $0x80] sm:$0xf]
    %v3228 = vld [vmem:[%s3205 + $0x84] sm:$0xff]
    %v3229 = vld [vmem:[%s3205 + $0x8c] sm:$0xf]
    %v3230 = vld [vmem:[%s3205 + $0x90] sm:$0xff]
    %v3231 = vld [vmem:[%s3205 + $0x98] sm:$0xf]
    %v3232 = vld [vmem:[%s3205 + $0x9c] sm:$0xff]
    %v3233 = vld [vmem:[%s3205 + $0xa4] sm:$0xf]
    %v3234 = vld [vmem:[%s3205 + $0xa8] sm:$0xff]
    %v3235 = vld [vmem:[%s3205 + $0xb0] sm:$0xf]
    %v3236 = vld [vmem:[%s3205 + $0xb4] sm:$0xff]
    %v3237 = vld [vmem:[%s3205 + $0xbc] sm:$0xf]
    %v3238 = vld [vmem:[#allocation7 + $0x2] sm:$0x1]
    %s3239 = scalar_lea.vmem [#allocation2], 384
    %v3240 = vld [vmem:[%s3239] sm:$0xff]
    %v3241 = vld [vmem:[%s3239 + $0x8] sm:$0xf]
    %v3242 = vld [vmem:[%s3239 + $0xc] sm:$0xff]
    %v3243 = vld [vmem:[%s3239 + $0x14] sm:$0xf]
    %v3244 = vld [vmem:[%s3239 + $0x18] sm:$0xff]
    %v3245 = vld [vmem:[%s3239 + $0x20] sm:$0xf]
    %v3246 = vld [vmem:[%s3239 + $0x24] sm:$0xff]
    %v3247 = vld [vmem:[%s3239 + $0x2c] sm:$0xf]
    %v3248 = vld [vmem:[%s3239 + $0x30] sm:$0xff]
    %v3249 = vld [vmem:[%s3239 + $0x38] sm:$0xf]
    %v3250 = vld [vmem:[%s3239 + $0x3c] sm:$0xff]
    %v3251 = vld [vmem:[%s3239 + $0x44] sm:$0xf]
    %v3252 = vld [vmem:[%s3239 + $0x48] sm:$0xff]
    %v3253 = vld [vmem:[%s3239 + $0x50] sm:$0xf]
    %v3254 = vld [vmem:[%s3239 + $0x54] sm:$0xff]
    %v3255 = vld [vmem:[%s3239 + $0x5c] sm:$0xf]
    %v3256 = vld [vmem:[%s3239 + $0x60] sm:$0xff]
    %v3257 = vld [vmem:[%s3239 + $0x68] sm:$0xf]
    %v3258 = vld [vmem:[%s3239 + $0x6c] sm:$0xff]
    %v3259 = vld [vmem:[%s3239 + $0x74] sm:$0xf]
    %v3260 = vld [vmem:[%s3239 + $0x78] sm:$0xff]
    %v3261 = vld [vmem:[%s3239 + $0x80] sm:$0xf]
    %v3262 = vld [vmem:[%s3239 + $0x84] sm:$0xff]
    %v3263 = vld [vmem:[%s3239 + $0x8c] sm:$0xf]
    %v3264 = vld [vmem:[%s3239 + $0x90] sm:$0xff]
    %v3265 = vld [vmem:[%s3239 + $0x98] sm:$0xf]
    %v3266 = vld [vmem:[%s3239 + $0x9c] sm:$0xff]
    %v3267 = vld [vmem:[%s3239 + $0xa4] sm:$0xf]
    %v3268 = vld [vmem:[%s3239 + $0xa8] sm:$0xff]
    %v3269 = vld [vmem:[%s3239 + $0xb0] sm:$0xf]
    %v3270 = vld [vmem:[%s3239 + $0xb4] sm:$0xff]
    %v3271 = vld [vmem:[%s3239 + $0xbc] sm:$0xf]
    %s3272 = scalar_lea.vmem [#allocation6], 2
    %v3273 = vld [vmem:[%s3272] ss:$4 sm:$0x7]
    %v3306 = vunpack.c.l.b16 %v3240
    %v3307 = vunpack.c.h.b16 %v3240
    %v3308 = vunpack.c.l.b16 %v3241
    %v3309 = vunpack.c.l.b16 %v3242
    %v3310 = vunpack.c.h.b16 %v3242
    %v3311 = vunpack.c.l.b16 %v3243
    %v3312 = vunpack.c.l.b16 %v3244
    %v3313 = vunpack.c.h.b16 %v3244
    %v3314 = vunpack.c.l.b16 %v3245
    %v3315 = vunpack.c.l.b16 %v3246
    %v3316 = vunpack.c.h.b16 %v3246
    %v3317 = vunpack.c.l.b16 %v3247
    %v3318 = vunpack.c.l.b16 %v3248
    %v3319 = vunpack.c.h.b16 %v3248
    %v3320 = vunpack.c.l.b16 %v3249
    %v3321 = vunpack.c.l.b16 %v3250
    %v3322 = vunpack.c.h.b16 %v3250
    %v3323 = vunpack.c.l.b16 %v3251
    %v3324 = vunpack.c.l.b16 %v3252
    %v3325 = vunpack.c.h.b16 %v3252
    %v3326 = vunpack.c.l.b16 %v3253
    %v3327 = vunpack.c.l.b16 %v3254
    %v3328 = vunpack.c.h.b16 %v3254
    %v3329 = vunpack.c.l.b16 %v3255
    %v3330 = vunpack.c.l.b16 %v3256
    %v3331 = vunpack.c.h.b16 %v3256
    %v3332 = vunpack.c.l.b16 %v3257
    %v3333 = vunpack.c.l.b16 %v3258
    %v3334 = vunpack.c.h.b16 %v3258
    %v3335 = vunpack.c.l.b16 %v3259
    %v3336 = vunpack.c.l.b16 %v3260
    %v3337 = vunpack.c.h.b16 %v3260
    %v3338 = vunpack.c.l.b16 %v3261
    %v3339 = vunpack.c.l.b16 %v3262
    %v3340 = vunpack.c.h.b16 %v3262
    %v3341 = vunpack.c.l.b16 %v3263
    %v3342 = vunpack.c.l.b16 %v3264
    %v3343 = vunpack.c.h.b16 %v3264
    %v3344 = vunpack.c.l.b16 %v3265
    %v3345 = vunpack.c.l.b16 %v3266
    %v3346 = vunpack.c.h.b16 %v3266
    %v3347 = vunpack.c.l.b16 %v3267
    %v3348 = vunpack.c.l.b16 %v3268
    %v3349 = vunpack.c.h.b16 %v3268
    %v3350 = vunpack.c.l.b16 %v3269
    %v3351 = vunpack.c.l.b16 %v3270
    %v3352 = vunpack.c.h.b16 %v3270
    %v3353 = vunpack.c.l.b16 %v3271
    %v3354 = vpack.c.b16 %v3309, %v3306
    %v3355 = vpack.c.b16 %v3310, %v3307
    %v3356 = vpack.c.b16 %v3311, %v3308
    %v3357 = vpack.c.b16 %v3315, %v3312
    %v3358 = vpack.c.b16 %v3316, %v3313
    %v3359 = vpack.c.b16 %v3317, %v3314
    %v3360 = vpack.c.b16 %v3321, %v3318
    %v3361 = vpack.c.b16 %v3322, %v3319
    %v3362 = vpack.c.b16 %v3323, %v3320
    %v3363 = vpack.c.b16 %v3327, %v3324
    %v3364 = vpack.c.b16 %v3328, %v3325
    %v3365 = vpack.c.b16 %v3329, %v3326
    %v3366 = vpack.c.b16 %v3333, %v3330
    %v3367 = vpack.c.b16 %v3334, %v3331
    %v3368 = vpack.c.b16 %v3335, %v3332
    %v3369 = vpack.c.b16 %v3339, %v3336
    %v3370 = vpack.c.b16 %v3340, %v3337
    %v3371 = vpack.c.b16 %v3341, %v3338
    %v3372 = vpack.c.b16 %v3345, %v3342
    %v3373 = vpack.c.b16 %v3346, %v3343
    %v3374 = vpack.c.b16 %v3347, %v3344
    %v3375 = vpack.c.b16 %v3351, %v3348
    %v3376 = vpack.c.b16 %v3352, %v3349
    %v3377 = vpack.c.b16 %v3353, %v3350
    %v3403 = vlaneseq
    %v3404 = vshrl.u32 %v3403, 7
    %v3405 = vsub.s32 0, %v3404
    %v3406 = vrot.slane %v3273, %v3405
    %v3407 = vlaneseq
    %v3408 = vshrl.u32 %v3407, 7
    %v3409 = vsub.s32 1, %v3408
    %v3410 = vrot.slane %v3273, %v3409
    %v3411 = vlaneseq
    %v3412 = vshrl.u32 %v3411, 7
    %v3413 = vsub.s32 2, %v3412
    %v3414 = vrot.slane %v3273, %v3413
    %3418 = vmatprep.subr.bf16.mxu0 %v3355
    %3419 = vmatpush1.bf16.msra.mxu0 %v3354
    %3420 = vmatprep.subr.bf16.mxu0 %v3358
    %3421 = vmatpush1.bf16.msra.mxu0 %v3357
    %3422 = vmatprep.subr.bf16.mxu0 %v3361
    %3423 = vmatpush1.bf16.msra.mxu0 %v3360
    %3424 = vmatprep.subr.bf16.mxu0 %v3364
    %3425 = vmatpush1.bf16.msra.mxu0 %v3363
    %3426 = vmatprep.subr.bf16.mxu0 %v3367
    %3427 = vmatpush1.bf16.msra.mxu0 %v3366
    %3428 = vmatprep.subr.bf16.mxu0 %v3370
    %3429 = vmatpush1.bf16.msra.mxu0 %v3369
    %3430 = vmatprep.subr.bf16.mxu0 %v3373
    %3431 = vmatpush1.bf16.msra.mxu0 %v3372
    %3432 = vmatprep.subr.bf16.mxu0 %v3376
    %3433 = vmatpush1.bf16.msra.mxu0 %v3375
    %3434 = vmatprep.subr.bf16.mxu0 0
    %3435 = vmatpush1.bf16.msra.mxu0 0
    %3436 = vmatprep.subr.bf16.mxu0 0
    %3437 = vmatpush1.bf16.msra.mxu0 0
    %3438 = vmatprep.subr.bf16.mxu0 0
    %3439 = vmatpush1.bf16.msra.mxu0 0
    %3440 = vmatprep.subr.bf16.mxu0 0
    %3441 = vmatpush1.bf16.msra.mxu0 0
    %3442 = vmatprep.subr.bf16.mxu0 0
    %3443 = vmatpush1.bf16.msra.mxu0 0
    %3444 = vmatprep.subr.bf16.mxu0 0
    %3445 = vmatpush1.bf16.msra.mxu0 0
    %3446 = vmatprep.subr.bf16.mxu0 0
    %3447 = vmatpush1.bf16.msra.mxu0 0
    %3448 = vmatprep.subr.bf16.mxu0 0
    %3449 = vmatpush1.bf16.msra.mxu0 0
    %3450 = vmatprep.mubr.bf16.mxu0 0
    %3451 = vmatmul.mubr.bf16.gmra.mrb[0].mxu0 %v1939
    %v3452 = vpop.f32.mrb[0].mxu0
    %v3453 = vadd.f32 %v3406, %v3452
    %v3454 = vpop.f32.mrb[0].mxu0
    %v3455 = vadd.f32 %v3410, %v3454
    %v3456 = vpop.f32.mrb[0].mxu0
    %v3457 = vpop.f32.mrb[0].mxu0
    %3458 = vdwg.mxu0
    %3459 = vmatprep.subr.bf16.mxu0 0
    %3460 = vmatpush1.bf16.msra.mxu0 %v3356
    %3461 = vmatprep.subr.bf16.mxu0 0
    %3462 = vmatpush1.bf16.msra.mxu0 %v3359
    %3463 = vmatprep.subr.bf16.mxu0 0
    %3464 = vmatpush1.bf16.msra.mxu0 %v3362
    %3465 = vmatprep.subr.bf16.mxu0 0
    %3466 = vmatpush1.bf16.msra.mxu0 %v3365
    %3467 = vmatprep.subr.bf16.mxu0 0
    %3468 = vmatpush1.bf16.msra.mxu0 %v3368
    %3469 = vmatprep.subr.bf16.mxu0 0
    %3470 = vmatpush1.bf16.msra.mxu0 %v3371
    %3471 = vmatprep.subr.bf16.mxu0 0
    %3472 = vmatpush1.bf16.msra.mxu0 %v3374
    %3473 = vmatprep.subr.bf16.mxu0 0
    %3474 = vmatpush1.bf16.msra.mxu0 %v3377
    %3475 = vmatprep.subr.bf16.mxu0 0
    %3476 = vmatpush1.bf16.msra.mxu0 0
    %3477 = vmatprep.subr.bf16.mxu0 0
    %3478 = vmatpush1.bf16.msra.mxu0 0
    %3479 = vmatprep.subr.bf16.mxu0 0
    %3480 = vmatpush1.bf16.msra.mxu0 0
    %3481 = vmatprep.subr.bf16.mxu0 0
    %3482 = vmatpush1.bf16.msra.mxu0 0
    %3483 = vmatprep.subr.bf16.mxu0 0
    %3484 = vmatpush1.bf16.msra.mxu0 0
    %3485 = vmatprep.subr.bf16.mxu0 0
    %3486 = vmatpush1.bf16.msra.mxu0 0
    %3487 = vmatprep.subr.bf16.mxu0 0
    %3488 = vmatpush1.bf16.msra.mxu0 0
    %3489 = vmatprep.subr.bf16.mxu0 0
    %3490 = vmatpush1.bf16.msra.mxu0 0
    %3491 = vmatprep.mubr.bf16.mxu0 0
    %3492 = vmatmul.mubr.bf16.gmra.mrb[0].mxu0 %v1939
    %v3493 = vpop.f32.mrb[0].mxu0
    %v3494 = vadd.f32 %v3414, %v3493
    %v3495 = vpop.f32.mrb[0].mxu0
    %v3496 = vpop.f32.mrb[0].mxu0
    %v3497 = vpop.f32.mrb[0].mxu0
    %3498 = vdwg.mxu0
    %v3531 = vunpack.c.l.b16 %v3206
    %v3532 = vunpack.c.h.b16 %v3206
    %v3533 = vunpack.c.l.b16 %v3207
    %v3534 = vunpack.c.l.b16 %v3208
    %v3535 = vunpack.c.h.b16 %v3208
    %v3536 = vunpack.c.l.b16 %v3209
    %v3537 = vunpack.c.l.b16 %v3210
    %v3538 = vunpack.c.h.b16 %v3210
    %v3539 = vunpack.c.l.b16 %v3211
    %v3540 = vunpack.c.l.b16 %v3212
    %v3541 = vunpack.c.h.b16 %v3212
    %v3542 = vunpack.c.l.b16 %v3213
    %v3543 = vunpack.c.l.b16 %v3214
    %v3544 = vunpack.c.h.b16 %v3214
    %v3545 = vunpack.c.l.b16 %v3215
    %v3546 = vunpack.c.l.b16 %v3216
    %v3547 = vunpack.c.h.b16 %v3216
    %v3548 = vunpack.c.l.b16 %v3217
    %v3549 = vunpack.c.l.b16 %v3218
    %v3550 = vunpack.c.h.b16 %v3218
    %v3551 = vunpack.c.l.b16 %v3219
    %v3552 = vunpack.c.l.b16 %v3220
    %v3553 = vunpack.c.h.b16 %v3220
    %v3554 = vunpack.c.l.b16 %v3221
    %v3555 = vunpack.c.l.b16 %v3222
    %v3556 = vunpack.c.h.b16 %v3222
    %v3557 = vunpack.c.l.b16 %v3223
    %v3558 = vunpack.c.l.b16 %v3224
    %v3559 = vunpack.c.h.b16 %v3224
    %v3560 = vunpack.c.l.b16 %v3225
    %v3561 = vunpack.c.l.b16 %v3226
    %v3562 = vunpack.c.h.b16 %v3226
    %v3563 = vunpack.c.l.b16 %v3227
    %v3564 = vunpack.c.l.b16 %v3228
    %v3565 = vunpack.c.h.b16 %v3228
    %v3566 = vunpack.c.l.b16 %v3229
    %v3567 = vunpack.c.l.b16 %v3230
    %v3568 = vunpack.c.h.b16 %v3230
    %v3569 = vunpack.c.l.b16 %v3231
    %v3570 = vunpack.c.l.b16 %v3232
    %v3571 = vunpack.c.h.b16 %v3232
    %v3572 = vunpack.c.l.b16 %v3233
    %v3573 = vunpack.c.l.b16 %v3234
    %v3574 = vunpack.c.h.b16 %v3234
    %v3575 = vunpack.c.l.b16 %v3235
    %v3576 = vunpack.c.l.b16 %v3236
    %v3577 = vunpack.c.h.b16 %v3236
    %v3578 = vunpack.c.l.b16 %v3237
    %v3579 = vpack.c.b16 %v3534, %v3531
    %v3580 = vpack.c.b16 %v3535, %v3532
    %v3581 = vpack.c.b16 %v3536, %v3533
    %v3582 = vpack.c.b16 %v3540, %v3537
    %v3583 = vpack.c.b16 %v3541, %v3538
    %v3584 = vpack.c.b16 %v3542, %v3539
    %v3585 = vpack.c.b16 %v3546, %v3543
    %v3586 = vpack.c.b16 %v3547, %v3544
    %v3587 = vpack.c.b16 %v3548, %v3545
    %v3588 = vpack.c.b16 %v3552, %v3549
    %v3589 = vpack.c.b16 %v3553, %v3550
    %v3590 = vpack.c.b16 %v3554, %v3551
    %v3591 = vpack.c.b16 %v3558, %v3555
    %v3592 = vpack.c.b16 %v3559, %v3556
    %v3593 = vpack.c.b16 %v3560, %v3557
    %v3594 = vpack.c.b16 %v3564, %v3561
    %v3595 = vpack.c.b16 %v3565, %v3562
    %v3596 = vpack.c.b16 %v3566, %v3563
    %v3597 = vpack.c.b16 %v3570, %v3567
    %v3598 = vpack.c.b16 %v3571, %v3568
    %v3599 = vpack.c.b16 %v3572, %v3569
    %v3600 = vpack.c.b16 %v3576, %v3573
    %v3601 = vpack.c.b16 %v3577, %v3574
    %v3602 = vpack.c.b16 %v3578, %v3575
    %3627 = vmatprep.subr.bf16.mxu0 %v3580
    %3628 = vmatpush1.bf16.msra.mxu0 %v3579
    %3629 = vmatprep.subr.bf16.mxu0 %v3583
    %3630 = vmatpush1.bf16.msra.mxu0 %v3582
    %3631 = vmatprep.subr.bf16.mxu0 %v3586
    %3632 = vmatpush1.bf16.msra.mxu0 %v3585
    %3633 = vmatprep.subr.bf16.mxu0 %v3589
    %3634 = vmatpush1.bf16.msra.mxu0 %v3588
    %3635 = vmatprep.subr.bf16.mxu0 %v3592
    %3636 = vmatpush1.bf16.msra.mxu0 %v3591
    %3637 = vmatprep.subr.bf16.mxu0 %v3595
    %3638 = vmatpush1.bf16.msra.mxu0 %v3594
    %3639 = vmatprep.subr.bf16.mxu0 %v3598
    %3640 = vmatpush1.bf16.msra.mxu0 %v3597
    %3641 = vmatprep.subr.bf16.mxu0 %v3601
    %3642 = vmatpush1.bf16.msra.mxu0 %v3600
    %3643 = vmatprep.subr.bf16.mxu0 0
    %3644 = vmatpush1.bf16.msra.mxu0 0
    %3645 = vmatprep.subr.bf16.mxu0 0
    %3646 = vmatpush1.bf16.msra.mxu0 0
    %3647 = vmatprep.subr.bf16.mxu0 0
    %3648 = vmatpush1.bf16.msra.mxu0 0
    %3649 = vmatprep.subr.bf16.mxu0 0
    %3650 = vmatpush1.bf16.msra.mxu0 0
    %3651 = vmatprep.subr.bf16.mxu0 0
    %3652 = vmatpush1.bf16.msra.mxu0 0
    %3653 = vmatprep.subr.bf16.mxu0 0
    %3654 = vmatpush1.bf16.msra.mxu0 0
    %3655 = vmatprep.subr.bf16.mxu0 0
    %3656 = vmatpush1.bf16.msra.mxu0 0
    %3657 = vmatprep.subr.bf16.mxu0 0
    %3658 = vmatpush1.bf16.msra.mxu0 0
    %3659 = vmatprep.mubr.bf16.mxu0 0
    %3660 = vmatmul.mubr.bf16.gmra.mrb[0].mxu0 0
    %v3661 = vpop.f32.mrb[0].mxu0
    %v3662 = vadd.f32 0.0, %v3661
    %v3663 = vpop.f32.mrb[0].mxu0
    %v3664 = vadd.f32 0.0, %v3663
    %v3665 = vpop.f32.mrb[0].mxu0
    %v3666 = vpop.f32.mrb[0].mxu0
    %3667 = vdwg.mxu0
    %3668 = vmatprep.subr.bf16.mxu0 0
    %3669 = vmatpush1.bf16.msra.mxu0 %v3581
    %3670 = vmatprep.subr.bf16.mxu0 0
    %3671 = vmatpush1.bf16.msra.mxu0 %v3584
    %3672 = vmatprep.subr.bf16.mxu0 0
    %3673 = vmatpush1.bf16.msra.mxu0 %v3587
    %3674 = vmatprep.subr.bf16.mxu0 0
    %3675 = vmatpush1.bf16.msra.mxu0 %v3590
    %3676 = vmatprep.subr.bf16.mxu0 0
    %3677 = vmatpush1.bf16.msra.mxu0 %v3593
    %3678 = vmatprep.subr.bf16.mxu0 0
    %3679 = vmatpush1.bf16.msra.mxu0 %v3596
    %3680 = vmatprep.subr.bf16.mxu0 0
    %3681 = vmatpush1.bf16.msra.mxu0 %v3599
    %3682 = vmatprep.subr.bf16.mxu0 0
    %3683 = vmatpush1.bf16.msra.mxu0 %v3602
    %3684 = vmatprep.subr.bf16.mxu0 0
    %3685 = vmatpush1.bf16.msra.mxu0 0
    %3686 = vmatprep.subr.bf16.mxu0 0
    %3687 = vmatpush1.bf16.msra.mxu0 0
    %3688 = vmatprep.subr.bf16.mxu0 0
    %3689 = vmatpush1.bf16.msra.mxu0 0
    %3690 = vmatprep.subr.bf16.mxu0 0
    %3691 = vmatpush1.bf16.msra.mxu0 0
    %3692 = vmatprep.subr.bf16.mxu0 0
    %3693 = vmatpush1.bf16.msra.mxu0 0
    %3694 = vmatprep.subr.bf16.mxu0 0
    %3695 = vmatpush1.bf16.msra.mxu0 0
    %3696 = vmatprep.subr.bf16.mxu0 0
    %3697 = vmatpush1.bf16.msra.mxu0 0
    %3698 = vmatprep.subr.bf16.mxu0 0
    %3699 = vmatpush1.bf16.msra.mxu0 0
    %3700 = vmatprep.mubr.bf16.mxu0 0
    %3701 = vmatmul.mubr.bf16.gmra.mrb[0].mxu0 0
    %v3702 = vpop.f32.mrb[0].mxu0
    %v3703 = vadd.f32 0.0, %v3702
    %v3704 = vpop.f32.mrb[0].mxu0
    %v3705 = vpop.f32.mrb[0].mxu0
    %v3706 = vpop.f32.mrb[0].mxu0
    %3707 = vdwg.mxu0
    %v3708 = vadd.f32 %v3453, %v3662
    %v3709 = vadd.f32 %v3455, %v3664
    %v3710 = vmul.f32 %v3708, 0.5
    %v3711 = vmul.f32 %v3709, 0.5
    %v3712 = vtanh.pop %v3710
    %v3713 = vtanh.pop %v3711
    %v3714 = vmul.f32 %v3712, 0.5
    %v3715 = vmul.f32 %v3713, 0.5
    %v3716 = vadd.f32 %v3714, 0.5
    %v3717 = vadd.f32 %v3715, 0.5
    %v3718 = vadd.f32 %v3703, %v3238
    %v3719 = vmul.f32 %v3716, %v3718
    %v3720 = vadd.f32 %v3494, %v3719
    %v3721 = vtanh.pop %v3720
    %v3722 = vsub.f32 0.0, %v3721
    %v3723 = vmul.f32 %v3717, %v3722
    %v3724 = vadd.f32 %v3721, %v3723
    %v3725 = vpack.c.bf16 %v3724, %v3724
    %3726 = vmatprep.subr.bf16.mxu0 %v3355
    %3727 = vmatpush1.bf16.msra.mxu0 %v3354
    %3728 = vmatprep.subr.bf16.mxu0 %v3358
    %3729 = vmatpush1.bf16.msra.mxu0 %v3357
    %3730 = vmatprep.subr.bf16.mxu0 %v3361
    %3731 = vmatpush1.bf16.msra.mxu0 %v3360
    %3732 = vmatprep.subr.bf16.mxu0 %v3364
    %3733 = vmatpush1.bf16.msra.mxu0 %v3363
    %3734 = vmatprep.subr.bf16.mxu0 %v3367
    %3735 = vmatpush1.bf16.msra.mxu0 %v3366
    %3736 = vmatprep.subr.bf16.mxu0 %v3370
    %3737 = vmatpush1.bf16.msra.mxu0 %v3369
    %3738 = vmatprep.subr.bf16.mxu0 %v3373
    %3739 = vmatpush1.bf16.msra.mxu0 %v3372
    %3740 = vmatprep.subr.bf16.mxu0 %v3376
    %3741 = vmatpush1.bf16.msra.mxu0 %v3375
    %3742 = vmatprep.subr.bf16.mxu0 0
    %3743 = vmatpush1.bf16.msra.mxu0 0
    %3744 = vmatprep.subr.bf16.mxu0 0
    %3745 = vmatpush1.bf16.msra.mxu0 0
    %3746 = vmatprep.subr.bf16.mxu0 0
    %3747 = vmatpush1.bf16.msra.mxu0 0
    %3748 = vmatprep.subr.bf16.mxu0 0
    %3749 = vmatpush1.bf16.msra.mxu0 0
    %3750 = vmatprep.subr.bf16.mxu0 0
    %3751 = vmatpush1.bf16.msra.mxu0 0
    %3752 = vmatprep.subr.bf16.mxu0 0
    %3753 = vmatpush1.bf16.msra.mxu0 0
    %3754 = vmatprep.subr.bf16.mxu0 0
    %3755 = vmatpush1.bf16.msra.mxu0 0
    %3756 = vmatprep.subr.bf16.mxu0 0
    %3757 = vmatpush1.bf16.msra.mxu0 0
    %3758 = vmatprep.mubr.bf16.mxu0 0
    %3759 = vmatmul.mubr.bf16.gmra.mrb[0].mxu0 %v2119
    %v3760 = vpop.f32.mrb[0].mxu0
    %v3761 = vadd.f32 %v3406, %v3760
    %v3762 = vpop.f32.mrb[0].mxu0
    %v3763 = vadd.f32 %v3410, %v3762
    %v3764 = vpop.f32.mrb[0].mxu0
    %v3765 = vpop.f32.mrb[0].mxu0
    %3766 = vdwg.mxu0
    %3767 = vmatprep.subr.bf16.mxu0 0
    %3768 = vmatpush1.bf16.msra.mxu0 %v3356
    %3769 = vmatprep.subr.bf16.mxu0 0
    %3770 = vmatpush1.bf16.msra.mxu0 %v3359
    %3771 = vmatprep.subr.bf16.mxu0 0
    %3772 = vmatpush1.bf16.msra.mxu0 %v3362
    %3773 = vmatprep.subr.bf16.mxu0 0
    %3774 = vmatpush1.bf16.msra.mxu0 %v3365
    %3775 = vmatprep.subr.bf16.mxu0 0
    %3776 = vmatpush1.bf16.msra.mxu0 %v3368
    %3777 = vmatprep.subr.bf16.mxu0 0
    %3778 = vmatpush1.bf16.msra.mxu0 %v3371
    %3779 = vmatprep.subr.bf16.mxu0 0
    %3780 = vmatpush1.bf16.msra.mxu0 %v3374
    %3781 = vmatprep.subr.bf16.mxu0 0
    %3782 = vmatpush1.bf16.msra.mxu0 %v3377
    %3783 = vmatprep.subr.bf16.mxu0 0
    %3784 = vmatpush1.bf16.msra.mxu0 0
    %3785 = vmatprep.subr.bf16.mxu0 0
    %3786 = vmatpush1.bf16.msra.mxu0 0
    %3787 = vmatprep.subr.bf16.mxu0 0
    %3788 = vmatpush1.bf16.msra.mxu0 0
    %3789 = vmatprep.subr.bf16.mxu0 0
    %3790 = vmatpush1.bf16.msra.mxu0 0
    %3791 = vmatprep.subr.bf16.mxu0 0
    %3792 = vmatpush1.bf16.msra.mxu0 0
    %3793 = vmatprep.subr.bf16.mxu0 0
    %3794 = vmatpush1.bf16.msra.mxu0 0
    %3795 = vmatprep.subr.bf16.mxu0 0
    %3796 = vmatpush1.bf16.msra.mxu0 0
    %3797 = vmatprep.subr.bf16.mxu0 0
    %3798 = vmatpush1.bf16.msra.mxu0 0
    %3799 = vmatprep.mubr.bf16.mxu0 0
    %3800 = vmatmul.mubr.bf16.gmra.mrb[0].mxu0 %v2119
    %v3801 = vpop.f32.mrb[0].mxu0
    %v3802 = vadd.f32 %v3414, %v3801
    %v3803 = vpop.f32.mrb[0].mxu0
    %v3804 = vpop.f32.mrb[0].mxu0
    %v3805 = vpop.f32.mrb[0].mxu0
    %3806 = vdwg.mxu0
    %3807 = vmatprep.subr.bf16.mxu0 %v3580
    %3808 = vmatpush1.bf16.msra.mxu0 %v3579
    %3809 = vmatprep.subr.bf16.mxu0 %v3583
    %3810 = vmatpush1.bf16.msra.mxu0 %v3582
    %3811 = vmatprep.subr.bf16.mxu0 %v3586
    %3812 = vmatpush1.bf16.msra.mxu0 %v3585
    %3813 = vmatprep.subr.bf16.mxu0 %v3589
    %3814 = vmatpush1.bf16.msra.mxu0 %v3588
    %3815 = vmatprep.subr.bf16.mxu0 %v3592
    %3816 = vmatpush1.bf16.msra.mxu0 %v3591
    %3817 = vmatprep.subr.bf16.mxu0 %v3595
    %3818 = vmatpush1.bf16.msra.mxu0 %v3594
    %3819 = vmatprep.subr.bf16.mxu0 %v3598
    %3820 = vmatpush1.bf16.msra.mxu0 %v3597
    %3821 = vmatprep.subr.bf16.mxu0 %v3601
    %3822 = vmatpush1.bf16.msra.mxu0 %v3600
    %3823 = vmatprep.subr.bf16.mxu0 0
    %3824 = vmatpush1.bf16.msra.mxu0 0
    %3825 = vmatprep.subr.bf16.mxu0 0
    %3826 = vmatpush1.bf16.msra.mxu0 0
    %3827 = vmatprep.subr.bf16.mxu0 0
    %3828 = vmatpush1.bf16.msra.mxu0 0
    %3829 = vmatprep.subr.bf16.mxu0 0
    %3830 = vmatpush1.bf16.msra.mxu0 0
    %3831 = vmatprep.subr.bf16.mxu0 0
    %3832 = vmatpush1.bf16.msra.mxu0 0
    %3833 = vmatprep.subr.bf16.mxu0 0
    %3834 = vmatpush1.bf16.msra.mxu0 0
    %3835 = vmatprep.subr.bf16.mxu0 0
    %3836 = vmatpush1.bf16.msra.mxu0 0
    %3837 = vmatprep.subr.bf16.mxu0 0
    %3838 = vmatpush1.bf16.msra.mxu0 0
    %3839 = vmatprep.mubr.bf16.mxu0 0
    %3840 = vmatmul.mubr.bf16.gmra.mrb[0].mxu0 %v3725
    %v3841 = vpop.f32.mrb[0].mxu0
    %v3842 = vadd.f32 0.0, %v3841
    %v3843 = vpop.f32.mrb[0].mxu0
    %v3844 = vadd.f32 0.0, %v3843
    %v3845 = vpop.f32.mrb[0].mxu0
    %v3846 = vpop.f32.mrb[0].mxu0
    %3847 = vdwg.mxu0
    %3848 = vmatprep.subr.bf16.mxu0 0
    %3849 = vmatpush1.bf16.msra.mxu0 %v3581
    %3850 = vmatprep.subr.bf16.mxu0 0
    %3851 = vmatpush1.bf16.msra.mxu0 %v3584
    %3852 = vmatprep.subr.bf16.mxu0 0
    %3853 = vmatpush1.bf16.msra.mxu0 %v3587
    %3854 = vmatprep.subr.bf16.mxu0 0
    %3855 = vmatpush1.bf16.msra.mxu0 %v3590
    %3856 = vmatprep.subr.bf16.mxu0 0
    %3857 = vmatpush1.bf16.msra.mxu0 %v3593
    %3858 = vmatprep.subr.bf16.mxu0 0
    %3859 = vmatpush1.bf16.msra.mxu0 %v3596
    %3860 = vmatprep.subr.bf16.mxu0 0
    %3861 = vmatpush1.bf16.msra.mxu0 %v3599
    %3862 = vmatprep.subr.bf16.mxu0 0
    %3863 = vmatpush1.bf16.msra.mxu0 %v3602
    %3864 = vmatprep.subr.bf16.mxu0 0
    %3865 = vmatpush1.bf16.msra.mxu0 0
    %3866 = vmatprep.subr.bf16.mxu0 0
    %3867 = vmatpush1.bf16.msra.mxu0 0
    %3868 = vmatprep.subr.bf16.mxu0 0
    %3869 = vmatpush1.bf16.msra.mxu0 0
    %3870 = vmatprep.subr.bf16.mxu0 0
    %3871 = vmatpush1.bf16.msra.mxu0 0
    %3872 = vmatprep.subr.bf16.mxu0 0
    %3873 = vmatpush1.bf16.msra.mxu0 0
    %3874 = vmatprep.subr.bf16.mxu0 0
    %3875 = vmatpush1.bf16.msra.mxu0 0
    %3876 = vmatprep.subr.bf16.mxu0 0
    %3877 = vmatpush1.bf16.msra.mxu0 0
    %3878 = vmatprep.subr.bf16.mxu0 0
    %3879 = vmatpush1.bf16.msra.mxu0 0
    %3880 = vmatprep.mubr.bf16.mxu0 0
    %3881 = vmatmul.mubr.bf16.gmra.mrb[0].mxu0 %v3725
    %v3882 = vpop.f32.mrb[0].mxu0
    %v3883 = vadd.f32 0.0, %v3882
    %v3884 = vpop.f32.mrb[0].mxu0
    %v3885 = vpop.f32.mrb[0].mxu0
    %v3886 = vpop.f32.mrb[0].mxu0
    %3887 = vdwg.mxu0
    %v3888 = vadd.f32 %v3761, %v3842
    %v3889 = vadd.f32 %v3763, %v3844
    %v3890 = vmul.f32 %v3888, 0.5
    %v3891 = vmul.f32 %v3889, 0.5
    %v3892 = vtanh.pop %v3890
    %v3893 = vtanh.pop %v3891
    %v3894 = vmul.f32 %v3892, 0.5
    %v3895 = vmul.f32 %v3893, 0.5
    %v3896 = vadd.f32 %v3894, 0.5
    %v3897 = vadd.f32 %v3895, 0.5
    %v3898 = vadd.f32 %v3883, %v3238
    %v3899 = vmul.f32 %v3896, %v3898
    %v3900 = vadd.f32 %v3802, %v3899
    %v3901 = vtanh.pop %v3900
    %v3902 = vsub.f32 %v3724, %v3901
    %v3903 = vmul.f32 %v3897, %v3902
    %v3904 = vadd.f32 %v3901, %v3903
    %v3905 = vpack.c.bf16 %v3904, %v3904
    %3906 = vmatprep.subr.bf16.mxu0 %v3355
    %3907 = vmatpush1.bf16.msra.mxu0 %v3354
    %3908 = vmatprep.subr.bf16.mxu0 %v3358
    %3909 = vmatpush1.bf16.msra.mxu0 %v3357
    %3910 = vmatprep.subr.bf16.mxu0 %v3361
    %3911 = vmatpush1.bf16.msra.mxu0 %v3360
    %3912 = vmatprep.subr.bf16.mxu0 %v3364
    %3913 = vmatpush1.bf16.msra.mxu0 %v3363
    %3914 = vmatprep.subr.bf16.mxu0 %v3367
    %3915 = vmatpush1.bf16.msra.mxu0 %v3366
    %3916 = vmatprep.subr.bf16.mxu0 %v3370
    %3917 = vmatpush1.bf16.msra.mxu0 %v3369
    %3918 = vmatprep.subr.bf16.mxu0 %v3373
    %3919 = vmatpush1.bf16.msra.mxu0 %v3372
    %3920 = vmatprep.subr.bf16.mxu0 %v3376
    %3921 = vmatpush1.bf16.msra.mxu0 %v3375
    %3922 = vmatprep.subr.bf16.mxu0 0
    %3923 = vmatpush1.bf16.msra.mxu0 0
    %3924 = vmatprep.subr.bf16.mxu0 0
    %3925 = vmatpush1.bf16.msra.mxu0 0
    %3926 = vmatprep.subr.bf16.mxu0 0
    %3927 = vmatpush1.bf16.msra.mxu0 0
    %3928 = vmatprep.subr.bf16.mxu0 0
    %3929 = vmatpush1.bf16.msra.mxu0 0
    %3930 = vmatprep.subr.bf16.mxu0 0
    %3931 = vmatpush1.bf16.msra.mxu0 0
    %3932 = vmatprep.subr.bf16.mxu0 0
    %3933 = vmatpush1.bf16.msra.mxu0 0
    %3934 = vmatprep.subr.bf16.mxu0 0
    %3935 = vmatpush1.bf16.msra.mxu0 0
    %3936 = vmatprep.subr.bf16.mxu0 0
    %3937 = vmatpush1.bf16.msra.mxu0 0
    %3938 = vmatprep.mubr.bf16.mxu0 0
    %3939 = vmatmul.mubr.bf16.gmra.mrb[0].mxu0 %v2299
    %v3940 = vpop.f32.mrb[0].mxu0
    %v3941 = vadd.f32 %v3406, %v3940
    %v3942 = vpop.f32.mrb[0].mxu0
    %v3943 = vadd.f32 %v3410, %v3942
    %v3944 = vpop.f32.mrb[0].mxu0
    %v3945 = vpop.f32.mrb[0].mxu0
    %3946 = vdwg.mxu0
    %3947 = vmatprep.subr.bf16.mxu0 0
    %3948 = vmatpush1.bf16.msra.mxu0 %v3356
    %3949 = vmatprep.subr.bf16.mxu0 0
    %3950 = vmatpush1.bf16.msra.mxu0 %v3359
    %3951 = vmatprep.subr.bf16.mxu0 0
    %3952 = vmatpush1.bf16.msra.mxu0 %v3362
    %3953 = vmatprep.subr.bf16.mxu0 0
    %3954 = vmatpush1.bf16.msra.mxu0 %v3365
    %3955 = vmatprep.subr.bf16.mxu0 0
    %3956 = vmatpush1.bf16.msra.mxu0 %v3368
    %3957 = vmatprep.subr.bf16.mxu0 0
    %3958 = vmatpush1.bf16.msra.mxu0 %v3371
    %3959 = vmatprep.subr.bf16.mxu0 0
    %3960 = vmatpush1.bf16.msra.mxu0 %v3374
    %3961 = vmatprep.subr.bf16.mxu0 0
    %3962 = vmatpush1.bf16.msra.mxu0 %v3377
    %3963 = vmatprep.subr.bf16.mxu0 0
    %3964 = vmatpush1.bf16.msra.mxu0 0
    %3965 = vmatprep.subr.bf16.mxu0 0
    %3966 = vmatpush1.bf16.msra.mxu0 0
    %3967 = vmatprep.subr.bf16.mxu0 0
    %3968 = vmatpush1.bf16.msra.mxu0 0
    %3969 = vmatprep.subr.bf16.mxu0 0
    %3970 = vmatpush1.bf16.msra.mxu0 0
    %3971 = vmatprep.subr.bf16.mxu0 0
    %3972 = vmatpush1.bf16.msra.mxu0 0
    %3973 = vmatprep.subr.bf16.mxu0 0
    %3974 = vmatpush1.bf16.msra.mxu0 0
    %3975 = vmatprep.subr.bf16.mxu0 0
    %3976 = vmatpush1.bf16.msra.mxu0 0
    %3977 = vmatprep.subr.bf16.mxu0 0
    %3978 = vmatpush1.bf16.msra.mxu0 0
    %3979 = vmatprep.mubr.bf16.mxu0 0
    %3980 = vmatmul.mubr.bf16.gmra.mrb[0].mxu0 %v2299
    %v3981 = vpop.f32.mrb[0].mxu0
    %v3982 = vadd.f32 %v3414, %v3981
    %v3983 = vpop.f32.mrb[0].mxu0
    %v3984 = vpop.f32.mrb[0].mxu0
    %v3985 = vpop.f32.mrb[0].mxu0
    %3986 = vdwg.mxu0
    %3987 = vmatprep.subr.bf16.mxu0 %v3580
    %3988 = vmatpush1.bf16.msra.mxu0 %v3579
    %3989 = vmatprep.subr.bf16.mxu0 %v3583
    %3990 = vmatpush1.bf16.msra.mxu0 %v3582
    %3991 = vmatprep.subr.bf16.mxu0 %v3586
    %3992 = vmatpush1.bf16.msra.mxu0 %v3585
    %3993 = vmatprep.subr.bf16.mxu0 %v3589
    %3994 = vmatpush1.bf16.msra.mxu0 %v3588
    %3995 = vmatprep.subr.bf16.mxu0 %v3592
    %3996 = vmatpush1.bf16.msra.mxu0 %v3591
    %3997 = vmatprep.subr.bf16.mxu0 %v3595
    %3998 = vmatpush1.bf16.msra.mxu0 %v3594
    %3999 = vmatprep.subr.bf16.mxu0 %v3598
    %4000 = vmatpush1.bf16.msra.mxu0 %v3597
    %4001 = vmatprep.subr.bf16.mxu0 %v3601
    %4002 = vmatpush1.bf16.msra.mxu0 %v3600
    %4003 = vmatprep.subr.bf16.mxu0 0
    %4004 = vmatpush1.bf16.msra.mxu0 0
    %4005 = vmatprep.subr.bf16.mxu0 0
    %4006 = vmatpush1.bf16.msra.mxu0 0
    %4007 = vmatprep.subr.bf16.mxu0 0
    %4008 = vmatpush1.bf16.msra.mxu0 0
    %4009 = vmatprep.subr.bf16.mxu0 0
    %4010 = vmatpush1.bf16.msra.mxu0 0
    %4011 = vmatprep.subr.bf16.mxu0 0
    %4012 = vmatpush1.bf16.msra.mxu0 0
    %4013 = vmatprep.subr.bf16.mxu0 0
    %4014 = vmatpush1.bf16.msra.mxu0 0
    %4015 = vmatprep.subr.bf16.mxu0 0
    %4016 = vmatpush1.bf16.msra.mxu0 0
    %4017 = vmatprep.subr.bf16.mxu0 0
    %4018 = vmatpush1.bf16.msra.mxu0 0
    %4019 = vmatprep.mubr.bf16.mxu0 0
    %4020 = vmatmul.mubr.bf16.gmra.mrb[0].mxu0 %v3905
    %v4021 = vpop.f32.mrb[0].mxu0
    %v4022 = vadd.f32 0.0, %v4021
    %v4023 = vpop.f32.mrb[0].mxu0
    %v4024 = vadd.f32 0.0, %v4023
    %v4025 = vpop.f32.mrb[0].mxu0
    %v4026 = vpop.f32.mrb[0].mxu0
    %4027 = vdwg.mxu0
    %4028 = vmatprep.subr.bf16.mxu0 0
    %4029 = vmatpush1.bf16.msra.mxu0 %v3581
    %4030 = vmatprep.subr.bf16.mxu0 0
    %4031 = vmatpush1.bf16.msra.mxu0 %v3584
    %4032 = vmatprep.subr.bf16.mxu0 0
    %4033 = vmatpush1.bf16.msra.mxu0 %v3587
    %4034 = vmatprep.subr.bf16.mxu0 0
    %4035 = vmatpush1.bf16.msra.mxu0 %v3590
    %4036 = vmatprep.subr.bf16.mxu0 0
    %4037 = vmatpush1.bf16.msra.mxu0 %v3593
    %4038 = vmatprep.subr.bf16.mxu0 0
    %4039 = vmatpush1.bf16.msra.mxu0 %v3596
    %4040 = vmatprep.subr.bf16.mxu0 0
    %4041 = vmatpush1.bf16.msra.mxu0 %v3599
    %4042 = vmatprep.subr.bf16.mxu0 0
    %4043 = vmatpush1.bf16.msra.mxu0 %v3602
    %4044 = vmatprep.subr.bf16.mxu0 0
    %4045 = vmatpush1.bf16.msra.mxu0 0
    %4046 = vmatprep.subr.bf16.mxu0 0
    %4047 = vmatpush1.bf16.msra.mxu0 0
    %4048 = vmatprep.subr.bf16.mxu0 0
    %4049 = vmatpush1.bf16.msra.mxu0 0
    %4050 = vmatprep.subr.bf16.mxu0 0
    %4051 = vmatpush1.bf16.msra.mxu0 0
    %4052 = vmatprep.subr.bf16.mxu0 0
    %4053 = vmatpush1.bf16.msra.mxu0 0
    %4054 = vmatprep.subr.bf16.mxu0 0
    %4055 = vmatpush1.bf16.msra.mxu0 0
    %4056 = vmatprep.subr.bf16.mxu0 0
    %4057 = vmatpush1.bf16.msra.mxu0 0
    %4058 = vmatprep.subr.bf16.mxu0 0
    %4059 = vmatpush1.bf16.msra.mxu0 0
    %4060 = vmatprep.mubr.bf16.mxu0 0
    %4061 = vmatmul.mubr.bf16.gmra.mrb[0].mxu0 %v3905
    %v4062 = vpop.f32.mrb[0].mxu0
    %v4063 = vadd.f32 0.0, %v4062
    %v4064 = vpop.f32.mrb[0].mxu0
    %v4065 = vpop.f32.mrb[0].mxu0
    %v4066 = vpop.f32.mrb[0].mxu0
    %4067 = vdwg.mxu0
    %v4068 = vadd.f32 %v3941, %v4022
    %v4069 = vadd.f32 %v3943, %v4024
    %v4070 = vmul.f32 %v4068, 0.5
    %v4071 = vmul.f32 %v4069, 0.5
    %v4072 = vtanh.pop %v4070
    %v4073 = vtanh.pop %v4071
    %v4074 = vmul.f32 %v4072, 0.5
    %v4075 = vmul.f32 %v4073, 0.5
    %v4076 = vadd.f32 %v4074, 0.5
    %v4077 = vadd.f32 %v4075, 0.5
    %v4078 = vadd.f32 %v4063, %v3238
    %v4079 = vmul.f32 %v4076, %v4078
    %v4080 = vadd.f32 %v3982, %v4079
    %v4081 = vtanh.pop %v4080
    %v4082 = vsub.f32 %v3904, %v4081
    %v4083 = vmul.f32 %v4077, %v4082
    %v4084 = vadd.f32 %v4081, %v4083
    %v4085 = vpack.c.bf16 %v4084, %v4084
    %4086 = vmatprep.subr.bf16.mxu0 %v3355
    %4087 = vmatpush1.bf16.msra.mxu0 %v3354
    %4088 = vmatprep.subr.bf16.mxu0 %v3358
    %4089 = vmatpush1.bf16.msra.mxu0 %v3357
    %4090 = vmatprep.subr.bf16.mxu0 %v3361
    %4091 = vmatpush1.bf16.msra.mxu0 %v3360
    %4092 = vmatprep.subr.bf16.mxu0 %v3364
    %4093 = vmatpush1.bf16.msra.mxu0 %v3363
    %4094 = vmatprep.subr.bf16.mxu0 %v3367
    %4095 = vmatpush1.bf16.msra.mxu0 %v3366
    %4096 = vmatprep.subr.bf16.mxu0 %v3370
    %4097 = vmatpush1.bf16.msra.mxu0 %v3369
    %4098 = vmatprep.subr.bf16.mxu0 %v3373
    %4099 = vmatpush1.bf16.msra.mxu0 %v3372
    %4100 = vmatprep.subr.bf16.mxu0 %v3376
    %4101 = vmatpush1.bf16.msra.mxu0 %v3375
    %4102 = vmatprep.subr.bf16.mxu0 0
    %4103 = vmatpush1.bf16.msra.mxu0 0
    %4104 = vmatprep.subr.bf16.mxu0 0
    %4105 = vmatpush1.bf16.msra.mxu0 0
    %4106 = vmatprep.subr.bf16.mxu0 0
    %4107 = vmatpush1.bf16.msra.mxu0 0
    %4108 = vmatprep.subr.bf16.mxu0 0
    %4109 = vmatpush1.bf16.msra.mxu0 0
    %4110 = vmatprep.subr.bf16.mxu0 0
    %4111 = vmatpush1.bf16.msra.mxu0 0
    %4112 = vmatprep.subr.bf16.mxu0 0
    %4113 = vmatpush1.bf16.msra.mxu0 0
    %4114 = vmatprep.subr.bf16.mxu0 0
    %4115 = vmatpush1.bf16.msra.mxu0 0
    %4116 = vmatprep.subr.bf16.mxu0 0
    %4117 = vmatpush1.bf16.msra.mxu0 0
    %4118 = vmatprep.mubr.bf16.mxu0 0
    %4119 = vmatmul.mubr.bf16.gmra.mrb[0].mxu0 %v2479
    %v4120 = vpop.f32.mrb[0].mxu0
    %v4121 = vadd.f32 %v3406, %v4120
    %v4122 = vpop.f32.mrb[0].mxu0
    %v4123 = vadd.f32 %v3410, %v4122
    %v4124 = vpop.f32.mrb[0].mxu0
    %v4125 = vpop.f32.mrb[0].mxu0
    %4126 = vdwg.mxu0
    %4127 = vmatprep.subr.bf16.mxu0 0
    %4128 = vmatpush1.bf16.msra.mxu0 %v3356
    %4129 = vmatprep.subr.bf16.mxu0 0
    %4130 = vmatpush1.bf16.msra.mxu0 %v3359
    %4131 = vmatprep.subr.bf16.mxu0 0
    %4132 = vmatpush1.bf16.msra.mxu0 %v3362
    %4133 = vmatprep.subr.bf16.mxu0 0
    %4134 = vmatpush1.bf16.msra.mxu0 %v3365
    %4135 = vmatprep.subr.bf16.mxu0 0
    %4136 = vmatpush1.bf16.msra.mxu0 %v3368
    %4137 = vmatprep.subr.bf16.mxu0 0
    %4138 = vmatpush1.bf16.msra.mxu0 %v3371
    %4139 = vmatprep.subr.bf16.mxu0 0
    %4140 = vmatpush1.bf16.msra.mxu0 %v3374
    %4141 = vmatprep.subr.bf16.mxu0 0
    %4142 = vmatpush1.bf16.msra.mxu0 %v3377
    %4143 = vmatprep.subr.bf16.mxu0 0
    %4144 = vmatpush1.bf16.msra.mxu0 0
    %4145 = vmatprep.subr.bf16.mxu0 0
    %4146 = vmatpush1.bf16.msra.mxu0 0
    %4147 = vmatprep.subr.bf16.mxu0 0
    %4148 = vmatpush1.bf16.msra.mxu0 0
    %4149 = vmatprep.subr.bf16.mxu0 0
    %4150 = vmatpush1.bf16.msra.mxu0 0
    %4151 = vmatprep.subr.bf16.mxu0 0
    %4152 = vmatpush1.bf16.msra.mxu0 0
    %4153 = vmatprep.subr.bf16.mxu0 0
    %4154 = vmatpush1.bf16.msra.mxu0 0
    %4155 = vmatprep.subr.bf16.mxu0 0
    %4156 = vmatpush1.bf16.msra.mxu0 0
    %4157 = vmatprep.subr.bf16.mxu0 0
    %4158 = vmatpush1.bf16.msra.mxu0 0
    %4159 = vmatprep.mubr.bf16.mxu0 0
    %4160 = vmatmul.mubr.bf16.gmra.mrb[0].mxu0 %v2479
    %v4161 = vpop.f32.mrb[0].mxu0
    %v4162 = vadd.f32 %v3414, %v4161
    %v4163 = vpop.f32.mrb[0].mxu0
    %v4164 = vpop.f32.mrb[0].mxu0
    %v4165 = vpop.f32.mrb[0].mxu0
    %4166 = vdwg.mxu0
    %4167 = vmatprep.subr.bf16.mxu0 %v3580
    %4168 = vmatpush1.bf16.msra.mxu0 %v3579
    %4169 = vmatprep.subr.bf16.mxu0 %v3583
    %4170 = vmatpush1.bf16.msra.mxu0 %v3582
    %4171 = vmatprep.subr.bf16.mxu0 %v3586
    %4172 = vmatpush1.bf16.msra.mxu0 %v3585
    %4173 = vmatprep.subr.bf16.mxu0 %v3589
    %4174 = vmatpush1.bf16.msra.mxu0 %v3588
    %4175 = vmatprep.subr.bf16.mxu0 %v3592
    %4176 = vmatpush1.bf16.msra.mxu0 %v3591
    %4177 = vmatprep.subr.bf16.mxu0 %v3595
    %4178 = vmatpush1.bf16.msra.mxu0 %v3594
    %4179 = vmatprep.subr.bf16.mxu0 %v3598
    %4180 = vmatpush1.bf16.msra.mxu0 %v3597
    %4181 = vmatprep.subr.bf16.mxu0 %v3601
    %4182 = vmatpush1.bf16.msra.mxu0 %v3600
    %4183 = vmatprep.subr.bf16.mxu0 0
    %4184 = vmatpush1.bf16.msra.mxu0 0
    %4185 = vmatprep.subr.bf16.mxu0 0
    %4186 = vmatpush1.bf16.msra.mxu0 0
    %4187 = vmatprep.subr.bf16.mxu0 0
    %4188 = vmatpush1.bf16.msra.mxu0 0
    %4189 = vmatprep.subr.bf16.mxu0 0
    %4190 = vmatpush1.bf16.msra.mxu0 0
    %4191 = vmatprep.subr.bf16.mxu0 0
    %4192 = vmatpush1.bf16.msra.mxu0 0
    %4193 = vmatprep.subr.bf16.mxu0 0
    %4194 = vmatpush1.bf16.msra.mxu0 0
    %4195 = vmatprep.subr.bf16.mxu0 0
    %4196 = vmatpush1.bf16.msra.mxu0 0
    %4197 = vmatprep.subr.bf16.mxu0 0
    %4198 = vmatpush1.bf16.msra.mxu0 0
    %4199 = vmatprep.mubr.bf16.mxu0 0
    %4200 = vmatmul.mubr.bf16.gmra.mrb[0].mxu0 %v4085
    %v4201 = vpop.f32.mrb[0].mxu0
    %v4202 = vadd.f32 0.0, %v4201
    %v4203 = vpop.f32.mrb[0].mxu0
    %v4204 = vadd.f32 0.0, %v4203
    %v4205 = vpop.f32.mrb[0].mxu0
    %v4206 = vpop.f32.mrb[0].mxu0
    %4207 = vdwg.mxu0
    %4208 = vmatprep.subr.bf16.mxu0 0
    %4209 = vmatpush1.bf16.msra.mxu0 %v3581
    %4210 = vmatprep.subr.bf16.mxu0 0
    %4211 = vmatpush1.bf16.msra.mxu0 %v3584
    %4212 = vmatprep.subr.bf16.mxu0 0
    %4213 = vmatpush1.bf16.msra.mxu0 %v3587
    %4214 = vmatprep.subr.bf16.mxu0 0
    %4215 = vmatpush1.bf16.msra.mxu0 %v3590
    %4216 = vmatprep.subr.bf16.mxu0 0
    %4217 = vmatpush1.bf16.msra.mxu0 %v3593
    %4218 = vmatprep.subr.bf16.mxu0 0
    %4219 = vmatpush1.bf16.msra.mxu0 %v3596
    %4220 = vmatprep.subr.bf16.mxu0 0
    %4221 = vmatpush1.bf16.msra.mxu0 %v3599
    %4222 = vmatprep.subr.bf16.mxu0 0
    %4223 = vmatpush1.bf16.msra.mxu0 %v3602
    %4224 = vmatprep.subr.bf16.mxu0 0
    %4225 = vmatpush1.bf16.msra.mxu0 0
    %4226 = vmatprep.subr.bf16.mxu0 0
    %4227 = vmatpush1.bf16.msra.mxu0 0
    %4228 = vmatprep.subr.bf16.mxu0 0
    %4229 = vmatpush1.bf16.msra.mxu0 0
    %4230 = vmatprep.subr.bf16.mxu0 0
    %4231 = vmatpush1.bf16.msra.mxu0 0
    %4232 = vmatprep.subr.bf16.mxu0 0
    %4233 = vmatpush1.bf16.msra.mxu0 0
    %4234 = vmatprep.subr.bf16.mxu0 0
    %4235 = vmatpush1.bf16.msra.mxu0 0
    %4236 = vmatprep.subr.bf16.mxu0 0
    %4237 = vmatpush1.bf16.msra.mxu0 0
    %4238 = vmatprep.subr.bf16.mxu0 0
    %4239 = vmatpush1.bf16.msra.mxu0 0
    %4240 = vmatprep.mubr.bf16.mxu0 0
    %4241 = vmatmul.mubr.bf16.gmra.mrb[0].mxu0 %v4085
    %v4242 = vpop.f32.mrb[0].mxu0
    %v4243 = vadd.f32 0.0, %v4242
    %v4244 = vpop.f32.mrb[0].mxu0
    %v4245 = vpop.f32.mrb[0].mxu0
    %v4246 = vpop.f32.mrb[0].mxu0
    %4247 = vdwg.mxu0
    %v4248 = vadd.f32 %v4121, %v4202
    %v4249 = vadd.f32 %v4123, %v4204
    %v4250 = vmul.f32 %v4248, 0.5
    %v4251 = vmul.f32 %v4249, 0.5
    %v4252 = vtanh.pop %v4250
    %v4253 = vtanh.pop %v4251
    %v4254 = vmul.f32 %v4252, 0.5
    %v4255 = vmul.f32 %v4253, 0.5
    %v4256 = vadd.f32 %v4254, 0.5
    %v4257 = vadd.f32 %v4255, 0.5
    %v4258 = vadd.f32 %v4243, %v3238
    %v4259 = vmul.f32 %v4256, %v4258
    %v4260 = vadd.f32 %v4162, %v4259
    %v4261 = vtanh.pop %v4260
    %v4262 = vsub.f32 %v4084, %v4261
    %v4263 = vmul.f32 %v4257, %v4262
    %v4264 = vadd.f32 %v4261, %v4263
    %v4265 = vpack.c.bf16 %v4264, %v4264
    %4266 = vmatprep.subr.bf16.mxu0 %v3355
    %4267 = vmatpush1.bf16.msra.mxu0 %v3354
    %4268 = vmatprep.subr.bf16.mxu0 %v3358
    %4269 = vmatpush1.bf16.msra.mxu0 %v3357
    %4270 = vmatprep.subr.bf16.mxu0 %v3361
    %4271 = vmatpush1.bf16.msra.mxu0 %v3360
    %4272 = vmatprep.subr.bf16.mxu0 %v3364
    %4273 = vmatpush1.bf16.msra.mxu0 %v3363
    %4274 = vmatprep.subr.bf16.mxu0 %v3367
    %4275 = vmatpush1.bf16.msra.mxu0 %v3366
    %4276 = vmatprep.subr.bf16.mxu0 %v3370
    %4277 = vmatpush1.bf16.msra.mxu0 %v3369
    %4278 = vmatprep.subr.bf16.mxu0 %v3373
    %4279 = vmatpush1.bf16.msra.mxu0 %v3372
    %4280 = vmatprep.subr.bf16.mxu0 %v3376
    %4281 = vmatpush1.bf16.msra.mxu0 %v3375
    %4282 = vmatprep.subr.bf16.mxu0 0
    %4283 = vmatpush1.bf16.msra.mxu0 0
    %4284 = vmatprep.subr.bf16.mxu0 0
    %4285 = vmatpush1.bf16.msra.mxu0 0
    %4286 = vmatprep.subr.bf16.mxu0 0
    %4287 = vmatpush1.bf16.msra.mxu0 0
    %4288 = vmatprep.subr.bf16.mxu0 0
    %4289 = vmatpush1.bf16.msra.mxu0 0
    %4290 = vmatprep.subr.bf16.mxu0 0
    %4291 = vmatpush1.bf16.msra.mxu0 0
    %4292 = vmatprep.subr.bf16.mxu0 0
    %4293 = vmatpush1.bf16.msra.mxu0 0
    %4294 = vmatprep.subr.bf16.mxu0 0
    %4295 = vmatpush1.bf16.msra.mxu0 0
    %4296 = vmatprep.subr.bf16.mxu0 0
    %4297 = vmatpush1.bf16.msra.mxu0 0
    %4298 = vmatprep.mubr.bf16.mxu0 0
    %4299 = vmatmul.mubr.bf16.gmra.mrb[0].mxu0 %v2659
    %v4300 = vpop.f32.mrb[0].mxu0
    %v4301 = vadd.f32 %v3406, %v4300
    %v4302 = vpop.f32.mrb[0].mxu0
    %v4303 = vadd.f32 %v3410, %v4302
    %v4304 = vpop.f32.mrb[0].mxu0
    %v4305 = vpop.f32.mrb[0].mxu0
    %4306 = vdwg.mxu0
    %4307 = vmatprep.subr.bf16.mxu0 0
    %4308 = vmatpush1.bf16.msra.mxu0 %v3356
    %4309 = vmatprep.subr.bf16.mxu0 0
    %4310 = vmatpush1.bf16.msra.mxu0 %v3359
    %4311 = vmatprep.subr.bf16.mxu0 0
    %4312 = vmatpush1.bf16.msra.mxu0 %v3362
    %4313 = vmatprep.subr.bf16.mxu0 0
    %4314 = vmatpush1.bf16.msra.mxu0 %v3365
    %4315 = vmatprep.subr.bf16.mxu0 0
    %4316 = vmatpush1.bf16.msra.mxu0 %v3368
    %4317 = vmatprep.subr.bf16.mxu0 0
    %4318 = vmatpush1.bf16.msra.mxu0 %v3371
    %4319 = vmatprep.subr.bf16.mxu0 0
    %4320 = vmatpush1.bf16.msra.mxu0 %v3374
    %4321 = vmatprep.subr.bf16.mxu0 0
    %4322 = vmatpush1.bf16.msra.mxu0 %v3377
    %4323 = vmatprep.subr.bf16.mxu0 0
    %4324 = vmatpush1.bf16.msra.mxu0 0
    %4325 = vmatprep.subr.bf16.mxu0 0
    %4326 = vmatpush1.bf16.msra.mxu0 0
    %4327 = vmatprep.subr.bf16.mxu0 0
    %4328 = vmatpush1.bf16.msra.mxu0 0
    %4329 = vmatprep.subr.bf16.mxu0 0
    %4330 = vmatpush1.bf16.msra.mxu0 0
    %4331 = vmatprep.subr.bf16.mxu0 0
    %4332 = vmatpush1.bf16.msra.mxu0 0
    %4333 = vmatprep.subr.bf16.mxu0 0
    %4334 = vmatpush1.bf16.msra.mxu0 0
    %4335 = vmatprep.subr.bf16.mxu0 0
    %4336 = vmatpush1.bf16.msra.mxu0 0
    %4337 = vmatprep.subr.bf16.mxu0 0
    %4338 = vmatpush1.bf16.msra.mxu0 0
    %4339 = vmatprep.mubr.bf16.mxu0 0
    %4340 = vmatmul.mubr.bf16.gmra.mrb[0].mxu0 %v2659
    %v4341 = vpop.f32.mrb[0].mxu0
    %v4342 = vadd.f32 %v3414, %v4341
    %v4343 = vpop.f32.mrb[0].mxu0
    %v4344 = vpop.f32.mrb[0].mxu0
    %v4345 = vpop.f32.mrb[0].mxu0
    %4346 = vdwg.mxu0
    %4347 = vmatprep.subr.bf16.mxu0 %v3580
    %4348 = vmatpush1.bf16.msra.mxu0 %v3579
    %4349 = vmatprep.subr.bf16.mxu0 %v3583
    %4350 = vmatpush1.bf16.msra.mxu0 %v3582
    %4351 = vmatprep.subr.bf16.mxu0 %v3586
    %4352 = vmatpush1.bf16.msra.mxu0 %v3585
    %4353 = vmatprep.subr.bf16.mxu0 %v3589
    %4354 = vmatpush1.bf16.msra.mxu0 %v3588
    %4355 = vmatprep.subr.bf16.mxu0 %v3592
    %4356 = vmatpush1.bf16.msra.mxu0 %v3591
    %4357 = vmatprep.subr.bf16.mxu0 %v3595
    %4358 = vmatpush1.bf16.msra.mxu0 %v3594
    %4359 = vmatprep.subr.bf16.mxu0 %v3598
    %4360 = vmatpush1.bf16.msra.mxu0 %v3597
    %4361 = vmatprep.subr.bf16.mxu0 %v3601
    %4362 = vmatpush1.bf16.msra.mxu0 %v3600
    %4363 = vmatprep.subr.bf16.mxu0 0
    %4364 = vmatpush1.bf16.msra.mxu0 0
    %4365 = vmatprep.subr.bf16.mxu0 0
    %4366 = vmatpush1.bf16.msra.mxu0 0
    %4367 = vmatprep.subr.bf16.mxu0 0
    %4368 = vmatpush1.bf16.msra.mxu0 0
    %4369 = vmatprep.subr.bf16.mxu0 0
    %4370 = vmatpush1.bf16.msra.mxu0 0
    %4371 = vmatprep.subr.bf16.mxu0 0
    %4372 = vmatpush1.bf16.msra.mxu0 0
    %4373 = vmatprep.subr.bf16.mxu0 0
    %4374 = vmatpush1.bf16.msra.mxu0 0
    %4375 = vmatprep.subr.bf16.mxu0 0
    %4376 = vmatpush1.bf16.msra.mxu0 0
    %4377 = vmatprep.subr.bf16.mxu0 0
    %4378 = vmatpush1.bf16.msra.mxu0 0
    %4379 = vmatprep.mubr.bf16.mxu0 0
    %4380 = vmatmul.mubr.bf16.gmra.mrb[0].mxu0 %v4265
    %v4381 = vpop.f32.mrb[0].mxu0
    %v4382 = vadd.f32 0.0, %v4381
    %v4383 = vpop.f32.mrb[0].mxu0
    %v4384 = vadd.f32 0.0, %v4383
    %v4385 = vpop.f32.mrb[0].mxu0
    %v4386 = vpop.f32.mrb[0].mxu0
    %4387 = vdwg.mxu0
    %4388 = vmatprep.subr.bf16.mxu0 0
    %4389 = vmatpush1.bf16.msra.mxu0 %v3581
    %4390 = vmatprep.subr.bf16.mxu0 0
    %4391 = vmatpush1.bf16.msra.mxu0 %v3584
    %4392 = vmatprep.subr.bf16.mxu0 0
    %4393 = vmatpush1.bf16.msra.mxu0 %v3587
    %4394 = vmatprep.subr.bf16.mxu0 0
    %4395 = vmatpush1.bf16.msra.mxu0 %v3590
    %4396 = vmatprep.subr.bf16.mxu0 0
    %4397 = vmatpush1.bf16.msra.mxu0 %v3593
    %4398 = vmatprep.subr.bf16.mxu0 0
    %4399 = vmatpush1.bf16.msra.mxu0 %v3596
    %4400 = vmatprep.subr.bf16.mxu0 0
    %4401 = vmatpush1.bf16.msra.mxu0 %v3599
    %4402 = vmatprep.subr.bf16.mxu0 0
    %4403 = vmatpush1.bf16.msra.mxu0 %v3602
    %4404 = vmatprep.subr.bf16.mxu0 0
    %4405 = vmatpush1.bf16.msra.mxu0 0
    %4406 = vmatprep.subr.bf16.mxu0 0
    %4407 = vmatpush1.bf16.msra.mxu0 0
    %4408 = vmatprep.subr.bf16.mxu0 0
    %4409 = vmatpush1.bf16.msra.mxu0 0
    %4410 = vmatprep.subr.bf16.mxu0 0
    %4411 = vmatpush1.bf16.msra.mxu0 0
    %4412 = vmatprep.subr.bf16.mxu0 0
    %4413 = vmatpush1.bf16.msra.mxu0 0
    %4414 = vmatprep.subr.bf16.mxu0 0
    %4415 = vmatpush1.bf16.msra.mxu0 0
    %4416 = vmatprep.subr.bf16.mxu0 0
    %4417 = vmatpush1.bf16.msra.mxu0 0
    %4418 = vmatprep.subr.bf16.mxu0 0
    %4419 = vmatpush1.bf16.msra.mxu0 0
    %4420 = vmatprep.mubr.bf16.mxu0 0
    %4421 = vmatmul.mubr.bf16.gmra.mrb[0].mxu0 %v4265
    %v4422 = vpop.f32.mrb[0].mxu0
    %v4423 = vadd.f32 0.0, %v4422
    %v4424 = vpop.f32.mrb[0].mxu0
    %v4425 = vpop.f32.mrb[0].mxu0
    %v4426 = vpop.f32.mrb[0].mxu0
    %4427 = vdwg.mxu0
    %v4428 = vadd.f32 %v4301, %v4382
    %v4429 = vadd.f32 %v4303, %v4384
    %v4430 = vmul.f32 %v4428, 0.5
    %v4431 = vmul.f32 %v4429, 0.5
    %v4432 = vtanh.pop %v4430
    %v4433 = vtanh.pop %v4431
    %v4434 = vmul.f32 %v4432, 0.5
    %v4435 = vmul.f32 %v4433, 0.5
    %v4436 = vadd.f32 %v4434, 0.5
    %v4437 = vadd.f32 %v4435, 0.5
    %v4438 = vadd.f32 %v4423, %v3238
    %v4439 = vmul.f32 %v4436, %v4438
    %v4440 = vadd.f32 %v4342, %v4439
    %v4441 = vtanh.pop %v4440
    %v4442 = vsub.f32 %v4264, %v4441
    %v4443 = vmul.f32 %v4437, %v4442
    %v4444 = vadd.f32 %v4441, %v4443
    %v4445 = vpack.c.bf16 %v4444, %v4444
    %4446 = vmatprep.subr.bf16.mxu0 %v3355
    %4447 = vmatpush1.bf16.msra.mxu0 %v3354
    %4448 = vmatprep.subr.bf16.mxu0 %v3358
    %4449 = vmatpush1.bf16.msra.mxu0 %v3357
    %4450 = vmatprep.subr.bf16.mxu0 %v3361
    %4451 = vmatpush1.bf16.msra.mxu0 %v3360
    %4452 = vmatprep.subr.bf16.mxu0 %v3364
    %4453 = vmatpush1.bf16.msra.mxu0 %v3363
    %4454 = vmatprep.subr.bf16.mxu0 %v3367
    %4455 = vmatpush1.bf16.msra.mxu0 %v3366
    %4456 = vmatprep.subr.bf16.mxu0 %v3370
    %4457 = vmatpush1.bf16.msra.mxu0 %v3369
    %4458 = vmatprep.subr.bf16.mxu0 %v3373
    %4459 = vmatpush1.bf16.msra.mxu0 %v3372
    %4460 = vmatprep.subr.bf16.mxu0 %v3376
    %4461 = vmatpush1.bf16.msra.mxu0 %v3375
    %4462 = vmatprep.subr.bf16.mxu0 0
    %4463 = vmatpush1.bf16.msra.mxu0 0
    %4464 = vmatprep.subr.bf16.mxu0 0
    %4465 = vmatpush1.bf16.msra.mxu0 0
    %4466 = vmatprep.subr.bf16.mxu0 0
    %4467 = vmatpush1.bf16.msra.mxu0 0
    %4468 = vmatprep.subr.bf16.mxu0 0
    %4469 = vmatpush1.bf16.msra.mxu0 0
    %4470 = vmatprep.subr.bf16.mxu0 0
    %4471 = vmatpush1.bf16.msra.mxu0 0
    %4472 = vmatprep.subr.bf16.mxu0 0
    %4473 = vmatpush1.bf16.msra.mxu0 0
    %4474 = vmatprep.subr.bf16.mxu0 0
    %4475 = vmatpush1.bf16.msra.mxu0 0
    %4476 = vmatprep.subr.bf16.mxu0 0
    %4477 = vmatpush1.bf16.msra.mxu0 0
    %4478 = vmatprep.mubr.bf16.mxu0 0
    %4479 = vmatmul.mubr.bf16.gmra.mrb[0].mxu0 %v2839
    %v4480 = vpop.f32.mrb[0].mxu0
    %v4481 = vadd.f32 %v3406, %v4480
    %v4482 = vpop.f32.mrb[0].mxu0
    %v4483 = vadd.f32 %v3410, %v4482
    %v4484 = vpop.f32.mrb[0].mxu0
    %v4485 = vpop.f32.mrb[0].mxu0
    %4486 = vdwg.mxu0
    %4487 = vmatprep.subr.bf16.mxu0 0
    %4488 = vmatpush1.bf16.msra.mxu0 %v3356
    %4489 = vmatprep.subr.bf16.mxu0 0
    %4490 = vmatpush1.bf16.msra.mxu0 %v3359
    %4491 = vmatprep.subr.bf16.mxu0 0
    %4492 = vmatpush1.bf16.msra.mxu0 %v3362
    %4493 = vmatprep.subr.bf16.mxu0 0
    %4494 = vmatpush1.bf16.msra.mxu0 %v3365
    %4495 = vmatprep.subr.bf16.mxu0 0
    %4496 = vmatpush1.bf16.msra.mxu0 %v3368
    %4497 = vmatprep.subr.bf16.mxu0 0
    %4498 = vmatpush1.bf16.msra.mxu0 %v3371
    %4499 = vmatprep.subr.bf16.mxu0 0
    %4500 = vmatpush1.bf16.msra.mxu0 %v3374
    %4501 = vmatprep.subr.bf16.mxu0 0
    %4502 = vmatpush1.bf16.msra.mxu0 %v3377
    %4503 = vmatprep.subr.bf16.mxu0 0
    %4504 = vmatpush1.bf16.msra.mxu0 0
    %4505 = vmatprep.subr.bf16.mxu0 0
    %4506 = vmatpush1.bf16.msra.mxu0 0
    %4507 = vmatprep.subr.bf16.mxu0 0
    %4508 = vmatpush1.bf16.msra.mxu0 0
    %4509 = vmatprep.subr.bf16.mxu0 0
    %4510 = vmatpush1.bf16.msra.mxu0 0
    %4511 = vmatprep.subr.bf16.mxu0 0
    %4512 = vmatpush1.bf16.msra.mxu0 0
    %4513 = vmatprep.subr.bf16.mxu0 0
    %4514 = vmatpush1.bf16.msra.mxu0 0
    %4515 = vmatprep.subr.bf16.mxu0 0
    %4516 = vmatpush1.bf16.msra.mxu0 0
    %4517 = vmatprep.subr.bf16.mxu0 0
    %4518 = vmatpush1.bf16.msra.mxu0 0
    %4519 = vmatprep.mubr.bf16.mxu0 0
    %4520 = vmatmul.mubr.bf16.gmra.mrb[0].mxu0 %v2839
    %v4521 = vpop.f32.mrb[0].mxu0
    %v4522 = vadd.f32 %v3414, %v4521
    %v4523 = vpop.f32.mrb[0].mxu0
    %v4524 = vpop.f32.mrb[0].mxu0
    %v4525 = vpop.f32.mrb[0].mxu0
    %4526 = vdwg.mxu0
    %4527 = vmatprep.subr.bf16.mxu0 %v3580
    %4528 = vmatpush1.bf16.msra.mxu0 %v3579
    %4529 = vmatprep.subr.bf16.mxu0 %v3583
    %4530 = vmatpush1.bf16.msra.mxu0 %v3582
    %4531 = vmatprep.subr.bf16.mxu0 %v3586
    %4532 = vmatpush1.bf16.msra.mxu0 %v3585
    %4533 = vmatprep.subr.bf16.mxu0 %v3589
    %4534 = vmatpush1.bf16.msra.mxu0 %v3588
    %4535 = vmatprep.subr.bf16.mxu0 %v3592
    %4536 = vmatpush1.bf16.msra.mxu0 %v3591
    %4537 = vmatprep.subr.bf16.mxu0 %v3595
    %4538 = vmatpush1.bf16.msra.mxu0 %v3594
    %4539 = vmatprep.subr.bf16.mxu0 %v3598
    %4540 = vmatpush1.bf16.msra.mxu0 %v3597
    %4541 = vmatprep.subr.bf16.mxu0 %v3601
    %4542 = vmatpush1.bf16.msra.mxu0 %v3600
    %4543 = vmatprep.subr.bf16.mxu0 0
    %4544 = vmatpush1.bf16.msra.mxu0 0
    %4545 = vmatprep.subr.bf16.mxu0 0
    %4546 = vmatpush1.bf16.msra.mxu0 0
    %4547 = vmatprep.subr.bf16.mxu0 0
    %4548 = vmatpush1.bf16.msra.mxu0 0
    %4549 = vmatprep.subr.bf16.mxu0 0
    %4550 = vmatpush1.bf16.msra.mxu0 0
    %4551 = vmatprep.subr.bf16.mxu0 0
    %4552 = vmatpush1.bf16.msra.mxu0 0
    %4553 = vmatprep.subr.bf16.mxu0 0
    %4554 = vmatpush1.bf16.msra.mxu0 0
    %4555 = vmatprep.subr.bf16.mxu0 0
    %4556 = vmatpush1.bf16.msra.mxu0 0
    %4557 = vmatprep.subr.bf16.mxu0 0
    %4558 = vmatpush1.bf16.msra.mxu0 0
    %4559 = vmatprep.mubr.bf16.mxu0 0
    %4560 = vmatmul.mubr.bf16.gmra.mrb[0].mxu0 %v4445
    %v4561 = vpop.f32.mrb[0].mxu0
    %v4562 = vadd.f32 0.0, %v4561
    %v4563 = vpop.f32.mrb[0].mxu0
    %v4564 = vadd.f32 0.0, %v4563
    %v4565 = vpop.f32.mrb[0].mxu0
    %v4566 = vpop.f32.mrb[0].mxu0
    %4567 = vdwg.mxu0
    %4568 = vmatprep.subr.bf16.mxu0 0
    %4569 = vmatpush1.bf16.msra.mxu0 %v3581
    %4570 = vmatprep.subr.bf16.mxu0 0
    %4571 = vmatpush1.bf16.msra.mxu0 %v3584
    %4572 = vmatprep.subr.bf16.mxu0 0
    %4573 = vmatpush1.bf16.msra.mxu0 %v3587
    %4574 = vmatprep.subr.bf16.mxu0 0
    %4575 = vmatpush1.bf16.msra.mxu0 %v3590
    %4576 = vmatprep.subr.bf16.mxu0 0
    %4577 = vmatpush1.bf16.msra.mxu0 %v3593
    %4578 = vmatprep.subr.bf16.mxu0 0
    %4579 = vmatpush1.bf16.msra.mxu0 %v3596
    %4580 = vmatprep.subr.bf16.mxu0 0
    %4581 = vmatpush1.bf16.msra.mxu0 %v3599
    %4582 = vmatprep.subr.bf16.mxu0 0
    %4583 = vmatpush1.bf16.msra.mxu0 %v3602
    %4584 = vmatprep.subr.bf16.mxu0 0
    %4585 = vmatpush1.bf16.msra.mxu0 0
    %4586 = vmatprep.subr.bf16.mxu0 0
    %4587 = vmatpush1.bf16.msra.mxu0 0
    %4588 = vmatprep.subr.bf16.mxu0 0
    %4589 = vmatpush1.bf16.msra.mxu0 0
    %4590 = vmatprep.subr.bf16.mxu0 0
    %4591 = vmatpush1.bf16.msra.mxu0 0
    %4592 = vmatprep.subr.bf16.mxu0 0
    %4593 = vmatpush1.bf16.msra.mxu0 0
    %4594 = vmatprep.subr.bf16.mxu0 0
    %4595 = vmatpush1.bf16.msra.mxu0 0
    %4596 = vmatprep.subr.bf16.mxu0 0
    %4597 = vmatpush1.bf16.msra.mxu0 0
    %4598 = vmatprep.subr.bf16.mxu0 0
    %4599 = vmatpush1.bf16.msra.mxu0 0
    %4600 = vmatprep.mubr.bf16.mxu0 0
    %4601 = vmatmul.mubr.bf16.gmra.mrb[0].mxu0 %v4445
    %v4602 = vpop.f32.mrb[0].mxu0
    %v4603 = vadd.f32 0.0, %v4602
    %v4604 = vpop.f32.mrb[0].mxu0
    %v4605 = vpop.f32.mrb[0].mxu0
    %v4606 = vpop.f32.mrb[0].mxu0
    %4607 = vdwg.mxu0
    %v4608 = vadd.f32 %v4481, %v4562
    %v4609 = vadd.f32 %v4483, %v4564
    %v4610 = vmul.f32 %v4608, 0.5
    %v4611 = vmul.f32 %v4609, 0.5
    %v4612 = vtanh.pop %v4610
    %v4613 = vtanh.pop %v4611
    %v4614 = vmul.f32 %v4612, 0.5
    %v4615 = vmul.f32 %v4613, 0.5
    %v4616 = vadd.f32 %v4614, 0.5
    %v4617 = vadd.f32 %v4615, 0.5
    %v4618 = vadd.f32 %v4603, %v3238
    %v4619 = vmul.f32 %v4616, %v4618
    %v4620 = vadd.f32 %v4522, %v4619
    %v4621 = vtanh.pop %v4620
    %v4622 = vsub.f32 %v4444, %v4621
    %v4623 = vmul.f32 %v4617, %v4622
    %v4624 = vadd.f32 %v4621, %v4623
    %v4625 = vpack.c.bf16 %v4624, %v4624
    %4626 = vmatprep.subr.bf16.mxu0 %v3355
    %4627 = vmatpush1.bf16.msra.mxu0 %v3354
    %4628 = vmatprep.subr.bf16.mxu0 %v3358
    %4629 = vmatpush1.bf16.msra.mxu0 %v3357
    %4630 = vmatprep.subr.bf16.mxu0 %v3361
    %4631 = vmatpush1.bf16.msra.mxu0 %v3360
    %4632 = vmatprep.subr.bf16.mxu0 %v3364
    %4633 = vmatpush1.bf16.msra.mxu0 %v3363
    %4634 = vmatprep.subr.bf16.mxu0 %v3367
    %4635 = vmatpush1.bf16.msra.mxu0 %v3366
    %4636 = vmatprep.subr.bf16.mxu0 %v3370
    %4637 = vmatpush1.bf16.msra.mxu0 %v3369
    %4638 = vmatprep.subr.bf16.mxu0 %v3373
    %4639 = vmatpush1.bf16.msra.mxu0 %v3372
    %4640 = vmatprep.subr.bf16.mxu0 %v3376
    %4641 = vmatpush1.bf16.msra.mxu0 %v3375
    %4642 = vmatprep.subr.bf16.mxu0 0
    %4643 = vmatpush1.bf16.msra.mxu0 0
    %4644 = vmatprep.subr.bf16.mxu0 0
    %4645 = vmatpush1.bf16.msra.mxu0 0
    %4646 = vmatprep.subr.bf16.mxu0 0
    %4647 = vmatpush1.bf16.msra.mxu0 0
    %4648 = vmatprep.subr.bf16.mxu0 0
    %4649 = vmatpush1.bf16.msra.mxu0 0
    %4650 = vmatprep.subr.bf16.mxu0 0
    %4651 = vmatpush1.bf16.msra.mxu0 0
    %4652 = vmatprep.subr.bf16.mxu0 0
    %4653 = vmatpush1.bf16.msra.mxu0 0
    %4654 = vmatprep.subr.bf16.mxu0 0
    %4655 = vmatpush1.bf16.msra.mxu0 0
    %4656 = vmatprep.subr.bf16.mxu0 0
    %4657 = vmatpush1.bf16.msra.mxu0 0
    %4658 = vmatprep.mubr.bf16.mxu0 0
    %4659 = vmatmul.mubr.bf16.gmra.mrb[0].mxu0 %v3019
    %v4660 = vpop.f32.mrb[0].mxu0
    %v4661 = vadd.f32 %v3406, %v4660
    %v4662 = vpop.f32.mrb[0].mxu0
    %v4663 = vadd.f32 %v3410, %v4662
    %v4664 = vpop.f32.mrb[0].mxu0
    %v4665 = vpop.f32.mrb[0].mxu0
    %4666 = vdwg.mxu0
    %4667 = vmatprep.subr.bf16.mxu0 0
    %4668 = vmatpush1.bf16.msra.mxu0 %v3356
    %4669 = vmatprep.subr.bf16.mxu0 0
    %4670 = vmatpush1.bf16.msra.mxu0 %v3359
    %4671 = vmatprep.subr.bf16.mxu0 0
    %4672 = vmatpush1.bf16.msra.mxu0 %v3362
    %4673 = vmatprep.subr.bf16.mxu0 0
    %4674 = vmatpush1.bf16.msra.mxu0 %v3365
    %4675 = vmatprep.subr.bf16.mxu0 0
    %4676 = vmatpush1.bf16.msra.mxu0 %v3368
    %4677 = vmatprep.subr.bf16.mxu0 0
    %4678 = vmatpush1.bf16.msra.mxu0 %v3371
    %4679 = vmatprep.subr.bf16.mxu0 0
    %4680 = vmatpush1.bf16.msra.mxu0 %v3374
    %4681 = vmatprep.subr.bf16.mxu0 0
    %4682 = vmatpush1.bf16.msra.mxu0 %v3377
    %4683 = vmatprep.subr.bf16.mxu0 0
    %4684 = vmatpush1.bf16.msra.mxu0 0
    %4685 = vmatprep.subr.bf16.mxu0 0
    %4686 = vmatpush1.bf16.msra.mxu0 0
    %4687 = vmatprep.subr.bf16.mxu0 0
    %4688 = vmatpush1.bf16.msra.mxu0 0
    %4689 = vmatprep.subr.bf16.mxu0 0
    %4690 = vmatpush1.bf16.msra.mxu0 0
    %4691 = vmatprep.subr.bf16.mxu0 0
    %4692 = vmatpush1.bf16.msra.mxu0 0
    %4693 = vmatprep.subr.bf16.mxu0 0
    %4694 = vmatpush1.bf16.msra.mxu0 0
    %4695 = vmatprep.subr.bf16.mxu0 0
    %4696 = vmatpush1.bf16.msra.mxu0 0
    %4697 = vmatprep.subr.bf16.mxu0 0
    %4698 = vmatpush1.bf16.msra.mxu0 0
    %4699 = vmatprep.mubr.bf16.mxu0 0
    %4700 = vmatmul.mubr.bf16.gmra.mrb[0].mxu0 %v3019
    %v4701 = vpop.f32.mrb[0].mxu0
    %v4702 = vadd.f32 %v3414, %v4701
    %v4703 = vpop.f32.mrb[0].mxu0
    %v4704 = vpop.f32.mrb[0].mxu0
    %v4705 = vpop.f32.mrb[0].mxu0
    %4706 = vdwg.mxu0
    %4707 = vmatprep.subr.bf16.mxu0 %v3580
    %4708 = vmatpush1.bf16.msra.mxu0 %v3579
    %4709 = vmatprep.subr.bf16.mxu0 %v3583
    %4710 = vmatpush1.bf16.msra.mxu0 %v3582
    %4711 = vmatprep.subr.bf16.mxu0 %v3586
    %4712 = vmatpush1.bf16.msra.mxu0 %v3585
    %4713 = vmatprep.subr.bf16.mxu0 %v3589
    %4714 = vmatpush1.bf16.msra.mxu0 %v3588
    %4715 = vmatprep.subr.bf16.mxu0 %v3592
    %4716 = vmatpush1.bf16.msra.mxu0 %v3591
    %4717 = vmatprep.subr.bf16.mxu0 %v3595
    %4718 = vmatpush1.bf16.msra.mxu0 %v3594
    %4719 = vmatprep.subr.bf16.mxu0 %v3598
    %4720 = vmatpush1.bf16.msra.mxu0 %v3597
    %4721 = vmatprep.subr.bf16.mxu0 %v3601
    %4722 = vmatpush1.bf16.msra.mxu0 %v3600
    %4723 = vmatprep.subr.bf16.mxu0 0
    %4724 = vmatpush1.bf16.msra.mxu0 0
    %4725 = vmatprep.subr.bf16.mxu0 0
    %4726 = vmatpush1.bf16.msra.mxu0 0
    %4727 = vmatprep.subr.bf16.mxu0 0
    %4728 = vmatpush1.bf16.msra.mxu0 0
    %4729 = vmatprep.subr.bf16.mxu0 0
    %4730 = vmatpush1.bf16.msra.mxu0 0
    %4731 = vmatprep.subr.bf16.mxu0 0
    %4732 = vmatpush1.bf16.msra.mxu0 0
    %4733 = vmatprep.subr.bf16.mxu0 0
    %4734 = vmatpush1.bf16.msra.mxu0 0
    %4735 = vmatprep.subr.bf16.mxu0 0
    %4736 = vmatpush1.bf16.msra.mxu0 0
    %4737 = vmatprep.subr.bf16.mxu0 0
    %4738 = vmatpush1.bf16.msra.mxu0 0
    %4739 = vmatprep.mubr.bf16.mxu0 0
    %4740 = vmatmul.mubr.bf16.gmra.mrb[0].mxu0 %v4625
    %v4741 = vpop.f32.mrb[0].mxu0
    %v4742 = vadd.f32 0.0, %v4741
    %v4743 = vpop.f32.mrb[0].mxu0
    %v4744 = vadd.f32 0.0, %v4743
    %v4745 = vpop.f32.mrb[0].mxu0
    %v4746 = vpop.f32.mrb[0].mxu0
    %4747 = vdwg.mxu0
    %4748 = vmatprep.subr.bf16.mxu0 0
    %4749 = vmatpush1.bf16.msra.mxu0 %v3581
    %4750 = vmatprep.subr.bf16.mxu0 0
    %4751 = vmatpush1.bf16.msra.mxu0 %v3584
    %4752 = vmatprep.subr.bf16.mxu0 0
    %4753 = vmatpush1.bf16.msra.mxu0 %v3587
    %4754 = vmatprep.subr.bf16.mxu0 0
    %4755 = vmatpush1.bf16.msra.mxu0 %v3590
    %4756 = vmatprep.subr.bf16.mxu0 0
    %4757 = vmatpush1.bf16.msra.mxu0 %v3593
    %4758 = vmatprep.subr.bf16.mxu0 0
    %4759 = vmatpush1.bf16.msra.mxu0 %v3596
    %4760 = vmatprep.subr.bf16.mxu0 0
    %4761 = vmatpush1.bf16.msra.mxu0 %v3599
    %4762 = vmatprep.subr.bf16.mxu0 0
    %4763 = vmatpush1.bf16.msra.mxu0 %v3602
    %4764 = vmatprep.subr.bf16.mxu0 0
    %4765 = vmatpush1.bf16.msra.mxu0 0
    %4766 = vmatprep.subr.bf16.mxu0 0
    %4767 = vmatpush1.bf16.msra.mxu0 0
    %4768 = vmatprep.subr.bf16.mxu0 0
    %4769 = vmatpush1.bf16.msra.mxu0 0
    %4770 = vmatprep.subr.bf16.mxu0 0
    %4771 = vmatpush1.bf16.msra.mxu0 0
    %4772 = vmatprep.subr.bf16.mxu0 0
    %4773 = vmatpush1.bf16.msra.mxu0 0
    %4774 = vmatprep.subr.bf16.mxu0 0
    %4775 = vmatpush1.bf16.msra.mxu0 0
    %4776 = vmatprep.subr.bf16.mxu0 0
    %4777 = vmatpush1.bf16.msra.mxu0 0
    %4778 = vmatprep.subr.bf16.mxu0 0
    %4779 = vmatpush1.bf16.msra.mxu0 0
    %4780 = vmatprep.mubr.bf16.mxu0 0
    %4781 = vmatmul.mubr.bf16.gmra.mrb[0].mxu0 %v4625
    %v4782 = vpop.f32.mrb[0].mxu0
    %v4783 = vadd.f32 0.0, %v4782
    %v4784 = vpop.f32.mrb[0].mxu0
    %v4785 = vpop.f32.mrb[0].mxu0
    %v4786 = vpop.f32.mrb[0].mxu0
    %4787 = vdwg.mxu0
    %v4788 = vadd.f32 %v4661, %v4742
    %v4789 = vadd.f32 %v4663, %v4744
    %v4790 = vmul.f32 %v4788, 0.5
    %v4791 = vmul.f32 %v4789, 0.5
    %v4792 = vtanh.pop %v4790
    %v4793 = vtanh.pop %v4791
    %v4794 = vmul.f32 %v4792, 0.5
    %v4795 = vmul.f32 %v4793, 0.5
    %v4796 = vadd.f32 %v4794, 0.5
    %v4797 = vadd.f32 %v4795, 0.5
    %v4798 = vadd.f32 %v4783, %v3238
    %v4799 = vmul.f32 %v4796, %v4798
    %v4800 = vadd.f32 %v4702, %v4799
    %v4801 = vtanh.pop %v4800
    %v4802 = vsub.f32 %v4624, %v4801
    %v4803 = vmul.f32 %v4797, %v4802
    %v4804 = vadd.f32 %v4801, %v4803
    %v4805 = vpack.c.bf16 %v4804, %v4804
    %4806 = vmatprep.subr.bf16.mxu0 %v3355
    %4807 = vmatpush1.bf16.msra.mxu0 %v3354
    %4808 = vmatprep.subr.bf16.mxu0 %v3358
    %4809 = vmatpush1.bf16.msra.mxu0 %v3357
    %4810 = vmatprep.subr.bf16.mxu0 %v3361
    %4811 = vmatpush1.bf16.msra.mxu0 %v3360
    %4812 = vmatprep.subr.bf16.mxu0 %v3364
    %4813 = vmatpush1.bf16.msra.mxu0 %v3363
    %4814 = vmatprep.subr.bf16.mxu0 %v3367
    %4815 = vmatpush1.bf16.msra.mxu0 %v3366
    %4816 = vmatprep.subr.bf16.mxu0 %v3370
    %4817 = vmatpush1.bf16.msra.mxu0 %v3369
    %4818 = vmatprep.subr.bf16.mxu0 %v3373
    %4819 = vmatpush1.bf16.msra.mxu0 %v3372
    %4820 = vmatprep.subr.bf16.mxu0 %v3376
    %4821 = vmatpush1.bf16.msra.mxu0 %v3375
    %4822 = vmatprep.subr.bf16.mxu0 0
    %4823 = vmatpush1.bf16.msra.mxu0 0
    %4824 = vmatprep.subr.bf16.mxu0 0
    %4825 = vmatpush1.bf16.msra.mxu0 0
    %4826 = vmatprep.subr.bf16.mxu0 0
    %4827 = vmatpush1.bf16.msra.mxu0 0
    %4828 = vmatprep.subr.bf16.mxu0 0
    %4829 = vmatpush1.bf16.msra.mxu0 0
    %4830 = vmatprep.subr.bf16.mxu0 0
    %4831 = vmatpush1.bf16.msra.mxu0 0
    %4832 = vmatprep.subr.bf16.mxu0 0
    %4833 = vmatpush1.bf16.msra.mxu0 0
    %4834 = vmatprep.subr.bf16.mxu0 0
    %4835 = vmatpush1.bf16.msra.mxu0 0
    %4836 = vmatprep.subr.bf16.mxu0 0
    %4837 = vmatpush1.bf16.msra.mxu0 0
    %4838 = vmatprep.mubr.bf16.mxu0 0
    %4839 = vmatmul.mubr.bf16.gmra.mrb[0].mxu0 %v3204
    %v4840 = vpop.f32.mrb[0].mxu0
    %v4841 = vadd.f32 %v3406, %v4840
    %v4842 = vpop.f32.mrb[0].mxu0
    %v4843 = vadd.f32 %v3410, %v4842
    %v4844 = vpop.f32.mrb[0].mxu0
    %v4845 = vpop.f32.mrb[0].mxu0
    %4846 = vdwg.mxu0
    %4847 = vmatprep.subr.bf16.mxu0 0
    %4848 = vmatpush1.bf16.msra.mxu0 %v3356
    %4849 = vmatprep.subr.bf16.mxu0 0
    %4850 = vmatpush1.bf16.msra.mxu0 %v3359
    %4851 = vmatprep.subr.bf16.mxu0 0
    %4852 = vmatpush1.bf16.msra.mxu0 %v3362
    %4853 = vmatprep.subr.bf16.mxu0 0
    %4854 = vmatpush1.bf16.msra.mxu0 %v3365
    %4855 = vmatprep.subr.bf16.mxu0 0
    %4856 = vmatpush1.bf16.msra.mxu0 %v3368
    %4857 = vmatprep.subr.bf16.mxu0 0
    %4858 = vmatpush1.bf16.msra.mxu0 %v3371
    %4859 = vmatprep.subr.bf16.mxu0 0
    %4860 = vmatpush1.bf16.msra.mxu0 %v3374
    %4861 = vmatprep.subr.bf16.mxu0 0
    %4862 = vmatpush1.bf16.msra.mxu0 %v3377
    %4863 = vmatprep.subr.bf16.mxu0 0
    %4864 = vmatpush1.bf16.msra.mxu0 0
    %4865 = vmatprep.subr.bf16.mxu0 0
    %4866 = vmatpush1.bf16.msra.mxu0 0
    %4867 = vmatprep.subr.bf16.mxu0 0
    %4868 = vmatpush1.bf16.msra.mxu0 0
    %4869 = vmatprep.subr.bf16.mxu0 0
    %4870 = vmatpush1.bf16.msra.mxu0 0
    %4871 = vmatprep.subr.bf16.mxu0 0
    %4872 = vmatpush1.bf16.msra.mxu0 0
    %4873 = vmatprep.subr.bf16.mxu0 0
    %4874 = vmatpush1.bf16.msra.mxu0 0
    %4875 = vmatprep.subr.bf16.mxu0 0
    %4876 = vmatpush1.bf16.msra.mxu0 0
    %4877 = vmatprep.subr.bf16.mxu0 0
    %4878 = vmatpush1.bf16.msra.mxu0 0
    %4879 = vmatprep.mubr.bf16.mxu0 0
    %4880 = vmatmul.mubr.bf16.gmra.mrb[0].mxu0 %v3204
    %v4881 = vpop.f32.mrb[0].mxu0
    %v4882 = vadd.f32 %v3414, %v4881
    %v4883 = vpop.f32.mrb[0].mxu0
    %v4884 = vpop.f32.mrb[0].mxu0
    %v4885 = vpop.f32.mrb[0].mxu0
    %4886 = vdwg.mxu0
    %4887 = vmatprep.subr.bf16.mxu0 %v3580
    %4888 = vmatpush1.bf16.msra.mxu0 %v3579
    %4889 = vmatprep.subr.bf16.mxu0 %v3583
    %4890 = vmatpush1.bf16.msra.mxu0 %v3582
    %4891 = vmatprep.subr.bf16.mxu0 %v3586
    %4892 = vmatpush1.bf16.msra.mxu0 %v3585
    %4893 = vmatprep.subr.bf16.mxu0 %v3589
    %4894 = vmatpush1.bf16.msra.mxu0 %v3588
    %4895 = vmatprep.subr.bf16.mxu0 %v3592
    %4896 = vmatpush1.bf16.msra.mxu0 %v3591
    %4897 = vmatprep.subr.bf16.mxu0 %v3595
    %4898 = vmatpush1.bf16.msra.mxu0 %v3594
    %4899 = vmatprep.subr.bf16.mxu0 %v3598
    %4900 = vmatpush1.bf16.msra.mxu0 %v3597
    %4901 = vmatprep.subr.bf16.mxu0 %v3601
    %4902 = vmatpush1.bf16.msra.mxu0 %v3600
    %4903 = vmatprep.subr.bf16.mxu0 0
    %4904 = vmatpush1.bf16.msra.mxu0 0
    %4905 = vmatprep.subr.bf16.mxu0 0
    %4906 = vmatpush1.bf16.msra.mxu0 0
    %4907 = vmatprep.subr.bf16.mxu0 0
    %4908 = vmatpush1.bf16.msra.mxu0 0
    %4909 = vmatprep.subr.bf16.mxu0 0
    %4910 = vmatpush1.bf16.msra.mxu0 0
    %4911 = vmatprep.subr.bf16.mxu0 0
    %4912 = vmatpush1.bf16.msra.mxu0 0
    %4913 = vmatprep.subr.bf16.mxu0 0
    %4914 = vmatpush1.bf16.msra.mxu0 0
    %4915 = vmatprep.subr.bf16.mxu0 0
    %4916 = vmatpush1.bf16.msra.mxu0 0
    %4917 = vmatprep.subr.bf16.mxu0 0
    %4918 = vmatpush1.bf16.msra.mxu0 0
    %4919 = vmatprep.mubr.bf16.mxu0 0
    %4920 = vmatmul.mubr.bf16.gmra.mrb[0].mxu0 %v4805
    %v4921 = vpop.f32.mrb[0].mxu0
    %v4922 = vadd.f32 0.0, %v4921
    %v4923 = vpop.f32.mrb[0].mxu0
    %v4924 = vadd.f32 0.0, %v4923
    %v4925 = vpop.f32.mrb[0].mxu0
    %v4926 = vpop.f32.mrb[0].mxu0
    %4927 = vdwg.mxu0
    %4928 = vmatprep.subr.bf16.mxu0 0
    %4929 = vmatpush1.bf16.msra.mxu0 %v3581
    %4930 = vmatprep.subr.bf16.mxu0 0
    %4931 = vmatpush1.bf16.msra.mxu0 %v3584
    %4932 = vmatprep.subr.bf16.mxu0 0
    %4933 = vmatpush1.bf16.msra.mxu0 %v3587
    %4934 = vmatprep.subr.bf16.mxu0 0
    %4935 = vmatpush1.bf16.msra.mxu0 %v3590
    %4936 = vmatprep.subr.bf16.mxu0 0
    %4937 = vmatpush1.bf16.msra.mxu0 %v3593
    %4938 = vmatprep.subr.bf16.mxu0 0
    %4939 = vmatpush1.bf16.msra.mxu0 %v3596
    %4940 = vmatprep.subr.bf16.mxu0 0
    %4941 = vmatpush1.bf16.msra.mxu0 %v3599
    %4942 = vmatprep.subr.bf16.mxu0 0
    %4943 = vmatpush1.bf16.msra.mxu0 %v3602
    %4944 = vmatprep.subr.bf16.mxu0 0
    %4945 = vmatpush1.bf16.msra.mxu0 0
    %4946 = vmatprep.subr.bf16.mxu0 0
    %4947 = vmatpush1.bf16.msra.mxu0 0
    %4948 = vmatprep.subr.bf16.mxu0 0
    %4949 = vmatpush1.bf16.msra.mxu0 0
    %4950 = vmatprep.subr.bf16.mxu0 0
    %4951 = vmatpush1.bf16.msra.mxu0 0
    %4952 = vmatprep.subr.bf16.mxu0 0
    %4953 = vmatpush1.bf16.msra.mxu0 0
    %4954 = vmatprep.subr.bf16.mxu0 0
    %4955 = vmatpush1.bf16.msra.mxu0 0
    %4956 = vmatprep.subr.bf16.mxu0 0
    %4957 = vmatpush1.bf16.msra.mxu0 0
    %4958 = vmatprep.subr.bf16.mxu0 0
    %4959 = vmatpush1.bf16.msra.mxu0 0
    %4960 = vmatprep.mubr.bf16.mxu0 0
    %4961 = vmatmul.mubr.bf16.gmra.mrb[0].mxu0 %v4805
    %v4962 = vpop.f32.mrb[0].mxu0
    %v4963 = vadd.f32 0.0, %v4962
    %v4964 = vpop.f32.mrb[0].mxu0
    %v4965 = vpop.f32.mrb[0].mxu0
    %v4966 = vpop.f32.mrb[0].mxu0
    %4967 = vdwg.mxu0
    %v4968 = vadd.f32 %v4841, %v4922
    %v4969 = vadd.f32 %v4843, %v4924
    %v4970 = vmul.f32 %v4968, 0.5
    %v4971 = vmul.f32 %v4969, 0.5
    %v4972 = vtanh.pop %v4970
    %v4973 = vtanh.pop %v4971
    %v4974 = vmul.f32 %v4972, 0.5
    %v4975 = vmul.f32 %v4973, 0.5
    %v4976 = vadd.f32 %v4974, 0.5
    %v4977 = vadd.f32 %v4975, 0.5
    %v4978 = vadd.f32 %v4963, %v3238
    %v4979 = vmul.f32 %v4976, %v4978
    %v4980 = vadd.f32 %v4882, %v4979
    %v4981 = vtanh.pop %v4980
    %v4982 = vsub.f32 %v4804, %v4981
    %v4983 = vmul.f32 %v4977, %v4982
    %v4984 = vadd.f32 %v4981, %v4983
    %v4985 = vpack.c.bf16 %v4984, %v4984
    %s4986 = scalar_lea.vmem [#allocation4], 576
    %v4987 = vld [vmem:[%s4986] sm:$0xff]
    %v4988 = vld [vmem:[%s4986 + $0x8] sm:$0xf]
    %v4989 = vld [vmem:[%s4986 + $0xc] sm:$0xff]
    %v4990 = vld [vmem:[%s4986 + $0x14] sm:$0xf]
    %v4991 = vld [vmem:[%s4986 + $0x18] sm:$0xff]
    %v4992 = vld [vmem:[%s4986 + $0x20] sm:$0xf]
    %v4993 = vld [vmem:[%s4986 + $0x24] sm:$0xff]
    %v4994 = vld [vmem:[%s4986 + $0x2c] sm:$0xf]
    %v4995 = vld [vmem:[%s4986 + $0x30] sm:$0xff]
    %v4996 = vld [vmem:[%s4986 + $0x38] sm:$0xf]
    %v4997 = vld [vmem:[%s4986 + $0x3c] sm:$0xff]
    %v4998 = vld [vmem:[%s4986 + $0x44] sm:$0xf]
    %v4999 = vld [vmem:[%s4986 + $0x48] sm:$0xff]
    %v5000 = vld [vmem:[%s4986 + $0x50] sm:$0xf]
    %v5001 = vld [vmem:[%s4986 + $0x54] sm:$0xff]
    %v5002 = vld [vmem:[%s4986 + $0x5c] sm:$0xf]
    %v5003 = vld [vmem:[%s4986 + $0x60] sm:$0xff]
    %v5004 = vld [vmem:[%s4986 + $0x68] sm:$0xf]
    %v5005 = vld [vmem:[%s4986 + $0x6c] sm:$0xff]
    %v5006 = vld [vmem:[%s4986 + $0x74] sm:$0xf]
    %v5007 = vld [vmem:[%s4986 + $0x78] sm:$0xff]
    %v5008 = vld [vmem:[%s4986 + $0x80] sm:$0xf]
    %v5009 = vld [vmem:[%s4986 + $0x84] sm:$0xff]
    %v5010 = vld [vmem:[%s4986 + $0x8c] sm:$0xf]
    %v5011 = vld [vmem:[%s4986 + $0x90] sm:$0xff]
    %v5012 = vld [vmem:[%s4986 + $0x98] sm:$0xf]
    %v5013 = vld [vmem:[%s4986 + $0x9c] sm:$0xff]
    %v5014 = vld [vmem:[%s4986 + $0xa4] sm:$0xf]
    %v5015 = vld [vmem:[%s4986 + $0xa8] sm:$0xff]
    %v5016 = vld [vmem:[%s4986 + $0xb0] sm:$0xf]
    %v5017 = vld [vmem:[%s4986 + $0xb4] sm:$0xff]
    %v5018 = vld [vmem:[%s4986 + $0xbc] sm:$0xf]
    %v5019 = vld [vmem:[#allocation7 + $0x3] sm:$0x1]
    %s5020 = scalar_lea.vmem [#allocation2], 576
    %v5021 = vld [vmem:[%s5020] sm:$0xff]
    %v5022 = vld [vmem:[%s5020 + $0x8] sm:$0xf]
    %v5023 = vld [vmem:[%s5020 + $0xc] sm:$0xff]
    %v5024 = vld [vmem:[%s5020 + $0x14] sm:$0xf]
    %v5025 = vld [vmem:[%s5020 + $0x18] sm:$0xff]
    %v5026 = vld [vmem:[%s5020 + $0x20] sm:$0xf]
    %v5027 = vld [vmem:[%s5020 + $0x24] sm:$0xff]
    %v5028 = vld [vmem:[%s5020 + $0x2c] sm:$0xf]
    %v5029 = vld [vmem:[%s5020 + $0x30] sm:$0xff]
    %v5030 = vld [vmem:[%s5020 + $0x38] sm:$0xf]
    %v5031 = vld [vmem:[%s5020 + $0x3c] sm:$0xff]
    %v5032 = vld [vmem:[%s5020 + $0x44] sm:$0xf]
    %v5033 = vld [vmem:[%s5020 + $0x48] sm:$0xff]
    %v5034 = vld [vmem:[%s5020 + $0x50] sm:$0xf]
    %v5035 = vld [vmem:[%s5020 + $0x54] sm:$0xff]
    %v5036 = vld [vmem:[%s5020 + $0x5c] sm:$0xf]
    %v5037 = vld [vmem:[%s5020 + $0x60] sm:$0xff]
    %v5038 = vld [vmem:[%s5020 + $0x68] sm:$0xf]
    %v5039 = vld [vmem:[%s5020 + $0x6c] sm:$0xff]
    %v5040 = vld [vmem:[%s5020 + $0x74] sm:$0xf]
    %v5041 = vld [vmem:[%s5020 + $0x78] sm:$0xff]
    %v5042 = vld [vmem:[%s5020 + $0x80] sm:$0xf]
    %v5043 = vld [vmem:[%s5020 + $0x84] sm:$0xff]
    %v5044 = vld [vmem:[%s5020 + $0x8c] sm:$0xf]
    %v5045 = vld [vmem:[%s5020 + $0x90] sm:$0xff]
    %v5046 = vld [vmem:[%s5020 + $0x98] sm:$0xf]
    %v5047 = vld [vmem:[%s5020 + $0x9c] sm:$0xff]
    %v5048 = vld [vmem:[%s5020 + $0xa4] sm:$0xf]
    %v5049 = vld [vmem:[%s5020 + $0xa8] sm:$0xff]
    %v5050 = vld [vmem:[%s5020 + $0xb0] sm:$0xf]
    %v5051 = vld [vmem:[%s5020 + $0xb4] sm:$0xff]
    %v5052 = vld [vmem:[%s5020 + $0xbc] sm:$0xf]
    %s5053 = scalar_lea.vmem [#allocation6], 3
    %v5054 = vld [vmem:[%s5053] ss:$4 sm:$0x7]
    %v5087 = vunpack.c.l.b16 %v5021
    %v5088 = vunpack.c.h.b16 %v5021
    %v5089 = vunpack.c.l.b16 %v5022
    %v5090 = vunpack.c.l.b16 %v5023
    %v5091 = vunpack.c.h.b16 %v5023
    %v5092 = vunpack.c.l.b16 %v5024
    %v5093 = vunpack.c.l.b16 %v5025
    %v5094 = vunpack.c.h.b16 %v5025
    %v5095 = vunpack.c.l.b16 %v5026
    %v5096 = vunpack.c.l.b16 %v5027
    %v5097 = vunpack.c.h.b16 %v5027
    %v5098 = vunpack.c.l.b16 %v5028
    %v5099 = vunpack.c.l.b16 %v5029
    %v5100 = vunpack.c.h.b16 %v5029
    %v5101 = vunpack.c.l.b16 %v5030
    %v5102 = vunpack.c.l.b16 %v5031
    %v5103 = vunpack.c.h.b16 %v5031
    %v5104 = vunpack.c.l.b16 %v5032
    %v5105 = vunpack.c.l.b16 %v5033
    %v5106 = vunpack.c.h.b16 %v5033
    %v5107 = vunpack.c.l.b16 %v5034
    %v5108 = vunpack.c.l.b16 %v5035
    %v5109 = vunpack.c.h.b16 %v5035
    %v5110 = vunpack.c.l.b16 %v5036
    %v5111 = vunpack.c.l.b16 %v5037
    %v5112 = vunpack.c.h.b16 %v5037
    %v5113 = vunpack.c.l.b16 %v5038
    %v5114 = vunpack.c.l.b16 %v5039
    %v5115 = vunpack.c.h.b16 %v5039
    %v5116 = vunpack.c.l.b16 %v5040
    %v5117 = vunpack.c.l.b16 %v5041
    %v5118 = vunpack.c.h.b16 %v5041
    %v5119 = vunpack.c.l.b16 %v5042
    %v5120 = vunpack.c.l.b16 %v5043
    %v5121 = vunpack.c.h.b16 %v5043
    %v5122 = vunpack.c.l.b16 %v5044
    %v5123 = vunpack.c.l.b16 %v5045
    %v5124 = vunpack.c.h.b16 %v5045
    %v5125 = vunpack.c.l.b16 %v5046
    %v5126 = vunpack.c.l.b16 %v5047
    %v5127 = vunpack.c.h.b16 %v5047
    %v5128 = vunpack.c.l.b16 %v5048
    %v5129 = vunpack.c.l.b16 %v5049
    %v5130 = vunpack.c.h.b16 %v5049
    %v5131 = vunpack.c.l.b16 %v5050
    %v5132 = vunpack.c.l.b16 %v5051
    %v5133 = vunpack.c.h.b16 %v5051
    %v5134 = vunpack.c.l.b16 %v5052
    %v5135 = vpack.c.b16 %v5090, %v5087
    %v5136 = vpack.c.b16 %v5091, %v5088
    %v5137 = vpack.c.b16 %v5092, %v5089
    %v5138 = vpack.c.b16 %v5096, %v5093
    %v5139 = vpack.c.b16 %v5097, %v5094
    %v5140 = vpack.c.b16 %v5098, %v5095
    %v5141 = vpack.c.b16 %v5102, %v5099
    %v5142 = vpack.c.b16 %v5103, %v5100
    %v5143 = vpack.c.b16 %v5104, %v5101
    %v5144 = vpack.c.b16 %v5108, %v5105
    %v5145 = vpack.c.b16 %v5109, %v5106
    %v5146 = vpack.c.b16 %v5110, %v5107
    %v5147 = vpack.c.b16 %v5114, %v5111
    %v5148 = vpack.c.b16 %v5115, %v5112
    %v5149 = vpack.c.b16 %v5116, %v5113
    %v5150 = vpack.c.b16 %v5120, %v5117
    %v5151 = vpack.c.b16 %v5121, %v5118
    %v5152 = vpack.c.b16 %v5122, %v5119
    %v5153 = vpack.c.b16 %v5126, %v5123
    %v5154 = vpack.c.b16 %v5127, %v5124
    %v5155 = vpack.c.b16 %v5128, %v5125
    %v5156 = vpack.c.b16 %v5132, %v5129
    %v5157 = vpack.c.b16 %v5133, %v5130
    %v5158 = vpack.c.b16 %v5134, %v5131
    %v5184 = vlaneseq
    %v5185 = vshrl.u32 %v5184, 7
    %v5186 = vsub.s32 0, %v5185
    %v5187 = vrot.slane %v5054, %v5186
    %v5188 = vlaneseq
    %v5189 = vshrl.u32 %v5188, 7
    %v5190 = vsub.s32 1, %v5189
    %v5191 = vrot.slane %v5054, %v5190
    %v5192 = vlaneseq
    %v5193 = vshrl.u32 %v5192, 7
    %v5194 = vsub.s32 2, %v5193
    %v5195 = vrot.slane %v5054, %v5194
    %5199 = vmatprep.subr.bf16.mxu0 %v5136
    %5200 = vmatpush1.bf16.msra.mxu0 %v5135
    %5201 = vmatprep.subr.bf16.mxu0 %v5139
    %5202 = vmatpush1.bf16.msra.mxu0 %v5138
    %5203 = vmatprep.subr.bf16.mxu0 %v5142
    %5204 = vmatpush1.bf16.msra.mxu0 %v5141
    %5205 = vmatprep.subr.bf16.mxu0 %v5145
    %5206 = vmatpush1.bf16.msra.mxu0 %v5144
    %5207 = vmatprep.subr.bf16.mxu0 %v5148
    %5208 = vmatpush1.bf16.msra.mxu0 %v5147
    %5209 = vmatprep.subr.bf16.mxu0 %v5151
    %5210 = vmatpush1.bf16.msra.mxu0 %v5150
    %5211 = vmatprep.subr.bf16.mxu0 %v5154
    %5212 = vmatpush1.bf16.msra.mxu0 %v5153
    %5213 = vmatprep.subr.bf16.mxu0 %v5157
    %5214 = vmatpush1.bf16.msra.mxu0 %v5156
    %5215 = vmatprep.subr.bf16.mxu0 0
    %5216 = vmatpush1.bf16.msra.mxu0 0
    %5217 = vmatprep.subr.bf16.mxu0 0
    %5218 = vmatpush1.bf16.msra.mxu0 0
    %5219 = vmatprep.subr.bf16.mxu0 0
    %5220 = vmatpush1.bf16.msra.mxu0 0
    %5221 = vmatprep.subr.bf16.mxu0 0
    %5222 = vmatpush1.bf16.msra.mxu0 0
    %5223 = vmatprep.subr.bf16.mxu0 0
    %5224 = vmatpush1.bf16.msra.mxu0 0
    %5225 = vmatprep.subr.bf16.mxu0 0
    %5226 = vmatpush1.bf16.msra.mxu0 0
    %5227 = vmatprep.subr.bf16.mxu0 0
    %5228 = vmatpush1.bf16.msra.mxu0 0
    %5229 = vmatprep.subr.bf16.mxu0 0
    %5230 = vmatpush1.bf16.msra.mxu0 0
    %5231 = vmatprep.mubr.bf16.mxu0 0
    %5232 = vmatmul.mubr.bf16.gmra.mrb[0].mxu0 %v3725
    %v5233 = vpop.f32.mrb[0].mxu0
    %v5234 = vadd.f32 %v5187, %v5233
    %v5235 = vpop.f32.mrb[0].mxu0
    %v5236 = vadd.f32 %v5191, %v5235
    %v5237 = vpop.f32.mrb[0].mxu0
    %v5238 = vpop.f32.mrb[0].mxu0
    %5239 = vdwg.mxu0
    %5240 = vmatprep.subr.bf16.mxu0 0
    %5241 = vmatpush1.bf16.msra.mxu0 %v5137
    %5242 = vmatprep.subr.bf16.mxu0 0
    %5243 = vmatpush1.bf16.msra.mxu0 %v5140
    %5244 = vmatprep.subr.bf16.mxu0 0
    %5245 = vmatpush1.bf16.msra.mxu0 %v5143
    %5246 = vmatprep.subr.bf16.mxu0 0
    %5247 = vmatpush1.bf16.msra.mxu0 %v5146
    %5248 = vmatprep.subr.bf16.mxu0 0
    %5249 = vmatpush1.bf16.msra.mxu0 %v5149
    %5250 = vmatprep.subr.bf16.mxu0 0
    %5251 = vmatpush1.bf16.msra.mxu0 %v5152
    %5252 = vmatprep.subr.bf16.mxu0 0
    %5253 = vmatpush1.bf16.msra.mxu0 %v5155
    %5254 = vmatprep.subr.bf16.mxu0 0
    %5255 = vmatpush1.bf16.msra.mxu0 %v5158
    %5256 = vmatprep.subr.bf16.mxu0 0
    %5257 = vmatpush1.bf16.msra.mxu0 0
    %5258 = vmatprep.subr.bf16.mxu0 0
    %5259 = vmatpush1.bf16.msra.mxu0 0
    %5260 = vmatprep.subr.bf16.mxu0 0
    %5261 = vmatpush1.bf16.msra.mxu0 0
    %5262 = vmatprep.subr.bf16.mxu0 0
    %5263 = vmatpush1.bf16.msra.mxu0 0
    %5264 = vmatprep.subr.bf16.mxu0 0
    %5265 = vmatpush1.bf16.msra.mxu0 0
    %5266 = vmatprep.subr.bf16.mxu0 0
    %5267 = vmatpush1.bf16.msra.mxu0 0
    %5268 = vmatprep.subr.bf16.mxu0 0
    %5269 = vmatpush1.bf16.msra.mxu0 0
    %5270 = vmatprep.subr.bf16.mxu0 0
    %5271 = vmatpush1.bf16.msra.mxu0 0
    %5272 = vmatprep.mubr.bf16.mxu0 0
    %5273 = vmatmul.mubr.bf16.gmra.mrb[0].mxu0 %v3725
    %v5274 = vpop.f32.mrb[0].mxu0
    %v5275 = vadd.f32 %v5195, %v5274
    %v5276 = vpop.f32.mrb[0].mxu0
    %v5277 = vpop.f32.mrb[0].mxu0
    %v5278 = vpop.f32.mrb[0].mxu0
    %5279 = vdwg.mxu0
    %v5312 = vunpack.c.l.b16 %v4987
    %v5313 = vunpack.c.h.b16 %v4987
    %v5314 = vunpack.c.l.b16 %v4988
    %v5315 = vunpack.c.l.b16 %v4989
    %v5316 = vunpack.c.h.b16 %v4989
    %v5317 = vunpack.c.l.b16 %v4990
    %v5318 = vunpack.c.l.b16 %v4991
    %v5319 = vunpack.c.h.b16 %v4991
    %v5320 = vunpack.c.l.b16 %v4992
    %v5321 = vunpack.c.l.b16 %v4993
    %v5322 = vunpack.c.h.b16 %v4993
    %v5323 = vunpack.c.l.b16 %v4994
    %v5324 = vunpack.c.l.b16 %v4995
    %v5325 = vunpack.c.h.b16 %v4995
    %v5326 = vunpack.c.l.b16 %v4996
    %v5327 = vunpack.c.l.b16 %v4997
    %v5328 = vunpack.c.h.b16 %v4997
    %v5329 = vunpack.c.l.b16 %v4998
    %v5330 = vunpack.c.l.b16 %v4999
    %v5331 = vunpack.c.h.b16 %v4999
    %v5332 = vunpack.c.l.b16 %v5000
    %v5333 = vunpack.c.l.b16 %v5001
    %v5334 = vunpack.c.h.b16 %v5001
    %v5335 = vunpack.c.l.b16 %v5002
    %v5336 = vunpack.c.l.b16 %v5003
    %v5337 = vunpack.c.h.b16 %v5003
    %v5338 = vunpack.c.l.b16 %v5004
    %v5339 = vunpack.c.l.b16 %v5005
    %v5340 = vunpack.c.h.b16 %v5005
    %v5341 = vunpack.c.l.b16 %v5006
    %v5342 = vunpack.c.l.b16 %v5007
    %v5343 = vunpack.c.h.b16 %v5007
    %v5344 = vunpack.c.l.b16 %v5008
    %v5345 = vunpack.c.l.b16 %v5009
    %v5346 = vunpack.c.h.b16 %v5009
    %v5347 = vunpack.c.l.b16 %v5010
    %v5348 = vunpack.c.l.b16 %v5011
    %v5349 = vunpack.c.h.b16 %v5011
    %v5350 = vunpack.c.l.b16 %v5012
    %v5351 = vunpack.c.l.b16 %v5013
    %v5352 = vunpack.c.h.b16 %v5013
    %v5353 = vunpack.c.l.b16 %v5014
    %v5354 = vunpack.c.l.b16 %v5015
    %v5355 = vunpack.c.h.b16 %v5015
    %v5356 = vunpack.c.l.b16 %v5016
    %v5357 = vunpack.c.l.b16 %v5017
    %v5358 = vunpack.c.h.b16 %v5017
    %v5359 = vunpack.c.l.b16 %v5018
    %v5360 = vpack.c.b16 %v5315, %v5312
    %v5361 = vpack.c.b16 %v5316, %v5313
    %v5362 = vpack.c.b16 %v5317, %v5314
    %v5363 = vpack.c.b16 %v5321, %v5318
    %v5364 = vpack.c.b16 %v5322, %v5319
    %v5365 = vpack.c.b16 %v5323, %v5320
    %v5366 = vpack.c.b16 %v5327, %v5324
    %v5367 = vpack.c.b16 %v5328, %v5325
    %v5368 = vpack.c.b16 %v5329, %v5326
    %v5369 = vpack.c.b16 %v5333, %v5330
    %v5370 = vpack.c.b16 %v5334, %v5331
    %v5371 = vpack.c.b16 %v5335, %v5332
    %v5372 = vpack.c.b16 %v5339, %v5336
    %v5373 = vpack.c.b16 %v5340, %v5337
    %v5374 = vpack.c.b16 %v5341, %v5338
    %v5375 = vpack.c.b16 %v5345, %v5342
    %v5376 = vpack.c.b16 %v5346, %v5343
    %v5377 = vpack.c.b16 %v5347, %v5344
    %v5378 = vpack.c.b16 %v5351, %v5348
    %v5379 = vpack.c.b16 %v5352, %v5349
    %v5380 = vpack.c.b16 %v5353, %v5350
    %v5381 = vpack.c.b16 %v5357, %v5354
    %v5382 = vpack.c.b16 %v5358, %v5355
    %v5383 = vpack.c.b16 %v5359, %v5356
    %5408 = vmatprep.subr.bf16.mxu0 %v5361
    %5409 = vmatpush1.bf16.msra.mxu0 %v5360
    %5410 = vmatprep.subr.bf16.mxu0 %v5364
    %5411 = vmatpush1.bf16.msra.mxu0 %v5363
    %5412 = vmatprep.subr.bf16.mxu0 %v5367
    %5413 = vmatpush1.bf16.msra.mxu0 %v5366
    %5414 = vmatprep.subr.bf16.mxu0 %v5370
    %5415 = vmatpush1.bf16.msra.mxu0 %v5369
    %5416 = vmatprep.subr.bf16.mxu0 %v5373
    %5417 = vmatpush1.bf16.msra.mxu0 %v5372
    %5418 = vmatprep.subr.bf16.mxu0 %v5376
    %5419 = vmatpush1.bf16.msra.mxu0 %v5375
    %5420 = vmatprep.subr.bf16.mxu0 %v5379
    %5421 = vmatpush1.bf16.msra.mxu0 %v5378
    %5422 = vmatprep.subr.bf16.mxu0 %v5382
    %5423 = vmatpush1.bf16.msra.mxu0 %v5381
    %5424 = vmatprep.subr.bf16.mxu0 0
    %5425 = vmatpush1.bf16.msra.mxu0 0
    %5426 = vmatprep.subr.bf16.mxu0 0
    %5427 = vmatpush1.bf16.msra.mxu0 0
    %5428 = vmatprep.subr.bf16.mxu0 0
    %5429 = vmatpush1.bf16.msra.mxu0 0
    %5430 = vmatprep.subr.bf16.mxu0 0
    %5431 = vmatpush1.bf16.msra.mxu0 0
    %5432 = vmatprep.subr.bf16.mxu0 0
    %5433 = vmatpush1.bf16.msra.mxu0 0
    %5434 = vmatprep.subr.bf16.mxu0 0
    %5435 = vmatpush1.bf16.msra.mxu0 0
    %5436 = vmatprep.subr.bf16.mxu0 0
    %5437 = vmatpush1.bf16.msra.mxu0 0
    %5438 = vmatprep.subr.bf16.mxu0 0
    %5439 = vmatpush1.bf16.msra.mxu0 0
    %5440 = vmatprep.mubr.bf16.mxu0 0
    %5441 = vmatmul.mubr.bf16.gmra.mrb[0].mxu0 0
    %v5442 = vpop.f32.mrb[0].mxu0
    %v5443 = vadd.f32 0.0, %v5442
    %v5444 = vpop.f32.mrb[0].mxu0
    %v5445 = vadd.f32 0.0, %v5444
    %v5446 = vpop.f32.mrb[0].mxu0
    %v5447 = vpop.f32.mrb[0].mxu0
    %5448 = vdwg.mxu0
    %5449 = vmatprep.subr.bf16.mxu0 0
    %5450 = vmatpush1.bf16.msra.mxu0 %v5362
    %5451 = vmatprep.subr.bf16.mxu0 0
    %5452 = vmatpush1.bf16.msra.mxu0 %v5365
    %5453 = vmatprep.subr.bf16.mxu0 0
    %5454 = vmatpush1.bf16.msra.mxu0 %v5368
    %5455 = vmatprep.subr.bf16.mxu0 0
    %5456 = vmatpush1.bf16.msra.mxu0 %v5371
    %5457 = vmatprep.subr.bf16.mxu0 0
    %5458 = vmatpush1.bf16.msra.mxu0 %v5374
    %5459 = vmatprep.subr.bf16.mxu0 0
    %5460 = vmatpush1.bf16.msra.mxu0 %v5377
    %5461 = vmatprep.subr.bf16.mxu0 0
    %5462 = vmatpush1.bf16.msra.mxu0 %v5380
    %5463 = vmatprep.subr.bf16.mxu0 0
    %5464 = vmatpush1.bf16.msra.mxu0 %v5383
    %5465 = vmatprep.subr.bf16.mxu0 0
    %5466 = vmatpush1.bf16.msra.mxu0 0
    %5467 = vmatprep.subr.bf16.mxu0 0
    %5468 = vmatpush1.bf16.msra.mxu0 0
    %5469 = vmatprep.subr.bf16.mxu0 0
    %5470 = vmatpush1.bf16.msra.mxu0 0
    %5471 = vmatprep.subr.bf16.mxu0 0
    %5472 = vmatpush1.bf16.msra.mxu0 0
    %5473 = vmatprep.subr.bf16.mxu0 0
    %5474 = vmatpush1.bf16.msra.mxu0 0
    %5475 = vmatprep.subr.bf16.mxu0 0
    %5476 = vmatpush1.bf16.msra.mxu0 0
    %5477 = vmatprep.subr.bf16.mxu0 0
    %5478 = vmatpush1.bf16.msra.mxu0 0
    %5479 = vmatprep.subr.bf16.mxu0 0
    %5480 = vmatpush1.bf16.msra.mxu0 0
    %5481 = vmatprep.mubr.bf16.mxu0 0
    %5482 = vmatmul.mubr.bf16.gmra.mrb[0].mxu0 0
    %v5483 = vpop.f32.mrb[0].mxu0
    %v5484 = vadd.f32 0.0, %v5483
    %v5485 = vpop.f32.mrb[0].mxu0
    %v5486 = vpop.f32.mrb[0].mxu0
    %v5487 = vpop.f32.mrb[0].mxu0
    %5488 = vdwg.mxu0
    %v5489 = vadd.f32 %v5234, %v5443
    %v5490 = vadd.f32 %v5236, %v5445
    %v5491 = vmul.f32 %v5489, 0.5
    %v5492 = vmul.f32 %v5490, 0.5
    %v5493 = vtanh.pop %v5491
    %v5494 = vtanh.pop %v5492
    %v5495 = vmul.f32 %v5493, 0.5
    %v5496 = vmul.f32 %v5494, 0.5
    %v5497 = vadd.f32 %v5495, 0.5
    %v5498 = vadd.f32 %v5496, 0.5
    %v5499 = vadd.f32 %v5484, %v5019
    %v5500 = vmul.f32 %v5497, %v5499
    %v5501 = vadd.f32 %v5275, %v5500
    %v5502 = vtanh.pop %v5501
    %v5503 = vsub.f32 0.0, %v5502
    %v5504 = vmul.f32 %v5498, %v5503
    %v5505 = vadd.f32 %v5502, %v5504
    %v5506 = vpack.c.bf16 %v5505, %v5505
    %5507 = vmatprep.subr.bf16.mxu0 %v5136
    %5508 = vmatpush1.bf16.msra.mxu0 %v5135
    %5509 = vmatprep.subr.bf16.mxu0 %v5139
    %5510 = vmatpush1.bf16.msra.mxu0 %v5138
    %5511 = vmatprep.subr.bf16.mxu0 %v5142
    %5512 = vmatpush1.bf16.msra.mxu0 %v5141
    %5513 = vmatprep.subr.bf16.mxu0 %v5145
    %5514 = vmatpush1.bf16.msra.mxu0 %v5144
    %5515 = vmatprep.subr.bf16.mxu0 %v5148
    %5516 = vmatpush1.bf16.msra.mxu0 %v5147
    %5517 = vmatprep.subr.bf16.mxu0 %v5151
    %5518 = vmatpush1.bf16.msra.mxu0 %v5150
    %5519 = vmatprep.subr.bf16.mxu0 %v5154
    %5520 = vmatpush1.bf16.msra.mxu0 %v5153
    %5521 = vmatprep.subr.bf16.mxu0 %v5157
    %5522 = vmatpush1.bf16.msra.mxu0 %v5156
    %5523 = vmatprep.subr.bf16.mxu0 0
    %5524 = vmatpush1.bf16.msra.mxu0 0
    %5525 = vmatprep.subr.bf16.mxu0 0
    %5526 = vmatpush1.bf16.msra.mxu0 0
    %5527 = vmatprep.subr.bf16.mxu0 0
    %5528 = vmatpush1.bf16.msra.mxu0 0
    %5529 = vmatprep.subr.bf16.mxu0 0
    %5530 = vmatpush1.bf16.msra.mxu0 0
    %5531 = vmatprep.subr.bf16.mxu0 0
    %5532 = vmatpush1.bf16.msra.mxu0 0
    %5533 = vmatprep.subr.bf16.mxu0 0
    %5534 = vmatpush1.bf16.msra.mxu0 0
    %5535 = vmatprep.subr.bf16.mxu0 0
    %5536 = vmatpush1.bf16.msra.mxu0 0
    %5537 = vmatprep.subr.bf16.mxu0 0
    %5538 = vmatpush1.bf16.msra.mxu0 0
    %5539 = vmatprep.mubr.bf16.mxu0 0
    %5540 = vmatmul.mubr.bf16.gmra.mrb[0].mxu0 %v3905
    %v5541 = vpop.f32.mrb[0].mxu0
    %v5542 = vadd.f32 %v5187, %v5541
    %v5543 = vpop.f32.mrb[0].mxu0
    %v5544 = vadd.f32 %v5191, %v5543
    %v5545 = vpop.f32.mrb[0].mxu0
    %v5546 = vpop.f32.mrb[0].mxu0
    %5547 = vdwg.mxu0
    %5548 = vmatprep.subr.bf16.mxu0 0
    %5549 = vmatpush1.bf16.msra.mxu0 %v5137
    %5550 = vmatprep.subr.bf16.mxu0 0
    %5551 = vmatpush1.bf16.msra.mxu0 %v5140
    %5552 = vmatprep.subr.bf16.mxu0 0
    %5553 = vmatpush1.bf16.msra.mxu0 %v5143
    %5554 = vmatprep.subr.bf16.mxu0 0
    %5555 = vmatpush1.bf16.msra.mxu0 %v5146
    %5556 = vmatprep.subr.bf16.mxu0 0
    %5557 = vmatpush1.bf16.msra.mxu0 %v5149
    %5558 = vmatprep.subr.bf16.mxu0 0
    %5559 = vmatpush1.bf16.msra.mxu0 %v5152
    %5560 = vmatprep.subr.bf16.mxu0 0
    %5561 = vmatpush1.bf16.msra.mxu0 %v5155
    %5562 = vmatprep.subr.bf16.mxu0 0
    %5563 = vmatpush1.bf16.msra.mxu0 %v5158
    %5564 = vmatprep.subr.bf16.mxu0 0
    %5565 = vmatpush1.bf16.msra.mxu0 0
    %5566 = vmatprep.subr.bf16.mxu0 0
    %5567 = vmatpush1.bf16.msra.mxu0 0
    %5568 = vmatprep.subr.bf16.mxu0 0
    %5569 = vmatpush1.bf16.msra.mxu0 0
    %5570 = vmatprep.subr.bf16.mxu0 0
    %5571 = vmatpush1.bf16.msra.mxu0 0
    %5572 = vmatprep.subr.bf16.mxu0 0
    %5573 = vmatpush1.bf16.msra.mxu0 0
    %5574 = vmatprep.subr.bf16.mxu0 0
    %5575 = vmatpush1.bf16.msra.mxu0 0
    %5576 = vmatprep.subr.bf16.mxu0 0
    %5577 = vmatpush1.bf16.msra.mxu0 0
    %5578 = vmatprep.subr.bf16.mxu0 0
    %5579 = vmatpush1.bf16.msra.mxu0 0
    %5580 = vmatprep.mubr.bf16.mxu0 0
    %5581 = vmatmul.mubr.bf16.gmra.mrb[0].mxu0 %v3905
    %v5582 = vpop.f32.mrb[0].mxu0
    %v5583 = vadd.f32 %v5195, %v5582
    %v5584 = vpop.f32.mrb[0].mxu0
    %v5585 = vpop.f32.mrb[0].mxu0
    %v5586 = vpop.f32.mrb[0].mxu0
    %5587 = vdwg.mxu0
    %5588 = vmatprep.subr.bf16.mxu0 %v5361
    %5589 = vmatpush1.bf16.msra.mxu0 %v5360
    %5590 = vmatprep.subr.bf16.mxu0 %v5364
    %5591 = vmatpush1.bf16.msra.mxu0 %v5363
    %5592 = vmatprep.subr.bf16.mxu0 %v5367
    %5593 = vmatpush1.bf16.msra.mxu0 %v5366
    %5594 = vmatprep.subr.bf16.mxu0 %v5370
    %5595 = vmatpush1.bf16.msra.mxu0 %v5369
    %5596 = vmatprep.subr.bf16.mxu0 %v5373
    %5597 = vmatpush1.bf16.msra.mxu0 %v5372
    %5598 = vmatprep.subr.bf16.mxu0 %v5376
    %5599 = vmatpush1.bf16.msra.mxu0 %v5375
    %5600 = vmatprep.subr.bf16.mxu0 %v5379
    %5601 = vmatpush1.bf16.msra.mxu0 %v5378
    %5602 = vmatprep.subr.bf16.mxu0 %v5382
    %5603 = vmatpush1.bf16.msra.mxu0 %v5381
    %5604 = vmatprep.subr.bf16.mxu0 0
    %5605 = vmatpush1.bf16.msra.mxu0 0
    %5606 = vmatprep.subr.bf16.mxu0 0
    %5607 = vmatpush1.bf16.msra.mxu0 0
    %5608 = vmatprep.subr.bf16.mxu0 0
    %5609 = vmatpush1.bf16.msra.mxu0 0
    %5610 = vmatprep.subr.bf16.mxu0 0
    %5611 = vmatpush1.bf16.msra.mxu0 0
    %5612 = vmatprep.subr.bf16.mxu0 0
    %5613 = vmatpush1.bf16.msra.mxu0 0
    %5614 = vmatprep.subr.bf16.mxu0 0
    %5615 = vmatpush1.bf16.msra.mxu0 0
    %5616 = vmatprep.subr.bf16.mxu0 0
    %5617 = vmatpush1.bf16.msra.mxu0 0
    %5618 = vmatprep.subr.bf16.mxu0 0
    %5619 = vmatpush1.bf16.msra.mxu0 0
    %5620 = vmatprep.mubr.bf16.mxu0 0
    %5621 = vmatmul.mubr.bf16.gmra.mrb[0].mxu0 %v5506
    %v5622 = vpop.f32.mrb[0].mxu0
    %v5623 = vadd.f32 0.0, %v5622
    %v5624 = vpop.f32.mrb[0].mxu0
    %v5625 = vadd.f32 0.0, %v5624
    %v5626 = vpop.f32.mrb[0].mxu0
    %v5627 = vpop.f32.mrb[0].mxu0
    %5628 = vdwg.mxu0
    %5629 = vmatprep.subr.bf16.mxu0 0
    %5630 = vmatpush1.bf16.msra.mxu0 %v5362
    %5631 = vmatprep.subr.bf16.mxu0 0
    %5632 = vmatpush1.bf16.msra.mxu0 %v5365
    %5633 = vmatprep.subr.bf16.mxu0 0
    %5634 = vmatpush1.bf16.msra.mxu0 %v5368
    %5635 = vmatprep.subr.bf16.mxu0 0
    %5636 = vmatpush1.bf16.msra.mxu0 %v5371
    %5637 = vmatprep.subr.bf16.mxu0 0
    %5638 = vmatpush1.bf16.msra.mxu0 %v5374
    %5639 = vmatprep.subr.bf16.mxu0 0
    %5640 = vmatpush1.bf16.msra.mxu0 %v5377
    %5641 = vmatprep.subr.bf16.mxu0 0
    %5642 = vmatpush1.bf16.msra.mxu0 %v5380
    %5643 = vmatprep.subr.bf16.mxu0 0
    %5644 = vmatpush1.bf16.msra.mxu0 %v5383
    %5645 = vmatprep.subr.bf16.mxu0 0
    %5646 = vmatpush1.bf16.msra.mxu0 0
    %5647 = vmatprep.subr.bf16.mxu0 0
    %5648 = vmatpush1.bf16.msra.mxu0 0
    %5649 = vmatprep.subr.bf16.mxu0 0
    %5650 = vmatpush1.bf16.msra.mxu0 0
    %5651 = vmatprep.subr.bf16.mxu0 0
    %5652 = vmatpush1.bf16.msra.mxu0 0
    %5653 = vmatprep.subr.bf16.mxu0 0
    %5654 = vmatpush1.bf16.msra.mxu0 0
    %5655 = vmatprep.subr.bf16.mxu0 0
    %5656 = vmatpush1.bf16.msra.mxu0 0
    %5657 = vmatprep.subr.bf16.mxu0 0
    %5658 = vmatpush1.bf16.msra.mxu0 0
    %5659 = vmatprep.subr.bf16.mxu0 0
    %5660 = vmatpush1.bf16.msra.mxu0 0
    %5661 = vmatprep.mubr.bf16.mxu0 0
    %5662 = vmatmul.mubr.bf16.gmra.mrb[0].mxu0 %v5506
    %v5663 = vpop.f32.mrb[0].mxu0
    %v5664 = vadd.f32 0.0, %v5663
    %v5665 = vpop.f32.mrb[0].mxu0
    %v5666 = vpop.f32.mrb[0].mxu0
    %v5667 = vpop.f32.mrb[0].mxu0
    %5668 = vdwg.mxu0
    %v5669 = vadd.f32 %v5542, %v5623
    %v5670 = vadd.f32 %v5544, %v5625
    %v5671 = vmul.f32 %v5669, 0.5
    %v5672 = vmul.f32 %v5670, 0.5
    %v5673 = vtanh.pop %v5671
    %v5674 = vtanh.pop %v5672
    %v5675 = vmul.f32 %v5673, 0.5
    %v5676 = vmul.f32 %v5674, 0.5
    %v5677 = vadd.f32 %v5675, 0.5
    %v5678 = vadd.f32 %v5676, 0.5
    %v5679 = vadd.f32 %v5664, %v5019
    %v5680 = vmul.f32 %v5677, %v5679
    %v5681 = vadd.f32 %v5583, %v5680
    %v5682 = vtanh.pop %v5681
    %v5683 = vsub.f32 %v5505, %v5682
    %v5684 = vmul.f32 %v5678, %v5683
    %v5685 = vadd.f32 %v5682, %v5684
    %v5686 = vpack.c.bf16 %v5685, %v5685
    %5687 = vmatprep.subr.bf16.mxu0 %v5136
    %5688 = vmatpush1.bf16.msra.mxu0 %v5135
    %5689 = vmatprep.subr.bf16.mxu0 %v5139
    %5690 = vmatpush1.bf16.msra.mxu0 %v5138
    %5691 = vmatprep.subr.bf16.mxu0 %v5142
    %5692 = vmatpush1.bf16.msra.mxu0 %v5141
    %5693 = vmatprep.subr.bf16.mxu0 %v5145
    %5694 = vmatpush1.bf16.msra.mxu0 %v5144
    %5695 = vmatprep.subr.bf16.mxu0 %v5148
    %5696 = vmatpush1.bf16.msra.mxu0 %v5147
    %5697 = vmatprep.subr.bf16.mxu0 %v5151
    %5698 = vmatpush1.bf16.msra.mxu0 %v5150
    %5699 = vmatprep.subr.bf16.mxu0 %v5154
    %5700 = vmatpush1.bf16.msra.mxu0 %v5153
    %5701 = vmatprep.subr.bf16.mxu0 %v5157
    %5702 = vmatpush1.bf16.msra.mxu0 %v5156
    %5703 = vmatprep.subr.bf16.mxu0 0
    %5704 = vmatpush1.bf16.msra.mxu0 0
    %5705 = vmatprep.subr.bf16.mxu0 0
    %5706 = vmatpush1.bf16.msra.mxu0 0
    %5707 = vmatprep.subr.bf16.mxu0 0
    %5708 = vmatpush1.bf16.msra.mxu0 0
    %5709 = vmatprep.subr.bf16.mxu0 0
    %5710 = vmatpush1.bf16.msra.mxu0 0
    %5711 = vmatprep.subr.bf16.mxu0 0
    %5712 = vmatpush1.bf16.msra.mxu0 0
    %5713 = vmatprep.subr.bf16.mxu0 0
    %5714 = vmatpush1.bf16.msra.mxu0 0
    %5715 = vmatprep.subr.bf16.mxu0 0
    %5716 = vmatpush1.bf16.msra.mxu0 0
    %5717 = vmatprep.subr.bf16.mxu0 0
    %5718 = vmatpush1.bf16.msra.mxu0 0
    %5719 = vmatprep.mubr.bf16.mxu0 0
    %5720 = vmatmul.mubr.bf16.gmra.mrb[0].mxu0 %v4085
    %v5721 = vpop.f32.mrb[0].mxu0
    %v5722 = vadd.f32 %v5187, %v5721
    %v5723 = vpop.f32.mrb[0].mxu0
    %v5724 = vadd.f32 %v5191, %v5723
    %v5725 = vpop.f32.mrb[0].mxu0
    %v5726 = vpop.f32.mrb[0].mxu0
    %5727 = vdwg.mxu0
    %5728 = vmatprep.subr.bf16.mxu0 0
    %5729 = vmatpush1.bf16.msra.mxu0 %v5137
    %5730 = vmatprep.subr.bf16.mxu0 0
    %5731 = vmatpush1.bf16.msra.mxu0 %v5140
    %5732 = vmatprep.subr.bf16.mxu0 0
    %5733 = vmatpush1.bf16.msra.mxu0 %v5143
    %5734 = vmatprep.subr.bf16.mxu0 0
    %5735 = vmatpush1.bf16.msra.mxu0 %v5146
    %5736 = vmatprep.subr.bf16.mxu0 0
    %5737 = vmatpush1.bf16.msra.mxu0 %v5149
    %5738 = vmatprep.subr.bf16.mxu0 0
    %5739 = vmatpush1.bf16.msra.mxu0 %v5152
    %5740 = vmatprep.subr.bf16.mxu0 0
    %5741 = vmatpush1.bf16.msra.mxu0 %v5155
    %5742 = vmatprep.subr.bf16.mxu0 0
    %5743 = vmatpush1.bf16.msra.mxu0 %v5158
    %5744 = vmatprep.subr.bf16.mxu0 0
    %5745 = vmatpush1.bf16.msra.mxu0 0
    %5746 = vmatprep.subr.bf16.mxu0 0
    %5747 = vmatpush1.bf16.msra.mxu0 0
    %5748 = vmatprep.subr.bf16.mxu0 0
    %5749 = vmatpush1.bf16.msra.mxu0 0
    %5750 = vmatprep.subr.bf16.mxu0 0
    %5751 = vmatpush1.bf16.msra.mxu0 0
    %5752 = vmatprep.subr.bf16.mxu0 0
    %5753 = vmatpush1.bf16.msra.mxu0 0
    %5754 = vmatprep.subr.bf16.mxu0 0
    %5755 = vmatpush1.bf16.msra.mxu0 0
    %5756 = vmatprep.subr.bf16.mxu0 0
    %5757 = vmatpush1.bf16.msra.mxu0 0
    %5758 = vmatprep.subr.bf16.mxu0 0
    %5759 = vmatpush1.bf16.msra.mxu0 0
    %5760 = vmatprep.mubr.bf16.mxu0 0
    %5761 = vmatmul.mubr.bf16.gmra.mrb[0].mxu0 %v4085
    %v5762 = vpop.f32.mrb[0].mxu0
    %v5763 = vadd.f32 %v5195, %v5762
    %v5764 = vpop.f32.mrb[0].mxu0
    %v5765 = vpop.f32.mrb[0].mxu0
    %v5766 = vpop.f32.mrb[0].mxu0
    %5767 = vdwg.mxu0
    %5768 = vmatprep.subr.bf16.mxu0 %v5361
    %5769 = vmatpush1.bf16.msra.mxu0 %v5360
    %5770 = vmatprep.subr.bf16.mxu0 %v5364
    %5771 = vmatpush1.bf16.msra.mxu0 %v5363
    %5772 = vmatprep.subr.bf16.mxu0 %v5367
    %5773 = vmatpush1.bf16.msra.mxu0 %v5366
    %5774 = vmatprep.subr.bf16.mxu0 %v5370
    %5775 = vmatpush1.bf16.msra.mxu0 %v5369
    %5776 = vmatprep.subr.bf16.mxu0 %v5373
    %5777 = vmatpush1.bf16.msra.mxu0 %v5372
    %5778 = vmatprep.subr.bf16.mxu0 %v5376
    %5779 = vmatpush1.bf16.msra.mxu0 %v5375
    %5780 = vmatprep.subr.bf16.mxu0 %v5379
    %5781 = vmatpush1.bf16.msra.mxu0 %v5378
    %5782 = vmatprep.subr.bf16.mxu0 %v5382
    %5783 = vmatpush1.bf16.msra.mxu0 %v5381
    %5784 = vmatprep.subr.bf16.mxu0 0
    %5785 = vmatpush1.bf16.msra.mxu0 0
    %5786 = vmatprep.subr.bf16.mxu0 0
    %5787 = vmatpush1.bf16.msra.mxu0 0
    %5788 = vmatprep.subr.bf16.mxu0 0
    %5789 = vmatpush1.bf16.msra.mxu0 0
    %5790 = vmatprep.subr.bf16.mxu0 0
    %5791 = vmatpush1.bf16.msra.mxu0 0
    %5792 = vmatprep.subr.bf16.mxu0 0
    %5793 = vmatpush1.bf16.msra.mxu0 0
    %5794 = vmatprep.subr.bf16.mxu0 0
    %5795 = vmatpush1.bf16.msra.mxu0 0
    %5796 = vmatprep.subr.bf16.mxu0 0
    %5797 = vmatpush1.bf16.msra.mxu0 0
    %5798 = vmatprep.subr.bf16.mxu0 0
    %5799 = vmatpush1.bf16.msra.mxu0 0
    %5800 = vmatprep.mubr.bf16.mxu0 0
    %5801 = vmatmul.mubr.bf16.gmra.mrb[0].mxu0 %v5686
    %v5802 = vpop.f32.mrb[0].mxu0
    %v5803 = vadd.f32 0.0, %v5802
    %v5804 = vpop.f32.mrb[0].mxu0
    %v5805 = vadd.f32 0.0, %v5804
    %v5806 = vpop.f32.mrb[0].mxu0
    %v5807 = vpop.f32.mrb[0].mxu0
    %5808 = vdwg.mxu0
    %5809 = vmatprep.subr.bf16.mxu0 0
    %5810 = vmatpush1.bf16.msra.mxu0 %v5362
    %5811 = vmatprep.subr.bf16.mxu0 0
    %5812 = vmatpush1.bf16.msra.mxu0 %v5365
    %5813 = vmatprep.subr.bf16.mxu0 0
    %5814 = vmatpush1.bf16.msra.mxu0 %v5368
    %5815 = vmatprep.subr.bf16.mxu0 0
    %5816 = vmatpush1.bf16.msra.mxu0 %v5371
    %5817 = vmatprep.subr.bf16.mxu0 0
    %5818 = vmatpush1.bf16.msra.mxu0 %v5374
    %5819 = vmatprep.subr.bf16.mxu0 0
    %5820 = vmatpush1.bf16.msra.mxu0 %v5377
    %5821 = vmatprep.subr.bf16.mxu0 0
    %5822 = vmatpush1.bf16.msra.mxu0 %v5380
    %5823 = vmatprep.subr.bf16.mxu0 0
    %5824 = vmatpush1.bf16.msra.mxu0 %v5383
    %5825 = vmatprep.subr.bf16.mxu0 0
    %5826 = vmatpush1.bf16.msra.mxu0 0
    %5827 = vmatprep.subr.bf16.mxu0 0
    %5828 = vmatpush1.bf16.msra.mxu0 0
    %5829 = vmatprep.subr.bf16.mxu0 0
    %5830 = vmatpush1.bf16.msra.mxu0 0
    %5831 = vmatprep.subr.bf16.mxu0 0
    %5832 = vmatpush1.bf16.msra.mxu0 0
    %5833 = vmatprep.subr.bf16.mxu0 0
    %5834 = vmatpush1.bf16.msra.mxu0 0
    %5835 = vmatprep.subr.bf16.mxu0 0
    %5836 = vmatpush1.bf16.msra.mxu0 0
    %5837 = vmatprep.subr.bf16.mxu0 0
    %5838 = vmatpush1.bf16.msra.mxu0 0
    %5839 = vmatprep.subr.bf16.mxu0 0
    %5840 = vmatpush1.bf16.msra.mxu0 0
    %5841 = vmatprep.mubr.bf16.mxu0 0
    %5842 = vmatmul.mubr.bf16.gmra.mrb[0].mxu0 %v5686
    %v5843 = vpop.f32.mrb[0].mxu0
    %v5844 = vadd.f32 0.0, %v5843
    %v5845 = vpop.f32.mrb[0].mxu0
    %v5846 = vpop.f32.mrb[0].mxu0
    %v5847 = vpop.f32.mrb[0].mxu0
    %5848 = vdwg.mxu0
    %v5849 = vadd.f32 %v5722, %v5803
    %v5850 = vadd.f32 %v5724, %v5805
    %v5851 = vmul.f32 %v5849, 0.5
    %v5852 = vmul.f32 %v5850, 0.5
    %v5853 = vtanh.pop %v5851
    %v5854 = vtanh.pop %v5852
    %v5855 = vmul.f32 %v5853, 0.5
    %v5856 = vmul.f32 %v5854, 0.5
    %v5857 = vadd.f32 %v5855, 0.5
    %v5858 = vadd.f32 %v5856, 0.5
    %v5859 = vadd.f32 %v5844, %v5019
    %v5860 = vmul.f32 %v5857, %v5859
    %v5861 = vadd.f32 %v5763, %v5860
    %v5862 = vtanh.pop %v5861
    %v5863 = vsub.f32 %v5685, %v5862
    %v5864 = vmul.f32 %v5858, %v5863
    %v5865 = vadd.f32 %v5862, %v5864
    %v5866 = vpack.c.bf16 %v5865, %v5865
    %5867 = vmatprep.subr.bf16.mxu0 %v5136
    %5868 = vmatpush1.bf16.msra.mxu0 %v5135
    %5869 = vmatprep.subr.bf16.mxu0 %v5139
    %5870 = vmatpush1.bf16.msra.mxu0 %v5138
    %5871 = vmatprep.subr.bf16.mxu0 %v5142
    %5872 = vmatpush1.bf16.msra.mxu0 %v5141
    %5873 = vmatprep.subr.bf16.mxu0 %v5145
    %5874 = vmatpush1.bf16.msra.mxu0 %v5144
    %5875 = vmatprep.subr.bf16.mxu0 %v5148
    %5876 = vmatpush1.bf16.msra.mxu0 %v5147
    %5877 = vmatprep.subr.bf16.mxu0 %v5151
    %5878 = vmatpush1.bf16.msra.mxu0 %v5150
    %5879 = vmatprep.subr.bf16.mxu0 %v5154
    %5880 = vmatpush1.bf16.msra.mxu0 %v5153
    %5881 = vmatprep.subr.bf16.mxu0 %v5157
    %5882 = vmatpush1.bf16.msra.mxu0 %v5156
    %5883 = vmatprep.subr.bf16.mxu0 0
    %5884 = vmatpush1.bf16.msra.mxu0 0
    %5885 = vmatprep.subr.bf16.mxu0 0
    %5886 = vmatpush1.bf16.msra.mxu0 0
    %5887 = vmatprep.subr.bf16.mxu0 0
    %5888 = vmatpush1.bf16.msra.mxu0 0
    %5889 = vmatprep.subr.bf16.mxu0 0
    %5890 = vmatpush1.bf16.msra.mxu0 0
    %5891 = vmatprep.subr.bf16.mxu0 0
    %5892 = vmatpush1.bf16.msra.mxu0 0
    %5893 = vmatprep.subr.bf16.mxu0 0
    %5894 = vmatpush1.bf16.msra.mxu0 0
    %5895 = vmatprep.subr.bf16.mxu0 0
    %5896 = vmatpush1.bf16.msra.mxu0 0
    %5897 = vmatprep.subr.bf16.mxu0 0
    %5898 = vmatpush1.bf16.msra.mxu0 0
    %5899 = vmatprep.mubr.bf16.mxu0 0
    %5900 = vmatmul.mubr.bf16.gmra.mrb[0].mxu0 %v4265
    %v5901 = vpop.f32.mrb[0].mxu0
    %v5902 = vadd.f32 %v5187, %v5901
    %v5903 = vpop.f32.mrb[0].mxu0
    %v5904 = vadd.f32 %v5191, %v5903
    %v5905 = vpop.f32.mrb[0].mxu0
    %v5906 = vpop.f32.mrb[0].mxu0
    %5907 = vdwg.mxu0
    %5908 = vmatprep.subr.bf16.mxu0 0
    %5909 = vmatpush1.bf16.msra.mxu0 %v5137
    %5910 = vmatprep.subr.bf16.mxu0 0
    %5911 = vmatpush1.bf16.msra.mxu0 %v5140
    %5912 = vmatprep.subr.bf16.mxu0 0
    %5913 = vmatpush1.bf16.msra.mxu0 %v5143
    %5914 = vmatprep.subr.bf16.mxu0 0
    %5915 = vmatpush1.bf16.msra.mxu0 %v5146
    %5916 = vmatprep.subr.bf16.mxu0 0
    %5917 = vmatpush1.bf16.msra.mxu0 %v5149
    %5918 = vmatprep.subr.bf16.mxu0 0
    %5919 = vmatpush1.bf16.msra.mxu0 %v5152
    %5920 = vmatprep.subr.bf16.mxu0 0
    %5921 = vmatpush1.bf16.msra.mxu0 %v5155
    %5922 = vmatprep.subr.bf16.mxu0 0
    %5923 = vmatpush1.bf16.msra.mxu0 %v5158
    %5924 = vmatprep.subr.bf16.mxu0 0
    %5925 = vmatpush1.bf16.msra.mxu0 0
    %5926 = vmatprep.subr.bf16.mxu0 0
    %5927 = vmatpush1.bf16.msra.mxu0 0
    %5928 = vmatprep.subr.bf16.mxu0 0
    %5929 = vmatpush1.bf16.msra.mxu0 0
    %5930 = vmatprep.subr.bf16.mxu0 0
    %5931 = vmatpush1.bf16.msra.mxu0 0
    %5932 = vmatprep.subr.bf16.mxu0 0
    %5933 = vmatpush1.bf16.msra.mxu0 0
    %5934 = vmatprep.subr.bf16.mxu0 0
    %5935 = vmatpush1.bf16.msra.mxu0 0
    %5936 = vmatprep.subr.bf16.mxu0 0
    %5937 = vmatpush1.bf16.msra.mxu0 0
    %5938 = vmatprep.subr.bf16.mxu0 0
    %5939 = vmatpush1.bf16.msra.mxu0 0
    %5940 = vmatprep.mubr.bf16.mxu0 0
    %5941 = vmatmul.mubr.bf16.gmra.mrb[0].mxu0 %v4265
    %v5942 = vpop.f32.mrb[0].mxu0
    %v5943 = vadd.f32 %v5195, %v5942
    %v5944 = vpop.f32.mrb[0].mxu0
    %v5945 = vpop.f32.mrb[0].mxu0
    %v5946 = vpop.f32.mrb[0].mxu0
    %5947 = vdwg.mxu0
    %5948 = vmatprep.subr.bf16.mxu0 %v5361
    %5949 = vmatpush1.bf16.msra.mxu0 %v5360
    %5950 = vmatprep.subr.bf16.mxu0 %v5364
    %5951 = vmatpush1.bf16.msra.mxu0 %v5363
    %5952 = vmatprep.subr.bf16.mxu0 %v5367
    %5953 = vmatpush1.bf16.msra.mxu0 %v5366
    %5954 = vmatprep.subr.bf16.mxu0 %v5370
    %5955 = vmatpush1.bf16.msra.mxu0 %v5369
    %5956 = vmatprep.subr.bf16.mxu0 %v5373
    %5957 = vmatpush1.bf16.msra.mxu0 %v5372
    %5958 = vmatprep.subr.bf16.mxu0 %v5376
    %5959 = vmatpush1.bf16.msra.mxu0 %v5375
    %5960 = vmatprep.subr.bf16.mxu0 %v5379
    %5961 = vmatpush1.bf16.msra.mxu0 %v5378
    %5962 = vmatprep.subr.bf16.mxu0 %v5382
    %5963 = vmatpush1.bf16.msra.mxu0 %v5381
    %5964 = vmatprep.subr.bf16.mxu0 0
    %5965 = vmatpush1.bf16.msra.mxu0 0
    %5966 = vmatprep.subr.bf16.mxu0 0
    %5967 = vmatpush1.bf16.msra.mxu0 0
    %5968 = vmatprep.subr.bf16.mxu0 0
    %5969 = vmatpush1.bf16.msra.mxu0 0
    %5970 = vmatprep.subr.bf16.mxu0 0
    %5971 = vmatpush1.bf16.msra.mxu0 0
    %5972 = vmatprep.subr.bf16.mxu0 0
    %5973 = vmatpush1.bf16.msra.mxu0 0
    %5974 = vmatprep.subr.bf16.mxu0 0
    %5975 = vmatpush1.bf16.msra.mxu0 0
    %5976 = vmatprep.subr.bf16.mxu0 0
    %5977 = vmatpush1.bf16.msra.mxu0 0
    %5978 = vmatprep.subr.bf16.mxu0 0
    %5979 = vmatpush1.bf16.msra.mxu0 0
    %5980 = vmatprep.mubr.bf16.mxu0 0
    %5981 = vmatmul.mubr.bf16.gmra.mrb[0].mxu0 %v5866
    %v5982 = vpop.f32.mrb[0].mxu0
    %v5983 = vadd.f32 0.0, %v5982
    %v5984 = vpop.f32.mrb[0].mxu0
    %v5985 = vadd.f32 0.0, %v5984
    %v5986 = vpop.f32.mrb[0].mxu0
    %v5987 = vpop.f32.mrb[0].mxu0
    %5988 = vdwg.mxu0
    %5989 = vmatprep.subr.bf16.mxu0 0
    %5990 = vmatpush1.bf16.msra.mxu0 %v5362
    %5991 = vmatprep.subr.bf16.mxu0 0
    %5992 = vmatpush1.bf16.msra.mxu0 %v5365
    %5993 = vmatprep.subr.bf16.mxu0 0
    %5994 = vmatpush1.bf16.msra.mxu0 %v5368
    %5995 = vmatprep.subr.bf16.mxu0 0
    %5996 = vmatpush1.bf16.msra.mxu0 %v5371
    %5997 = vmatprep.subr.bf16.mxu0 0
    %5998 = vmatpush1.bf16.msra.mxu0 %v5374
    %5999 = vmatprep.subr.bf16.mxu0 0
    %6000 = vmatpush1.bf16.msra.mxu0 %v5377
    %6001 = vmatprep.subr.bf16.mxu0 0
    %6002 = vmatpush1.bf16.msra.mxu0 %v5380
    %6003 = vmatprep.subr.bf16.mxu0 0
    %6004 = vmatpush1.bf16.msra.mxu0 %v5383
    %6005 = vmatprep.subr.bf16.mxu0 0
    %6006 = vmatpush1.bf16.msra.mxu0 0
    %6007 = vmatprep.subr.bf16.mxu0 0
    %6008 = vmatpush1.bf16.msra.mxu0 0
    %6009 = vmatprep.subr.bf16.mxu0 0
    %6010 = vmatpush1.bf16.msra.mxu0 0
    %6011 = vmatprep.subr.bf16.mxu0 0
    %6012 = vmatpush1.bf16.msra.mxu0 0
    %6013 = vmatprep.subr.bf16.mxu0 0
    %6014 = vmatpush1.bf16.msra.mxu0 0
    %6015 = vmatprep.subr.bf16.mxu0 0
    %6016 = vmatpush1.bf16.msra.mxu0 0
    %6017 = vmatprep.subr.bf16.mxu0 0
    %6018 = vmatpush1.bf16.msra.mxu0 0
    %6019 = vmatprep.subr.bf16.mxu0 0
    %6020 = vmatpush1.bf16.msra.mxu0 0
    %6021 = vmatprep.mubr.bf16.mxu0 0
    %6022 = vmatmul.mubr.bf16.gmra.mrb[0].mxu0 %v5866
    %v6023 = vpop.f32.mrb[0].mxu0
    %v6024 = vadd.f32 0.0, %v6023
    %v6025 = vpop.f32.mrb[0].mxu0
    %v6026 = vpop.f32.mrb[0].mxu0
    %v6027 = vpop.f32.mrb[0].mxu0
    %6028 = vdwg.mxu0
    %v6029 = vadd.f32 %v5902, %v5983
    %v6030 = vadd.f32 %v5904, %v5985
    %v6031 = vmul.f32 %v6029, 0.5
    %v6032 = vmul.f32 %v6030, 0.5
    %v6033 = vtanh.pop %v6031
    %v6034 = vtanh.pop %v6032
    %v6035 = vmul.f32 %v6033, 0.5
    %v6036 = vmul.f32 %v6034, 0.5
    %v6037 = vadd.f32 %v6035, 0.5
    %v6038 = vadd.f32 %v6036, 0.5
    %v6039 = vadd.f32 %v6024, %v5019
    %v6040 = vmul.f32 %v6037, %v6039
    %v6041 = vadd.f32 %v5943, %v6040
    %v6042 = vtanh.pop %v6041
    %v6043 = vsub.f32 %v5865, %v6042
    %v6044 = vmul.f32 %v6038, %v6043
    %v6045 = vadd.f32 %v6042, %v6044
    %v6046 = vpack.c.bf16 %v6045, %v6045
    %6047 = vmatprep.subr.bf16.mxu0 %v5136
    %6048 = vmatpush1.bf16.msra.mxu0 %v5135
    %6049 = vmatprep.subr.bf16.mxu0 %v5139
    %6050 = vmatpush1.bf16.msra.mxu0 %v5138
    %6051 = vmatprep.subr.bf16.mxu0 %v5142
    %6052 = vmatpush1.bf16.msra.mxu0 %v5141
    %6053 = vmatprep.subr.bf16.mxu0 %v5145
    %6054 = vmatpush1.bf16.msra.mxu0 %v5144
    %6055 = vmatprep.subr.bf16.mxu0 %v5148
    %6056 = vmatpush1.bf16.msra.mxu0 %v5147
    %6057 = vmatprep.subr.bf16.mxu0 %v5151
    %6058 = vmatpush1.bf16.msra.mxu0 %v5150
    %6059 = vmatprep.subr.bf16.mxu0 %v5154
    %6060 = vmatpush1.bf16.msra.mxu0 %v5153
    %6061 = vmatprep.subr.bf16.mxu0 %v5157
    %6062 = vmatpush1.bf16.msra.mxu0 %v5156
    %6063 = vmatprep.subr.bf16.mxu0 0
    %6064 = vmatpush1.bf16.msra.mxu0 0
    %6065 = vmatprep.subr.bf16.mxu0 0
    %6066 = vmatpush1.bf16.msra.mxu0 0
    %6067 = vmatprep.subr.bf16.mxu0 0
    %6068 = vmatpush1.bf16.msra.mxu0 0
    %6069 = vmatprep.subr.bf16.mxu0 0
    %6070 = vmatpush1.bf16.msra.mxu0 0
    %6071 = vmatprep.subr.bf16.mxu0 0
    %6072 = vmatpush1.bf16.msra.mxu0 0
    %6073 = vmatprep.subr.bf16.mxu0 0
    %6074 = vmatpush1.bf16.msra.mxu0 0
    %6075 = vmatprep.subr.bf16.mxu0 0
    %6076 = vmatpush1.bf16.msra.mxu0 0
    %6077 = vmatprep.subr.bf16.mxu0 0
    %6078 = vmatpush1.bf16.msra.mxu0 0
    %6079 = vmatprep.mubr.bf16.mxu0 0
    %6080 = vmatmul.mubr.bf16.gmra.mrb[0].mxu0 %v4445
    %v6081 = vpop.f32.mrb[0].mxu0
    %v6082 = vadd.f32 %v5187, %v6081
    %v6083 = vpop.f32.mrb[0].mxu0
    %v6084 = vadd.f32 %v5191, %v6083
    %v6085 = vpop.f32.mrb[0].mxu0
    %v6086 = vpop.f32.mrb[0].mxu0
    %6087 = vdwg.mxu0
    %6088 = vmatprep.subr.bf16.mxu0 0
    %6089 = vmatpush1.bf16.msra.mxu0 %v5137
    %6090 = vmatprep.subr.bf16.mxu0 0
    %6091 = vmatpush1.bf16.msra.mxu0 %v5140
    %6092 = vmatprep.subr.bf16.mxu0 0
    %6093 = vmatpush1.bf16.msra.mxu0 %v5143
    %6094 = vmatprep.subr.bf16.mxu0 0
    %6095 = vmatpush1.bf16.msra.mxu0 %v5146
    %6096 = vmatprep.subr.bf16.mxu0 0
    %6097 = vmatpush1.bf16.msra.mxu0 %v5149
    %6098 = vmatprep.subr.bf16.mxu0 0
    %6099 = vmatpush1.bf16.msra.mxu0 %v5152
    %6100 = vmatprep.subr.bf16.mxu0 0
    %6101 = vmatpush1.bf16.msra.mxu0 %v5155
    %6102 = vmatprep.subr.bf16.mxu0 0
    %6103 = vmatpush1.bf16.msra.mxu0 %v5158
    %6104 = vmatprep.subr.bf16.mxu0 0
    %6105 = vmatpush1.bf16.msra.mxu0 0
    %6106 = vmatprep.subr.bf16.mxu0 0
    %6107 = vmatpush1.bf16.msra.mxu0 0
    %6108 = vmatprep.subr.bf16.mxu0 0
    %6109 = vmatpush1.bf16.msra.mxu0 0
    %6110 = vmatprep.subr.bf16.mxu0 0
    %6111 = vmatpush1.bf16.msra.mxu0 0
    %6112 = vmatprep.subr.bf16.mxu0 0
    %6113 = vmatpush1.bf16.msra.mxu0 0
    %6114 = vmatprep.subr.bf16.mxu0 0
    %6115 = vmatpush1.bf16.msra.mxu0 0
    %6116 = vmatprep.subr.bf16.mxu0 0
    %6117 = vmatpush1.bf16.msra.mxu0 0
    %6118 = vmatprep.subr.bf16.mxu0 0
    %6119 = vmatpush1.bf16.msra.mxu0 0
    %6120 = vmatprep.mubr.bf16.mxu0 0
    %6121 = vmatmul.mubr.bf16.gmra.mrb[0].mxu0 %v4445
    %v6122 = vpop.f32.mrb[0].mxu0
    %v6123 = vadd.f32 %v5195, %v6122
    %v6124 = vpop.f32.mrb[0].mxu0
    %v6125 = vpop.f32.mrb[0].mxu0
    %v6126 = vpop.f32.mrb[0].mxu0
    %6127 = vdwg.mxu0
    %6128 = vmatprep.subr.bf16.mxu0 %v5361
    %6129 = vmatpush1.bf16.msra.mxu0 %v5360
    %6130 = vmatprep.subr.bf16.mxu0 %v5364
    %6131 = vmatpush1.bf16.msra.mxu0 %v5363
    %6132 = vmatprep.subr.bf16.mxu0 %v5367
    %6133 = vmatpush1.bf16.msra.mxu0 %v5366
    %6134 = vmatprep.subr.bf16.mxu0 %v5370
    %6135 = vmatpush1.bf16.msra.mxu0 %v5369
    %6136 = vmatprep.subr.bf16.mxu0 %v5373
    %6137 = vmatpush1.bf16.msra.mxu0 %v5372
    %6138 = vmatprep.subr.bf16.mxu0 %v5376
    %6139 = vmatpush1.bf16.msra.mxu0 %v5375
    %6140 = vmatprep.subr.bf16.mxu0 %v5379
    %6141 = vmatpush1.bf16.msra.mxu0 %v5378
    %6142 = vmatprep.subr.bf16.mxu0 %v5382
    %6143 = vmatpush1.bf16.msra.mxu0 %v5381
    %6144 = vmatprep.subr.bf16.mxu0 0
    %6145 = vmatpush1.bf16.msra.mxu0 0
    %6146 = vmatprep.subr.bf16.mxu0 0
    %6147 = vmatpush1.bf16.msra.mxu0 0
    %6148 = vmatprep.subr.bf16.mxu0 0
    %6149 = vmatpush1.bf16.msra.mxu0 0
    %6150 = vmatprep.subr.bf16.mxu0 0
    %6151 = vmatpush1.bf16.msra.mxu0 0
    %6152 = vmatprep.subr.bf16.mxu0 0
    %6153 = vmatpush1.bf16.msra.mxu0 0
    %6154 = vmatprep.subr.bf16.mxu0 0
    %6155 = vmatpush1.bf16.msra.mxu0 0
    %6156 = vmatprep.subr.bf16.mxu0 0
    %6157 = vmatpush1.bf16.msra.mxu0 0
    %6158 = vmatprep.subr.bf16.mxu0 0
    %6159 = vmatpush1.bf16.msra.mxu0 0
    %6160 = vmatprep.mubr.bf16.mxu0 0
    %6161 = vmatmul.mubr.bf16.gmra.mrb[0].mxu0 %v6046
    %v6162 = vpop.f32.mrb[0].mxu0
    %v6163 = vadd.f32 0.0, %v6162
    %v6164 = vpop.f32.mrb[0].mxu0
    %v6165 = vadd.f32 0.0, %v6164
    %v6166 = vpop.f32.mrb[0].mxu0
    %v6167 = vpop.f32.mrb[0].mxu0
    %6168 = vdwg.mxu0
    %6169 = vmatprep.subr.bf16.mxu0 0
    %6170 = vmatpush1.bf16.msra.mxu0 %v5362
    %6171 = vmatprep.subr.bf16.mxu0 0
    %6172 = vmatpush1.bf16.msra.mxu0 %v5365
    %6173 = vmatprep.subr.bf16.mxu0 0
    %6174 = vmatpush1.bf16.msra.mxu0 %v5368
    %6175 = vmatprep.subr.bf16.mxu0 0
    %6176 = vmatpush1.bf16.msra.mxu0 %v5371
    %6177 = vmatprep.subr.bf16.mxu0 0
    %6178 = vmatpush1.bf16.msra.mxu0 %v5374
    %6179 = vmatprep.subr.bf16.mxu0 0
    %6180 = vmatpush1.bf16.msra.mxu0 %v5377
    %6181 = vmatprep.subr.bf16.mxu0 0
    %6182 = vmatpush1.bf16.msra.mxu0 %v5380
    %6183 = vmatprep.subr.bf16.mxu0 0
    %6184 = vmatpush1.bf16.msra.mxu0 %v5383
    %6185 = vmatprep.subr.bf16.mxu0 0
    %6186 = vmatpush1.bf16.msra.mxu0 0
    %6187 = vmatprep.subr.bf16.mxu0 0
    %6188 = vmatpush1.bf16.msra.mxu0 0
    %6189 = vmatprep.subr.bf16.mxu0 0
    %6190 = vmatpush1.bf16.msra.mxu0 0
    %6191 = vmatprep.subr.bf16.mxu0 0
    %6192 = vmatpush1.bf16.msra.mxu0 0
    %6193 = vmatprep.subr.bf16.mxu0 0
    %6194 = vmatpush1.bf16.msra.mxu0 0
    %6195 = vmatprep.subr.bf16.mxu0 0
    %6196 = vmatpush1.bf16.msra.mxu0 0
    %6197 = vmatprep.subr.bf16.mxu0 0
    %6198 = vmatpush1.bf16.msra.mxu0 0
    %6199 = vmatprep.subr.bf16.mxu0 0
    %6200 = vmatpush1.bf16.msra.mxu0 0
    %6201 = vmatprep.mubr.bf16.mxu0 0
    %6202 = vmatmul.mubr.bf16.gmra.mrb[0].mxu0 %v6046
    %v6203 = vpop.f32.mrb[0].mxu0
    %v6204 = vadd.f32 0.0, %v6203
    %v6205 = vpop.f32.mrb[0].mxu0
    %v6206 = vpop.f32.mrb[0].mxu0
    %v6207 = vpop.f32.mrb[0].mxu0
    %6208 = vdwg.mxu0
    %v6209 = vadd.f32 %v6082, %v6163
    %v6210 = vadd.f32 %v6084, %v6165
    %v6211 = vmul.f32 %v6209, 0.5
    %v6212 = vmul.f32 %v6210, 0.5
    %v6213 = vtanh.pop %v6211
    %v6214 = vtanh.pop %v6212
    %v6215 = vmul.f32 %v6213, 0.5
    %v6216 = vmul.f32 %v6214, 0.5
    %v6217 = vadd.f32 %v6215, 0.5
    %v6218 = vadd.f32 %v6216, 0.5
    %v6219 = vadd.f32 %v6204, %v5019
    %v6220 = vmul.f32 %v6217, %v6219
    %v6221 = vadd.f32 %v6123, %v6220
    %v6222 = vtanh.pop %v6221
    %v6223 = vsub.f32 %v6045, %v6222
    %v6224 = vmul.f32 %v6218, %v6223
    %v6225 = vadd.f32 %v6222, %v6224
    %v6226 = vpack.c.bf16 %v6225, %v6225
    %6227 = vmatprep.subr.bf16.mxu0 %v5136
    %6228 = vmatpush1.bf16.msra.mxu0 %v5135
    %6229 = vmatprep.subr.bf16.mxu0 %v5139
    %6230 = vmatpush1.bf16.msra.mxu0 %v5138
    %6231 = vmatprep.subr.bf16.mxu0 %v5142
    %6232 = vmatpush1.bf16.msra.mxu0 %v5141
    %6233 = vmatprep.subr.bf16.mxu0 %v5145
    %6234 = vmatpush1.bf16.msra.mxu0 %v5144
    %6235 = vmatprep.subr.bf16.mxu0 %v5148
    %6236 = vmatpush1.bf16.msra.mxu0 %v5147
    %6237 = vmatprep.subr.bf16.mxu0 %v5151
    %6238 = vmatpush1.bf16.msra.mxu0 %v5150
    %6239 = vmatprep.subr.bf16.mxu0 %v5154
    %6240 = vmatpush1.bf16.msra.mxu0 %v5153
    %6241 = vmatprep.subr.bf16.mxu0 %v5157
    %6242 = vmatpush1.bf16.msra.mxu0 %v5156
    %6243 = vmatprep.subr.bf16.mxu0 0
    %6244 = vmatpush1.bf16.msra.mxu0 0
    %6245 = vmatprep.subr.bf16.mxu0 0
    %6246 = vmatpush1.bf16.msra.mxu0 0
    %6247 = vmatprep.subr.bf16.mxu0 0
    %6248 = vmatpush1.bf16.msra.mxu0 0
    %6249 = vmatprep.subr.bf16.mxu0 0
    %6250 = vmatpush1.bf16.msra.mxu0 0
    %6251 = vmatprep.subr.bf16.mxu0 0
    %6252 = vmatpush1.bf16.msra.mxu0 0
    %6253 = vmatprep.subr.bf16.mxu0 0
    %6254 = vmatpush1.bf16.msra.mxu0 0
    %6255 = vmatprep.subr.bf16.mxu0 0
    %6256 = vmatpush1.bf16.msra.mxu0 0
    %6257 = vmatprep.subr.bf16.mxu0 0
    %6258 = vmatpush1.bf16.msra.mxu0 0
    %6259 = vmatprep.mubr.bf16.mxu0 0
    %6260 = vmatmul.mubr.bf16.gmra.mrb[0].mxu0 %v4625
    %v6261 = vpop.f32.mrb[0].mxu0
    %v6262 = vadd.f32 %v5187, %v6261
    %v6263 = vpop.f32.mrb[0].mxu0
    %v6264 = vadd.f32 %v5191, %v6263
    %v6265 = vpop.f32.mrb[0].mxu0
    %v6266 = vpop.f32.mrb[0].mxu0
    %6267 = vdwg.mxu0
    %6268 = vmatprep.subr.bf16.mxu0 0
    %6269 = vmatpush1.bf16.msra.mxu0 %v5137
    %6270 = vmatprep.subr.bf16.mxu0 0
    %6271 = vmatpush1.bf16.msra.mxu0 %v5140
    %6272 = vmatprep.subr.bf16.mxu0 0
    %6273 = vmatpush1.bf16.msra.mxu0 %v5143
    %6274 = vmatprep.subr.bf16.mxu0 0
    %6275 = vmatpush1.bf16.msra.mxu0 %v5146
    %6276 = vmatprep.subr.bf16.mxu0 0
    %6277 = vmatpush1.bf16.msra.mxu0 %v5149
    %6278 = vmatprep.subr.bf16.mxu0 0
    %6279 = vmatpush1.bf16.msra.mxu0 %v5152
    %6280 = vmatprep.subr.bf16.mxu0 0
    %6281 = vmatpush1.bf16.msra.mxu0 %v5155
    %6282 = vmatprep.subr.bf16.mxu0 0
    %6283 = vmatpush1.bf16.msra.mxu0 %v5158
    %6284 = vmatprep.subr.bf16.mxu0 0
    %6285 = vmatpush1.bf16.msra.mxu0 0
    %6286 = vmatprep.subr.bf16.mxu0 0
    %6287 = vmatpush1.bf16.msra.mxu0 0
    %6288 = vmatprep.subr.bf16.mxu0 0
    %6289 = vmatpush1.bf16.msra.mxu0 0
    %6290 = vmatprep.subr.bf16.mxu0 0
    %6291 = vmatpush1.bf16.msra.mxu0 0
    %6292 = vmatprep.subr.bf16.mxu0 0
    %6293 = vmatpush1.bf16.msra.mxu0 0
    %6294 = vmatprep.subr.bf16.mxu0 0
    %6295 = vmatpush1.bf16.msra.mxu0 0
    %6296 = vmatprep.subr.bf16.mxu0 0
    %6297 = vmatpush1.bf16.msra.mxu0 0
    %6298 = vmatprep.subr.bf16.mxu0 0
    %6299 = vmatpush1.bf16.msra.mxu0 0
    %6300 = vmatprep.mubr.bf16.mxu0 0
    %6301 = vmatmul.mubr.bf16.gmra.mrb[0].mxu0 %v4625
    %v6302 = vpop.f32.mrb[0].mxu0
    %v6303 = vadd.f32 %v5195, %v6302
    %v6304 = vpop.f32.mrb[0].mxu0
    %v6305 = vpop.f32.mrb[0].mxu0
    %v6306 = vpop.f32.mrb[0].mxu0
    %6307 = vdwg.mxu0
    %6308 = vmatprep.subr.bf16.mxu0 %v5361
    %6309 = vmatpush1.bf16.msra.mxu0 %v5360
    %6310 = vmatprep.subr.bf16.mxu0 %v5364
    %6311 = vmatpush1.bf16.msra.mxu0 %v5363
    %6312 = vmatprep.subr.bf16.mxu0 %v5367
    %6313 = vmatpush1.bf16.msra.mxu0 %v5366
    %6314 = vmatprep.subr.bf16.mxu0 %v5370
    %6315 = vmatpush1.bf16.msra.mxu0 %v5369
    %6316 = vmatprep.subr.bf16.mxu0 %v5373
    %6317 = vmatpush1.bf16.msra.mxu0 %v5372
    %6318 = vmatprep.subr.bf16.mxu0 %v5376
    %6319 = vmatpush1.bf16.msra.mxu0 %v5375
    %6320 = vmatprep.subr.bf16.mxu0 %v5379
    %6321 = vmatpush1.bf16.msra.mxu0 %v5378
    %6322 = vmatprep.subr.bf16.mxu0 %v5382
    %6323 = vmatpush1.bf16.msra.mxu0 %v5381
    %6324 = vmatprep.subr.bf16.mxu0 0
    %6325 = vmatpush1.bf16.msra.mxu0 0
    %6326 = vmatprep.subr.bf16.mxu0 0
    %6327 = vmatpush1.bf16.msra.mxu0 0
    %6328 = vmatprep.subr.bf16.mxu0 0
    %6329 = vmatpush1.bf16.msra.mxu0 0
    %6330 = vmatprep.subr.bf16.mxu0 0
    %6331 = vmatpush1.bf16.msra.mxu0 0
    %6332 = vmatprep.subr.bf16.mxu0 0
    %6333 = vmatpush1.bf16.msra.mxu0 0
    %6334 = vmatprep.subr.bf16.mxu0 0
    %6335 = vmatpush1.bf16.msra.mxu0 0
    %6336 = vmatprep.subr.bf16.mxu0 0
    %6337 = vmatpush1.bf16.msra.mxu0 0
    %6338 = vmatprep.subr.bf16.mxu0 0
    %6339 = vmatpush1.bf16.msra.mxu0 0
    %6340 = vmatprep.mubr.bf16.mxu0 0
    %6341 = vmatmul.mubr.bf16.gmra.mrb[0].mxu0 %v6226
    %v6342 = vpop.f32.mrb[0].mxu0
    %v6343 = vadd.f32 0.0, %v6342
    %v6344 = vpop.f32.mrb[0].mxu0
    %v6345 = vadd.f32 0.0, %v6344
    %v6346 = vpop.f32.mrb[0].mxu0
    %v6347 = vpop.f32.mrb[0].mxu0
    %6348 = vdwg.mxu0
    %6349 = vmatprep.subr.bf16.mxu0 0
    %6350 = vmatpush1.bf16.msra.mxu0 %v5362
    %6351 = vmatprep.subr.bf16.mxu0 0
    %6352 = vmatpush1.bf16.msra.mxu0 %v5365
    %6353 = vmatprep.subr.bf16.mxu0 0
    %6354 = vmatpush1.bf16.msra.mxu0 %v5368
    %6355 = vmatprep.subr.bf16.mxu0 0
    %6356 = vmatpush1.bf16.msra.mxu0 %v5371
    %6357 = vmatprep.subr.bf16.mxu0 0
    %6358 = vmatpush1.bf16.msra.mxu0 %v5374
    %6359 = vmatprep.subr.bf16.mxu0 0
    %6360 = vmatpush1.bf16.msra.mxu0 %v5377
    %6361 = vmatprep.subr.bf16.mxu0 0
    %6362 = vmatpush1.bf16.msra.mxu0 %v5380
    %6363 = vmatprep.subr.bf16.mxu0 0
    %6364 = vmatpush1.bf16.msra.mxu0 %v5383
    %6365 = vmatprep.subr.bf16.mxu0 0
    %6366 = vmatpush1.bf16.msra.mxu0 0
    %6367 = vmatprep.subr.bf16.mxu0 0
    %6368 = vmatpush1.bf16.msra.mxu0 0
    %6369 = vmatprep.subr.bf16.mxu0 0
    %6370 = vmatpush1.bf16.msra.mxu0 0
    %6371 = vmatprep.subr.bf16.mxu0 0
    %6372 = vmatpush1.bf16.msra.mxu0 0
    %6373 = vmatprep.subr.bf16.mxu0 0
    %6374 = vmatpush1.bf16.msra.mxu0 0
    %6375 = vmatprep.subr.bf16.mxu0 0
    %6376 = vmatpush1.bf16.msra.mxu0 0
    %6377 = vmatprep.subr.bf16.mxu0 0
    %6378 = vmatpush1.bf16.msra.mxu0 0
    %6379 = vmatprep.subr.bf16.mxu0 0
    %6380 = vmatpush1.bf16.msra.mxu0 0
    %6381 = vmatprep.mubr.bf16.mxu0 0
    %6382 = vmatmul.mubr.bf16.gmra.mrb[0].mxu0 %v6226
    %v6383 = vpop.f32.mrb[0].mxu0
    %v6384 = vadd.f32 0.0, %v6383
    %v6385 = vpop.f32.mrb[0].mxu0
    %v6386 = vpop.f32.mrb[0].mxu0
    %v6387 = vpop.f32.mrb[0].mxu0
    %6388 = vdwg.mxu0
    %v6389 = vadd.f32 %v6262, %v6343
    %v6390 = vadd.f32 %v6264, %v6345
    %v6391 = vmul.f32 %v6389, 0.5
    %v6392 = vmul.f32 %v6390, 0.5
    %v6393 = vtanh.pop %v6391
    %v6394 = vtanh.pop %v6392
    %v6395 = vmul.f32 %v6393, 0.5
    %v6396 = vmul.f32 %v6394, 0.5
    %v6397 = vadd.f32 %v6395, 0.5
    %v6398 = vadd.f32 %v6396, 0.5
    %v6399 = vadd.f32 %v6384, %v5019
    %v6400 = vmul.f32 %v6397, %v6399
    %v6401 = vadd.f32 %v6303, %v6400
    %v6402 = vtanh.pop %v6401
    %v6403 = vsub.f32 %v6225, %v6402
    %v6404 = vmul.f32 %v6398, %v6403
    %v6405 = vadd.f32 %v6402, %v6404
    %v6406 = vpack.c.bf16 %v6405, %v6405
    %6407 = vmatprep.subr.bf16.mxu0 %v5136
    %6408 = vmatpush1.bf16.msra.mxu0 %v5135
    %6409 = vmatprep.subr.bf16.mxu0 %v5139
    %6410 = vmatpush1.bf16.msra.mxu0 %v5138
    %6411 = vmatprep.subr.bf16.mxu0 %v5142
    %6412 = vmatpush1.bf16.msra.mxu0 %v5141
    %6413 = vmatprep.subr.bf16.mxu0 %v5145
    %6414 = vmatpush1.bf16.msra.mxu0 %v5144
    %6415 = vmatprep.subr.bf16.mxu0 %v5148
    %6416 = vmatpush1.bf16.msra.mxu0 %v5147
    %6417 = vmatprep.subr.bf16.mxu0 %v5151
    %6418 = vmatpush1.bf16.msra.mxu0 %v5150
    %6419 = vmatprep.subr.bf16.mxu0 %v5154
    %6420 = vmatpush1.bf16.msra.mxu0 %v5153
    %6421 = vmatprep.subr.bf16.mxu0 %v5157
    %6422 = vmatpush1.bf16.msra.mxu0 %v5156
    %6423 = vmatprep.subr.bf16.mxu0 0
    %6424 = vmatpush1.bf16.msra.mxu0 0
    %6425 = vmatprep.subr.bf16.mxu0 0
    %6426 = vmatpush1.bf16.msra.mxu0 0
    %6427 = vmatprep.subr.bf16.mxu0 0
    %6428 = vmatpush1.bf16.msra.mxu0 0
    %6429 = vmatprep.subr.bf16.mxu0 0
    %6430 = vmatpush1.bf16.msra.mxu0 0
    %6431 = vmatprep.subr.bf16.mxu0 0
    %6432 = vmatpush1.bf16.msra.mxu0 0
    %6433 = vmatprep.subr.bf16.mxu0 0
    %6434 = vmatpush1.bf16.msra.mxu0 0
    %6435 = vmatprep.subr.bf16.mxu0 0
    %6436 = vmatpush1.bf16.msra.mxu0 0
    %6437 = vmatprep.subr.bf16.mxu0 0
    %6438 = vmatpush1.bf16.msra.mxu0 0
    %6439 = vmatprep.mubr.bf16.mxu0 0
    %6440 = vmatmul.mubr.bf16.gmra.mrb[0].mxu0 %v4805
    %v6441 = vpop.f32.mrb[0].mxu0
    %v6442 = vadd.f32 %v5187, %v6441
    %v6443 = vpop.f32.mrb[0].mxu0
    %v6444 = vadd.f32 %v5191, %v6443
    %v6445 = vpop.f32.mrb[0].mxu0
    %v6446 = vpop.f32.mrb[0].mxu0
    %6447 = vdwg.mxu0
    %6448 = vmatprep.subr.bf16.mxu0 0
    %6449 = vmatpush1.bf16.msra.mxu0 %v5137
    %6450 = vmatprep.subr.bf16.mxu0 0
    %6451 = vmatpush1.bf16.msra.mxu0 %v5140
    %6452 = vmatprep.subr.bf16.mxu0 0
    %6453 = vmatpush1.bf16.msra.mxu0 %v5143
    %6454 = vmatprep.subr.bf16.mxu0 0
    %6455 = vmatpush1.bf16.msra.mxu0 %v5146
    %6456 = vmatprep.subr.bf16.mxu0 0
    %6457 = vmatpush1.bf16.msra.mxu0 %v5149
    %6458 = vmatprep.subr.bf16.mxu0 0
    %6459 = vmatpush1.bf16.msra.mxu0 %v5152
    %6460 = vmatprep.subr.bf16.mxu0 0
    %6461 = vmatpush1.bf16.msra.mxu0 %v5155
    %6462 = vmatprep.subr.bf16.mxu0 0
    %6463 = vmatpush1.bf16.msra.mxu0 %v5158
    %6464 = vmatprep.subr.bf16.mxu0 0
    %6465 = vmatpush1.bf16.msra.mxu0 0
    %6466 = vmatprep.subr.bf16.mxu0 0
    %6467 = vmatpush1.bf16.msra.mxu0 0
    %6468 = vmatprep.subr.bf16.mxu0 0
    %6469 = vmatpush1.bf16.msra.mxu0 0
    %6470 = vmatprep.subr.bf16.mxu0 0
    %6471 = vmatpush1.bf16.msra.mxu0 0
    %6472 = vmatprep.subr.bf16.mxu0 0
    %6473 = vmatpush1.bf16.msra.mxu0 0
    %6474 = vmatprep.subr.bf16.mxu0 0
    %6475 = vmatpush1.bf16.msra.mxu0 0
    %6476 = vmatprep.subr.bf16.mxu0 0
    %6477 = vmatpush1.bf16.msra.mxu0 0
    %6478 = vmatprep.subr.bf16.mxu0 0
    %6479 = vmatpush1.bf16.msra.mxu0 0
    %6480 = vmatprep.mubr.bf16.mxu0 0
    %6481 = vmatmul.mubr.bf16.gmra.mrb[0].mxu0 %v4805
    %v6482 = vpop.f32.mrb[0].mxu0
    %v6483 = vadd.f32 %v5195, %v6482
    %v6484 = vpop.f32.mrb[0].mxu0
    %v6485 = vpop.f32.mrb[0].mxu0
    %v6486 = vpop.f32.mrb[0].mxu0
    %6487 = vdwg.mxu0
    %6488 = vmatprep.subr.bf16.mxu0 %v5361
    %6489 = vmatpush1.bf16.msra.mxu0 %v5360
    %6490 = vmatprep.subr.bf16.mxu0 %v5364
    %6491 = vmatpush1.bf16.msra.mxu0 %v5363
    %6492 = vmatprep.subr.bf16.mxu0 %v5367
    %6493 = vmatpush1.bf16.msra.mxu0 %v5366
    %6494 = vmatprep.subr.bf16.mxu0 %v5370
    %6495 = vmatpush1.bf16.msra.mxu0 %v5369
    %6496 = vmatprep.subr.bf16.mxu0 %v5373
    %6497 = vmatpush1.bf16.msra.mxu0 %v5372
    %6498 = vmatprep.subr.bf16.mxu0 %v5376
    %6499 = vmatpush1.bf16.msra.mxu0 %v5375
    %6500 = vmatprep.subr.bf16.mxu0 %v5379
    %6501 = vmatpush1.bf16.msra.mxu0 %v5378
    %6502 = vmatprep.subr.bf16.mxu0 %v5382
    %6503 = vmatpush1.bf16.msra.mxu0 %v5381
    %6504 = vmatprep.subr.bf16.mxu0 0
    %6505 = vmatpush1.bf16.msra.mxu0 0
    %6506 = vmatprep.subr.bf16.mxu0 0
    %6507 = vmatpush1.bf16.msra.mxu0 0
    %6508 = vmatprep.subr.bf16.mxu0 0
    %6509 = vmatpush1.bf16.msra.mxu0 0
    %6510 = vmatprep.subr.bf16.mxu0 0
    %6511 = vmatpush1.bf16.msra.mxu0 0
    %6512 = vmatprep.subr.bf16.mxu0 0
    %6513 = vmatpush1.bf16.msra.mxu0 0
    %6514 = vmatprep.subr.bf16.mxu0 0
    %6515 = vmatpush1.bf16.msra.mxu0 0
    %6516 = vmatprep.subr.bf16.mxu0 0
    %6517 = vmatpush1.bf16.msra.mxu0 0
    %6518 = vmatprep.subr.bf16.mxu0 0
    %6519 = vmatpush1.bf16.msra.mxu0 0
    %6520 = vmatprep.mubr.bf16.mxu0 0
    %6521 = vmatmul.mubr.bf16.gmra.mrb[0].mxu0 %v6406
    %v6522 = vpop.f32.mrb[0].mxu0
    %v6523 = vadd.f32 0.0, %v6522
    %v6524 = vpop.f32.mrb[0].mxu0
    %v6525 = vadd.f32 0.0, %v6524
    %v6526 = vpop.f32.mrb[0].mxu0
    %v6527 = vpop.f32.mrb[0].mxu0
    %6528 = vdwg.mxu0
    %6529 = vmatprep.subr.bf16.mxu0 0
    %6530 = vmatpush1.bf16.msra.mxu0 %v5362
    %6531 = vmatprep.subr.bf16.mxu0 0
    %6532 = vmatpush1.bf16.msra.mxu0 %v5365
    %6533 = vmatprep.subr.bf16.mxu0 0
    %6534 = vmatpush1.bf16.msra.mxu0 %v5368
    %6535 = vmatprep.subr.bf16.mxu0 0
    %6536 = vmatpush1.bf16.msra.mxu0 %v5371
    %6537 = vmatprep.subr.bf16.mxu0 0
    %6538 = vmatpush1.bf16.msra.mxu0 %v5374
    %6539 = vmatprep.subr.bf16.mxu0 0
    %6540 = vmatpush1.bf16.msra.mxu0 %v5377
    %6541 = vmatprep.subr.bf16.mxu0 0
    %6542 = vmatpush1.bf16.msra.mxu0 %v5380
    %6543 = vmatprep.subr.bf16.mxu0 0
    %6544 = vmatpush1.bf16.msra.mxu0 %v5383
    %6545 = vmatprep.subr.bf16.mxu0 0
    %6546 = vmatpush1.bf16.msra.mxu0 0
    %6547 = vmatprep.subr.bf16.mxu0 0
    %6548 = vmatpush1.bf16.msra.mxu0 0
    %6549 = vmatprep.subr.bf16.mxu0 0
    %6550 = vmatpush1.bf16.msra.mxu0 0
    %6551 = vmatprep.subr.bf16.mxu0 0
    %6552 = vmatpush1.bf16.msra.mxu0 0
    %6553 = vmatprep.subr.bf16.mxu0 0
    %6554 = vmatpush1.bf16.msra.mxu0 0
    %6555 = vmatprep.subr.bf16.mxu0 0
    %6556 = vmatpush1.bf16.msra.mxu0 0
    %6557 = vmatprep.subr.bf16.mxu0 0
    %6558 = vmatpush1.bf16.msra.mxu0 0
    %6559 = vmatprep.subr.bf16.mxu0 0
    %6560 = vmatpush1.bf16.msra.mxu0 0
    %6561 = vmatprep.mubr.bf16.mxu0 0
    %6562 = vmatmul.mubr.bf16.gmra.mrb[0].mxu0 %v6406
    %v6563 = vpop.f32.mrb[0].mxu0
    %v6564 = vadd.f32 0.0, %v6563
    %v6565 = vpop.f32.mrb[0].mxu0
    %v6566 = vpop.f32.mrb[0].mxu0
    %v6567 = vpop.f32.mrb[0].mxu0
    %6568 = vdwg.mxu0
    %v6569 = vadd.f32 %v6442, %v6523
    %v6570 = vadd.f32 %v6444, %v6525
    %v6571 = vmul.f32 %v6569, 0.5
    %v6572 = vmul.f32 %v6570, 0.5
    %v6573 = vtanh.pop %v6571
    %v6574 = vtanh.pop %v6572
    %v6575 = vmul.f32 %v6573, 0.5
    %v6576 = vmul.f32 %v6574, 0.5
    %v6577 = vadd.f32 %v6575, 0.5
    %v6578 = vadd.f32 %v6576, 0.5
    %v6579 = vadd.f32 %v6564, %v5019
    %v6580 = vmul.f32 %v6577, %v6579
    %v6581 = vadd.f32 %v6483, %v6580
    %v6582 = vtanh.pop %v6581
    %v6583 = vsub.f32 %v6405, %v6582
    %v6584 = vmul.f32 %v6578, %v6583
    %v6585 = vadd.f32 %v6582, %v6584
    %v6586 = vpack.c.bf16 %v6585, %v6585
    %6587 = vmatprep.subr.bf16.mxu0 %v5136
    %6588 = vmatpush1.bf16.msra.mxu0 %v5135
    %6589 = vmatprep.subr.bf16.mxu0 %v5139
    %6590 = vmatpush1.bf16.msra.mxu0 %v5138
    %6591 = vmatprep.subr.bf16.mxu0 %v5142
    %6592 = vmatpush1.bf16.msra.mxu0 %v5141
    %6593 = vmatprep.subr.bf16.mxu0 %v5145
    %6594 = vmatpush1.bf16.msra.mxu0 %v5144
    %6595 = vmatprep.subr.bf16.mxu0 %v5148
    %6596 = vmatpush1.bf16.msra.mxu0 %v5147
    %6597 = vmatprep.subr.bf16.mxu0 %v5151
    %6598 = vmatpush1.bf16.msra.mxu0 %v5150
    %6599 = vmatprep.subr.bf16.mxu0 %v5154
    %6600 = vmatpush1.bf16.msra.mxu0 %v5153
    %6601 = vmatprep.subr.bf16.mxu0 %v5157
    %6602 = vmatpush1.bf16.msra.mxu0 %v5156
    %6603 = vmatprep.subr.bf16.mxu0 0
    %6604 = vmatpush1.bf16.msra.mxu0 0
    %6605 = vmatprep.subr.bf16.mxu0 0
    %6606 = vmatpush1.bf16.msra.mxu0 0
    %6607 = vmatprep.subr.bf16.mxu0 0
    %6608 = vmatpush1.bf16.msra.mxu0 0
    %6609 = vmatprep.subr.bf16.mxu0 0
    %6610 = vmatpush1.bf16.msra.mxu0 0
    %6611 = vmatprep.subr.bf16.mxu0 0
    %6612 = vmatpush1.bf16.msra.mxu0 0
    %6613 = vmatprep.subr.bf16.mxu0 0
    %6614 = vmatpush1.bf16.msra.mxu0 0
    %6615 = vmatprep.subr.bf16.mxu0 0
    %6616 = vmatpush1.bf16.msra.mxu0 0
    %6617 = vmatprep.subr.bf16.mxu0 0
    %6618 = vmatpush1.bf16.msra.mxu0 0
    %6619 = vmatprep.mubr.bf16.mxu0 0
    %6620 = vmatmul.mubr.bf16.gmra.mrb[0].mxu0 %v4985
    %v6621 = vpop.f32.mrb[0].mxu0
    %v6622 = vadd.f32 %v5187, %v6621
    %v6623 = vpop.f32.mrb[0].mxu0
    %v6624 = vadd.f32 %v5191, %v6623
    %v6625 = vpop.f32.mrb[0].mxu0
    %v6626 = vpop.f32.mrb[0].mxu0
    %6627 = vdwg.mxu0
    %6628 = vmatprep.subr.bf16.mxu0 0
    %6629 = vmatpush1.bf16.msra.mxu0 %v5137
    %6630 = vmatprep.subr.bf16.mxu0 0
    %6631 = vmatpush1.bf16.msra.mxu0 %v5140
    %6632 = vmatprep.subr.bf16.mxu0 0
    %6633 = vmatpush1.bf16.msra.mxu0 %v5143
    %6634 = vmatprep.subr.bf16.mxu0 0
    %6635 = vmatpush1.bf16.msra.mxu0 %v5146
    %6636 = vmatprep.subr.bf16.mxu0 0
    %6637 = vmatpush1.bf16.msra.mxu0 %v5149
    %6638 = vmatprep.subr.bf16.mxu0 0
    %6639 = vmatpush1.bf16.msra.mxu0 %v5152
    %6640 = vmatprep.subr.bf16.mxu0 0
    %6641 = vmatpush1.bf16.msra.mxu0 %v5155
    %6642 = vmatprep.subr.bf16.mxu0 0
    %6643 = vmatpush1.bf16.msra.mxu0 %v5158
    %6644 = vmatprep.subr.bf16.mxu0 0
    %6645 = vmatpush1.bf16.msra.mxu0 0
    %6646 = vmatprep.subr.bf16.mxu0 0
    %6647 = vmatpush1.bf16.msra.mxu0 0
    %6648 = vmatprep.subr.bf16.mxu0 0
    %6649 = vmatpush1.bf16.msra.mxu0 0
    %6650 = vmatprep.subr.bf16.mxu0 0
    %6651 = vmatpush1.bf16.msra.mxu0 0
    %6652 = vmatprep.subr.bf16.mxu0 0
    %6653 = vmatpush1.bf16.msra.mxu0 0
    %6654 = vmatprep.subr.bf16.mxu0 0
    %6655 = vmatpush1.bf16.msra.mxu0 0
    %6656 = vmatprep.subr.bf16.mxu0 0
    %6657 = vmatpush1.bf16.msra.mxu0 0
    %6658 = vmatprep.subr.bf16.mxu0 0
    %6659 = vmatpush1.bf16.msra.mxu0 0
    %6660 = vmatprep.mubr.bf16.mxu0 0
    %6661 = vmatmul.mubr.bf16.gmra.mrb[0].mxu0 %v4985
    %v6662 = vpop.f32.mrb[0].mxu0
    %v6663 = vadd.f32 %v5195, %v6662
    %v6664 = vpop.f32.mrb[0].mxu0
    %v6665 = vpop.f32.mrb[0].mxu0
    %v6666 = vpop.f32.mrb[0].mxu0
    %6667 = vdwg.mxu0
    %6668 = vmatprep.subr.bf16.mxu0 %v5361
    %6669 = vmatpush1.bf16.msra.mxu0 %v5360
    %6670 = vmatprep.subr.bf16.mxu0 %v5364
    %6671 = vmatpush1.bf16.msra.mxu0 %v5363
    %6672 = vmatprep.subr.bf16.mxu0 %v5367
    %6673 = vmatpush1.bf16.msra.mxu0 %v5366
    %6674 = vmatprep.subr.bf16.mxu0 %v5370
    %6675 = vmatpush1.bf16.msra.mxu0 %v5369
    %6676 = vmatprep.subr.bf16.mxu0 %v5373
    %6677 = vmatpush1.bf16.msra.mxu0 %v5372
    %6678 = vmatprep.subr.bf16.mxu0 %v5376
    %6679 = vmatpush1.bf16.msra.mxu0 %v5375
    %6680 = vmatprep.subr.bf16.mxu0 %v5379
    %6681 = vmatpush1.bf16.msra.mxu0 %v5378
    %6682 = vmatprep.subr.bf16.mxu0 %v5382
    %6683 = vmatpush1.bf16.msra.mxu0 %v5381
    %6684 = vmatprep.subr.bf16.mxu0 0
    %6685 = vmatpush1.bf16.msra.mxu0 0
    %6686 = vmatprep.subr.bf16.mxu0 0
    %6687 = vmatpush1.bf16.msra.mxu0 0
    %6688 = vmatprep.subr.bf16.mxu0 0
    %6689 = vmatpush1.bf16.msra.mxu0 0
    %6690 = vmatprep.subr.bf16.mxu0 0
    %6691 = vmatpush1.bf16.msra.mxu0 0
    %6692 = vmatprep.subr.bf16.mxu0 0
    %6693 = vmatpush1.bf16.msra.mxu0 0
    %6694 = vmatprep.subr.bf16.mxu0 0
    %6695 = vmatpush1.bf16.msra.mxu0 0
    %6696 = vmatprep.subr.bf16.mxu0 0
    %6697 = vmatpush1.bf16.msra.mxu0 0
    %6698 = vmatprep.subr.bf16.mxu0 0
    %6699 = vmatpush1.bf16.msra.mxu0 0
    %6700 = vmatprep.mubr.bf16.mxu0 0
    %6701 = vmatmul.mubr.bf16.gmra.mrb[0].mxu0 %v6586
    %v6702 = vpop.f32.mrb[0].mxu0
    %v6703 = vadd.f32 0.0, %v6702
    %v6704 = vpop.f32.mrb[0].mxu0
    %v6705 = vadd.f32 0.0, %v6704
    %v6706 = vpop.f32.mrb[0].mxu0
    %v6707 = vpop.f32.mrb[0].mxu0
    %6708 = vdwg.mxu0
    %6709 = vmatprep.subr.bf16.mxu0 0
    %6710 = vmatpush1.bf16.msra.mxu0 %v5362
    %6711 = vmatprep.subr.bf16.mxu0 0
    %6712 = vmatpush1.bf16.msra.mxu0 %v5365
    %6713 = vmatprep.subr.bf16.mxu0 0
    %6714 = vmatpush1.bf16.msra.mxu0 %v5368
    %6715 = vmatprep.subr.bf16.mxu0 0
    %6716 = vmatpush1.bf16.msra.mxu0 %v5371
    %6717 = vmatprep.subr.bf16.mxu0 0
    %6718 = vmatpush1.bf16.msra.mxu0 %v5374
    %6719 = vmatprep.subr.bf16.mxu0 0
    %6720 = vmatpush1.bf16.msra.mxu0 %v5377
    %6721 = vmatprep.subr.bf16.mxu0 0
    %6722 = vmatpush1.bf16.msra.mxu0 %v5380
    %6723 = vmatprep.subr.bf16.mxu0 0
    %6724 = vmatpush1.bf16.msra.mxu0 %v5383
    %6725 = vmatprep.subr.bf16.mxu0 0
    %6726 = vmatpush1.bf16.msra.mxu0 0
    %6727 = vmatprep.subr.bf16.mxu0 0
    %6728 = vmatpush1.bf16.msra.mxu0 0
    %6729 = vmatprep.subr.bf16.mxu0 0
    %6730 = vmatpush1.bf16.msra.mxu0 0
    %6731 = vmatprep.subr.bf16.mxu0 0
    %6732 = vmatpush1.bf16.msra.mxu0 0
    %6733 = vmatprep.subr.bf16.mxu0 0
    %6734 = vmatpush1.bf16.msra.mxu0 0
    %6735 = vmatprep.subr.bf16.mxu0 0
    %6736 = vmatpush1.bf16.msra.mxu0 0
    %6737 = vmatprep.subr.bf16.mxu0 0
    %6738 = vmatpush1.bf16.msra.mxu0 0
    %6739 = vmatprep.subr.bf16.mxu0 0
    %6740 = vmatpush1.bf16.msra.mxu0 0
    %6741 = vmatprep.mubr.bf16.mxu0 0
    %6742 = vmatmul.mubr.bf16.gmra.mrb[0].mxu0 %v6586
    %v6743 = vpop.f32.mrb[0].mxu0
    %v6744 = vadd.f32 0.0, %v6743
    %v6745 = vpop.f32.mrb[0].mxu0
    %v6746 = vpop.f32.mrb[0].mxu0
    %v6747 = vpop.f32.mrb[0].mxu0
    %6748 = vdwg.mxu0
    %v6749 = vadd.f32 %v6622, %v6703
    %v6750 = vadd.f32 %v6624, %v6705
    %v6751 = vmul.f32 %v6749, 0.5
    %v6752 = vmul.f32 %v6750, 0.5
    %v6753 = vtanh.pop %v6751
    %v6754 = vtanh.pop %v6752
    %v6755 = vmul.f32 %v6753, 0.5
    %v6756 = vmul.f32 %v6754, 0.5
    %v6757 = vadd.f32 %v6755, 0.5
    %v6758 = vadd.f32 %v6756, 0.5
    %v6759 = vadd.f32 %v6744, %v5019
    %v6760 = vmul.f32 %v6757, %v6759
    %v6761 = vadd.f32 %v6663, %v6760
    %v6762 = vtanh.pop %v6761
    %v6763 = vsub.f32 %v6585, %v6762
    %v6764 = vmul.f32 %v6758, %v6763
    %v6765 = vadd.f32 %v6762, %v6764
    %v6766 = vpack.c.bf16 %v6765, %v6765
    %v6768 = vshll.u32 %v5686, 16
    %v6772 = vrot.slane %v5866, 7
    %v6774 = vshll.u32 %v6046, 16
    %v6776 = vrot.slane %v6774, 7
    %v6779 = vrot.slane %v6226, 6
    %v6781 = vshll.u32 %v6406, 16
    %v6783 = vrot.slane %v6781, 6
    %v6786 = vrot.slane %v6586, 5
    %v6788 = vshll.u32 %v6766, 16
    %v6790 = vrot.slane %v6788, 5
    %vm6792 = vcmask 1040384
    %vm6793 = vsmask.f32 256
    %vm6794 = vmand %vm6792, %vm6793
    %v6795 = vsel %vm6794, %v5506, %v6768
    %vm6796 = vcmask 1040384
    %v6799 = vsel %vm6796, %v6795, %v6772
    %vm6801 = vcmask 1041408
    %vm6802 = vsmask.f32 1280
    %vm6803 = vmand %vm6801, %vm6802
    %v6804 = vsel %vm6803, %v6799, %v6776
    %vm6805 = vcmask 1041408
    %v6808 = vsel %vm6805, %v6804, %v6779
    %vm6810 = vcmask 1042432
    %vm6811 = vsmask.f32 2304
    %vm6812 = vmand %vm6810, %vm6811
    %v6813 = vsel %vm6812, %v6808, %v6783
    %vm6814 = vcmask 1042432
    %v6817 = vsel %vm6814, %v6813, %v6786
    %vm6819 = vcmask 1043456
    %vm6820 = vsmask.f32 3328
    %vm6821 = vmand %vm6819, %vm6820
    %v6822 = vsel %vm6821, %v6817, %v6790
    %v6823 = vld [vmem:[%s5] sm:$0xf]
    %v6824 = vld [vmem:[%s5 + $0x4] sm:$0xf]
    %v6825 = vld [vmem:[%s5 + $0x8] sm:$0xf]
    %v6826 = vld [vmem:[%s5 + $0xc] sm:$0xf]
    %v6827 = vld [vmem:[%s5 + $0x10] sm:$0xf]
    %v6828 = vld [vmem:[%s5 + $0x14] sm:$0xf]
    %v6829 = vld [vmem:[%s5 + $0x18] sm:$0xf]
    %v6830 = vld [vmem:[%s5 + $0x1c] sm:$0xf]
    %v6831 = vld [vmem:[%s5 + $0x20] sm:$0xf]
    %v6832 = vld [vmem:[%s5 + $0x24] sm:$0xf]
    %v6833 = vld [vmem:[%s5 + $0x28] sm:$0xf]
    %v6834 = vld [vmem:[%s5 + $0x2c] sm:$0xf]
    %v6835 = vld [vmem:[%s5 + $0x30] sm:$0xf]
    %v6836 = vld [vmem:[%s5 + $0x34] sm:$0xf]
    %v6837 = vld [vmem:[%s5 + $0x38] sm:$0xf]
    %v6838 = vld [vmem:[%s5 + $0x3c] sm:$0xf]
    %v6839 = vld [vmem:[%s6] sm:$0x1]
    %v6841 = vlaneseq
    %v6842 = vshrl.u32 %v6841, 7
    %v6843 = vsub.s32 0, %v6842
    %v6844 = vrot.slane %v6839, %v6843
    %v6862 = vunpack.c.l.b16 %v6823
    %v6863 = vunpack.c.l.b16 %v6824
    %v6864 = vunpack.c.l.b16 %v6825
    %v6865 = vunpack.c.l.b16 %v6826
    %v6866 = vunpack.c.l.b16 %v6827
    %v6867 = vunpack.c.l.b16 %v6828
    %v6868 = vunpack.c.l.b16 %v6829
    %v6869 = vunpack.c.l.b16 %v6830
    %v6870 = vunpack.c.l.b16 %v6831
    %v6871 = vunpack.c.l.b16 %v6832
    %v6872 = vunpack.c.l.b16 %v6833
    %v6873 = vunpack.c.l.b16 %v6834
    %v6874 = vunpack.c.l.b16 %v6835
    %v6875 = vunpack.c.l.b16 %v6836
    %v6876 = vunpack.c.l.b16 %v6837
    %v6877 = vunpack.c.l.b16 %v6838
    %v6878 = vpack.c.b16 %v6863, %v6862
    %v6879 = vpack.c.b16 %v6865, %v6864
    %v6880 = vpack.c.b16 %v6867, %v6866
    %v6881 = vpack.c.b16 %v6869, %v6868
    %v6882 = vpack.c.b16 %v6871, %v6870
    %v6883 = vpack.c.b16 %v6873, %v6872
    %v6884 = vpack.c.b16 %v6875, %v6874
    %v6885 = vpack.c.b16 %v6877, %v6876
    %6894 = vmatprep.subr.bf16.mxu0 0
    %6895 = vmatpush1.bf16.msra.mxu0 %v6878
    %6896 = vmatprep.subr.bf16.mxu0 0
    %6897 = vmatpush1.bf16.msra.mxu0 %v6879
    %6898 = vmatprep.subr.bf16.mxu0 0
    %6899 = vmatpush1.bf16.msra.mxu0 %v6880
    %6900 = vmatprep.subr.bf16.mxu0 0
    %6901 = vmatpush1.bf16.msra.mxu0 %v6881
    %6902 = vmatprep.subr.bf16.mxu0 0
    %6903 = vmatpush1.bf16.msra.mxu0 %v6882
    %6904 = vmatprep.subr.bf16.mxu0 0
    %6905 = vmatpush1.bf16.msra.mxu0 %v6883
    %6906 = vmatprep.subr.bf16.mxu0 0
    %6907 = vmatpush1.bf16.msra.mxu0 %v6884
    %6908 = vmatprep.subr.bf16.mxu0 0
    %6909 = vmatpush1.bf16.msra.mxu0 %v6885
    %6910 = vmatprep.subr.bf16.mxu0 0
    %6911 = vmatpush1.bf16.msra.mxu0 0
    %6912 = vmatprep.subr.bf16.mxu0 0
    %6913 = vmatpush1.bf16.msra.mxu0 0
    %6914 = vmatprep.subr.bf16.mxu0 0
    %6915 = vmatpush1.bf16.msra.mxu0 0
    %6916 = vmatprep.subr.bf16.mxu0 0
    %6917 = vmatpush1.bf16.msra.mxu0 0
    %6918 = vmatprep.subr.bf16.mxu0 0
    %6919 = vmatpush1.bf16.msra.mxu0 0
    %6920 = vmatprep.subr.bf16.mxu0 0
    %6921 = vmatpush1.bf16.msra.mxu0 0
    %6922 = vmatprep.subr.bf16.mxu0 0
    %6923 = vmatpush1.bf16.msra.mxu0 0
    %6924 = vmatprep.subr.bf16.mxu0 0
    %6925 = vmatpush1.bf16.msra.mxu0 0
    %6926 = vmatprep.mubr.bf16.mxu0 0
    %6927 = vmatmul.mubr.bf16.gmra.mrb[0].mxu0 %v6822
    %v6928 = vpop.f32.mrb[0].mxu0
    %v6929 = vadd.f32 %v6844, %v6928
    %v6930 = vpop.f32.mrb[0].mxu0
    %v6931 = vpop.f32.mrb[0].mxu0
    %v6932 = vpop.f32.mrb[0].mxu0
    %6933 = vdwg.mxu0
    %6934 = vst [vmem:[%s7] sm:$0xff] %v6929
    // Predicated region
    $region46: #{_gru_forward.1} parent=1 // pred_check
      _
    $region47: #{_gru_forward.1} parent=1 // pred_check_branch
      %6936 = sbr.rel (0) target = $region49
    $region48: #{_gru_forward.1} parent=1 // pred_region
      _
    $region49: #{_gru_forward.1} parent=1 // pred_fallthru
      _
    // Predicated region
    $region50: #{_gru_forward.1} parent=1 // pred_check
      _
    $region51: #{_gru_forward.1} parent=1 // pred_check_branch
      %6938 = sbr.rel (0) target = $region53
    $region52: #{_gru_forward.1} parent=1 // pred_region
      _
    $region53: #{_gru_forward.1} parent=1 // pred_fallthru
      _
    %6939 = vsyncpa [#allocation3], 1
    %6940 = vsyncpa [#allocation5], 1
    %6941 = vsyncpa [#allocation8], 1

</llo_original>
